<compile_context>
chip_gen: v7x
topology: tpu7x:2x2x1
jax: 0.10.0
libtpu: 0.0.40
codegen_flags: <defaults>
</compile_context>

<pallas_src>
import functools

import jax
import jax.numpy as jnp
import numpy as np
from jax.experimental import pallas as pl
from jax.experimental.pallas import tpu as pltpu


def _round_up(x, m):
    return ((x + m - 1) // m) * m


def _vmem_capacity_bytes():
    """Per-core VMEM capacity; conservative 64 MiB (v7x) fallback."""
    try:
        info_fn = getattr(pltpu, "get_tpu_info", None)
        if info_fn is not None:
            cap = int(getattr(info_fn(), "vmem_capacity_bytes", 0))
            if cap > 0:
                return cap
    except Exception:
        pass
    return 64 * 1024 * 1024


def siren_kernel(*refs, n_extra, mxu_dtype, act_dtype):
    """Fused SIREN forward for one row tile.

    refs = (x, wA, bA, [wB, bB,] wC, bC, out)
      x  : (tm, nin) f32     wA : (nin, H)  mxu_dtype    bA : (1, H)  f32
      wB : (L, H, H) mxu     bB : (L, 1, H) f32
      wC : (H, Np)   mxu     bC : (1, Np)   f32          out: (tm, Np) f32

    omega_0 is already folded into wA/bA/wB/bB (see prepare_params), so each
    sine layer is just sin(matmul + bias): one fewer (tm, H) VPU multiply per
    layer in a VALU-bound kernel. Matmuls accumulate in f32 on the MXU.
    """
    if n_extra > 0:
        x_ref, wA_ref, bA_ref, wB_ref, bB_ref, wC_ref, bC_ref, o_ref = refs
    else:
        x_ref, wA_ref, bA_ref, wC_ref, bC_ref, o_ref = refs
        wB_ref = bB_ref = None

    def sine(acc_f32, bias):
        # Bias-add in f32; sin optionally in bf16 (packed VALU on v6e/v7x).
        return jnp.sin((acc_f32 + bias).astype(act_dtype))

    h = sine(
        jnp.dot(x_ref[...].astype(mxu_dtype), wA_ref[...],
                preferred_element_type=jnp.float32),
        bA_ref[...])

    for l in range(n_extra):  # static unroll; weights are VMEM-resident
        h = sine(
            jnp.dot(h.astype(mxu_dtype), wB_ref[l],
                    preferred_element_type=jnp.float32),
            bB_ref[l])

    y = jnp.dot(h.astype(mxu_dtype), wC_ref[...],
                preferred_element_type=jnp.float32) + bC_ref[...]
    o_ref[...] = y.astype(o_ref.dtype)


def siren_forward(x, params, *, nout=None, tm=None, act_dtype=jnp.float32,
                  slice_output=True):
    """Fused Pallas TPU forward of the `siren` module.

    x:            (M, nin) f32 points.
    params:       output of prepare_params (pre-transposed / pre-cast / padded).
    nout:         unpadded output width (static int) for the final slice.
    tm:           requested row tile; None -> auto (grow to 2048, VMEM-budget,
                  then clamp to >= ~4 grid steps).
    act_dtype:    jnp.bfloat16 runs the sine chain in packed bf16 on v6e/v7x
                  (accuracy trade-off); keep f32 on v5e / for parity.
    slice_output: False returns the padded (Mp, Np) array (lets a consumer
                  fuse/slice lazily and avoid an extra HBM round trip).
    """
    wA, bA, wB, bB, wC, bC = params
    M, nin = x.shape
    H = wA.shape[1]
    Np = wC.shape[1]                      # already padded to a multiple of 128
    n_extra = 0 if wB is None else wB.shape[0]
    mxu_dtype = wA.dtype
    w_item = wA.dtype.itemsize

    # Total VMEM-resident weight/bias footprint (bytes). Biases stay f32.
    w_bytes = ((nin * H + n_extra * H * H + H * Np) * w_item
               + (H + n_extra * H + Np) * 4)

    # Constant-index (resident) operands: single-buffer them when large enough
    # to matter (halves their VMEM footprint; mostly helps v7x's 64 MiB).
    single_buffer_weights = (w_bytes > (4 << 20)) and hasattr(pl, "Buffered")
    wb_mult = 1 if single_buffer_weights else 2

    cap = _vmem_capacity_bytes()
    vmem_limit = min((cap * 3) // 4, cap - (16 << 20))   # ~48 MiB v7x, ~96 MiB v5e/v6e
    budget = vmem_limit - (8 << 20)                      # headroom for Mosaic scratch

    def _vmem_est(t):
        # x / out double-buffered + ~4 live (t, H) f32 temporaries of the
        # matmul->bias->sin chain + the (t, Np) f32 pre-store tile.
        act_bytes = (2 * t * nin + 2 * t * Np) * 4 + (4 * t * H + t * Np) * 4
        return wb_mult * w_bytes + act_bytes

    # Row tile: grow toward 2048, shrink to the VMEM budget, then clamp so the
    # grid has >= ~4 steps (v7x two-TensorCore sharding + pipeline depth).
    tm = 2048 if tm is None else int(tm)
    tm = max(8, (min(tm, _round_up(M, 8)) // 8) * 8)
    while tm > 8 and _vmem_est(tm) > budget:
        tm = max(8, ((tm // 2) // 8) * 8)
    if M > 4 * 8:
        tm = min(tm, max(8, _round_up(-(-M // 4), 8)))
    # TODO(synk): fall back to tiling over H / per-layer when the weight stack
    # alone exceeds the VMEM budget (tm bottoms out at 8 in that case).

    Mp = _round_up(M, tm)
    if Mp != M:
        x = jnp.pad(x, ((0, Mp - M), (0, 0)))
    grid = (Mp // tm,)

    def _resident_spec(shape):
        ndim = len(shape)
        index_map = lambda i: (0,) * ndim
        if single_buffer_weights:
            try:
                return pl.BlockSpec(shape, index_map,
                                    pipeline_mode=pl.Buffered(1))
            except TypeError:   # older jax without pipeline_mode kwarg
                pass
        return pl.BlockSpec(shape, index_map)

    in_specs = [
        pl.BlockSpec((tm, nin), lambda i: (i, 0)),    # x: tiled over rows
        _resident_spec((nin, H)),                     # wA
        _resident_spec((1, H)),                       # bA
    ]
    args = [x, wA, bA]
    if n_extra > 0:
        in_specs += [
            _resident_spec((n_extra, H, H)),          # wB stack
            _resident_spec((n_extra, 1, H)),          # bB stack
        ]
        args += [wB, bB]
    in_specs += [
        _resident_spec((H, Np)),                      # wC
        _resident_spec((1, Np)),                      # bC
    ]
    args += [wC, bC]

    out_spec = pl.BlockSpec((tm, Np), lambda i: (i, 0))

    kernel = functools.partial(siren_kernel, n_extra=n_extra,
                               mxu_dtype=mxu_dtype, act_dtype=act_dtype)

    out = pl.pallas_call(
        kernel,
        out_shape=jax.ShapeDtypeStruct((Mp, Np), x.dtype),
        grid_spec=pltpu.PrefetchScalarGridSpec(
            num_scalar_prefetch=0,
            grid=grid,
            in_specs=in_specs,
            out_specs=out_spec,
        ),
        compiler_params=pltpu.CompilerParams(
            dimension_semantics=("parallel",),
            vmem_limit_bytes=int(vmem_limit),
        ),
    )(*args)

    if not slice_output:
        return out                     # padded (Mp, Np); consumer slices/fuses
    n = Np if nout is None else int(nout)
    return out[:M, :n]


# ---------------------------------------------------------------------------
# Parameter construction (matches the PyTorch module's init) + one-time prep.
# ---------------------------------------------------------------------------
def init_siren_params(key, nin, nout, hidden_dim, n_sin_layers=2, omega_0=30.0):
    """PyTorch-layout params: (out, in) weights, (out,) biases."""
    keys = jax.random.split(key, 2 * (n_sin_layers + 1))
    # sinA (is_first=True): W ~ U(-1/nin, 1/nin); bias = nn.Linear default.
    wA = jax.random.uniform(keys[0], (hidden_dim, nin), jnp.float32,
                            minval=-1.0 / nin, maxval=1.0 / nin)
    bA = jax.random.uniform(keys[1], (hidden_dim,), jnp.float32,
                            minval=-1.0 / np.sqrt(nin), maxval=1.0 / np.sqrt(nin))
    # sinB / sinC: W ~ U(-sqrt(6/H)/omega0, +).
    bound = float(np.sqrt(6.0 / hidden_dim) / omega_0)
    b_hid = float(1.0 / np.sqrt(hidden_dim))
    wBs, bBs = [], []
    for i in range(n_sin_layers - 1):
        kw, kb = keys[2 + 2 * i], keys[3 + 2 * i]
        wBs.append(jax.random.uniform(kw, (hidden_dim, hidden_dim), jnp.float32,
                                      minval=-bound, maxval=bound))
        bBs.append(jax.random.uniform(kb, (hidden_dim,), jnp.float32,
                                      minval=-b_hid, maxval=b_hid))
    wC = jax.random.uniform(keys[-2], (nout, hidden_dim), jnp.float32,
                            minval=-bound, maxval=bound)
    bC = jax.random.uniform(keys[-1], (nout,), jnp.float32,
                            minval=-b_hid, maxval=b_hid)
    return dict(wA=wA, bA=bA, wB=wBs, bB=bBs, wC=wC, bC=bC)


def prepare_params(raw, *, omega_0=30.0, mxu_dtype=jnp.bfloat16):
    """One-time prep (outside jit): transpose weights to (in, out), fold
    omega_0 into the sine-layer weights/biases, cast weights to the MXU input
    dtype, stack hidden layers and pad the final layer to a lane-dense width.
    Returns (params, nout) where nout is the unpadded output width."""
    om = float(omega_0)
    wA = (om * jnp.asarray(raw["wA"], jnp.float32)).T.astype(mxu_dtype)   # (nin, H)
    bA = (om * jnp.asarray(raw["bA"], jnp.float32)).reshape(1, -1)        # (1, H) f32
    if raw["wB"]:
        wB = jnp.stack([(om * jnp.asarray(w, jnp.float32)).T
                        for w in raw["wB"]]).astype(mxu_dtype)            # (L, H, H)
        bB = jnp.stack([(om * jnp.asarray(b, jnp.float32)).reshape(1, -1)
                        for b in raw["bB"]])                              # (L, 1, H) f32
    else:
        wB, bB = None, None
    wC = jnp.asarray(raw["wC"], jnp.float32).T                            # (H, nout)
    bC = jnp.asarray(raw["bC"], jnp.float32).reshape(1, -1)               # (1, nout)
    nout = wC.shape[1]
    Np = max(_round_up(nout, 128), 128)
    if Np != nout:
        wC = jnp.pad(wC, ((0, 0), (0, Np - nout)))
        bC = jnp.pad(bC, ((0, 0), (0, Np - nout)))
    wC = wC.astype(mxu_dtype)
    return (wA, bA, wB, bB, wC, bC), nout


def siren_reference(x, raw, omega_0=30.0):
    """Plain-JAX reference with the original PyTorch-layout params."""
    h = jnp.sin(omega_0 * (x @ raw["wA"].T + raw["bA"]))
    for w, b in zip(raw["wB"], raw["bB"]):
        h = jnp.sin(omega_0 * (h @ w.T + b))
    return h @ raw["wC"].T + raw["bC"]


if __name__ == "__main__":
    key = jax.random.PRNGKey(0)
    k_x, k_p = jax.random.split(key)

    # Small-but-representative SIREN: 3 coords -> 128 hidden -> 2 outputs,
    # nSinLayers=2 (one hidden sine layer), batch of 1000 points (not a
    # multiple of the row tile -> exercises pad + multi-step grid + slice).
    batch = 1000
    nin, hidden_dim, nout = 3, 128, 2
    n_sin_layers = 2
    omega_0 = 30.0

    x = jax.random.uniform(k_x, (batch, nin), jnp.float32, minval=-1.0, maxval=1.0)
    raw = init_siren_params(k_p, nin, nout, hidden_dim, n_sin_layers, omega_0)
    ref = np.asarray(siren_reference(x, raw, omega_0))

    # 1) Exact-parity f32-weight path (tight tolerance).
    params32, n_out = prepare_params(raw, omega_0=omega_0, mxu_dtype=jnp.float32)
    fwd32 = jax.jit(functools.partial(siren_forward, nout=n_out))
    out32 = jax.block_until_ready(fwd32(x, params32))
    np.testing.assert_allclose(np.asarray(out32), ref, rtol=1e-4, atol=1e-4)

    # 2) Fast bf16-MXU path (production default: bf16 MXU inputs, f32
    #    accumulation / bias / sin) with a bf16-appropriate tolerance.
    params_bf, n_out = prepare_params(raw, omega_0=omega_0, mxu_dtype=jnp.bfloat16)
    fwd_bf = jax.jit(functools.partial(siren_forward, nout=n_out))
    out_bf = jax.block_until_ready(fwd_bf(x, params_bf))
    np.testing.assert_allclose(np.asarray(out_bf), ref, rtol=1e-1, atol=1e-1)

    print("KERNEL_OK")
</pallas_src>

<mosaic_0001>
module attributes {stable_mosaic.version = 11 : i64} {
  func.func @siren_kernel(%arg0: i32, %arg1: memref<256x3xf32, #tpu.memory_space<vmem>>, %arg2: memref<3x128xf32, #tpu.memory_space<vmem>>, %arg3: memref<1x128xf32, #tpu.memory_space<vmem>>, %arg4: memref<1x128x128xf32, #tpu.memory_space<vmem>>, %arg5: memref<1x1x128xf32, #tpu.memory_space<vmem>>, %arg6: memref<128x128xf32, #tpu.memory_space<vmem>>, %arg7: memref<1x128xf32, #tpu.memory_space<vmem>>, %arg8: memref<256x128xf32, #tpu.memory_space<vmem>>) attributes {dimension_semantics = [#tpu.dimension_semantics<parallel>], iteration_bounds = array<i64: 4>, scalar_prefetch = 0 : i64, scratch_operands = 0 : i64, tpu.core_type = #tpu.core_type<tc>, window_params = [{transform_indices = @transform_0, window_bounds = array<i64: 256, 3>}, {pipeline_mode = #tpu.pipeline_mode<synchronous>, transform_indices = @transform_1, window_bounds = array<i64: 3, 128>}, {pipeline_mode = #tpu.pipeline_mode<synchronous>, transform_indices = @transform_2, window_bounds = array<i64: 1, 128>}, {pipeline_mode = #tpu.pipeline_mode<synchronous>, transform_indices = @transform_3, window_bounds = array<i64: 1, 128, 128>}, {pipeline_mode = #tpu.pipeline_mode<synchronous>, transform_indices = @transform_4, window_bounds = array<i64: 1, 1, 128>}, {pipeline_mode = #tpu.pipeline_mode<synchronous>, transform_indices = @transform_5, window_bounds = array<i64: 128, 128>}, {pipeline_mode = #tpu.pipeline_mode<synchronous>, transform_indices = @transform_6, window_bounds = array<i64: 1, 128>}, {transform_indices = @transform_7, window_bounds = array<i64: 256, 128>}]} {
    %c0 = arith.constant 0 : index
    %c0_0 = arith.constant 0 : index
    %0 = vector.load %arg1[%c0, %c0_0] : memref<256x3xf32, #tpu.memory_space<vmem>>, vector<256x3xf32>
    %c0_1 = arith.constant 0 : index
    %c0_2 = arith.constant 0 : index
    %1 = vector.load %arg2[%c0_1, %c0_2] : memref<3x128xf32, #tpu.memory_space<vmem>>, vector<3x128xf32>
    %cst = arith.constant dense<0.000000e+00> : vector<256x128xf32>
    %2 = tpu.matmul %0, %1, %cst {dimension_numbers = #tpu.dot_dimension_numbers<[1], [0], [0], [1], [0, 0, 1, 1], [], []>} : vector<256x3xf32>, vector<3x128xf32>, vector<256x128xf32> -> vector<256x128xf32>
    %c0_3 = arith.constant 0 : index
    %c0_4 = arith.constant 0 : index
    %3 = vector.load %arg3[%c0_3, %c0_4] : memref<1x128xf32, #tpu.memory_space<vmem>>, vector<1x128xf32>
    %4 = vector.broadcast %3 : vector<1x128xf32> to vector<256x128xf32>
    %5 = arith.addf %2, %4 : vector<256x128xf32>
    %6 = math.sin %5 : vector<256x128xf32>
    %c0_5 = arith.constant 0 : index
    %c0_6 = arith.constant 0 : index
    %c0_7 = arith.constant 0 : index
    %7 = vector.load %arg4[%c0_5, %c0_6, %c0_7] : memref<1x128x128xf32, #tpu.memory_space<vmem>>, vector<1x128x128xf32>
    %8 = vector.shape_cast %7 : vector<1x128x128xf32> to vector<128x128xf32>
    %cst_8 = arith.constant dense<0.000000e+00> : vector<256x128xf32>
    %9 = tpu.matmul %6, %8, %cst_8 {dimension_numbers = #tpu.dot_dimension_numbers<[1], [0], [0], [1], [0, 0, 1, 1], [], []>} : vector<256x128xf32>, vector<128x128xf32>, vector<256x128xf32> -> vector<256x128xf32>
    %c0_9 = arith.constant 0 : index
    %c0_10 = arith.constant 0 : index
    %c0_11 = arith.constant 0 : index
    %10 = vector.load %arg5[%c0_9, %c0_10, %c0_11] : memref<1x1x128xf32, #tpu.memory_space<vmem>>, vector<1x1x128xf32>
    %11 = vector.shape_cast %10 : vector<1x1x128xf32> to vector<1x128xf32>
    %12 = vector.broadcast %11 : vector<1x128xf32> to vector<256x128xf32>
    %13 = arith.addf %9, %12 : vector<256x128xf32>
    %14 = math.sin %13 : vector<256x128xf32>
    %c0_12 = arith.constant 0 : index
    %c0_13 = arith.constant 0 : index
    %15 = vector.load %arg6[%c0_12, %c0_13] : memref<128x128xf32, #tpu.memory_space<vmem>>, vector<128x128xf32>
    %cst_14 = arith.constant dense<0.000000e+00> : vector<256x128xf32>
    %16 = tpu.matmul %14, %15, %cst_14 {dimension_numbers = #tpu.dot_dimension_numbers<[1], [0], [0], [1], [0, 0, 1, 1], [], []>} : vector<256x128xf32>, vector<128x128xf32>, vector<256x128xf32> -> vector<256x128xf32>
    %c0_15 = arith.constant 0 : index
    %c0_16 = arith.constant 0 : index
    %17 = vector.load %arg7[%c0_15, %c0_16] : memref<1x128xf32, #tpu.memory_space<vmem>>, vector<1x128xf32>
    %18 = vector.broadcast %17 : vector<1x128xf32> to vector<256x128xf32>
    %19 = arith.addf %16, %18 : vector<256x128xf32>
    %c0_17 = arith.constant 0 : index
    %c0_18 = arith.constant 0 : index
    %20 = vector.load %arg8[%c0_17, %c0_18] : memref<256x128xf32, #tpu.memory_space<vmem>>, vector<256x128xf32>
    tpu.vector_store %arg8[%c0_17, %c0_18], %19 {strides = array<i32>} : memref<256x128xf32, #tpu.memory_space<vmem>>, vector<256x128xf32>,
    return
  }
  func.func @transform_0(%arg0: i32) -> (i32, i32) {
    %c0_i32 = arith.constant 0 : i32
    %c0_i32_0 = arith.constant 0 : i32
    return %arg0, %c0_i32 : i32, i32
  }
  func.func @transform_1(%arg0: i32) -> (i32, i32) {
    %c0_i32 = arith.constant 0 : i32
    %c0_i32_0 = arith.constant 0 : i32
    %c0_i32_1 = arith.constant 0 : i32
    return %c0_i32, %c0_i32_0 : i32, i32
  }
  func.func @transform_2(%arg0: i32) -> (i32, i32) {
    %c0_i32 = arith.constant 0 : i32
    %c0_i32_0 = arith.constant 0 : i32
    %c0_i32_1 = arith.constant 0 : i32
    return %c0_i32, %c0_i32_0 : i32, i32
  }
  func.func @transform_3(%arg0: i32) -> (i32, i32, i32) {
    %c0_i32 = arith.constant 0 : i32
    %c0_i32_0 = arith.constant 0 : i32
    %c0_i32_1 = arith.constant 0 : i32
    %c0_i32_2 = arith.constant 0 : i32
    return %c0_i32, %c0_i32_0, %c0_i32_1 : i32, i32, i32
  }
  func.func @transform_4(%arg0: i32) -> (i32, i32, i32) {
    %c0_i32 = arith.constant 0 : i32
    %c0_i32_0 = arith.constant 0 : i32
    %c0_i32_1 = arith.constant 0 : i32
    %c0_i32_2 = arith.constant 0 : i32
    return %c0_i32, %c0_i32_0, %c0_i32_1 : i32, i32, i32
  }
  func.func @transform_5(%arg0: i32) -> (i32, i32) {
    %c0_i32 = arith.constant 0 : i32
    %c0_i32_0 = arith.constant 0 : i32
    %c0_i32_1 = arith.constant 0 : i32
    return %c0_i32, %c0_i32_0 : i32, i32
  }
  func.func @transform_6(%arg0: i32) -> (i32, i32) {
    %c0_i32 = arith.constant 0 : i32
    %c0_i32_0 = arith.constant 0 : i32
    %c0_i32_1 = arith.constant 0 : i32
    return %c0_i32, %c0_i32_0 : i32, i32
  }
  func.func @transform_7(%arg0: i32) -> (i32, i32) {
    %c0_i32 = arith.constant 0 : i32
    %c0_i32_0 = arith.constant 0 : i32
    return %arg0, %c0_i32 : i32, i32
  }
}

</mosaic_0001>

<llo_original>
// kernel: siren_forward.1
$region0: #{siren_forward.1}
  #allocation0 [shape = 'u32[]', space=smem, size = 0x4, offset = 0x4, fixed_abs, tag = 'smem constant byte address 0x4 - core index']
  #allocation1 [shape = 'u32[144,128]{1,0:T(1,128)}', space=vmem, size = 0x12000, scoped, tag = 'internal scratch']
  %s0 = inlined_call_operand.vmem [shape: f32[1024,3], index: 0, kind: input, shape index: {}]
  %s1 = inlined_call_operand.vmem [shape: f32[3,128], index: 1, kind: input, shape index: {}]
  %s2 = inlined_call_operand.vmem [shape: f32[1,128], index: 2, kind: input, shape index: {}]
  %s3 = inlined_call_operand.vmem [shape: f32[1,128,128], index: 3, kind: input, shape index: {}]
  %s4 = inlined_call_operand.vmem [shape: f32[1,1,128], index: 4, kind: input, shape index: {}]
  %s5 = inlined_call_operand.vmem [shape: f32[128,128], index: 5, kind: input, shape index: {}]
  %s6 = inlined_call_operand.vmem [shape: f32[1,128], index: 6, kind: input, shape index: {}]
  %s7 = inlined_call_operand.vmem [shape: f32[1024,128], index: 7, kind: output, shape index: {}]
  %s8 = sld [smem:[#allocation0]]
  $region61: #{siren_forward.1} parent=0
    _
  %s10 = ssub.s32 1, %s8
  %s11 = scalar_select 0, %s10, %s8
  loop: start=0, step=1, limit=6
  $region2: #{siren_forward.1} parent=0 // loop_pre_header
    _
  $region3: #{siren_forward.1} parent=0 // loop_header
    %s13 = sphi 0, %s17
    %p14 = scmp.ge.s32.totalorder %s13, 6
    %s23 = sphi 0, %s25
    %s26 = sphi 0, %s23
    %s27 = sphi 0, %s26
    %s43 = sphi 0, %s27
    %s47 = sphi 0, %s47
    %s49 = sphi 0, %s47
    %s50 = sphi 0, %s49
    %s64 = sphi 0, %s50
    %s68 = sphi 0, %s68
    %s70 = sphi 0, %s68
    %s71 = sphi 0, %s70
    %s85 = sphi 0, %s71
    %s89 = sphi 0, %s89
    %s91 = sphi 0, %s89
    %s92 = sphi 0, %s91
    %s106 = sphi 0, %s92
    %s110 = sphi 0, %s110
    %s112 = sphi 0, %s110
    %s113 = sphi 0, %s112
    %s127 = sphi 0, %s113
    %s131 = sphi 0, %s131
    %s133 = sphi 0, %s131
    %s134 = sphi 0, %s133
    %s148 = sphi 0, %s134
    %s152 = sphi 0, %s152
    %s154 = sphi 0, %s152
    %s155 = sphi 0, %s154
    %s169 = sphi 0, %s155
    %s175 = sphi 0, %s177
    %s178 = sphi 0, %s175
    %s179 = sphi 0, %s178
    %s195 = sphi 0, %s179
  $region4: #{siren_forward.1} parent=0 // loop_header_branch
    %16 = sbr.rel (%p14) target = $region8
  $region5: #{siren_forward.1} parent=0 // loop_body
    %s18 = ssub.s32 %s13, 1
    %s19 = ssub.s32 %s13, 2
    %s20 = sadd.s32 %s13, 1
    %s21 = ssub.s32 %s13, %s20
    %p22 = scmp.eq.s32.totalorder %s21, 0
    %s24 = sadd.s32 %s23, 1
    %s25 = scalar_select %p22, %s23, %s24
    %p28 = pneg %p22
    %p29 = scmp.eq.s32.totalorder %s13, 3
    %p30 = por %p28, %p29
    %p31 = scmp.ne.s32.totalorder %s23, %s26
    %p32 = scmp.eq.s32.totalorder %s13, 0
    %p33 = por %p31, %p32
    %p34 = scmp.ne.s32.totalorder %s23, %s26
    %p35 = scmp.eq.s32.totalorder %s18, 3
    %p36 = por %p34, %p35
    %p37 = scmp.ne.s32.totalorder %s26, %s27
    %p38 = scmp.eq.s32.totalorder %s18, 0
    %p39 = por %p37, %p38
    %p40 = scmp.ne.s32.totalorder %s26, %s27
    %p41 = scmp.eq.s32.totalorder %s19, 3
    %p42 = por %p40, %p41
    %p44 = scmp.ne.s32.totalorder %s27, %s43
    %p45 = scmp.eq.s32.totalorder %s19, 0
    %p46 = por %p44, %p45
    %s48 = sadd.s32 %s47, 1
    %p51 = scmp.eq.s32.totalorder %s13, 3
    %p52 = scmp.ne.s32.totalorder %s47, %s49
    %p53 = scmp.eq.s32.totalorder %s13, 0
    %p54 = por %p52, %p53
    %p55 = scmp.ne.s32.totalorder %s47, %s49
    %p56 = scmp.eq.s32.totalorder %s18, 3
    %p57 = por %p55, %p56
    %p58 = scmp.ne.s32.totalorder %s49, %s50
    %p59 = scmp.eq.s32.totalorder %s18, 0
    %p60 = por %p58, %p59
    %p61 = scmp.ne.s32.totalorder %s49, %s50
    %p62 = scmp.eq.s32.totalorder %s19, 3
    %p63 = por %p61, %p62
    %p65 = scmp.ne.s32.totalorder %s50, %s64
    %p66 = scmp.eq.s32.totalorder %s19, 0
    %p67 = por %p65, %p66
    %s69 = sadd.s32 %s68, 1
    %p72 = scmp.eq.s32.totalorder %s13, 3
    %p73 = scmp.ne.s32.totalorder %s68, %s70
    %p74 = scmp.eq.s32.totalorder %s13, 0
    %p75 = por %p73, %p74
    %p76 = scmp.ne.s32.totalorder %s68, %s70
    %p77 = scmp.eq.s32.totalorder %s18, 3
    %p78 = por %p76, %p77
    %p79 = scmp.ne.s32.totalorder %s70, %s71
    %p80 = scmp.eq.s32.totalorder %s18, 0
    %p81 = por %p79, %p80
    %p82 = scmp.ne.s32.totalorder %s70, %s71
    %p83 = scmp.eq.s32.totalorder %s19, 3
    %p84 = por %p82, %p83
    %p86 = scmp.ne.s32.totalorder %s71, %s85
    %p87 = scmp.eq.s32.totalorder %s19, 0
    %p88 = por %p86, %p87
    %s90 = sadd.s32 %s89, 1
    %p93 = scmp.eq.s32.totalorder %s13, 3
    %p94 = scmp.ne.s32.totalorder %s89, %s91
    %p95 = scmp.eq.s32.totalorder %s13, 0
    %p96 = por %p94, %p95
    %p97 = scmp.ne.s32.totalorder %s89, %s91
    %p98 = scmp.eq.s32.totalorder %s18, 3
    %p99 = por %p97, %p98
    %p100 = scmp.ne.s32.totalorder %s91, %s92
    %p101 = scmp.eq.s32.totalorder %s18, 0
    %p102 = por %p100, %p101
    %p103 = scmp.ne.s32.totalorder %s91, %s92
    %p104 = scmp.eq.s32.totalorder %s19, 3
    %p105 = por %p103, %p104
    %p107 = scmp.ne.s32.totalorder %s92, %s106
    %p108 = scmp.eq.s32.totalorder %s19, 0
    %p109 = por %p107, %p108
    %s111 = sadd.s32 %s110, 1
    %p114 = scmp.eq.s32.totalorder %s13, 3
    %p115 = scmp.ne.s32.totalorder %s110, %s112
    %p116 = scmp.eq.s32.totalorder %s13, 0
    %p117 = por %p115, %p116
    %p118 = scmp.ne.s32.totalorder %s110, %s112
    %p119 = scmp.eq.s32.totalorder %s18, 3
    %p120 = por %p118, %p119
    %p121 = scmp.ne.s32.totalorder %s112, %s113
    %p122 = scmp.eq.s32.totalorder %s18, 0
    %p123 = por %p121, %p122
    %p124 = scmp.ne.s32.totalorder %s112, %s113
    %p125 = scmp.eq.s32.totalorder %s19, 3
    %p126 = por %p124, %p125
    %p128 = scmp.ne.s32.totalorder %s113, %s127
    %p129 = scmp.eq.s32.totalorder %s19, 0
    %p130 = por %p128, %p129
    %s132 = sadd.s32 %s131, 1
    %p135 = scmp.eq.s32.totalorder %s13, 3
    %p136 = scmp.ne.s32.totalorder %s131, %s133
    %p137 = scmp.eq.s32.totalorder %s13, 0
    %p138 = por %p136, %p137
    %p139 = scmp.ne.s32.totalorder %s131, %s133
    %p140 = scmp.eq.s32.totalorder %s18, 3
    %p141 = por %p139, %p140
    %p142 = scmp.ne.s32.totalorder %s133, %s134
    %p143 = scmp.eq.s32.totalorder %s18, 0
    %p144 = por %p142, %p143
    %p145 = scmp.ne.s32.totalorder %s133, %s134
    %p146 = scmp.eq.s32.totalorder %s19, 3
    %p147 = por %p145, %p146
    %p149 = scmp.ne.s32.totalorder %s134, %s148
    %p150 = scmp.eq.s32.totalorder %s19, 0
    %p151 = por %p149, %p150
    %s153 = sadd.s32 %s152, 1
    %p156 = scmp.eq.s32.totalorder %s13, 3
    %p157 = scmp.ne.s32.totalorder %s152, %s154
    %p158 = scmp.eq.s32.totalorder %s13, 0
    %p159 = por %p157, %p158
    %p160 = scmp.ne.s32.totalorder %s152, %s154
    %p161 = scmp.eq.s32.totalorder %s18, 3
    %p162 = por %p160, %p161
    %p163 = scmp.ne.s32.totalorder %s154, %s155
    %p164 = scmp.eq.s32.totalorder %s18, 0
    %p165 = por %p163, %p164
    %p166 = scmp.ne.s32.totalorder %s154, %s155
    %p167 = scmp.eq.s32.totalorder %s19, 3
    %p168 = por %p166, %p167
    %p170 = scmp.ne.s32.totalorder %s155, %s169
    %p171 = scmp.eq.s32.totalorder %s19, 0
    %p172 = por %p170, %p171
    %s173 = ssub.s32 %s13, %s20
    %p174 = scmp.eq.s32.totalorder %s173, 0
    %s176 = sadd.s32 %s175, 1
    %s177 = scalar_select %p174, %s175, %s176
    %p180 = pneg %p174
    %p181 = scmp.eq.s32.totalorder %s13, 3
    %p182 = por %p180, %p181
    %p183 = scmp.ne.s32.totalorder %s175, %s178
    %p184 = scmp.eq.s32.totalorder %s13, 0
    %p185 = por %p183, %p184
    %p186 = scmp.ne.s32.totalorder %s175, %s178
    %p187 = scmp.eq.s32.totalorder %s18, 3
    %p188 = por %p186, %p187
    %p189 = scmp.ne.s32.totalorder %s178, %s179
    %p190 = scmp.eq.s32.totalorder %s18, 0
    %p191 = por %p189, %p190
    %p192 = scmp.ne.s32.totalorder %s178, %s179
    %p193 = scmp.eq.s32.totalorder %s19, 3
    %p194 = por %p192, %p193
    %p196 = scmp.ne.s32.totalorder %s179, %s195
    %p197 = scmp.eq.s32.totalorder %s19, 0
    %p198 = por %p196, %p197
    %p199 = scmp.le.s32.totalorder 1, %s13
    %p200 = scmp.lt.s32.totalorder %s13, 5
    %p201 = pnand %p199, %p200
    %p202 = pneg %p201
    // Predicated region
    $region9: #{siren_forward.1} parent=5 // pred_check
      _
    $region10: #{siren_forward.1} parent=5 // pred_check_branch
      %204 = sbr.rel (%p201) target = $region12
    $region11: #{siren_forward.1} parent=5 // pred_region
      %s205 = ssub.s32 %s13, 1
      // Predicated region
      $region13: #{siren_forward.1} parent=11 // pred_check
        %p206 = pneg %p60
      $region14: #{siren_forward.1} parent=11 // pred_check_branch
        %208 = sbr.rel (%p206) target = $region16
      $region15: #{siren_forward.1} parent=11 // pred_region
        _
      $region16: #{siren_forward.1} parent=11 // pred_fallthru
        _
      // Predicated region
      $region17: #{siren_forward.1} parent=11 // pred_check
        %p209 = pneg %p81
      $region18: #{siren_forward.1} parent=11 // pred_check_branch
        %211 = sbr.rel (%p209) target = $region20
      $region19: #{siren_forward.1} parent=11 // pred_region
        _
      $region20: #{siren_forward.1} parent=11 // pred_fallthru
        _
      // Predicated region
      $region21: #{siren_forward.1} parent=11 // pred_check
        %p212 = pneg %p102
      $region22: #{siren_forward.1} parent=11 // pred_check_branch
        %214 = sbr.rel (%p212) target = $region24
      $region23: #{siren_forward.1} parent=11 // pred_region
        _
      $region24: #{siren_forward.1} parent=11 // pred_fallthru
        _
      // Predicated region
      $region25: #{siren_forward.1} parent=11 // pred_check
        %p215 = pneg %p123
      $region26: #{siren_forward.1} parent=11 // pred_check_branch
        %217 = sbr.rel (%p215) target = $region28
      $region27: #{siren_forward.1} parent=11 // pred_region
        _
      $region28: #{siren_forward.1} parent=11 // pred_fallthru
        _
      // Predicated region
      $region29: #{siren_forward.1} parent=11 // pred_check
        %p218 = pneg %p144
      $region30: #{siren_forward.1} parent=11 // pred_check_branch
        %220 = sbr.rel (%p218) target = $region32
      $region31: #{siren_forward.1} parent=11 // pred_region
        _
      $region32: #{siren_forward.1} parent=11 // pred_fallthru
        _
      // Predicated region
      $region33: #{siren_forward.1} parent=11 // pred_check
        %p221 = pneg %p165
      $region34: #{siren_forward.1} parent=11 // pred_check_branch
        %223 = sbr.rel (%p221) target = $region36
      $region35: #{siren_forward.1} parent=11 // pred_region
        _
      $region36: #{siren_forward.1} parent=11 // pred_fallthru
        _
    $region12: #{siren_forward.1} parent=5 // pred_fallthru
      _
    %p224 = scmp.lt.s32.totalorder %s13, 4
    // Predicated region
    $region37: #{siren_forward.1} parent=5 // pred_check
      %p225 = pneg %p224
    $region38: #{siren_forward.1} parent=5 // pred_check_branch
      %227 = sbr.rel (%p225) target = $region40
    $region39: #{siren_forward.1} parent=5 // pred_region
      // Predicated region
      $region41: #{siren_forward.1} parent=39 // pred_check
        %p228 = pneg %p33
      $region42: #{siren_forward.1} parent=39 // pred_check_branch
        %230 = sbr.rel (%p228) target = $region44
      $region43: #{siren_forward.1} parent=39 // pred_region
        %s231 = smul.u32 32, %s13
        %p232 = scmp.lt.s32.totalorder %s231, 127
        %s233 = scalar_select %p232, %s231, 127
        %s234 = smul.addr %s233, 8
        %s235 = scalar_lea.vmem %s0, %s234
        %s236 = smul.u32 32, %s13
      $region44: #{siren_forward.1} parent=39 // pred_fallthru
        _
    $region40: #{siren_forward.1} parent=5 // pred_fallthru
      _
    %p237 = scmp.le.s32.totalorder 1, %s13
    %p238 = scmp.lt.s32.totalorder %s13, 5
    %p239 = pnand %p237, %p238
    %p240 = pneg %p239
    // Predicated region
    $region45: #{siren_forward.1} parent=5 // pred_check
      _
    $region46: #{siren_forward.1} parent=5 // pred_check_branch
      %242 = sbr.rel (%p239) target = $region48
    $region47: #{siren_forward.1} parent=5 // pred_region
      %s243 = ssub.s32 %s13, 1
      %s244 = smul.u32 32, %s18
      %p245 = scmp.lt.s32.totalorder %s244, 127
      %s246 = scalar_select %p245, %s244, 127
      %s247 = smul.addr %s246, 8
      %s248 = scalar_lea.vmem %s0, %s247
      %p249 = pneg %p39
      %p250 = pneg %p36
      %p251 = pneg %p60
      %p252 = pneg %p57
      %p253 = pneg %p81
      %p254 = pneg %p78
      %p255 = pneg %p102
      %p256 = pneg %p99
      %p257 = pneg %p123
      %p258 = pneg %p120
      %p259 = pneg %p144
      %p260 = pneg %p141
      %p261 = pneg %p165
      %p262 = pneg %p162
      %p263 = pneg %p191
      %p264 = pneg %p188
      %s265 = smul.u32 32, %s18
      %p266 = scmp.lt.s32.totalorder %s265, 127
      %s267 = scalar_select %p266, %s265, 127
      %s268 = smul.addr %s267, 8
      %s269 = scalar_lea.vmem %s7, %s268
      %s270 = smul.u32 32, %s18
      %p271 = scmp.lt.s32.totalorder %s270, 127
      %s272 = scalar_select %p271, %s270, 127
      %s273 = smul.addr %s272, 8
      %s274 = scalar_lea.vmem %s0, %s273
      %s275 = smul.u32 32, %s18
      %s276 = smul.u32 32, %s18
      %p277 = scmp.lt.s32.totalorder %s276, 127
      %s278 = scalar_select %p277, %s276, 127
      %s279 = smul.addr %s278, 8
      %s280 = scalar_lea.vmem %s7, %s279
      %s281 = smul.u32 32, %s18
      %v282 = vld [vmem:[%s274] sm:$0xff]
      %v283 = vld [vmem:[%s274 + $0x8] sm:$0xff]
      %v284 = vld [vmem:[%s274 + $0x10] sm:$0xff]
      %v285 = vld [vmem:[%s274 + $0x18] sm:$0xff]
      %v286 = vld [vmem:[%s274 + $0x20] sm:$0xff]
      %v287 = vld [vmem:[%s274 + $0x28] sm:$0xff]
      %v288 = vld [vmem:[%s274 + $0x30] sm:$0xff]
      %v289 = vld [vmem:[%s274 + $0x38] sm:$0xff]
      %v290 = vld [vmem:[%s274 + $0x40] sm:$0xff]
      %v291 = vld [vmem:[%s274 + $0x48] sm:$0xff]
      %v292 = vld [vmem:[%s274 + $0x50] sm:$0xff]
      %v293 = vld [vmem:[%s274 + $0x58] sm:$0xff]
      %v294 = vld [vmem:[%s274 + $0x60] sm:$0xff]
      %v295 = vld [vmem:[%s274 + $0x68] sm:$0xff]
      %v296 = vld [vmem:[%s274 + $0x70] sm:$0xff]
      %v297 = vld [vmem:[%s274 + $0x78] sm:$0xff]
      %v298 = vld [vmem:[%s274 + $0x80] sm:$0xff]
      %v299 = vld [vmem:[%s274 + $0x88] sm:$0xff]
      %v300 = vld [vmem:[%s274 + $0x90] sm:$0xff]
      %v301 = vld [vmem:[%s274 + $0x98] sm:$0xff]
      %v302 = vld [vmem:[%s274 + $0xa0] sm:$0xff]
      %v303 = vld [vmem:[%s274 + $0xa8] sm:$0xff]
      %v304 = vld [vmem:[%s274 + $0xb0] sm:$0xff]
      %v305 = vld [vmem:[%s274 + $0xb8] sm:$0xff]
      %v306 = vld [vmem:[%s274 + $0xc0] sm:$0xff]
      %v307 = vld [vmem:[%s274 + $0xc8] sm:$0xff]
      %v308 = vld [vmem:[%s274 + $0xd0] sm:$0xff]
      %v309 = vld [vmem:[%s274 + $0xd8] sm:$0xff]
      %v310 = vld [vmem:[%s274 + $0xe0] sm:$0xff]
      %v311 = vld [vmem:[%s274 + $0xe8] sm:$0xff]
      %v312 = vld [vmem:[%s274 + $0xf0] sm:$0xff]
      %v313 = vld [vmem:[%s274 + $0xf8] sm:$0xff]
      %v314 = vld [vmem:[%s1] sm:$0x7]
      %v315 = vld [vmem:[%s2] sm:$0x1]
      %v317 = vlaneseq
      %v318 = vshrl.u32 %v317, 7
      %v319 = vsub.s32 0, %v318
      %v320 = vrot.slane %v315, %v319
      %vm322 = vcmask 23552
      %v324 = vsel %vm322, %v282, 0
      %v327 = vsel %vm322, %v283, 0
      %v330 = vsel %vm322, %v284, 0
      %v333 = vsel %vm322, %v285, 0
      %v336 = vsel %vm322, %v286, 0
      %v339 = vsel %vm322, %v287, 0
      %v342 = vsel %vm322, %v288, 0
      %v345 = vsel %vm322, %v289, 0
      %v348 = vsel %vm322, %v290, 0
      %v351 = vsel %vm322, %v291, 0
      %v354 = vsel %vm322, %v292, 0
      %v357 = vsel %vm322, %v293, 0
      %v360 = vsel %vm322, %v294, 0
      %v363 = vsel %vm322, %v295, 0
      %v366 = vsel %vm322, %v296, 0
      %v369 = vsel %vm322, %v297, 0
      %v372 = vsel %vm322, %v298, 0
      %v375 = vsel %vm322, %v299, 0
      %v378 = vsel %vm322, %v300, 0
      %v381 = vsel %vm322, %v301, 0
      %v384 = vsel %vm322, %v302, 0
      %v387 = vsel %vm322, %v303, 0
      %v390 = vsel %vm322, %v304, 0
      %v393 = vsel %vm322, %v305, 0
      %v396 = vsel %vm322, %v306, 0
      %v399 = vsel %vm322, %v307, 0
      %v402 = vsel %vm322, %v308, 0
      %v405 = vsel %vm322, %v309, 0
      %v408 = vsel %vm322, %v310, 0
      %v411 = vsel %vm322, %v311, 0
      %v414 = vsel %vm322, %v312, 0
      %v417 = vsel %vm322, %v313, 0
      %vm419 = vcmask 1042432
      %v421 = vsel %vm419, %v314, 0
      %423 = vmatprep.subr.mxu0 0.0
      %424 = vmatpush1.msra.mxu0 %v421
      %425 = vmatprep.subr.mxu0 0.0
      %426 = vmatpush1.msra.mxu0 0.0
      %427 = vmatprep.subr.mxu0 0.0
      %428 = vmatpush1.msra.mxu0 0.0
      %429 = vmatprep.subr.mxu0 0.0
      %430 = vmatpush1.msra.mxu0 0.0
      %431 = vmatprep.subr.mxu0 0.0
      %432 = vmatpush1.msra.mxu0 0.0
      %433 = vmatprep.subr.mxu0 0.0
      %434 = vmatpush1.msra.mxu0 0.0
      %435 = vmatprep.subr.mxu0 0.0
      %436 = vmatpush1.msra.mxu0 0.0
      %437 = vmatprep.subr.mxu0 0.0
      %438 = vmatpush1.msra.mxu0 0.0
      %439 = vmatprep.subr.mxu0 0.0
      %440 = vmatpush1.msra.mxu0 0.0
      %441 = vmatprep.subr.mxu0 0.0
      %442 = vmatpush1.msra.mxu0 0.0
      %443 = vmatprep.subr.mxu0 0.0
      %444 = vmatpush1.msra.mxu0 0.0
      %445 = vmatprep.subr.mxu0 0.0
      %446 = vmatpush1.msra.mxu0 0.0
      %447 = vmatprep.subr.mxu0 0.0
      %448 = vmatpush1.msra.mxu0 0.0
      %449 = vmatprep.subr.mxu0 0.0
      %450 = vmatpush1.msra.mxu0 0.0
      %451 = vmatprep.subr.mxu0 0.0
      %452 = vmatpush1.msra.mxu0 0.0
      %453 = vmatprep.subr.mxu0 0.0
      %454 = vmatpush1.msra.mxu0 0.0
      %455 = vmatprep.subr.mxu0 0.0
      %456 = vmatpush1.msra.mxu0 0.0
      %457 = vmatprep.subr.mxu0 0.0
      %458 = vmatpush1.msra.mxu0 0.0
      %459 = vmatprep.subr.mxu0 0.0
      %460 = vmatpush1.msra.mxu0 0.0
      %461 = vmatprep.subr.mxu0 0.0
      %462 = vmatpush1.msra.mxu0 0.0
      %463 = vmatprep.subr.mxu0 0.0
      %464 = vmatpush1.msra.mxu0 0.0
      %465 = vmatprep.subr.mxu0 0.0
      %466 = vmatpush1.msra.mxu0 0.0
      %467 = vmatprep.subr.mxu0 0.0
      %468 = vmatpush1.msra.mxu0 0.0
      %469 = vmatprep.subr.mxu0 0.0
      %470 = vmatpush1.msra.mxu0 0.0
      %471 = vmatprep.subr.mxu0 0.0
      %472 = vmatpush1.msra.mxu0 0.0
      %473 = vmatprep.subr.mxu0 0.0
      %474 = vmatpush1.msra.mxu0 0.0
      %475 = vmatprep.subr.mxu0 0.0
      %476 = vmatpush1.msra.mxu0 0.0
      %477 = vmatprep.subr.mxu0 0.0
      %478 = vmatpush1.msra.mxu0 0.0
      %479 = vmatprep.subr.mxu0 0.0
      %480 = vmatpush1.msra.mxu0 0.0
      %481 = vmatprep.subr.mxu0 0.0
      %482 = vmatpush1.msra.mxu0 0.0
      %483 = vmatprep.subr.mxu0 0.0
      %484 = vmatpush1.msra.mxu0 0.0
      %485 = vmatprep.subr.mxu0 0.0
      %486 = vmatpush1.msra.mxu0 0.0
      %487 = vmatprep.mubr.f32.mxu0 0.0
      %488 = vmatmul.mubr.f32.gmra.mrb[0].mxu0 %v324
      %v489 = vpop.f32.mrb[0].mxu0
      %v490 = vadd.f32 %v320, %v489
      %v491 = vpop.f32.mrb[0].mxu0
      %492 = vmatprep.mubr.f32.mxu0 0.0
      %493 = vmatmul.mubr.f32.gmra.mrb[0].mxu0 %v327
      %v494 = vpop.f32.mrb[0].mxu0
      %v495 = vadd.f32 %v320, %v494
      %v496 = vpop.f32.mrb[0].mxu0
      %497 = vmatprep.mubr.f32.mxu0 0.0
      %498 = vmatmul.mubr.f32.gmra.mrb[0].mxu0 %v330
      %v499 = vpop.f32.mrb[0].mxu0
      %v500 = vadd.f32 %v320, %v499
      %v501 = vpop.f32.mrb[0].mxu0
      %502 = vmatprep.mubr.f32.mxu0 0.0
      %503 = vmatmul.mubr.f32.gmra.mrb[0].mxu0 %v333
      %v504 = vpop.f32.mrb[0].mxu0
      %v505 = vadd.f32 %v320, %v504
      %v506 = vpop.f32.mrb[0].mxu0
      %507 = vmatprep.mubr.f32.mxu0 0.0
      %508 = vmatmul.mubr.f32.gmra.mrb[0].mxu0 %v336
      %v509 = vpop.f32.mrb[0].mxu0
      %v510 = vadd.f32 %v320, %v509
      %v511 = vpop.f32.mrb[0].mxu0
      %512 = vmatprep.mubr.f32.mxu0 0.0
      %513 = vmatmul.mubr.f32.gmra.mrb[0].mxu0 %v339
      %v514 = vpop.f32.mrb[0].mxu0
      %v515 = vadd.f32 %v320, %v514
      %v516 = vpop.f32.mrb[0].mxu0
      %517 = vmatprep.mubr.f32.mxu0 0.0
      %518 = vmatmul.mubr.f32.gmra.mrb[0].mxu0 %v342
      %v519 = vpop.f32.mrb[0].mxu0
      %v520 = vadd.f32 %v320, %v519
      %v521 = vpop.f32.mrb[0].mxu0
      %522 = vmatprep.mubr.f32.mxu0 0.0
      %523 = vmatmul.mubr.f32.gmra.mrb[0].mxu0 %v345
      %v524 = vpop.f32.mrb[0].mxu0
      %v525 = vadd.f32 %v320, %v524
      %v526 = vpop.f32.mrb[0].mxu0
      %527 = vmatprep.mubr.f32.mxu0 0.0
      %528 = vmatmul.mubr.f32.gmra.mrb[0].mxu0 %v348
      %v529 = vpop.f32.mrb[0].mxu0
      %v530 = vadd.f32 %v320, %v529
      %v531 = vpop.f32.mrb[0].mxu0
      %532 = vmatprep.mubr.f32.mxu0 0.0
      %533 = vmatmul.mubr.f32.gmra.mrb[0].mxu0 %v351
      %v534 = vpop.f32.mrb[0].mxu0
      %v535 = vadd.f32 %v320, %v534
      %v536 = vpop.f32.mrb[0].mxu0
      %537 = vmatprep.mubr.f32.mxu0 0.0
      %538 = vmatmul.mubr.f32.gmra.mrb[0].mxu0 %v354
      %v539 = vpop.f32.mrb[0].mxu0
      %v540 = vadd.f32 %v320, %v539
      %v541 = vpop.f32.mrb[0].mxu0
      %542 = vmatprep.mubr.f32.mxu0 0.0
      %543 = vmatmul.mubr.f32.gmra.mrb[0].mxu0 %v357
      %v544 = vpop.f32.mrb[0].mxu0
      %v545 = vadd.f32 %v320, %v544
      %v546 = vpop.f32.mrb[0].mxu0
      %547 = vmatprep.mubr.f32.mxu0 0.0
      %548 = vmatmul.mubr.f32.gmra.mrb[0].mxu0 %v360
      %v549 = vpop.f32.mrb[0].mxu0
      %v550 = vadd.f32 %v320, %v549
      %v551 = vpop.f32.mrb[0].mxu0
      %552 = vmatprep.mubr.f32.mxu0 0.0
      %553 = vmatmul.mubr.f32.gmra.mrb[0].mxu0 %v363
      %v554 = vpop.f32.mrb[0].mxu0
      %v555 = vadd.f32 %v320, %v554
      %v556 = vpop.f32.mrb[0].mxu0
      %557 = vmatprep.mubr.f32.mxu0 0.0
      %558 = vmatmul.mubr.f32.gmra.mrb[0].mxu0 %v366
      %v559 = vpop.f32.mrb[0].mxu0
      %v560 = vadd.f32 %v320, %v559
      %v561 = vpop.f32.mrb[0].mxu0
      %562 = vmatprep.mubr.f32.mxu0 0.0
      %563 = vmatmul.mubr.f32.gmra.mrb[0].mxu0 %v369
      %v564 = vpop.f32.mrb[0].mxu0
      %v565 = vadd.f32 %v320, %v564
      %v566 = vpop.f32.mrb[0].mxu0
      %567 = vmatprep.mubr.f32.mxu0 0.0
      %568 = vmatmul.mubr.f32.gmra.mrb[0].mxu0 %v372
      %v569 = vpop.f32.mrb[0].mxu0
      %v570 = vadd.f32 %v320, %v569
      %v571 = vpop.f32.mrb[0].mxu0
      %572 = vmatprep.mubr.f32.mxu0 0.0
      %573 = vmatmul.mubr.f32.gmra.mrb[0].mxu0 %v375
      %v574 = vpop.f32.mrb[0].mxu0
      %v575 = vadd.f32 %v320, %v574
      %v576 = vpop.f32.mrb[0].mxu0
      %577 = vmatprep.mubr.f32.mxu0 0.0
      %578 = vmatmul.mubr.f32.gmra.mrb[0].mxu0 %v378
      %v579 = vpop.f32.mrb[0].mxu0
      %v580 = vadd.f32 %v320, %v579
      %v581 = vpop.f32.mrb[0].mxu0
      %582 = vmatprep.mubr.f32.mxu0 0.0
      %583 = vmatmul.mubr.f32.gmra.mrb[0].mxu0 %v381
      %v584 = vpop.f32.mrb[0].mxu0
      %v585 = vadd.f32 %v320, %v584
      %v586 = vpop.f32.mrb[0].mxu0
      %587 = vmatprep.mubr.f32.mxu0 0.0
      %588 = vmatmul.mubr.f32.gmra.mrb[0].mxu0 %v384
      %v589 = vpop.f32.mrb[0].mxu0
      %v590 = vadd.f32 %v320, %v589
      %v591 = vpop.f32.mrb[0].mxu0
      %592 = vmatprep.mubr.f32.mxu0 0.0
      %593 = vmatmul.mubr.f32.gmra.mrb[0].mxu0 %v387
      %v594 = vpop.f32.mrb[0].mxu0
      %v595 = vadd.f32 %v320, %v594
      %v596 = vpop.f32.mrb[0].mxu0
      %597 = vmatprep.mubr.f32.mxu0 0.0
      %598 = vmatmul.mubr.f32.gmra.mrb[0].mxu0 %v390
      %v599 = vpop.f32.mrb[0].mxu0
      %v600 = vadd.f32 %v320, %v599
      %v601 = vpop.f32.mrb[0].mxu0
      %602 = vmatprep.mubr.f32.mxu0 0.0
      %603 = vmatmul.mubr.f32.gmra.mrb[0].mxu0 %v393
      %v604 = vpop.f32.mrb[0].mxu0
      %v605 = vadd.f32 %v320, %v604
      %v606 = vpop.f32.mrb[0].mxu0
      %607 = vmatprep.mubr.f32.mxu0 0.0
      %608 = vmatmul.mubr.f32.gmra.mrb[0].mxu0 %v396
      %v609 = vpop.f32.mrb[0].mxu0
      %v610 = vadd.f32 %v320, %v609
      %v611 = vpop.f32.mrb[0].mxu0
      %612 = vmatprep.mubr.f32.mxu0 0.0
      %613 = vmatmul.mubr.f32.gmra.mrb[0].mxu0 %v399
      %v614 = vpop.f32.mrb[0].mxu0
      %v615 = vadd.f32 %v320, %v614
      %v616 = vpop.f32.mrb[0].mxu0
      %617 = vmatprep.mubr.f32.mxu0 0.0
      %618 = vmatmul.mubr.f32.gmra.mrb[0].mxu0 %v402
      %v619 = vpop.f32.mrb[0].mxu0
      %v620 = vadd.f32 %v320, %v619
      %v621 = vpop.f32.mrb[0].mxu0
      %622 = vmatprep.mubr.f32.mxu0 0.0
      %623 = vmatmul.mubr.f32.gmra.mrb[0].mxu0 %v405
      %v624 = vpop.f32.mrb[0].mxu0
      %v625 = vadd.f32 %v320, %v624
      %v626 = vpop.f32.mrb[0].mxu0
      %627 = vmatprep.mubr.f32.mxu0 0.0
      %628 = vmatmul.mubr.f32.gmra.mrb[0].mxu0 %v408
      %v629 = vpop.f32.mrb[0].mxu0
      %v630 = vadd.f32 %v320, %v629
      %v631 = vpop.f32.mrb[0].mxu0
      %632 = vmatprep.mubr.f32.mxu0 0.0
      %633 = vmatmul.mubr.f32.gmra.mrb[0].mxu0 %v411
      %v634 = vpop.f32.mrb[0].mxu0
      %v635 = vadd.f32 %v320, %v634
      %v636 = vpop.f32.mrb[0].mxu0
      %637 = vmatprep.mubr.f32.mxu0 0.0
      %638 = vmatmul.mubr.f32.gmra.mrb[0].mxu0 %v414
      %v639 = vpop.f32.mrb[0].mxu0
      %v640 = vadd.f32 %v320, %v639
      %v641 = vpop.f32.mrb[0].mxu0
      %642 = vmatprep.mubr.f32.mxu0 0.0
      %643 = vmatmul.mubr.f32.gmra.mrb[0].mxu0 %v417
      %v644 = vpop.f32.mrb[0].mxu0
      %v645 = vadd.f32 %v320, %v644
      %v646 = vpop.f32.mrb[0].mxu0
      %647 = vdwg.mxu0
      %v648 = vand.u32 2147483647, %v490
      %vm649 = vcmp.le.f32.partialorder %v648, 0.7853982
      %vm650 = vcmp.lt.s32.totalorder %v490, 0
      %v651 = vand.u32 %v490, 2139095040
      %v652 = vshrl.u32 %v651, 23
      %v653 = vsub.s32 %v652, 127
      %v654 = vand.u32 2147483647, %v490
      %v655 = vand.u32 %v654, 8388607
      %v656 = vor.u32 %v655, 8388608
      %v657 = vsub.s32 0, %v656
      %v658 = vadd.s32 %v653, 1
      %vm659 = vcmp.gt.s32.totalorder %v658, 0
      %v660 = vsel %vm659, %v658, 0
      %v661 = vshrl.u32 %v660, 5
      %v662 = vand.u32 %v660, 31
      %v663 = vsub.s32 32, %v662
      %v664 = vshrl.u32 683565275, %v663
      %v665 = vshll.u32 683565275, %v662
      %v666 = vshrl.u32 2475754826, %v663
      %v667 = vor.u32 %v665, %v666
      %v668 = vshll.u32 2475754826, %v662
      %v669 = vshrl.u32 2131351028, %v663
      %v670 = vor.u32 %v668, %v669
      %v671 = vshll.u32 2131351028, %v662
      %v672 = vshrl.u32 2102212464, %v663
      %v673 = vor.u32 %v671, %v672
      %v674 = vshll.u32 2102212464, %v662
      %v675 = vshrl.u32 920167782, %v663
      %v676 = vor.u32 %v674, %v675
      %v677 = vshll.u32 920167782, %v662
      %v678 = vshrl.u32 1326507024, %v663
      %v679 = vor.u32 %v677, %v678
      %vm680 = vcmp.lt.s32.totalorder %v661, 1
      %vm681 = vcmp.lt.s32.totalorder %v661, 2
      %vm682 = vcmp.lt.s32.totalorder %v661, 3
      %vm683 = vcmp.lt.s32.totalorder %v661, 4
      %v684 = vsel %vm680, %v664, %v667
      %v685 = vsel %vm683, %v673, 2102212464
      %v686 = vsel %vm682, %v670, %v685
      %v687 = vsel %vm681, %v684, %v686
      %v688 = vsel %vm680, %v667, %v670
      %v689 = vsel %vm683, %v676, 920167782
      %v690 = vsel %vm682, %v673, %v689
      %v691 = vsel %vm681, %v688, %v690
      %v692 = vsel %vm680, %v670, %v673
      %v693 = vsel %vm683, %v679, 1326507024
      %v694 = vsel %vm682, %v676, %v693
      %v695 = vsel %vm681, %v692, %v694
      %v696 = vshll.u32 %v656, 8
      %v697 = vmul.u32.u64.compose %v696, %v695
      %v698 = vextract.low.u32 %v697
      %v699 = vextract.high.u32 %v697
      %v700 = vmul.u32.u64.compose %v696, %v691
      %v701 = vextract.low.u32 %v700
      %v702 = vextract.high.u32 %v700
      %v703 = vmul.u32 %v696, %v687
      %v704 = vadd.s32 %v699, %v701
      %vm705 = vc.u32 %v699, %v701
      %v706 = vadd.s32 %v702, 1
      %v707 = vsel %vm705, %v706, %v702
      %v708 = vadd.s32 %v703, %v707
      %v709 = vadd.s32 %v708, 536870912
      %v710 = vshrl.u32 %v709, 30
      %v711 = vshll.u32 %v710, 30
      %v712 = vsub.s32 %v708, %v711
      %vm713 = vcmp.lt.s32.totalorder %v712, 0
      %v714 = vsub.s32 0, %v712
      %v715 = vsel %vm713, %v714, %v712
      %v716 = vclz %v715
      %v717 = vsub.s32 %v716, 2
      %vm718 = vcmp.gt.s32.totalorder 0, %v717
      %v719 = vsel %vm718, 0, %v717
      %v720 = vsub.s32 32, %v719
      %v721 = vshll.u32 %v712, %v719
      %v722 = vshrl.u32 %v704, %v720
      %v723 = vor.u32 %v721, %v722
      %v724 = vsub.s32 4294967266, %v719
      %v725 = vadd.s32 %v724, 127
      %v726 = vshll.u32 %v725, 23
      %v727 = vor.u32 4788187, %v726
      %v728 = vand.u32 2147483647, %v727
      %v730 = vcvt.s32.f32 %v723
      %v731 = vmul.f32 %v730, %v728
      %v732 = vxor.u32 %v731, 2147483648
      %v733 = vsel %vm650, %v732, %v731
      %v734 = vsub.s32 4, %v710
      %v735 = vsel %vm650, %v734, %v710
      %v736 = vsel %vm649, %v490, %v733
      %v737 = vsel %vm649, 0, %v735
      %v738 = vcosq.f32.pop %v736
      %v739 = vsinq.f32.pop %v736
      %vm740 = vweird.f32 %v490
      %v741 = vadd.s32 %v737, 3
      %v742 = vand.u32 %v741, 3
      %vm743 = vcmp.lt.s32.totalorder %v742, 2
      %vm744 = vcmp.eq.s32.totalorder %v742, 0
      %v745 = vxor.u32 %v739, 2147483648
      %v746 = vsel %vm744, %v738, %v745
      %vm747 = vcmp.eq.s32.totalorder %v742, 2
      %v748 = vxor.u32 %v738, 2147483648
      %v749 = vsel %vm747, %v748, %v739
      %v750 = vsel %vm743, %v746, %v749
      %v751 = vsel %vm740, nan, %v750
      %v752 = vand.u32 2147483647, %v495
      %vm753 = vcmp.le.f32.partialorder %v752, 0.7853982
      %vm754 = vcmp.lt.s32.totalorder %v495, 0
      %v755 = vand.u32 %v495, 2139095040
      %v756 = vshrl.u32 %v755, 23
      %v757 = vsub.s32 %v756, 127
      %v758 = vand.u32 2147483647, %v495
      %v759 = vand.u32 %v758, 8388607
      %v760 = vor.u32 %v759, 8388608
      %v761 = vsub.s32 0, %v760
      %v762 = vadd.s32 %v757, 1
      %vm763 = vcmp.gt.s32.totalorder %v762, 0
      %v764 = vsel %vm763, %v762, 0
      %v765 = vshrl.u32 %v764, 5
      %v766 = vand.u32 %v764, 31
      %v767 = vsub.s32 32, %v766
      %v768 = vshrl.u32 683565275, %v767
      %v769 = vshll.u32 683565275, %v766
      %v770 = vshrl.u32 2475754826, %v767
      %v771 = vor.u32 %v769, %v770
      %v772 = vshll.u32 2475754826, %v766
      %v773 = vshrl.u32 2131351028, %v767
      %v774 = vor.u32 %v772, %v773
      %v775 = vshll.u32 2131351028, %v766
      %v776 = vshrl.u32 2102212464, %v767
      %v777 = vor.u32 %v775, %v776
      %v778 = vshll.u32 2102212464, %v766
      %v779 = vshrl.u32 920167782, %v767
      %v780 = vor.u32 %v778, %v779
      %v781 = vshll.u32 920167782, %v766
      %v782 = vshrl.u32 1326507024, %v767
      %v783 = vor.u32 %v781, %v782
      %vm784 = vcmp.lt.s32.totalorder %v765, 1
      %vm785 = vcmp.lt.s32.totalorder %v765, 2
      %vm786 = vcmp.lt.s32.totalorder %v765, 3
      %vm787 = vcmp.lt.s32.totalorder %v765, 4
      %v788 = vsel %vm784, %v768, %v771
      %v789 = vsel %vm787, %v777, 2102212464
      %v790 = vsel %vm786, %v774, %v789
      %v791 = vsel %vm785, %v788, %v790
      %v792 = vsel %vm784, %v771, %v774
      %v793 = vsel %vm787, %v780, 920167782
      %v794 = vsel %vm786, %v777, %v793
      %v795 = vsel %vm785, %v792, %v794
      %v796 = vsel %vm784, %v774, %v777
      %v797 = vsel %vm787, %v783, 1326507024
      %v798 = vsel %vm786, %v780, %v797
      %v799 = vsel %vm785, %v796, %v798
      %v800 = vshll.u32 %v760, 8
      %v801 = vmul.u32.u64.compose %v800, %v799
      %v802 = vextract.low.u32 %v801
      %v803 = vextract.high.u32 %v801
      %v804 = vmul.u32.u64.compose %v800, %v795
      %v805 = vextract.low.u32 %v804
      %v806 = vextract.high.u32 %v804
      %v807 = vmul.u32 %v800, %v791
      %v808 = vadd.s32 %v803, %v805
      %vm809 = vc.u32 %v803, %v805
      %v810 = vadd.s32 %v806, 1
      %v811 = vsel %vm809, %v810, %v806
      %v812 = vadd.s32 %v807, %v811
      %v813 = vadd.s32 %v812, 536870912
      %v814 = vshrl.u32 %v813, 30
      %v815 = vshll.u32 %v814, 30
      %v816 = vsub.s32 %v812, %v815
      %vm817 = vcmp.lt.s32.totalorder %v816, 0
      %v818 = vsub.s32 0, %v816
      %v819 = vsel %vm817, %v818, %v816
      %v820 = vclz %v819
      %v821 = vsub.s32 %v820, 2
      %vm822 = vcmp.gt.s32.totalorder 0, %v821
      %v823 = vsel %vm822, 0, %v821
      %v824 = vsub.s32 32, %v823
      %v825 = vshll.u32 %v816, %v823
      %v826 = vshrl.u32 %v808, %v824
      %v827 = vor.u32 %v825, %v826
      %v828 = vsub.s32 4294967266, %v823
      %v829 = vadd.s32 %v828, 127
      %v830 = vshll.u32 %v829, 23
      %v831 = vor.u32 4788187, %v830
      %v832 = vand.u32 2147483647, %v831
      %v834 = vcvt.s32.f32 %v827
      %v835 = vmul.f32 %v834, %v832
      %v836 = vxor.u32 %v835, 2147483648
      %v837 = vsel %vm754, %v836, %v835
      %v838 = vsub.s32 4, %v814
      %v839 = vsel %vm754, %v838, %v814
      %v840 = vsel %vm753, %v495, %v837
      %v841 = vsel %vm753, 0, %v839
      %v842 = vcosq.f32.pop %v840
      %v843 = vsinq.f32.pop %v840
      %vm844 = vweird.f32 %v495
      %v845 = vadd.s32 %v841, 3
      %v846 = vand.u32 %v845, 3
      %vm847 = vcmp.lt.s32.totalorder %v846, 2
      %vm848 = vcmp.eq.s32.totalorder %v846, 0
      %v849 = vxor.u32 %v843, 2147483648
      %v850 = vsel %vm848, %v842, %v849
      %vm851 = vcmp.eq.s32.totalorder %v846, 2
      %v852 = vxor.u32 %v842, 2147483648
      %v853 = vsel %vm851, %v852, %v843
      %v854 = vsel %vm847, %v850, %v853
      %v855 = vsel %vm844, nan, %v854
      %v856 = vand.u32 2147483647, %v500
      %vm857 = vcmp.le.f32.partialorder %v856, 0.7853982
      %vm858 = vcmp.lt.s32.totalorder %v500, 0
      %v859 = vand.u32 %v500, 2139095040
      %v860 = vshrl.u32 %v859, 23
      %v861 = vsub.s32 %v860, 127
      %v862 = vand.u32 2147483647, %v500
      %v863 = vand.u32 %v862, 8388607
      %v864 = vor.u32 %v863, 8388608
      %v865 = vsub.s32 0, %v864
      %v866 = vadd.s32 %v861, 1
      %vm867 = vcmp.gt.s32.totalorder %v866, 0
      %v868 = vsel %vm867, %v866, 0
      %v869 = vshrl.u32 %v868, 5
      %v870 = vand.u32 %v868, 31
      %v871 = vsub.s32 32, %v870
      %v872 = vshrl.u32 683565275, %v871
      %v873 = vshll.u32 683565275, %v870
      %v874 = vshrl.u32 2475754826, %v871
      %v875 = vor.u32 %v873, %v874
      %v876 = vshll.u32 2475754826, %v870
      %v877 = vshrl.u32 2131351028, %v871
      %v878 = vor.u32 %v876, %v877
      %v879 = vshll.u32 2131351028, %v870
      %v880 = vshrl.u32 2102212464, %v871
      %v881 = vor.u32 %v879, %v880
      %v882 = vshll.u32 2102212464, %v870
      %v883 = vshrl.u32 920167782, %v871
      %v884 = vor.u32 %v882, %v883
      %v885 = vshll.u32 920167782, %v870
      %v886 = vshrl.u32 1326507024, %v871
      %v887 = vor.u32 %v885, %v886
      %vm888 = vcmp.lt.s32.totalorder %v869, 1
      %vm889 = vcmp.lt.s32.totalorder %v869, 2
      %vm890 = vcmp.lt.s32.totalorder %v869, 3
      %vm891 = vcmp.lt.s32.totalorder %v869, 4
      %v892 = vsel %vm888, %v872, %v875
      %v893 = vsel %vm891, %v881, 2102212464
      %v894 = vsel %vm890, %v878, %v893
      %v895 = vsel %vm889, %v892, %v894
      %v896 = vsel %vm888, %v875, %v878
      %v897 = vsel %vm891, %v884, 920167782
      %v898 = vsel %vm890, %v881, %v897
      %v899 = vsel %vm889, %v896, %v898
      %v900 = vsel %vm888, %v878, %v881
      %v901 = vsel %vm891, %v887, 1326507024
      %v902 = vsel %vm890, %v884, %v901
      %v903 = vsel %vm889, %v900, %v902
      %v904 = vshll.u32 %v864, 8
      %v905 = vmul.u32.u64.compose %v904, %v903
      %v906 = vextract.low.u32 %v905
      %v907 = vextract.high.u32 %v905
      %v908 = vmul.u32.u64.compose %v904, %v899
      %v909 = vextract.low.u32 %v908
      %v910 = vextract.high.u32 %v908
      %v911 = vmul.u32 %v904, %v895
      %v912 = vadd.s32 %v907, %v909
      %vm913 = vc.u32 %v907, %v909
      %v914 = vadd.s32 %v910, 1
      %v915 = vsel %vm913, %v914, %v910
      %v916 = vadd.s32 %v911, %v915
      %v917 = vadd.s32 %v916, 536870912
      %v918 = vshrl.u32 %v917, 30
      %v919 = vshll.u32 %v918, 30
      %v920 = vsub.s32 %v916, %v919
      %vm921 = vcmp.lt.s32.totalorder %v920, 0
      %v922 = vsub.s32 0, %v920
      %v923 = vsel %vm921, %v922, %v920
      %v924 = vclz %v923
      %v925 = vsub.s32 %v924, 2
      %vm926 = vcmp.gt.s32.totalorder 0, %v925
      %v927 = vsel %vm926, 0, %v925
      %v928 = vsub.s32 32, %v927
      %v929 = vshll.u32 %v920, %v927
      %v930 = vshrl.u32 %v912, %v928
      %v931 = vor.u32 %v929, %v930
      %v932 = vsub.s32 4294967266, %v927
      %v933 = vadd.s32 %v932, 127
      %v934 = vshll.u32 %v933, 23
      %v935 = vor.u32 4788187, %v934
      %v936 = vand.u32 2147483647, %v935
      %v938 = vcvt.s32.f32 %v931
      %v939 = vmul.f32 %v938, %v936
      %v940 = vxor.u32 %v939, 2147483648
      %v941 = vsel %vm858, %v940, %v939
      %v942 = vsub.s32 4, %v918
      %v943 = vsel %vm858, %v942, %v918
      %v944 = vsel %vm857, %v500, %v941
      %v945 = vsel %vm857, 0, %v943
      %v946 = vcosq.f32.pop %v944
      %v947 = vsinq.f32.pop %v944
      %vm948 = vweird.f32 %v500
      %v949 = vadd.s32 %v945, 3
      %v950 = vand.u32 %v949, 3
      %vm951 = vcmp.lt.s32.totalorder %v950, 2
      %vm952 = vcmp.eq.s32.totalorder %v950, 0
      %v953 = vxor.u32 %v947, 2147483648
      %v954 = vsel %vm952, %v946, %v953
      %vm955 = vcmp.eq.s32.totalorder %v950, 2
      %v956 = vxor.u32 %v946, 2147483648
      %v957 = vsel %vm955, %v956, %v947
      %v958 = vsel %vm951, %v954, %v957
      %v959 = vsel %vm948, nan, %v958
      %v960 = vand.u32 2147483647, %v505
      %vm961 = vcmp.le.f32.partialorder %v960, 0.7853982
      %vm962 = vcmp.lt.s32.totalorder %v505, 0
      %v963 = vand.u32 %v505, 2139095040
      %v964 = vshrl.u32 %v963, 23
      %v965 = vsub.s32 %v964, 127
      %v966 = vand.u32 2147483647, %v505
      %v967 = vand.u32 %v966, 8388607
      %v968 = vor.u32 %v967, 8388608
      %v969 = vsub.s32 0, %v968
      %v970 = vadd.s32 %v965, 1
      %vm971 = vcmp.gt.s32.totalorder %v970, 0
      %v972 = vsel %vm971, %v970, 0
      %v973 = vshrl.u32 %v972, 5
      %v974 = vand.u32 %v972, 31
      %v975 = vsub.s32 32, %v974
      %v976 = vshrl.u32 683565275, %v975
      %v977 = vshll.u32 683565275, %v974
      %v978 = vshrl.u32 2475754826, %v975
      %v979 = vor.u32 %v977, %v978
      %v980 = vshll.u32 2475754826, %v974
      %v981 = vshrl.u32 2131351028, %v975
      %v982 = vor.u32 %v980, %v981
      %v983 = vshll.u32 2131351028, %v974
      %v984 = vshrl.u32 2102212464, %v975
      %v985 = vor.u32 %v983, %v984
      %v986 = vshll.u32 2102212464, %v974
      %v987 = vshrl.u32 920167782, %v975
      %v988 = vor.u32 %v986, %v987
      %v989 = vshll.u32 920167782, %v974
      %v990 = vshrl.u32 1326507024, %v975
      %v991 = vor.u32 %v989, %v990
      %vm992 = vcmp.lt.s32.totalorder %v973, 1
      %vm993 = vcmp.lt.s32.totalorder %v973, 2
      %vm994 = vcmp.lt.s32.totalorder %v973, 3
      %vm995 = vcmp.lt.s32.totalorder %v973, 4
      %v996 = vsel %vm992, %v976, %v979
      %v997 = vsel %vm995, %v985, 2102212464
      %v998 = vsel %vm994, %v982, %v997
      %v999 = vsel %vm993, %v996, %v998
      %v1000 = vsel %vm992, %v979, %v982
      %v1001 = vsel %vm995, %v988, 920167782
      %v1002 = vsel %vm994, %v985, %v1001
      %v1003 = vsel %vm993, %v1000, %v1002
      %v1004 = vsel %vm992, %v982, %v985
      %v1005 = vsel %vm995, %v991, 1326507024
      %v1006 = vsel %vm994, %v988, %v1005
      %v1007 = vsel %vm993, %v1004, %v1006
      %v1008 = vshll.u32 %v968, 8
      %v1009 = vmul.u32.u64.compose %v1008, %v1007
      %v1010 = vextract.low.u32 %v1009
      %v1011 = vextract.high.u32 %v1009
      %v1012 = vmul.u32.u64.compose %v1008, %v1003
      %v1013 = vextract.low.u32 %v1012
      %v1014 = vextract.high.u32 %v1012
      %v1015 = vmul.u32 %v1008, %v999
      %v1016 = vadd.s32 %v1011, %v1013
      %vm1017 = vc.u32 %v1011, %v1013
      %v1018 = vadd.s32 %v1014, 1
      %v1019 = vsel %vm1017, %v1018, %v1014
      %v1020 = vadd.s32 %v1015, %v1019
      %v1021 = vadd.s32 %v1020, 536870912
      %v1022 = vshrl.u32 %v1021, 30
      %v1023 = vshll.u32 %v1022, 30
      %v1024 = vsub.s32 %v1020, %v1023
      %vm1025 = vcmp.lt.s32.totalorder %v1024, 0
      %v1026 = vsub.s32 0, %v1024
      %v1027 = vsel %vm1025, %v1026, %v1024
      %v1028 = vclz %v1027
      %v1029 = vsub.s32 %v1028, 2
      %vm1030 = vcmp.gt.s32.totalorder 0, %v1029
      %v1031 = vsel %vm1030, 0, %v1029
      %v1032 = vsub.s32 32, %v1031
      %v1033 = vshll.u32 %v1024, %v1031
      %v1034 = vshrl.u32 %v1016, %v1032
      %v1035 = vor.u32 %v1033, %v1034
      %v1036 = vsub.s32 4294967266, %v1031
      %v1037 = vadd.s32 %v1036, 127
      %v1038 = vshll.u32 %v1037, 23
      %v1039 = vor.u32 4788187, %v1038
      %v1040 = vand.u32 2147483647, %v1039
      %v1042 = vcvt.s32.f32 %v1035
      %v1043 = vmul.f32 %v1042, %v1040
      %v1044 = vxor.u32 %v1043, 2147483648
      %v1045 = vsel %vm962, %v1044, %v1043
      %v1046 = vsub.s32 4, %v1022
      %v1047 = vsel %vm962, %v1046, %v1022
      %v1048 = vsel %vm961, %v505, %v1045
      %v1049 = vsel %vm961, 0, %v1047
      %v1050 = vcosq.f32.pop %v1048
      %v1051 = vsinq.f32.pop %v1048
      %vm1052 = vweird.f32 %v505
      %v1053 = vadd.s32 %v1049, 3
      %v1054 = vand.u32 %v1053, 3
      %vm1055 = vcmp.lt.s32.totalorder %v1054, 2
      %vm1056 = vcmp.eq.s32.totalorder %v1054, 0
      %v1057 = vxor.u32 %v1051, 2147483648
      %v1058 = vsel %vm1056, %v1050, %v1057
      %vm1059 = vcmp.eq.s32.totalorder %v1054, 2
      %v1060 = vxor.u32 %v1050, 2147483648
      %v1061 = vsel %vm1059, %v1060, %v1051
      %v1062 = vsel %vm1055, %v1058, %v1061
      %v1063 = vsel %vm1052, nan, %v1062
      %v1064 = vand.u32 2147483647, %v510
      %vm1065 = vcmp.le.f32.partialorder %v1064, 0.7853982
      %vm1066 = vcmp.lt.s32.totalorder %v510, 0
      %v1067 = vand.u32 %v510, 2139095040
      %v1068 = vshrl.u32 %v1067, 23
      %v1069 = vsub.s32 %v1068, 127
      %v1070 = vand.u32 2147483647, %v510
      %v1071 = vand.u32 %v1070, 8388607
      %v1072 = vor.u32 %v1071, 8388608
      %v1073 = vsub.s32 0, %v1072
      %v1074 = vadd.s32 %v1069, 1
      %vm1075 = vcmp.gt.s32.totalorder %v1074, 0
      %v1076 = vsel %vm1075, %v1074, 0
      %v1077 = vshrl.u32 %v1076, 5
      %v1078 = vand.u32 %v1076, 31
      %v1079 = vsub.s32 32, %v1078
      %v1080 = vshrl.u32 683565275, %v1079
      %v1081 = vshll.u32 683565275, %v1078
      %v1082 = vshrl.u32 2475754826, %v1079
      %v1083 = vor.u32 %v1081, %v1082
      %v1084 = vshll.u32 2475754826, %v1078
      %v1085 = vshrl.u32 2131351028, %v1079
      %v1086 = vor.u32 %v1084, %v1085
      %v1087 = vshll.u32 2131351028, %v1078
      %v1088 = vshrl.u32 2102212464, %v1079
      %v1089 = vor.u32 %v1087, %v1088
      %v1090 = vshll.u32 2102212464, %v1078
      %v1091 = vshrl.u32 920167782, %v1079
      %v1092 = vor.u32 %v1090, %v1091
      %v1093 = vshll.u32 920167782, %v1078
      %v1094 = vshrl.u32 1326507024, %v1079
      %v1095 = vor.u32 %v1093, %v1094
      %vm1096 = vcmp.lt.s32.totalorder %v1077, 1
      %vm1097 = vcmp.lt.s32.totalorder %v1077, 2
      %vm1098 = vcmp.lt.s32.totalorder %v1077, 3
      %vm1099 = vcmp.lt.s32.totalorder %v1077, 4
      %v1100 = vsel %vm1096, %v1080, %v1083
      %v1101 = vsel %vm1099, %v1089, 2102212464
      %v1102 = vsel %vm1098, %v1086, %v1101
      %v1103 = vsel %vm1097, %v1100, %v1102
      %v1104 = vsel %vm1096, %v1083, %v1086
      %v1105 = vsel %vm1099, %v1092, 920167782
      %v1106 = vsel %vm1098, %v1089, %v1105
      %v1107 = vsel %vm1097, %v1104, %v1106
      %v1108 = vsel %vm1096, %v1086, %v1089
      %v1109 = vsel %vm1099, %v1095, 1326507024
      %v1110 = vsel %vm1098, %v1092, %v1109
      %v1111 = vsel %vm1097, %v1108, %v1110
      %v1112 = vshll.u32 %v1072, 8
      %v1113 = vmul.u32.u64.compose %v1112, %v1111
      %v1114 = vextract.low.u32 %v1113
      %v1115 = vextract.high.u32 %v1113
      %v1116 = vmul.u32.u64.compose %v1112, %v1107
      %v1117 = vextract.low.u32 %v1116
      %v1118 = vextract.high.u32 %v1116
      %v1119 = vmul.u32 %v1112, %v1103
      %v1120 = vadd.s32 %v1115, %v1117
      %vm1121 = vc.u32 %v1115, %v1117
      %v1122 = vadd.s32 %v1118, 1
      %v1123 = vsel %vm1121, %v1122, %v1118
      %v1124 = vadd.s32 %v1119, %v1123
      %v1125 = vadd.s32 %v1124, 536870912
      %v1126 = vshrl.u32 %v1125, 30
      %v1127 = vshll.u32 %v1126, 30
      %v1128 = vsub.s32 %v1124, %v1127
      %vm1129 = vcmp.lt.s32.totalorder %v1128, 0
      %v1130 = vsub.s32 0, %v1128
      %v1131 = vsel %vm1129, %v1130, %v1128
      %v1132 = vclz %v1131
      %v1133 = vsub.s32 %v1132, 2
      %vm1134 = vcmp.gt.s32.totalorder 0, %v1133
      %v1135 = vsel %vm1134, 0, %v1133
      %v1136 = vsub.s32 32, %v1135
      %v1137 = vshll.u32 %v1128, %v1135
      %v1138 = vshrl.u32 %v1120, %v1136
      %v1139 = vor.u32 %v1137, %v1138
      %v1140 = vsub.s32 4294967266, %v1135
      %v1141 = vadd.s32 %v1140, 127
      %v1142 = vshll.u32 %v1141, 23
      %v1143 = vor.u32 4788187, %v1142
      %v1144 = vand.u32 2147483647, %v1143
      %v1146 = vcvt.s32.f32 %v1139
      %v1147 = vmul.f32 %v1146, %v1144
      %v1148 = vxor.u32 %v1147, 2147483648
      %v1149 = vsel %vm1066, %v1148, %v1147
      %v1150 = vsub.s32 4, %v1126
      %v1151 = vsel %vm1066, %v1150, %v1126
      %v1152 = vsel %vm1065, %v510, %v1149
      %v1153 = vsel %vm1065, 0, %v1151
      %v1154 = vcosq.f32.pop %v1152
      %v1155 = vsinq.f32.pop %v1152
      %vm1156 = vweird.f32 %v510
      %v1157 = vadd.s32 %v1153, 3
      %v1158 = vand.u32 %v1157, 3
      %vm1159 = vcmp.lt.s32.totalorder %v1158, 2
      %vm1160 = vcmp.eq.s32.totalorder %v1158, 0
      %v1161 = vxor.u32 %v1155, 2147483648
      %v1162 = vsel %vm1160, %v1154, %v1161
      %vm1163 = vcmp.eq.s32.totalorder %v1158, 2
      %v1164 = vxor.u32 %v1154, 2147483648
      %v1165 = vsel %vm1163, %v1164, %v1155
      %v1166 = vsel %vm1159, %v1162, %v1165
      %v1167 = vsel %vm1156, nan, %v1166
      %v1168 = vand.u32 2147483647, %v515
      %vm1169 = vcmp.le.f32.partialorder %v1168, 0.7853982
      %vm1170 = vcmp.lt.s32.totalorder %v515, 0
      %v1171 = vand.u32 %v515, 2139095040
      %v1172 = vshrl.u32 %v1171, 23
      %v1173 = vsub.s32 %v1172, 127
      %v1174 = vand.u32 2147483647, %v515
      %v1175 = vand.u32 %v1174, 8388607
      %v1176 = vor.u32 %v1175, 8388608
      %v1177 = vsub.s32 0, %v1176
      %v1178 = vadd.s32 %v1173, 1
      %vm1179 = vcmp.gt.s32.totalorder %v1178, 0
      %v1180 = vsel %vm1179, %v1178, 0
      %v1181 = vshrl.u32 %v1180, 5
      %v1182 = vand.u32 %v1180, 31
      %v1183 = vsub.s32 32, %v1182
      %v1184 = vshrl.u32 683565275, %v1183
      %v1185 = vshll.u32 683565275, %v1182
      %v1186 = vshrl.u32 2475754826, %v1183
      %v1187 = vor.u32 %v1185, %v1186
      %v1188 = vshll.u32 2475754826, %v1182
      %v1189 = vshrl.u32 2131351028, %v1183
      %v1190 = vor.u32 %v1188, %v1189
      %v1191 = vshll.u32 2131351028, %v1182
      %v1192 = vshrl.u32 2102212464, %v1183
      %v1193 = vor.u32 %v1191, %v1192
      %v1194 = vshll.u32 2102212464, %v1182
      %v1195 = vshrl.u32 920167782, %v1183
      %v1196 = vor.u32 %v1194, %v1195
      %v1197 = vshll.u32 920167782, %v1182
      %v1198 = vshrl.u32 1326507024, %v1183
      %v1199 = vor.u32 %v1197, %v1198
      %vm1200 = vcmp.lt.s32.totalorder %v1181, 1
      %vm1201 = vcmp.lt.s32.totalorder %v1181, 2
      %vm1202 = vcmp.lt.s32.totalorder %v1181, 3
      %vm1203 = vcmp.lt.s32.totalorder %v1181, 4
      %v1204 = vsel %vm1200, %v1184, %v1187
      %v1205 = vsel %vm1203, %v1193, 2102212464
      %v1206 = vsel %vm1202, %v1190, %v1205
      %v1207 = vsel %vm1201, %v1204, %v1206
      %v1208 = vsel %vm1200, %v1187, %v1190
      %v1209 = vsel %vm1203, %v1196, 920167782
      %v1210 = vsel %vm1202, %v1193, %v1209
      %v1211 = vsel %vm1201, %v1208, %v1210
      %v1212 = vsel %vm1200, %v1190, %v1193
      %v1213 = vsel %vm1203, %v1199, 1326507024
      %v1214 = vsel %vm1202, %v1196, %v1213
      %v1215 = vsel %vm1201, %v1212, %v1214
      %v1216 = vshll.u32 %v1176, 8
      %v1217 = vmul.u32.u64.compose %v1216, %v1215
      %v1218 = vextract.low.u32 %v1217
      %v1219 = vextract.high.u32 %v1217
      %v1220 = vmul.u32.u64.compose %v1216, %v1211
      %v1221 = vextract.low.u32 %v1220
      %v1222 = vextract.high.u32 %v1220
      %v1223 = vmul.u32 %v1216, %v1207
      %v1224 = vadd.s32 %v1219, %v1221
      %vm1225 = vc.u32 %v1219, %v1221
      %v1226 = vadd.s32 %v1222, 1
      %v1227 = vsel %vm1225, %v1226, %v1222
      %v1228 = vadd.s32 %v1223, %v1227
      %v1229 = vadd.s32 %v1228, 536870912
      %v1230 = vshrl.u32 %v1229, 30
      %v1231 = vshll.u32 %v1230, 30
      %v1232 = vsub.s32 %v1228, %v1231
      %vm1233 = vcmp.lt.s32.totalorder %v1232, 0
      %v1234 = vsub.s32 0, %v1232
      %v1235 = vsel %vm1233, %v1234, %v1232
      %v1236 = vclz %v1235
      %v1237 = vsub.s32 %v1236, 2
      %vm1238 = vcmp.gt.s32.totalorder 0, %v1237
      %v1239 = vsel %vm1238, 0, %v1237
      %v1240 = vsub.s32 32, %v1239
      %v1241 = vshll.u32 %v1232, %v1239
      %v1242 = vshrl.u32 %v1224, %v1240
      %v1243 = vor.u32 %v1241, %v1242
      %v1244 = vsub.s32 4294967266, %v1239
      %v1245 = vadd.s32 %v1244, 127
      %v1246 = vshll.u32 %v1245, 23
      %v1247 = vor.u32 4788187, %v1246
      %v1248 = vand.u32 2147483647, %v1247
      %v1250 = vcvt.s32.f32 %v1243
      %v1251 = vmul.f32 %v1250, %v1248
      %v1252 = vxor.u32 %v1251, 2147483648
      %v1253 = vsel %vm1170, %v1252, %v1251
      %v1254 = vsub.s32 4, %v1230
      %v1255 = vsel %vm1170, %v1254, %v1230
      %v1256 = vsel %vm1169, %v515, %v1253
      %v1257 = vsel %vm1169, 0, %v1255
      %v1258 = vcosq.f32.pop %v1256
      %v1259 = vsinq.f32.pop %v1256
      %vm1260 = vweird.f32 %v515
      %v1261 = vadd.s32 %v1257, 3
      %v1262 = vand.u32 %v1261, 3
      %vm1263 = vcmp.lt.s32.totalorder %v1262, 2
      %vm1264 = vcmp.eq.s32.totalorder %v1262, 0
      %v1265 = vxor.u32 %v1259, 2147483648
      %v1266 = vsel %vm1264, %v1258, %v1265
      %vm1267 = vcmp.eq.s32.totalorder %v1262, 2
      %v1268 = vxor.u32 %v1258, 2147483648
      %v1269 = vsel %vm1267, %v1268, %v1259
      %v1270 = vsel %vm1263, %v1266, %v1269
      %v1271 = vsel %vm1260, nan, %v1270
      %v1272 = vand.u32 2147483647, %v520
      %vm1273 = vcmp.le.f32.partialorder %v1272, 0.7853982
      %vm1274 = vcmp.lt.s32.totalorder %v520, 0
      %v1275 = vand.u32 %v520, 2139095040
      %v1276 = vshrl.u32 %v1275, 23
      %v1277 = vsub.s32 %v1276, 127
      %v1278 = vand.u32 2147483647, %v520
      %v1279 = vand.u32 %v1278, 8388607
      %v1280 = vor.u32 %v1279, 8388608
      %v1281 = vsub.s32 0, %v1280
      %v1282 = vadd.s32 %v1277, 1
      %vm1283 = vcmp.gt.s32.totalorder %v1282, 0
      %v1284 = vsel %vm1283, %v1282, 0
      %v1285 = vshrl.u32 %v1284, 5
      %v1286 = vand.u32 %v1284, 31
      %v1287 = vsub.s32 32, %v1286
      %v1288 = vshrl.u32 683565275, %v1287
      %v1289 = vshll.u32 683565275, %v1286
      %v1290 = vshrl.u32 2475754826, %v1287
      %v1291 = vor.u32 %v1289, %v1290
      %v1292 = vshll.u32 2475754826, %v1286
      %v1293 = vshrl.u32 2131351028, %v1287
      %v1294 = vor.u32 %v1292, %v1293
      %v1295 = vshll.u32 2131351028, %v1286
      %v1296 = vshrl.u32 2102212464, %v1287
      %v1297 = vor.u32 %v1295, %v1296
      %v1298 = vshll.u32 2102212464, %v1286
      %v1299 = vshrl.u32 920167782, %v1287
      %v1300 = vor.u32 %v1298, %v1299
      %v1301 = vshll.u32 920167782, %v1286
      %v1302 = vshrl.u32 1326507024, %v1287
      %v1303 = vor.u32 %v1301, %v1302
      %vm1304 = vcmp.lt.s32.totalorder %v1285, 1
      %vm1305 = vcmp.lt.s32.totalorder %v1285, 2
      %vm1306 = vcmp.lt.s32.totalorder %v1285, 3
      %vm1307 = vcmp.lt.s32.totalorder %v1285, 4
      %v1308 = vsel %vm1304, %v1288, %v1291
      %v1309 = vsel %vm1307, %v1297, 2102212464
      %v1310 = vsel %vm1306, %v1294, %v1309
      %v1311 = vsel %vm1305, %v1308, %v1310
      %v1312 = vsel %vm1304, %v1291, %v1294
      %v1313 = vsel %vm1307, %v1300, 920167782
      %v1314 = vsel %vm1306, %v1297, %v1313
      %v1315 = vsel %vm1305, %v1312, %v1314
      %v1316 = vsel %vm1304, %v1294, %v1297
      %v1317 = vsel %vm1307, %v1303, 1326507024
      %v1318 = vsel %vm1306, %v1300, %v1317
      %v1319 = vsel %vm1305, %v1316, %v1318
      %v1320 = vshll.u32 %v1280, 8
      %v1321 = vmul.u32.u64.compose %v1320, %v1319
      %v1322 = vextract.low.u32 %v1321
      %v1323 = vextract.high.u32 %v1321
      %v1324 = vmul.u32.u64.compose %v1320, %v1315
      %v1325 = vextract.low.u32 %v1324
      %v1326 = vextract.high.u32 %v1324
      %v1327 = vmul.u32 %v1320, %v1311
      %v1328 = vadd.s32 %v1323, %v1325
      %vm1329 = vc.u32 %v1323, %v1325
      %v1330 = vadd.s32 %v1326, 1
      %v1331 = vsel %vm1329, %v1330, %v1326
      %v1332 = vadd.s32 %v1327, %v1331
      %v1333 = vadd.s32 %v1332, 536870912
      %v1334 = vshrl.u32 %v1333, 30
      %v1335 = vshll.u32 %v1334, 30
      %v1336 = vsub.s32 %v1332, %v1335
      %vm1337 = vcmp.lt.s32.totalorder %v1336, 0
      %v1338 = vsub.s32 0, %v1336
      %v1339 = vsel %vm1337, %v1338, %v1336
      %v1340 = vclz %v1339
      %v1341 = vsub.s32 %v1340, 2
      %vm1342 = vcmp.gt.s32.totalorder 0, %v1341
      %v1343 = vsel %vm1342, 0, %v1341
      %v1344 = vsub.s32 32, %v1343
      %v1345 = vshll.u32 %v1336, %v1343
      %v1346 = vshrl.u32 %v1328, %v1344
      %v1347 = vor.u32 %v1345, %v1346
      %v1348 = vsub.s32 4294967266, %v1343
      %v1349 = vadd.s32 %v1348, 127
      %v1350 = vshll.u32 %v1349, 23
      %v1351 = vor.u32 4788187, %v1350
      %v1352 = vand.u32 2147483647, %v1351
      %v1354 = vcvt.s32.f32 %v1347
      %v1355 = vmul.f32 %v1354, %v1352
      %v1356 = vxor.u32 %v1355, 2147483648
      %v1357 = vsel %vm1274, %v1356, %v1355
      %v1358 = vsub.s32 4, %v1334
      %v1359 = vsel %vm1274, %v1358, %v1334
      %v1360 = vsel %vm1273, %v520, %v1357
      %v1361 = vsel %vm1273, 0, %v1359
      %v1362 = vcosq.f32.pop %v1360
      %v1363 = vsinq.f32.pop %v1360
      %vm1364 = vweird.f32 %v520
      %v1365 = vadd.s32 %v1361, 3
      %v1366 = vand.u32 %v1365, 3
      %vm1367 = vcmp.lt.s32.totalorder %v1366, 2
      %vm1368 = vcmp.eq.s32.totalorder %v1366, 0
      %v1369 = vxor.u32 %v1363, 2147483648
      %v1370 = vsel %vm1368, %v1362, %v1369
      %vm1371 = vcmp.eq.s32.totalorder %v1366, 2
      %v1372 = vxor.u32 %v1362, 2147483648
      %v1373 = vsel %vm1371, %v1372, %v1363
      %v1374 = vsel %vm1367, %v1370, %v1373
      %v1375 = vsel %vm1364, nan, %v1374
      %v1376 = vand.u32 2147483647, %v525
      %vm1377 = vcmp.le.f32.partialorder %v1376, 0.7853982
      %vm1378 = vcmp.lt.s32.totalorder %v525, 0
      %v1379 = vand.u32 %v525, 2139095040
      %v1380 = vshrl.u32 %v1379, 23
      %v1381 = vsub.s32 %v1380, 127
      %v1382 = vand.u32 2147483647, %v525
      %v1383 = vand.u32 %v1382, 8388607
      %v1384 = vor.u32 %v1383, 8388608
      %v1385 = vsub.s32 0, %v1384
      %v1386 = vadd.s32 %v1381, 1
      %vm1387 = vcmp.gt.s32.totalorder %v1386, 0
      %v1388 = vsel %vm1387, %v1386, 0
      %v1389 = vshrl.u32 %v1388, 5
      %v1390 = vand.u32 %v1388, 31
      %v1391 = vsub.s32 32, %v1390
      %v1392 = vshrl.u32 683565275, %v1391
      %v1393 = vshll.u32 683565275, %v1390
      %v1394 = vshrl.u32 2475754826, %v1391
      %v1395 = vor.u32 %v1393, %v1394
      %v1396 = vshll.u32 2475754826, %v1390
      %v1397 = vshrl.u32 2131351028, %v1391
      %v1398 = vor.u32 %v1396, %v1397
      %v1399 = vshll.u32 2131351028, %v1390
      %v1400 = vshrl.u32 2102212464, %v1391
      %v1401 = vor.u32 %v1399, %v1400
      %v1402 = vshll.u32 2102212464, %v1390
      %v1403 = vshrl.u32 920167782, %v1391
      %v1404 = vor.u32 %v1402, %v1403
      %v1405 = vshll.u32 920167782, %v1390
      %v1406 = vshrl.u32 1326507024, %v1391
      %v1407 = vor.u32 %v1405, %v1406
      %vm1408 = vcmp.lt.s32.totalorder %v1389, 1
      %vm1409 = vcmp.lt.s32.totalorder %v1389, 2
      %vm1410 = vcmp.lt.s32.totalorder %v1389, 3
      %vm1411 = vcmp.lt.s32.totalorder %v1389, 4
      %v1412 = vsel %vm1408, %v1392, %v1395
      %v1413 = vsel %vm1411, %v1401, 2102212464
      %v1414 = vsel %vm1410, %v1398, %v1413
      %v1415 = vsel %vm1409, %v1412, %v1414
      %v1416 = vsel %vm1408, %v1395, %v1398
      %v1417 = vsel %vm1411, %v1404, 920167782
      %v1418 = vsel %vm1410, %v1401, %v1417
      %v1419 = vsel %vm1409, %v1416, %v1418
      %v1420 = vsel %vm1408, %v1398, %v1401
      %v1421 = vsel %vm1411, %v1407, 1326507024
      %v1422 = vsel %vm1410, %v1404, %v1421
      %v1423 = vsel %vm1409, %v1420, %v1422
      %v1424 = vshll.u32 %v1384, 8
      %v1425 = vmul.u32.u64.compose %v1424, %v1423
      %v1426 = vextract.low.u32 %v1425
      %v1427 = vextract.high.u32 %v1425
      %v1428 = vmul.u32.u64.compose %v1424, %v1419
      %v1429 = vextract.low.u32 %v1428
      %v1430 = vextract.high.u32 %v1428
      %v1431 = vmul.u32 %v1424, %v1415
      %v1432 = vadd.s32 %v1427, %v1429
      %vm1433 = vc.u32 %v1427, %v1429
      %v1434 = vadd.s32 %v1430, 1
      %v1435 = vsel %vm1433, %v1434, %v1430
      %v1436 = vadd.s32 %v1431, %v1435
      %v1437 = vadd.s32 %v1436, 536870912
      %v1438 = vshrl.u32 %v1437, 30
      %v1439 = vshll.u32 %v1438, 30
      %v1440 = vsub.s32 %v1436, %v1439
      %vm1441 = vcmp.lt.s32.totalorder %v1440, 0
      %v1442 = vsub.s32 0, %v1440
      %v1443 = vsel %vm1441, %v1442, %v1440
      %v1444 = vclz %v1443
      %v1445 = vsub.s32 %v1444, 2
      %vm1446 = vcmp.gt.s32.totalorder 0, %v1445
      %v1447 = vsel %vm1446, 0, %v1445
      %v1448 = vsub.s32 32, %v1447
      %v1449 = vshll.u32 %v1440, %v1447
      %v1450 = vshrl.u32 %v1432, %v1448
      %v1451 = vor.u32 %v1449, %v1450
      %v1452 = vsub.s32 4294967266, %v1447
      %v1453 = vadd.s32 %v1452, 127
      %v1454 = vshll.u32 %v1453, 23
      %v1455 = vor.u32 4788187, %v1454
      %v1456 = vand.u32 2147483647, %v1455
      %v1458 = vcvt.s32.f32 %v1451
      %v1459 = vmul.f32 %v1458, %v1456
      %v1460 = vxor.u32 %v1459, 2147483648
      %v1461 = vsel %vm1378, %v1460, %v1459
      %v1462 = vsub.s32 4, %v1438
      %v1463 = vsel %vm1378, %v1462, %v1438
      %v1464 = vsel %vm1377, %v525, %v1461
      %v1465 = vsel %vm1377, 0, %v1463
      %v1466 = vcosq.f32.pop %v1464
      %v1467 = vsinq.f32.pop %v1464
      %vm1468 = vweird.f32 %v525
      %v1469 = vadd.s32 %v1465, 3
      %v1470 = vand.u32 %v1469, 3
      %vm1471 = vcmp.lt.s32.totalorder %v1470, 2
      %vm1472 = vcmp.eq.s32.totalorder %v1470, 0
      %v1473 = vxor.u32 %v1467, 2147483648
      %v1474 = vsel %vm1472, %v1466, %v1473
      %vm1475 = vcmp.eq.s32.totalorder %v1470, 2
      %v1476 = vxor.u32 %v1466, 2147483648
      %v1477 = vsel %vm1475, %v1476, %v1467
      %v1478 = vsel %vm1471, %v1474, %v1477
      %v1479 = vsel %vm1468, nan, %v1478
      %v1480 = vand.u32 2147483647, %v530
      %vm1481 = vcmp.le.f32.partialorder %v1480, 0.7853982
      %vm1482 = vcmp.lt.s32.totalorder %v530, 0
      %v1483 = vand.u32 %v530, 2139095040
      %v1484 = vshrl.u32 %v1483, 23
      %v1485 = vsub.s32 %v1484, 127
      %v1486 = vand.u32 2147483647, %v530
      %v1487 = vand.u32 %v1486, 8388607
      %v1488 = vor.u32 %v1487, 8388608
      %v1489 = vsub.s32 0, %v1488
      %v1490 = vadd.s32 %v1485, 1
      %vm1491 = vcmp.gt.s32.totalorder %v1490, 0
      %v1492 = vsel %vm1491, %v1490, 0
      %v1493 = vshrl.u32 %v1492, 5
      %v1494 = vand.u32 %v1492, 31
      %v1495 = vsub.s32 32, %v1494
      %v1496 = vshrl.u32 683565275, %v1495
      %v1497 = vshll.u32 683565275, %v1494
      %v1498 = vshrl.u32 2475754826, %v1495
      %v1499 = vor.u32 %v1497, %v1498
      %v1500 = vshll.u32 2475754826, %v1494
      %v1501 = vshrl.u32 2131351028, %v1495
      %v1502 = vor.u32 %v1500, %v1501
      %v1503 = vshll.u32 2131351028, %v1494
      %v1504 = vshrl.u32 2102212464, %v1495
      %v1505 = vor.u32 %v1503, %v1504
      %v1506 = vshll.u32 2102212464, %v1494
      %v1507 = vshrl.u32 920167782, %v1495
      %v1508 = vor.u32 %v1506, %v1507
      %v1509 = vshll.u32 920167782, %v1494
      %v1510 = vshrl.u32 1326507024, %v1495
      %v1511 = vor.u32 %v1509, %v1510
      %vm1512 = vcmp.lt.s32.totalorder %v1493, 1
      %vm1513 = vcmp.lt.s32.totalorder %v1493, 2
      %vm1514 = vcmp.lt.s32.totalorder %v1493, 3
      %vm1515 = vcmp.lt.s32.totalorder %v1493, 4
      %v1516 = vsel %vm1512, %v1496, %v1499
      %v1517 = vsel %vm1515, %v1505, 2102212464
      %v1518 = vsel %vm1514, %v1502, %v1517
      %v1519 = vsel %vm1513, %v1516, %v1518
      %v1520 = vsel %vm1512, %v1499, %v1502
      %v1521 = vsel %vm1515, %v1508, 920167782
      %v1522 = vsel %vm1514, %v1505, %v1521
      %v1523 = vsel %vm1513, %v1520, %v1522
      %v1524 = vsel %vm1512, %v1502, %v1505
      %v1525 = vsel %vm1515, %v1511, 1326507024
      %v1526 = vsel %vm1514, %v1508, %v1525
      %v1527 = vsel %vm1513, %v1524, %v1526
      %v1528 = vshll.u32 %v1488, 8
      %v1529 = vmul.u32.u64.compose %v1528, %v1527
      %v1530 = vextract.low.u32 %v1529
      %v1531 = vextract.high.u32 %v1529
      %v1532 = vmul.u32.u64.compose %v1528, %v1523
      %v1533 = vextract.low.u32 %v1532
      %v1534 = vextract.high.u32 %v1532
      %v1535 = vmul.u32 %v1528, %v1519
      %v1536 = vadd.s32 %v1531, %v1533
      %vm1537 = vc.u32 %v1531, %v1533
      %v1538 = vadd.s32 %v1534, 1
      %v1539 = vsel %vm1537, %v1538, %v1534
      %v1540 = vadd.s32 %v1535, %v1539
      %v1541 = vadd.s32 %v1540, 536870912
      %v1542 = vshrl.u32 %v1541, 30
      %v1543 = vshll.u32 %v1542, 30
      %v1544 = vsub.s32 %v1540, %v1543
      %vm1545 = vcmp.lt.s32.totalorder %v1544, 0
      %v1546 = vsub.s32 0, %v1544
      %v1547 = vsel %vm1545, %v1546, %v1544
      %v1548 = vclz %v1547
      %v1549 = vsub.s32 %v1548, 2
      %vm1550 = vcmp.gt.s32.totalorder 0, %v1549
      %v1551 = vsel %vm1550, 0, %v1549
      %v1552 = vsub.s32 32, %v1551
      %v1553 = vshll.u32 %v1544, %v1551
      %v1554 = vshrl.u32 %v1536, %v1552
      %v1555 = vor.u32 %v1553, %v1554
      %v1556 = vsub.s32 4294967266, %v1551
      %v1557 = vadd.s32 %v1556, 127
      %v1558 = vshll.u32 %v1557, 23
      %v1559 = vor.u32 4788187, %v1558
      %v1560 = vand.u32 2147483647, %v1559
      %v1562 = vcvt.s32.f32 %v1555
      %v1563 = vmul.f32 %v1562, %v1560
      %v1564 = vxor.u32 %v1563, 2147483648
      %v1565 = vsel %vm1482, %v1564, %v1563
      %v1566 = vsub.s32 4, %v1542
      %v1567 = vsel %vm1482, %v1566, %v1542
      %v1568 = vsel %vm1481, %v530, %v1565
      %v1569 = vsel %vm1481, 0, %v1567
      %v1570 = vcosq.f32.pop %v1568
      %v1571 = vsinq.f32.pop %v1568
      %vm1572 = vweird.f32 %v530
      %v1573 = vadd.s32 %v1569, 3
      %v1574 = vand.u32 %v1573, 3
      %vm1575 = vcmp.lt.s32.totalorder %v1574, 2
      %vm1576 = vcmp.eq.s32.totalorder %v1574, 0
      %v1577 = vxor.u32 %v1571, 2147483648
      %v1578 = vsel %vm1576, %v1570, %v1577
      %vm1579 = vcmp.eq.s32.totalorder %v1574, 2
      %v1580 = vxor.u32 %v1570, 2147483648
      %v1581 = vsel %vm1579, %v1580, %v1571
      %v1582 = vsel %vm1575, %v1578, %v1581
      %v1583 = vsel %vm1572, nan, %v1582
      %v1584 = vand.u32 2147483647, %v535
      %vm1585 = vcmp.le.f32.partialorder %v1584, 0.7853982
      %vm1586 = vcmp.lt.s32.totalorder %v535, 0
      %v1587 = vand.u32 %v535, 2139095040
      %v1588 = vshrl.u32 %v1587, 23
      %v1589 = vsub.s32 %v1588, 127
      %v1590 = vand.u32 2147483647, %v535
      %v1591 = vand.u32 %v1590, 8388607
      %v1592 = vor.u32 %v1591, 8388608
      %v1593 = vsub.s32 0, %v1592
      %v1594 = vadd.s32 %v1589, 1
      %vm1595 = vcmp.gt.s32.totalorder %v1594, 0
      %v1596 = vsel %vm1595, %v1594, 0
      %v1597 = vshrl.u32 %v1596, 5
      %v1598 = vand.u32 %v1596, 31
      %v1599 = vsub.s32 32, %v1598
      %v1600 = vshrl.u32 683565275, %v1599
      %v1601 = vshll.u32 683565275, %v1598
      %v1602 = vshrl.u32 2475754826, %v1599
      %v1603 = vor.u32 %v1601, %v1602
      %v1604 = vshll.u32 2475754826, %v1598
      %v1605 = vshrl.u32 2131351028, %v1599
      %v1606 = vor.u32 %v1604, %v1605
      %v1607 = vshll.u32 2131351028, %v1598
      %v1608 = vshrl.u32 2102212464, %v1599
      %v1609 = vor.u32 %v1607, %v1608
      %v1610 = vshll.u32 2102212464, %v1598
      %v1611 = vshrl.u32 920167782, %v1599
      %v1612 = vor.u32 %v1610, %v1611
      %v1613 = vshll.u32 920167782, %v1598
      %v1614 = vshrl.u32 1326507024, %v1599
      %v1615 = vor.u32 %v1613, %v1614
      %vm1616 = vcmp.lt.s32.totalorder %v1597, 1
      %vm1617 = vcmp.lt.s32.totalorder %v1597, 2
      %vm1618 = vcmp.lt.s32.totalorder %v1597, 3
      %vm1619 = vcmp.lt.s32.totalorder %v1597, 4
      %v1620 = vsel %vm1616, %v1600, %v1603
      %v1621 = vsel %vm1619, %v1609, 2102212464
      %v1622 = vsel %vm1618, %v1606, %v1621
      %v1623 = vsel %vm1617, %v1620, %v1622
      %v1624 = vsel %vm1616, %v1603, %v1606
      %v1625 = vsel %vm1619, %v1612, 920167782
      %v1626 = vsel %vm1618, %v1609, %v1625
      %v1627 = vsel %vm1617, %v1624, %v1626
      %v1628 = vsel %vm1616, %v1606, %v1609
      %v1629 = vsel %vm1619, %v1615, 1326507024
      %v1630 = vsel %vm1618, %v1612, %v1629
      %v1631 = vsel %vm1617, %v1628, %v1630
      %v1632 = vshll.u32 %v1592, 8
      %v1633 = vmul.u32.u64.compose %v1632, %v1631
      %v1634 = vextract.low.u32 %v1633
      %v1635 = vextract.high.u32 %v1633
      %v1636 = vmul.u32.u64.compose %v1632, %v1627
      %v1637 = vextract.low.u32 %v1636
      %v1638 = vextract.high.u32 %v1636
      %v1639 = vmul.u32 %v1632, %v1623
      %v1640 = vadd.s32 %v1635, %v1637
      %vm1641 = vc.u32 %v1635, %v1637
      %v1642 = vadd.s32 %v1638, 1
      %v1643 = vsel %vm1641, %v1642, %v1638
      %v1644 = vadd.s32 %v1639, %v1643
      %v1645 = vadd.s32 %v1644, 536870912
      %v1646 = vshrl.u32 %v1645, 30
      %v1647 = vshll.u32 %v1646, 30
      %v1648 = vsub.s32 %v1644, %v1647
      %vm1649 = vcmp.lt.s32.totalorder %v1648, 0
      %v1650 = vsub.s32 0, %v1648
      %v1651 = vsel %vm1649, %v1650, %v1648
      %v1652 = vclz %v1651
      %v1653 = vsub.s32 %v1652, 2
      %vm1654 = vcmp.gt.s32.totalorder 0, %v1653
      %v1655 = vsel %vm1654, 0, %v1653
      %v1656 = vsub.s32 32, %v1655
      %v1657 = vshll.u32 %v1648, %v1655
      %v1658 = vshrl.u32 %v1640, %v1656
      %v1659 = vor.u32 %v1657, %v1658
      %v1660 = vsub.s32 4294967266, %v1655
      %v1661 = vadd.s32 %v1660, 127
      %v1662 = vshll.u32 %v1661, 23
      %v1663 = vor.u32 4788187, %v1662
      %v1664 = vand.u32 2147483647, %v1663
      %v1666 = vcvt.s32.f32 %v1659
      %v1667 = vmul.f32 %v1666, %v1664
      %v1668 = vxor.u32 %v1667, 2147483648
      %v1669 = vsel %vm1586, %v1668, %v1667
      %v1670 = vsub.s32 4, %v1646
      %v1671 = vsel %vm1586, %v1670, %v1646
      %v1672 = vsel %vm1585, %v535, %v1669
      %v1673 = vsel %vm1585, 0, %v1671
      %v1674 = vcosq.f32.pop %v1672
      %v1675 = vsinq.f32.pop %v1672
      %vm1676 = vweird.f32 %v535
      %v1677 = vadd.s32 %v1673, 3
      %v1678 = vand.u32 %v1677, 3
      %vm1679 = vcmp.lt.s32.totalorder %v1678, 2
      %vm1680 = vcmp.eq.s32.totalorder %v1678, 0
      %v1681 = vxor.u32 %v1675, 2147483648
      %v1682 = vsel %vm1680, %v1674, %v1681
      %vm1683 = vcmp.eq.s32.totalorder %v1678, 2
      %v1684 = vxor.u32 %v1674, 2147483648
      %v1685 = vsel %vm1683, %v1684, %v1675
      %v1686 = vsel %vm1679, %v1682, %v1685
      %v1687 = vsel %vm1676, nan, %v1686
      %v1688 = vand.u32 2147483647, %v540
      %vm1689 = vcmp.le.f32.partialorder %v1688, 0.7853982
      %vm1690 = vcmp.lt.s32.totalorder %v540, 0
      %v1691 = vand.u32 %v540, 2139095040
      %v1692 = vshrl.u32 %v1691, 23
      %v1693 = vsub.s32 %v1692, 127
      %v1694 = vand.u32 2147483647, %v540
      %v1695 = vand.u32 %v1694, 8388607
      %v1696 = vor.u32 %v1695, 8388608
      %v1697 = vsub.s32 0, %v1696
      %v1698 = vadd.s32 %v1693, 1
      %vm1699 = vcmp.gt.s32.totalorder %v1698, 0
      %v1700 = vsel %vm1699, %v1698, 0
      %v1701 = vshrl.u32 %v1700, 5
      %v1702 = vand.u32 %v1700, 31
      %v1703 = vsub.s32 32, %v1702
      %v1704 = vshrl.u32 683565275, %v1703
      %v1705 = vshll.u32 683565275, %v1702
      %v1706 = vshrl.u32 2475754826, %v1703
      %v1707 = vor.u32 %v1705, %v1706
      %v1708 = vshll.u32 2475754826, %v1702
      %v1709 = vshrl.u32 2131351028, %v1703
      %v1710 = vor.u32 %v1708, %v1709
      %v1711 = vshll.u32 2131351028, %v1702
      %v1712 = vshrl.u32 2102212464, %v1703
      %v1713 = vor.u32 %v1711, %v1712
      %v1714 = vshll.u32 2102212464, %v1702
      %v1715 = vshrl.u32 920167782, %v1703
      %v1716 = vor.u32 %v1714, %v1715
      %v1717 = vshll.u32 920167782, %v1702
      %v1718 = vshrl.u32 1326507024, %v1703
      %v1719 = vor.u32 %v1717, %v1718
      %vm1720 = vcmp.lt.s32.totalorder %v1701, 1
      %vm1721 = vcmp.lt.s32.totalorder %v1701, 2
      %vm1722 = vcmp.lt.s32.totalorder %v1701, 3
      %vm1723 = vcmp.lt.s32.totalorder %v1701, 4
      %v1724 = vsel %vm1720, %v1704, %v1707
      %v1725 = vsel %vm1723, %v1713, 2102212464
      %v1726 = vsel %vm1722, %v1710, %v1725
      %v1727 = vsel %vm1721, %v1724, %v1726
      %v1728 = vsel %vm1720, %v1707, %v1710
      %v1729 = vsel %vm1723, %v1716, 920167782
      %v1730 = vsel %vm1722, %v1713, %v1729
      %v1731 = vsel %vm1721, %v1728, %v1730
      %v1732 = vsel %vm1720, %v1710, %v1713
      %v1733 = vsel %vm1723, %v1719, 1326507024
      %v1734 = vsel %vm1722, %v1716, %v1733
      %v1735 = vsel %vm1721, %v1732, %v1734
      %v1736 = vshll.u32 %v1696, 8
      %v1737 = vmul.u32.u64.compose %v1736, %v1735
      %v1738 = vextract.low.u32 %v1737
      %v1739 = vextract.high.u32 %v1737
      %v1740 = vmul.u32.u64.compose %v1736, %v1731
      %v1741 = vextract.low.u32 %v1740
      %v1742 = vextract.high.u32 %v1740
      %v1743 = vmul.u32 %v1736, %v1727
      %v1744 = vadd.s32 %v1739, %v1741
      %vm1745 = vc.u32 %v1739, %v1741
      %v1746 = vadd.s32 %v1742, 1
      %v1747 = vsel %vm1745, %v1746, %v1742
      %v1748 = vadd.s32 %v1743, %v1747
      %v1749 = vadd.s32 %v1748, 536870912
      %v1750 = vshrl.u32 %v1749, 30
      %v1751 = vshll.u32 %v1750, 30
      %v1752 = vsub.s32 %v1748, %v1751
      %vm1753 = vcmp.lt.s32.totalorder %v1752, 0
      %v1754 = vsub.s32 0, %v1752
      %v1755 = vsel %vm1753, %v1754, %v1752
      %v1756 = vclz %v1755
      %v1757 = vsub.s32 %v1756, 2
      %vm1758 = vcmp.gt.s32.totalorder 0, %v1757
      %v1759 = vsel %vm1758, 0, %v1757
      %v1760 = vsub.s32 32, %v1759
      %v1761 = vshll.u32 %v1752, %v1759
      %v1762 = vshrl.u32 %v1744, %v1760
      %v1763 = vor.u32 %v1761, %v1762
      %v1764 = vsub.s32 4294967266, %v1759
      %v1765 = vadd.s32 %v1764, 127
      %v1766 = vshll.u32 %v1765, 23
      %v1767 = vor.u32 4788187, %v1766
      %v1768 = vand.u32 2147483647, %v1767
      %v1770 = vcvt.s32.f32 %v1763
      %v1771 = vmul.f32 %v1770, %v1768
      %v1772 = vxor.u32 %v1771, 2147483648
      %v1773 = vsel %vm1690, %v1772, %v1771
      %v1774 = vsub.s32 4, %v1750
      %v1775 = vsel %vm1690, %v1774, %v1750
      %v1776 = vsel %vm1689, %v540, %v1773
      %v1777 = vsel %vm1689, 0, %v1775
      %v1778 = vcosq.f32.pop %v1776
      %v1779 = vsinq.f32.pop %v1776
      %vm1780 = vweird.f32 %v540
      %v1781 = vadd.s32 %v1777, 3
      %v1782 = vand.u32 %v1781, 3
      %vm1783 = vcmp.lt.s32.totalorder %v1782, 2
      %vm1784 = vcmp.eq.s32.totalorder %v1782, 0
      %v1785 = vxor.u32 %v1779, 2147483648
      %v1786 = vsel %vm1784, %v1778, %v1785
      %vm1787 = vcmp.eq.s32.totalorder %v1782, 2
      %v1788 = vxor.u32 %v1778, 2147483648
      %v1789 = vsel %vm1787, %v1788, %v1779
      %v1790 = vsel %vm1783, %v1786, %v1789
      %v1791 = vsel %vm1780, nan, %v1790
      %v1792 = vand.u32 2147483647, %v545
      %vm1793 = vcmp.le.f32.partialorder %v1792, 0.7853982
      %vm1794 = vcmp.lt.s32.totalorder %v545, 0
      %v1795 = vand.u32 %v545, 2139095040
      %v1796 = vshrl.u32 %v1795, 23
      %v1797 = vsub.s32 %v1796, 127
      %v1798 = vand.u32 2147483647, %v545
      %v1799 = vand.u32 %v1798, 8388607
      %v1800 = vor.u32 %v1799, 8388608
      %v1801 = vsub.s32 0, %v1800
      %v1802 = vadd.s32 %v1797, 1
      %vm1803 = vcmp.gt.s32.totalorder %v1802, 0
      %v1804 = vsel %vm1803, %v1802, 0
      %v1805 = vshrl.u32 %v1804, 5
      %v1806 = vand.u32 %v1804, 31
      %v1807 = vsub.s32 32, %v1806
      %v1808 = vshrl.u32 683565275, %v1807
      %v1809 = vshll.u32 683565275, %v1806
      %v1810 = vshrl.u32 2475754826, %v1807
      %v1811 = vor.u32 %v1809, %v1810
      %v1812 = vshll.u32 2475754826, %v1806
      %v1813 = vshrl.u32 2131351028, %v1807
      %v1814 = vor.u32 %v1812, %v1813
      %v1815 = vshll.u32 2131351028, %v1806
      %v1816 = vshrl.u32 2102212464, %v1807
      %v1817 = vor.u32 %v1815, %v1816
      %v1818 = vshll.u32 2102212464, %v1806
      %v1819 = vshrl.u32 920167782, %v1807
      %v1820 = vor.u32 %v1818, %v1819
      %v1821 = vshll.u32 920167782, %v1806
      %v1822 = vshrl.u32 1326507024, %v1807
      %v1823 = vor.u32 %v1821, %v1822
      %vm1824 = vcmp.lt.s32.totalorder %v1805, 1
      %vm1825 = vcmp.lt.s32.totalorder %v1805, 2
      %vm1826 = vcmp.lt.s32.totalorder %v1805, 3
      %vm1827 = vcmp.lt.s32.totalorder %v1805, 4
      %v1828 = vsel %vm1824, %v1808, %v1811
      %v1829 = vsel %vm1827, %v1817, 2102212464
      %v1830 = vsel %vm1826, %v1814, %v1829
      %v1831 = vsel %vm1825, %v1828, %v1830
      %v1832 = vsel %vm1824, %v1811, %v1814
      %v1833 = vsel %vm1827, %v1820, 920167782
      %v1834 = vsel %vm1826, %v1817, %v1833
      %v1835 = vsel %vm1825, %v1832, %v1834
      %v1836 = vsel %vm1824, %v1814, %v1817
      %v1837 = vsel %vm1827, %v1823, 1326507024
      %v1838 = vsel %vm1826, %v1820, %v1837
      %v1839 = vsel %vm1825, %v1836, %v1838
      %v1840 = vshll.u32 %v1800, 8
      %v1841 = vmul.u32.u64.compose %v1840, %v1839
      %v1842 = vextract.low.u32 %v1841
      %v1843 = vextract.high.u32 %v1841
      %v1844 = vmul.u32.u64.compose %v1840, %v1835
      %v1845 = vextract.low.u32 %v1844
      %v1846 = vextract.high.u32 %v1844
      %v1847 = vmul.u32 %v1840, %v1831
      %v1848 = vadd.s32 %v1843, %v1845
      %vm1849 = vc.u32 %v1843, %v1845
      %v1850 = vadd.s32 %v1846, 1
      %v1851 = vsel %vm1849, %v1850, %v1846
      %v1852 = vadd.s32 %v1847, %v1851
      %v1853 = vadd.s32 %v1852, 536870912
      %v1854 = vshrl.u32 %v1853, 30
      %v1855 = vshll.u32 %v1854, 30
      %v1856 = vsub.s32 %v1852, %v1855
      %vm1857 = vcmp.lt.s32.totalorder %v1856, 0
      %v1858 = vsub.s32 0, %v1856
      %v1859 = vsel %vm1857, %v1858, %v1856
      %v1860 = vclz %v1859
      %v1861 = vsub.s32 %v1860, 2
      %vm1862 = vcmp.gt.s32.totalorder 0, %v1861
      %v1863 = vsel %vm1862, 0, %v1861
      %v1864 = vsub.s32 32, %v1863
      %v1865 = vshll.u32 %v1856, %v1863
      %v1866 = vshrl.u32 %v1848, %v1864
      %v1867 = vor.u32 %v1865, %v1866
      %v1868 = vsub.s32 4294967266, %v1863
      %v1869 = vadd.s32 %v1868, 127
      %v1870 = vshll.u32 %v1869, 23
      %v1871 = vor.u32 4788187, %v1870
      %v1872 = vand.u32 2147483647, %v1871
      %v1874 = vcvt.s32.f32 %v1867
      %v1875 = vmul.f32 %v1874, %v1872
      %v1876 = vxor.u32 %v1875, 2147483648
      %v1877 = vsel %vm1794, %v1876, %v1875
      %v1878 = vsub.s32 4, %v1854
      %v1879 = vsel %vm1794, %v1878, %v1854
      %v1880 = vsel %vm1793, %v545, %v1877
      %v1881 = vsel %vm1793, 0, %v1879
      %v1882 = vcosq.f32.pop %v1880
      %v1883 = vsinq.f32.pop %v1880
      %vm1884 = vweird.f32 %v545
      %v1885 = vadd.s32 %v1881, 3
      %v1886 = vand.u32 %v1885, 3
      %vm1887 = vcmp.lt.s32.totalorder %v1886, 2
      %vm1888 = vcmp.eq.s32.totalorder %v1886, 0
      %v1889 = vxor.u32 %v1883, 2147483648
      %v1890 = vsel %vm1888, %v1882, %v1889
      %vm1891 = vcmp.eq.s32.totalorder %v1886, 2
      %v1892 = vxor.u32 %v1882, 2147483648
      %v1893 = vsel %vm1891, %v1892, %v1883
      %v1894 = vsel %vm1887, %v1890, %v1893
      %v1895 = vsel %vm1884, nan, %v1894
      %v1896 = vand.u32 2147483647, %v550
      %vm1897 = vcmp.le.f32.partialorder %v1896, 0.7853982
      %vm1898 = vcmp.lt.s32.totalorder %v550, 0
      %v1899 = vand.u32 %v550, 2139095040
      %v1900 = vshrl.u32 %v1899, 23
      %v1901 = vsub.s32 %v1900, 127
      %v1902 = vand.u32 2147483647, %v550
      %v1903 = vand.u32 %v1902, 8388607
      %v1904 = vor.u32 %v1903, 8388608
      %v1905 = vsub.s32 0, %v1904
      %v1906 = vadd.s32 %v1901, 1
      %vm1907 = vcmp.gt.s32.totalorder %v1906, 0
      %v1908 = vsel %vm1907, %v1906, 0
      %v1909 = vshrl.u32 %v1908, 5
      %v1910 = vand.u32 %v1908, 31
      %v1911 = vsub.s32 32, %v1910
      %v1912 = vshrl.u32 683565275, %v1911
      %v1913 = vshll.u32 683565275, %v1910
      %v1914 = vshrl.u32 2475754826, %v1911
      %v1915 = vor.u32 %v1913, %v1914
      %v1916 = vshll.u32 2475754826, %v1910
      %v1917 = vshrl.u32 2131351028, %v1911
      %v1918 = vor.u32 %v1916, %v1917
      %v1919 = vshll.u32 2131351028, %v1910
      %v1920 = vshrl.u32 2102212464, %v1911
      %v1921 = vor.u32 %v1919, %v1920
      %v1922 = vshll.u32 2102212464, %v1910
      %v1923 = vshrl.u32 920167782, %v1911
      %v1924 = vor.u32 %v1922, %v1923
      %v1925 = vshll.u32 920167782, %v1910
      %v1926 = vshrl.u32 1326507024, %v1911
      %v1927 = vor.u32 %v1925, %v1926
      %vm1928 = vcmp.lt.s32.totalorder %v1909, 1
      %vm1929 = vcmp.lt.s32.totalorder %v1909, 2
      %vm1930 = vcmp.lt.s32.totalorder %v1909, 3
      %vm1931 = vcmp.lt.s32.totalorder %v1909, 4
      %v1932 = vsel %vm1928, %v1912, %v1915
      %v1933 = vsel %vm1931, %v1921, 2102212464
      %v1934 = vsel %vm1930, %v1918, %v1933
      %v1935 = vsel %vm1929, %v1932, %v1934
      %v1936 = vsel %vm1928, %v1915, %v1918
      %v1937 = vsel %vm1931, %v1924, 920167782
      %v1938 = vsel %vm1930, %v1921, %v1937
      %v1939 = vsel %vm1929, %v1936, %v1938
      %v1940 = vsel %vm1928, %v1918, %v1921
      %v1941 = vsel %vm1931, %v1927, 1326507024
      %v1942 = vsel %vm1930, %v1924, %v1941
      %v1943 = vsel %vm1929, %v1940, %v1942
      %v1944 = vshll.u32 %v1904, 8
      %v1945 = vmul.u32.u64.compose %v1944, %v1943
      %v1946 = vextract.low.u32 %v1945
      %v1947 = vextract.high.u32 %v1945
      %v1948 = vmul.u32.u64.compose %v1944, %v1939
      %v1949 = vextract.low.u32 %v1948
      %v1950 = vextract.high.u32 %v1948
      %v1951 = vmul.u32 %v1944, %v1935
      %v1952 = vadd.s32 %v1947, %v1949
      %vm1953 = vc.u32 %v1947, %v1949
      %v1954 = vadd.s32 %v1950, 1
      %v1955 = vsel %vm1953, %v1954, %v1950
      %v1956 = vadd.s32 %v1951, %v1955
      %v1957 = vadd.s32 %v1956, 536870912
      %v1958 = vshrl.u32 %v1957, 30
      %v1959 = vshll.u32 %v1958, 30
      %v1960 = vsub.s32 %v1956, %v1959
      %vm1961 = vcmp.lt.s32.totalorder %v1960, 0
      %v1962 = vsub.s32 0, %v1960
      %v1963 = vsel %vm1961, %v1962, %v1960
      %v1964 = vclz %v1963
      %v1965 = vsub.s32 %v1964, 2
      %vm1966 = vcmp.gt.s32.totalorder 0, %v1965
      %v1967 = vsel %vm1966, 0, %v1965
      %v1968 = vsub.s32 32, %v1967
      %v1969 = vshll.u32 %v1960, %v1967
      %v1970 = vshrl.u32 %v1952, %v1968
      %v1971 = vor.u32 %v1969, %v1970
      %v1972 = vsub.s32 4294967266, %v1967
      %v1973 = vadd.s32 %v1972, 127
      %v1974 = vshll.u32 %v1973, 23
      %v1975 = vor.u32 4788187, %v1974
      %v1976 = vand.u32 2147483647, %v1975
      %v1978 = vcvt.s32.f32 %v1971
      %v1979 = vmul.f32 %v1978, %v1976
      %v1980 = vxor.u32 %v1979, 2147483648
      %v1981 = vsel %vm1898, %v1980, %v1979
      %v1982 = vsub.s32 4, %v1958
      %v1983 = vsel %vm1898, %v1982, %v1958
      %v1984 = vsel %vm1897, %v550, %v1981
      %v1985 = vsel %vm1897, 0, %v1983
      %v1986 = vcosq.f32.pop %v1984
      %v1987 = vsinq.f32.pop %v1984
      %vm1988 = vweird.f32 %v550
      %v1989 = vadd.s32 %v1985, 3
      %v1990 = vand.u32 %v1989, 3
      %vm1991 = vcmp.lt.s32.totalorder %v1990, 2
      %vm1992 = vcmp.eq.s32.totalorder %v1990, 0
      %v1993 = vxor.u32 %v1987, 2147483648
      %v1994 = vsel %vm1992, %v1986, %v1993
      %vm1995 = vcmp.eq.s32.totalorder %v1990, 2
      %v1996 = vxor.u32 %v1986, 2147483648
      %v1997 = vsel %vm1995, %v1996, %v1987
      %v1998 = vsel %vm1991, %v1994, %v1997
      %v1999 = vsel %vm1988, nan, %v1998
      %v2000 = vand.u32 2147483647, %v555
      %vm2001 = vcmp.le.f32.partialorder %v2000, 0.7853982
      %vm2002 = vcmp.lt.s32.totalorder %v555, 0
      %v2003 = vand.u32 %v555, 2139095040
      %v2004 = vshrl.u32 %v2003, 23
      %v2005 = vsub.s32 %v2004, 127
      %v2006 = vand.u32 2147483647, %v555
      %v2007 = vand.u32 %v2006, 8388607
      %v2008 = vor.u32 %v2007, 8388608
      %v2009 = vsub.s32 0, %v2008
      %v2010 = vadd.s32 %v2005, 1
      %vm2011 = vcmp.gt.s32.totalorder %v2010, 0
      %v2012 = vsel %vm2011, %v2010, 0
      %v2013 = vshrl.u32 %v2012, 5
      %v2014 = vand.u32 %v2012, 31
      %v2015 = vsub.s32 32, %v2014
      %v2016 = vshrl.u32 683565275, %v2015
      %v2017 = vshll.u32 683565275, %v2014
      %v2018 = vshrl.u32 2475754826, %v2015
      %v2019 = vor.u32 %v2017, %v2018
      %v2020 = vshll.u32 2475754826, %v2014
      %v2021 = vshrl.u32 2131351028, %v2015
      %v2022 = vor.u32 %v2020, %v2021
      %v2023 = vshll.u32 2131351028, %v2014
      %v2024 = vshrl.u32 2102212464, %v2015
      %v2025 = vor.u32 %v2023, %v2024
      %v2026 = vshll.u32 2102212464, %v2014
      %v2027 = vshrl.u32 920167782, %v2015
      %v2028 = vor.u32 %v2026, %v2027
      %v2029 = vshll.u32 920167782, %v2014
      %v2030 = vshrl.u32 1326507024, %v2015
      %v2031 = vor.u32 %v2029, %v2030
      %vm2032 = vcmp.lt.s32.totalorder %v2013, 1
      %vm2033 = vcmp.lt.s32.totalorder %v2013, 2
      %vm2034 = vcmp.lt.s32.totalorder %v2013, 3
      %vm2035 = vcmp.lt.s32.totalorder %v2013, 4
      %v2036 = vsel %vm2032, %v2016, %v2019
      %v2037 = vsel %vm2035, %v2025, 2102212464
      %v2038 = vsel %vm2034, %v2022, %v2037
      %v2039 = vsel %vm2033, %v2036, %v2038
      %v2040 = vsel %vm2032, %v2019, %v2022
      %v2041 = vsel %vm2035, %v2028, 920167782
      %v2042 = vsel %vm2034, %v2025, %v2041
      %v2043 = vsel %vm2033, %v2040, %v2042
      %v2044 = vsel %vm2032, %v2022, %v2025
      %v2045 = vsel %vm2035, %v2031, 1326507024
      %v2046 = vsel %vm2034, %v2028, %v2045
      %v2047 = vsel %vm2033, %v2044, %v2046
      %v2048 = vshll.u32 %v2008, 8
      %v2049 = vmul.u32.u64.compose %v2048, %v2047
      %v2050 = vextract.low.u32 %v2049
      %v2051 = vextract.high.u32 %v2049
      %v2052 = vmul.u32.u64.compose %v2048, %v2043
      %v2053 = vextract.low.u32 %v2052
      %v2054 = vextract.high.u32 %v2052
      %v2055 = vmul.u32 %v2048, %v2039
      %v2056 = vadd.s32 %v2051, %v2053
      %vm2057 = vc.u32 %v2051, %v2053
      %v2058 = vadd.s32 %v2054, 1
      %v2059 = vsel %vm2057, %v2058, %v2054
      %v2060 = vadd.s32 %v2055, %v2059
      %v2061 = vadd.s32 %v2060, 536870912
      %v2062 = vshrl.u32 %v2061, 30
      %v2063 = vshll.u32 %v2062, 30
      %v2064 = vsub.s32 %v2060, %v2063
      %vm2065 = vcmp.lt.s32.totalorder %v2064, 0
      %v2066 = vsub.s32 0, %v2064
      %v2067 = vsel %vm2065, %v2066, %v2064
      %v2068 = vclz %v2067
      %v2069 = vsub.s32 %v2068, 2
      %vm2070 = vcmp.gt.s32.totalorder 0, %v2069
      %v2071 = vsel %vm2070, 0, %v2069
      %v2072 = vsub.s32 32, %v2071
      %v2073 = vshll.u32 %v2064, %v2071
      %v2074 = vshrl.u32 %v2056, %v2072
      %v2075 = vor.u32 %v2073, %v2074
      %v2076 = vsub.s32 4294967266, %v2071
      %v2077 = vadd.s32 %v2076, 127
      %v2078 = vshll.u32 %v2077, 23
      %v2079 = vor.u32 4788187, %v2078
      %v2080 = vand.u32 2147483647, %v2079
      %v2082 = vcvt.s32.f32 %v2075
      %v2083 = vmul.f32 %v2082, %v2080
      %v2084 = vxor.u32 %v2083, 2147483648
      %v2085 = vsel %vm2002, %v2084, %v2083
      %v2086 = vsub.s32 4, %v2062
      %v2087 = vsel %vm2002, %v2086, %v2062
      %v2088 = vsel %vm2001, %v555, %v2085
      %v2089 = vsel %vm2001, 0, %v2087
      %v2090 = vcosq.f32.pop %v2088
      %v2091 = vsinq.f32.pop %v2088
      %vm2092 = vweird.f32 %v555
      %v2093 = vadd.s32 %v2089, 3
      %v2094 = vand.u32 %v2093, 3
      %vm2095 = vcmp.lt.s32.totalorder %v2094, 2
      %vm2096 = vcmp.eq.s32.totalorder %v2094, 0
      %v2097 = vxor.u32 %v2091, 2147483648
      %v2098 = vsel %vm2096, %v2090, %v2097
      %vm2099 = vcmp.eq.s32.totalorder %v2094, 2
      %v2100 = vxor.u32 %v2090, 2147483648
      %v2101 = vsel %vm2099, %v2100, %v2091
      %v2102 = vsel %vm2095, %v2098, %v2101
      %v2103 = vsel %vm2092, nan, %v2102
      %v2104 = vand.u32 2147483647, %v560
      %vm2105 = vcmp.le.f32.partialorder %v2104, 0.7853982
      %vm2106 = vcmp.lt.s32.totalorder %v560, 0
      %v2107 = vand.u32 %v560, 2139095040
      %v2108 = vshrl.u32 %v2107, 23
      %v2109 = vsub.s32 %v2108, 127
      %v2110 = vand.u32 2147483647, %v560
      %v2111 = vand.u32 %v2110, 8388607
      %v2112 = vor.u32 %v2111, 8388608
      %v2113 = vsub.s32 0, %v2112
      %v2114 = vadd.s32 %v2109, 1
      %vm2115 = vcmp.gt.s32.totalorder %v2114, 0
      %v2116 = vsel %vm2115, %v2114, 0
      %v2117 = vshrl.u32 %v2116, 5
      %v2118 = vand.u32 %v2116, 31
      %v2119 = vsub.s32 32, %v2118
      %v2120 = vshrl.u32 683565275, %v2119
      %v2121 = vshll.u32 683565275, %v2118
      %v2122 = vshrl.u32 2475754826, %v2119
      %v2123 = vor.u32 %v2121, %v2122
      %v2124 = vshll.u32 2475754826, %v2118
      %v2125 = vshrl.u32 2131351028, %v2119
      %v2126 = vor.u32 %v2124, %v2125
      %v2127 = vshll.u32 2131351028, %v2118
      %v2128 = vshrl.u32 2102212464, %v2119
      %v2129 = vor.u32 %v2127, %v2128
      %v2130 = vshll.u32 2102212464, %v2118
      %v2131 = vshrl.u32 920167782, %v2119
      %v2132 = vor.u32 %v2130, %v2131
      %v2133 = vshll.u32 920167782, %v2118
      %v2134 = vshrl.u32 1326507024, %v2119
      %v2135 = vor.u32 %v2133, %v2134
      %vm2136 = vcmp.lt.s32.totalorder %v2117, 1
      %vm2137 = vcmp.lt.s32.totalorder %v2117, 2
      %vm2138 = vcmp.lt.s32.totalorder %v2117, 3
      %vm2139 = vcmp.lt.s32.totalorder %v2117, 4
      %v2140 = vsel %vm2136, %v2120, %v2123
      %v2141 = vsel %vm2139, %v2129, 2102212464
      %v2142 = vsel %vm2138, %v2126, %v2141
      %v2143 = vsel %vm2137, %v2140, %v2142
      %v2144 = vsel %vm2136, %v2123, %v2126
      %v2145 = vsel %vm2139, %v2132, 920167782
      %v2146 = vsel %vm2138, %v2129, %v2145
      %v2147 = vsel %vm2137, %v2144, %v2146
      %v2148 = vsel %vm2136, %v2126, %v2129
      %v2149 = vsel %vm2139, %v2135, 1326507024
      %v2150 = vsel %vm2138, %v2132, %v2149
      %v2151 = vsel %vm2137, %v2148, %v2150
      %v2152 = vshll.u32 %v2112, 8
      %v2153 = vmul.u32.u64.compose %v2152, %v2151
      %v2154 = vextract.low.u32 %v2153
      %v2155 = vextract.high.u32 %v2153
      %v2156 = vmul.u32.u64.compose %v2152, %v2147
      %v2157 = vextract.low.u32 %v2156
      %v2158 = vextract.high.u32 %v2156
      %v2159 = vmul.u32 %v2152, %v2143
      %v2160 = vadd.s32 %v2155, %v2157
      %vm2161 = vc.u32 %v2155, %v2157
      %v2162 = vadd.s32 %v2158, 1
      %v2163 = vsel %vm2161, %v2162, %v2158
      %v2164 = vadd.s32 %v2159, %v2163
      %v2165 = vadd.s32 %v2164, 536870912
      %v2166 = vshrl.u32 %v2165, 30
      %v2167 = vshll.u32 %v2166, 30
      %v2168 = vsub.s32 %v2164, %v2167
      %vm2169 = vcmp.lt.s32.totalorder %v2168, 0
      %v2170 = vsub.s32 0, %v2168
      %v2171 = vsel %vm2169, %v2170, %v2168
      %v2172 = vclz %v2171
      %v2173 = vsub.s32 %v2172, 2
      %vm2174 = vcmp.gt.s32.totalorder 0, %v2173
      %v2175 = vsel %vm2174, 0, %v2173
      %v2176 = vsub.s32 32, %v2175
      %v2177 = vshll.u32 %v2168, %v2175
      %v2178 = vshrl.u32 %v2160, %v2176
      %v2179 = vor.u32 %v2177, %v2178
      %v2180 = vsub.s32 4294967266, %v2175
      %v2181 = vadd.s32 %v2180, 127
      %v2182 = vshll.u32 %v2181, 23
      %v2183 = vor.u32 4788187, %v2182
      %v2184 = vand.u32 2147483647, %v2183
      %v2186 = vcvt.s32.f32 %v2179
      %v2187 = vmul.f32 %v2186, %v2184
      %v2188 = vxor.u32 %v2187, 2147483648
      %v2189 = vsel %vm2106, %v2188, %v2187
      %v2190 = vsub.s32 4, %v2166
      %v2191 = vsel %vm2106, %v2190, %v2166
      %v2192 = vsel %vm2105, %v560, %v2189
      %v2193 = vsel %vm2105, 0, %v2191
      %v2194 = vcosq.f32.pop %v2192
      %v2195 = vsinq.f32.pop %v2192
      %vm2196 = vweird.f32 %v560
      %v2197 = vadd.s32 %v2193, 3
      %v2198 = vand.u32 %v2197, 3
      %vm2199 = vcmp.lt.s32.totalorder %v2198, 2
      %vm2200 = vcmp.eq.s32.totalorder %v2198, 0
      %v2201 = vxor.u32 %v2195, 2147483648
      %v2202 = vsel %vm2200, %v2194, %v2201
      %vm2203 = vcmp.eq.s32.totalorder %v2198, 2
      %v2204 = vxor.u32 %v2194, 2147483648
      %v2205 = vsel %vm2203, %v2204, %v2195
      %v2206 = vsel %vm2199, %v2202, %v2205
      %v2207 = vsel %vm2196, nan, %v2206
      %v2208 = vand.u32 2147483647, %v565
      %vm2209 = vcmp.le.f32.partialorder %v2208, 0.7853982
      %vm2210 = vcmp.lt.s32.totalorder %v565, 0
      %v2211 = vand.u32 %v565, 2139095040
      %v2212 = vshrl.u32 %v2211, 23
      %v2213 = vsub.s32 %v2212, 127
      %v2214 = vand.u32 2147483647, %v565
      %v2215 = vand.u32 %v2214, 8388607
      %v2216 = vor.u32 %v2215, 8388608
      %v2217 = vsub.s32 0, %v2216
      %v2218 = vadd.s32 %v2213, 1
      %vm2219 = vcmp.gt.s32.totalorder %v2218, 0
      %v2220 = vsel %vm2219, %v2218, 0
      %v2221 = vshrl.u32 %v2220, 5
      %v2222 = vand.u32 %v2220, 31
      %v2223 = vsub.s32 32, %v2222
      %v2224 = vshrl.u32 683565275, %v2223
      %v2225 = vshll.u32 683565275, %v2222
      %v2226 = vshrl.u32 2475754826, %v2223
      %v2227 = vor.u32 %v2225, %v2226
      %v2228 = vshll.u32 2475754826, %v2222
      %v2229 = vshrl.u32 2131351028, %v2223
      %v2230 = vor.u32 %v2228, %v2229
      %v2231 = vshll.u32 2131351028, %v2222
      %v2232 = vshrl.u32 2102212464, %v2223
      %v2233 = vor.u32 %v2231, %v2232
      %v2234 = vshll.u32 2102212464, %v2222
      %v2235 = vshrl.u32 920167782, %v2223
      %v2236 = vor.u32 %v2234, %v2235
      %v2237 = vshll.u32 920167782, %v2222
      %v2238 = vshrl.u32 1326507024, %v2223
      %v2239 = vor.u32 %v2237, %v2238
      %vm2240 = vcmp.lt.s32.totalorder %v2221, 1
      %vm2241 = vcmp.lt.s32.totalorder %v2221, 2
      %vm2242 = vcmp.lt.s32.totalorder %v2221, 3
      %vm2243 = vcmp.lt.s32.totalorder %v2221, 4
      %v2244 = vsel %vm2240, %v2224, %v2227
      %v2245 = vsel %vm2243, %v2233, 2102212464
      %v2246 = vsel %vm2242, %v2230, %v2245
      %v2247 = vsel %vm2241, %v2244, %v2246
      %v2248 = vsel %vm2240, %v2227, %v2230
      %v2249 = vsel %vm2243, %v2236, 920167782
      %v2250 = vsel %vm2242, %v2233, %v2249
      %v2251 = vsel %vm2241, %v2248, %v2250
      %v2252 = vsel %vm2240, %v2230, %v2233
      %v2253 = vsel %vm2243, %v2239, 1326507024
      %v2254 = vsel %vm2242, %v2236, %v2253
      %v2255 = vsel %vm2241, %v2252, %v2254
      %v2256 = vshll.u32 %v2216, 8
      %v2257 = vmul.u32.u64.compose %v2256, %v2255
      %v2258 = vextract.low.u32 %v2257
      %v2259 = vextract.high.u32 %v2257
      %v2260 = vmul.u32.u64.compose %v2256, %v2251
      %v2261 = vextract.low.u32 %v2260
      %v2262 = vextract.high.u32 %v2260
      %v2263 = vmul.u32 %v2256, %v2247
      %v2264 = vadd.s32 %v2259, %v2261
      %vm2265 = vc.u32 %v2259, %v2261
      %v2266 = vadd.s32 %v2262, 1
      %v2267 = vsel %vm2265, %v2266, %v2262
      %v2268 = vadd.s32 %v2263, %v2267
      %v2269 = vadd.s32 %v2268, 536870912
      %v2270 = vshrl.u32 %v2269, 30
      %v2271 = vshll.u32 %v2270, 30
      %v2272 = vsub.s32 %v2268, %v2271
      %vm2273 = vcmp.lt.s32.totalorder %v2272, 0
      %v2274 = vsub.s32 0, %v2272
      %v2275 = vsel %vm2273, %v2274, %v2272
      %v2276 = vclz %v2275
      %v2277 = vsub.s32 %v2276, 2
      %vm2278 = vcmp.gt.s32.totalorder 0, %v2277
      %v2279 = vsel %vm2278, 0, %v2277
      %v2280 = vsub.s32 32, %v2279
      %v2281 = vshll.u32 %v2272, %v2279
      %v2282 = vshrl.u32 %v2264, %v2280
      %v2283 = vor.u32 %v2281, %v2282
      %v2284 = vsub.s32 4294967266, %v2279
      %v2285 = vadd.s32 %v2284, 127
      %v2286 = vshll.u32 %v2285, 23
      %v2287 = vor.u32 4788187, %v2286
      %v2288 = vand.u32 2147483647, %v2287
      %v2290 = vcvt.s32.f32 %v2283
      %v2291 = vmul.f32 %v2290, %v2288
      %v2292 = vxor.u32 %v2291, 2147483648
      %v2293 = vsel %vm2210, %v2292, %v2291
      %v2294 = vsub.s32 4, %v2270
      %v2295 = vsel %vm2210, %v2294, %v2270
      %v2296 = vsel %vm2209, %v565, %v2293
      %v2297 = vsel %vm2209, 0, %v2295
      %v2298 = vcosq.f32.pop %v2296
      %v2299 = vsinq.f32.pop %v2296
      %vm2300 = vweird.f32 %v565
      %v2301 = vadd.s32 %v2297, 3
      %v2302 = vand.u32 %v2301, 3
      %vm2303 = vcmp.lt.s32.totalorder %v2302, 2
      %vm2304 = vcmp.eq.s32.totalorder %v2302, 0
      %v2305 = vxor.u32 %v2299, 2147483648
      %v2306 = vsel %vm2304, %v2298, %v2305
      %vm2307 = vcmp.eq.s32.totalorder %v2302, 2
      %v2308 = vxor.u32 %v2298, 2147483648
      %v2309 = vsel %vm2307, %v2308, %v2299
      %v2310 = vsel %vm2303, %v2306, %v2309
      %v2311 = vsel %vm2300, nan, %v2310
      %v2312 = vand.u32 2147483647, %v570
      %vm2313 = vcmp.le.f32.partialorder %v2312, 0.7853982
      %vm2314 = vcmp.lt.s32.totalorder %v570, 0
      %v2315 = vand.u32 %v570, 2139095040
      %v2316 = vshrl.u32 %v2315, 23
      %v2317 = vsub.s32 %v2316, 127
      %v2318 = vand.u32 2147483647, %v570
      %v2319 = vand.u32 %v2318, 8388607
      %v2320 = vor.u32 %v2319, 8388608
      %v2321 = vsub.s32 0, %v2320
      %v2322 = vadd.s32 %v2317, 1
      %vm2323 = vcmp.gt.s32.totalorder %v2322, 0
      %v2324 = vsel %vm2323, %v2322, 0
      %v2325 = vshrl.u32 %v2324, 5
      %v2326 = vand.u32 %v2324, 31
      %v2327 = vsub.s32 32, %v2326
      %v2328 = vshrl.u32 683565275, %v2327
      %v2329 = vshll.u32 683565275, %v2326
      %v2330 = vshrl.u32 2475754826, %v2327
      %v2331 = vor.u32 %v2329, %v2330
      %v2332 = vshll.u32 2475754826, %v2326
      %v2333 = vshrl.u32 2131351028, %v2327
      %v2334 = vor.u32 %v2332, %v2333
      %v2335 = vshll.u32 2131351028, %v2326
      %v2336 = vshrl.u32 2102212464, %v2327
      %v2337 = vor.u32 %v2335, %v2336
      %v2338 = vshll.u32 2102212464, %v2326
      %v2339 = vshrl.u32 920167782, %v2327
      %v2340 = vor.u32 %v2338, %v2339
      %v2341 = vshll.u32 920167782, %v2326
      %v2342 = vshrl.u32 1326507024, %v2327
      %v2343 = vor.u32 %v2341, %v2342
      %vm2344 = vcmp.lt.s32.totalorder %v2325, 1
      %vm2345 = vcmp.lt.s32.totalorder %v2325, 2
      %vm2346 = vcmp.lt.s32.totalorder %v2325, 3
      %vm2347 = vcmp.lt.s32.totalorder %v2325, 4
      %v2348 = vsel %vm2344, %v2328, %v2331
      %v2349 = vsel %vm2347, %v2337, 2102212464
      %v2350 = vsel %vm2346, %v2334, %v2349
      %v2351 = vsel %vm2345, %v2348, %v2350
      %v2352 = vsel %vm2344, %v2331, %v2334
      %v2353 = vsel %vm2347, %v2340, 920167782
      %v2354 = vsel %vm2346, %v2337, %v2353
      %v2355 = vsel %vm2345, %v2352, %v2354
      %v2356 = vsel %vm2344, %v2334, %v2337
      %v2357 = vsel %vm2347, %v2343, 1326507024
      %v2358 = vsel %vm2346, %v2340, %v2357
      %v2359 = vsel %vm2345, %v2356, %v2358
      %v2360 = vshll.u32 %v2320, 8
      %v2361 = vmul.u32.u64.compose %v2360, %v2359
      %v2362 = vextract.low.u32 %v2361
      %v2363 = vextract.high.u32 %v2361
      %v2364 = vmul.u32.u64.compose %v2360, %v2355
      %v2365 = vextract.low.u32 %v2364
      %v2366 = vextract.high.u32 %v2364
      %v2367 = vmul.u32 %v2360, %v2351
      %v2368 = vadd.s32 %v2363, %v2365
      %vm2369 = vc.u32 %v2363, %v2365
      %v2370 = vadd.s32 %v2366, 1
      %v2371 = vsel %vm2369, %v2370, %v2366
      %v2372 = vadd.s32 %v2367, %v2371
      %v2373 = vadd.s32 %v2372, 536870912
      %v2374 = vshrl.u32 %v2373, 30
      %v2375 = vshll.u32 %v2374, 30
      %v2376 = vsub.s32 %v2372, %v2375
      %vm2377 = vcmp.lt.s32.totalorder %v2376, 0
      %v2378 = vsub.s32 0, %v2376
      %v2379 = vsel %vm2377, %v2378, %v2376
      %v2380 = vclz %v2379
      %v2381 = vsub.s32 %v2380, 2
      %vm2382 = vcmp.gt.s32.totalorder 0, %v2381
      %v2383 = vsel %vm2382, 0, %v2381
      %v2384 = vsub.s32 32, %v2383
      %v2385 = vshll.u32 %v2376, %v2383
      %v2386 = vshrl.u32 %v2368, %v2384
      %v2387 = vor.u32 %v2385, %v2386
      %v2388 = vsub.s32 4294967266, %v2383
      %v2389 = vadd.s32 %v2388, 127
      %v2390 = vshll.u32 %v2389, 23
      %v2391 = vor.u32 4788187, %v2390
      %v2392 = vand.u32 2147483647, %v2391
      %v2394 = vcvt.s32.f32 %v2387
      %v2395 = vmul.f32 %v2394, %v2392
      %v2396 = vxor.u32 %v2395, 2147483648
      %v2397 = vsel %vm2314, %v2396, %v2395
      %v2398 = vsub.s32 4, %v2374
      %v2399 = vsel %vm2314, %v2398, %v2374
      %v2400 = vsel %vm2313, %v570, %v2397
      %v2401 = vsel %vm2313, 0, %v2399
      %v2402 = vcosq.f32.pop %v2400
      %v2403 = vsinq.f32.pop %v2400
      %vm2404 = vweird.f32 %v570
      %v2405 = vadd.s32 %v2401, 3
      %v2406 = vand.u32 %v2405, 3
      %vm2407 = vcmp.lt.s32.totalorder %v2406, 2
      %vm2408 = vcmp.eq.s32.totalorder %v2406, 0
      %v2409 = vxor.u32 %v2403, 2147483648
      %v2410 = vsel %vm2408, %v2402, %v2409
      %vm2411 = vcmp.eq.s32.totalorder %v2406, 2
      %v2412 = vxor.u32 %v2402, 2147483648
      %v2413 = vsel %vm2411, %v2412, %v2403
      %v2414 = vsel %vm2407, %v2410, %v2413
      %v2415 = vsel %vm2404, nan, %v2414
      %v2416 = vand.u32 2147483647, %v575
      %vm2417 = vcmp.le.f32.partialorder %v2416, 0.7853982
      %vm2418 = vcmp.lt.s32.totalorder %v575, 0
      %v2419 = vand.u32 %v575, 2139095040
      %v2420 = vshrl.u32 %v2419, 23
      %v2421 = vsub.s32 %v2420, 127
      %v2422 = vand.u32 2147483647, %v575
      %v2423 = vand.u32 %v2422, 8388607
      %v2424 = vor.u32 %v2423, 8388608
      %v2425 = vsub.s32 0, %v2424
      %v2426 = vadd.s32 %v2421, 1
      %vm2427 = vcmp.gt.s32.totalorder %v2426, 0
      %v2428 = vsel %vm2427, %v2426, 0
      %v2429 = vshrl.u32 %v2428, 5
      %v2430 = vand.u32 %v2428, 31
      %v2431 = vsub.s32 32, %v2430
      %v2432 = vshrl.u32 683565275, %v2431
      %v2433 = vshll.u32 683565275, %v2430
      %v2434 = vshrl.u32 2475754826, %v2431
      %v2435 = vor.u32 %v2433, %v2434
      %v2436 = vshll.u32 2475754826, %v2430
      %v2437 = vshrl.u32 2131351028, %v2431
      %v2438 = vor.u32 %v2436, %v2437
      %v2439 = vshll.u32 2131351028, %v2430
      %v2440 = vshrl.u32 2102212464, %v2431
      %v2441 = vor.u32 %v2439, %v2440
      %v2442 = vshll.u32 2102212464, %v2430
      %v2443 = vshrl.u32 920167782, %v2431
      %v2444 = vor.u32 %v2442, %v2443
      %v2445 = vshll.u32 920167782, %v2430
      %v2446 = vshrl.u32 1326507024, %v2431
      %v2447 = vor.u32 %v2445, %v2446
      %vm2448 = vcmp.lt.s32.totalorder %v2429, 1
      %vm2449 = vcmp.lt.s32.totalorder %v2429, 2
      %vm2450 = vcmp.lt.s32.totalorder %v2429, 3
      %vm2451 = vcmp.lt.s32.totalorder %v2429, 4
      %v2452 = vsel %vm2448, %v2432, %v2435
      %v2453 = vsel %vm2451, %v2441, 2102212464
      %v2454 = vsel %vm2450, %v2438, %v2453
      %v2455 = vsel %vm2449, %v2452, %v2454
      %v2456 = vsel %vm2448, %v2435, %v2438
      %v2457 = vsel %vm2451, %v2444, 920167782
      %v2458 = vsel %vm2450, %v2441, %v2457
      %v2459 = vsel %vm2449, %v2456, %v2458
      %v2460 = vsel %vm2448, %v2438, %v2441
      %v2461 = vsel %vm2451, %v2447, 1326507024
      %v2462 = vsel %vm2450, %v2444, %v2461
      %v2463 = vsel %vm2449, %v2460, %v2462
      %v2464 = vshll.u32 %v2424, 8
      %v2465 = vmul.u32.u64.compose %v2464, %v2463
      %v2466 = vextract.low.u32 %v2465
      %v2467 = vextract.high.u32 %v2465
      %v2468 = vmul.u32.u64.compose %v2464, %v2459
      %v2469 = vextract.low.u32 %v2468
      %v2470 = vextract.high.u32 %v2468
      %v2471 = vmul.u32 %v2464, %v2455
      %v2472 = vadd.s32 %v2467, %v2469
      %vm2473 = vc.u32 %v2467, %v2469
      %v2474 = vadd.s32 %v2470, 1
      %v2475 = vsel %vm2473, %v2474, %v2470
      %v2476 = vadd.s32 %v2471, %v2475
      %v2477 = vadd.s32 %v2476, 536870912
      %v2478 = vshrl.u32 %v2477, 30
      %v2479 = vshll.u32 %v2478, 30
      %v2480 = vsub.s32 %v2476, %v2479
      %vm2481 = vcmp.lt.s32.totalorder %v2480, 0
      %v2482 = vsub.s32 0, %v2480
      %v2483 = vsel %vm2481, %v2482, %v2480
      %v2484 = vclz %v2483
      %v2485 = vsub.s32 %v2484, 2
      %vm2486 = vcmp.gt.s32.totalorder 0, %v2485
      %v2487 = vsel %vm2486, 0, %v2485
      %v2488 = vsub.s32 32, %v2487
      %v2489 = vshll.u32 %v2480, %v2487
      %v2490 = vshrl.u32 %v2472, %v2488
      %v2491 = vor.u32 %v2489, %v2490
      %v2492 = vsub.s32 4294967266, %v2487
      %v2493 = vadd.s32 %v2492, 127
      %v2494 = vshll.u32 %v2493, 23
      %v2495 = vor.u32 4788187, %v2494
      %v2496 = vand.u32 2147483647, %v2495
      %v2498 = vcvt.s32.f32 %v2491
      %v2499 = vmul.f32 %v2498, %v2496
      %v2500 = vxor.u32 %v2499, 2147483648
      %v2501 = vsel %vm2418, %v2500, %v2499
      %v2502 = vsub.s32 4, %v2478
      %v2503 = vsel %vm2418, %v2502, %v2478
      %v2504 = vsel %vm2417, %v575, %v2501
      %v2505 = vsel %vm2417, 0, %v2503
      %v2506 = vcosq.f32.pop %v2504
      %v2507 = vsinq.f32.pop %v2504
      %vm2508 = vweird.f32 %v575
      %v2509 = vadd.s32 %v2505, 3
      %v2510 = vand.u32 %v2509, 3
      %vm2511 = vcmp.lt.s32.totalorder %v2510, 2
      %vm2512 = vcmp.eq.s32.totalorder %v2510, 0
      %v2513 = vxor.u32 %v2507, 2147483648
      %v2514 = vsel %vm2512, %v2506, %v2513
      %vm2515 = vcmp.eq.s32.totalorder %v2510, 2
      %v2516 = vxor.u32 %v2506, 2147483648
      %v2517 = vsel %vm2515, %v2516, %v2507
      %v2518 = vsel %vm2511, %v2514, %v2517
      %v2519 = vsel %vm2508, nan, %v2518
      %v2520 = vand.u32 2147483647, %v580
      %vm2521 = vcmp.le.f32.partialorder %v2520, 0.7853982
      %vm2522 = vcmp.lt.s32.totalorder %v580, 0
      %v2523 = vand.u32 %v580, 2139095040
      %v2524 = vshrl.u32 %v2523, 23
      %v2525 = vsub.s32 %v2524, 127
      %v2526 = vand.u32 2147483647, %v580
      %v2527 = vand.u32 %v2526, 8388607
      %v2528 = vor.u32 %v2527, 8388608
      %v2529 = vsub.s32 0, %v2528
      %v2530 = vadd.s32 %v2525, 1
      %vm2531 = vcmp.gt.s32.totalorder %v2530, 0
      %v2532 = vsel %vm2531, %v2530, 0
      %v2533 = vshrl.u32 %v2532, 5
      %v2534 = vand.u32 %v2532, 31
      %v2535 = vsub.s32 32, %v2534
      %v2536 = vshrl.u32 683565275, %v2535
      %v2537 = vshll.u32 683565275, %v2534
      %v2538 = vshrl.u32 2475754826, %v2535
      %v2539 = vor.u32 %v2537, %v2538
      %v2540 = vshll.u32 2475754826, %v2534
      %v2541 = vshrl.u32 2131351028, %v2535
      %v2542 = vor.u32 %v2540, %v2541
      %v2543 = vshll.u32 2131351028, %v2534
      %v2544 = vshrl.u32 2102212464, %v2535
      %v2545 = vor.u32 %v2543, %v2544
      %v2546 = vshll.u32 2102212464, %v2534
      %v2547 = vshrl.u32 920167782, %v2535
      %v2548 = vor.u32 %v2546, %v2547
      %v2549 = vshll.u32 920167782, %v2534
      %v2550 = vshrl.u32 1326507024, %v2535
      %v2551 = vor.u32 %v2549, %v2550
      %vm2552 = vcmp.lt.s32.totalorder %v2533, 1
      %vm2553 = vcmp.lt.s32.totalorder %v2533, 2
      %vm2554 = vcmp.lt.s32.totalorder %v2533, 3
      %vm2555 = vcmp.lt.s32.totalorder %v2533, 4
      %v2556 = vsel %vm2552, %v2536, %v2539
      %v2557 = vsel %vm2555, %v2545, 2102212464
      %v2558 = vsel %vm2554, %v2542, %v2557
      %v2559 = vsel %vm2553, %v2556, %v2558
      %v2560 = vsel %vm2552, %v2539, %v2542
      %v2561 = vsel %vm2555, %v2548, 920167782
      %v2562 = vsel %vm2554, %v2545, %v2561
      %v2563 = vsel %vm2553, %v2560, %v2562
      %v2564 = vsel %vm2552, %v2542, %v2545
      %v2565 = vsel %vm2555, %v2551, 1326507024
      %v2566 = vsel %vm2554, %v2548, %v2565
      %v2567 = vsel %vm2553, %v2564, %v2566
      %v2568 = vshll.u32 %v2528, 8
      %v2569 = vmul.u32.u64.compose %v2568, %v2567
      %v2570 = vextract.low.u32 %v2569
      %v2571 = vextract.high.u32 %v2569
      %v2572 = vmul.u32.u64.compose %v2568, %v2563
      %v2573 = vextract.low.u32 %v2572
      %v2574 = vextract.high.u32 %v2572
      %v2575 = vmul.u32 %v2568, %v2559
      %v2576 = vadd.s32 %v2571, %v2573
      %vm2577 = vc.u32 %v2571, %v2573
      %v2578 = vadd.s32 %v2574, 1
      %v2579 = vsel %vm2577, %v2578, %v2574
      %v2580 = vadd.s32 %v2575, %v2579
      %v2581 = vadd.s32 %v2580, 536870912
      %v2582 = vshrl.u32 %v2581, 30
      %v2583 = vshll.u32 %v2582, 30
      %v2584 = vsub.s32 %v2580, %v2583
      %vm2585 = vcmp.lt.s32.totalorder %v2584, 0
      %v2586 = vsub.s32 0, %v2584
      %v2587 = vsel %vm2585, %v2586, %v2584
      %v2588 = vclz %v2587
      %v2589 = vsub.s32 %v2588, 2
      %vm2590 = vcmp.gt.s32.totalorder 0, %v2589
      %v2591 = vsel %vm2590, 0, %v2589
      %v2592 = vsub.s32 32, %v2591
      %v2593 = vshll.u32 %v2584, %v2591
      %v2594 = vshrl.u32 %v2576, %v2592
      %v2595 = vor.u32 %v2593, %v2594
      %v2596 = vsub.s32 4294967266, %v2591
      %v2597 = vadd.s32 %v2596, 127
      %v2598 = vshll.u32 %v2597, 23
      %v2599 = vor.u32 4788187, %v2598
      %v2600 = vand.u32 2147483647, %v2599
      %v2602 = vcvt.s32.f32 %v2595
      %v2603 = vmul.f32 %v2602, %v2600
      %v2604 = vxor.u32 %v2603, 2147483648
      %v2605 = vsel %vm2522, %v2604, %v2603
      %v2606 = vsub.s32 4, %v2582
      %v2607 = vsel %vm2522, %v2606, %v2582
      %v2608 = vsel %vm2521, %v580, %v2605
      %v2609 = vsel %vm2521, 0, %v2607
      %v2610 = vcosq.f32.pop %v2608
      %v2611 = vsinq.f32.pop %v2608
      %vm2612 = vweird.f32 %v580
      %v2613 = vadd.s32 %v2609, 3
      %v2614 = vand.u32 %v2613, 3
      %vm2615 = vcmp.lt.s32.totalorder %v2614, 2
      %vm2616 = vcmp.eq.s32.totalorder %v2614, 0
      %v2617 = vxor.u32 %v2611, 2147483648
      %v2618 = vsel %vm2616, %v2610, %v2617
      %vm2619 = vcmp.eq.s32.totalorder %v2614, 2
      %v2620 = vxor.u32 %v2610, 2147483648
      %v2621 = vsel %vm2619, %v2620, %v2611
      %v2622 = vsel %vm2615, %v2618, %v2621
      %v2623 = vsel %vm2612, nan, %v2622
      %v2624 = vand.u32 2147483647, %v585
      %vm2625 = vcmp.le.f32.partialorder %v2624, 0.7853982
      %vm2626 = vcmp.lt.s32.totalorder %v585, 0
      %v2627 = vand.u32 %v585, 2139095040
      %v2628 = vshrl.u32 %v2627, 23
      %v2629 = vsub.s32 %v2628, 127
      %v2630 = vand.u32 2147483647, %v585
      %v2631 = vand.u32 %v2630, 8388607
      %v2632 = vor.u32 %v2631, 8388608
      %v2633 = vsub.s32 0, %v2632
      %v2634 = vadd.s32 %v2629, 1
      %vm2635 = vcmp.gt.s32.totalorder %v2634, 0
      %v2636 = vsel %vm2635, %v2634, 0
      %v2637 = vshrl.u32 %v2636, 5
      %v2638 = vand.u32 %v2636, 31
      %v2639 = vsub.s32 32, %v2638
      %v2640 = vshrl.u32 683565275, %v2639
      %v2641 = vshll.u32 683565275, %v2638
      %v2642 = vshrl.u32 2475754826, %v2639
      %v2643 = vor.u32 %v2641, %v2642
      %v2644 = vshll.u32 2475754826, %v2638
      %v2645 = vshrl.u32 2131351028, %v2639
      %v2646 = vor.u32 %v2644, %v2645
      %v2647 = vshll.u32 2131351028, %v2638
      %v2648 = vshrl.u32 2102212464, %v2639
      %v2649 = vor.u32 %v2647, %v2648
      %v2650 = vshll.u32 2102212464, %v2638
      %v2651 = vshrl.u32 920167782, %v2639
      %v2652 = vor.u32 %v2650, %v2651
      %v2653 = vshll.u32 920167782, %v2638
      %v2654 = vshrl.u32 1326507024, %v2639
      %v2655 = vor.u32 %v2653, %v2654
      %vm2656 = vcmp.lt.s32.totalorder %v2637, 1
      %vm2657 = vcmp.lt.s32.totalorder %v2637, 2
      %vm2658 = vcmp.lt.s32.totalorder %v2637, 3
      %vm2659 = vcmp.lt.s32.totalorder %v2637, 4
      %v2660 = vsel %vm2656, %v2640, %v2643
      %v2661 = vsel %vm2659, %v2649, 2102212464
      %v2662 = vsel %vm2658, %v2646, %v2661
      %v2663 = vsel %vm2657, %v2660, %v2662
      %v2664 = vsel %vm2656, %v2643, %v2646
      %v2665 = vsel %vm2659, %v2652, 920167782
      %v2666 = vsel %vm2658, %v2649, %v2665
      %v2667 = vsel %vm2657, %v2664, %v2666
      %v2668 = vsel %vm2656, %v2646, %v2649
      %v2669 = vsel %vm2659, %v2655, 1326507024
      %v2670 = vsel %vm2658, %v2652, %v2669
      %v2671 = vsel %vm2657, %v2668, %v2670
      %v2672 = vshll.u32 %v2632, 8
      %v2673 = vmul.u32.u64.compose %v2672, %v2671
      %v2674 = vextract.low.u32 %v2673
      %v2675 = vextract.high.u32 %v2673
      %v2676 = vmul.u32.u64.compose %v2672, %v2667
      %v2677 = vextract.low.u32 %v2676
      %v2678 = vextract.high.u32 %v2676
      %v2679 = vmul.u32 %v2672, %v2663
      %v2680 = vadd.s32 %v2675, %v2677
      %vm2681 = vc.u32 %v2675, %v2677
      %v2682 = vadd.s32 %v2678, 1
      %v2683 = vsel %vm2681, %v2682, %v2678
      %v2684 = vadd.s32 %v2679, %v2683
      %v2685 = vadd.s32 %v2684, 536870912
      %v2686 = vshrl.u32 %v2685, 30
      %v2687 = vshll.u32 %v2686, 30
      %v2688 = vsub.s32 %v2684, %v2687
      %vm2689 = vcmp.lt.s32.totalorder %v2688, 0
      %v2690 = vsub.s32 0, %v2688
      %v2691 = vsel %vm2689, %v2690, %v2688
      %v2692 = vclz %v2691
      %v2693 = vsub.s32 %v2692, 2
      %vm2694 = vcmp.gt.s32.totalorder 0, %v2693
      %v2695 = vsel %vm2694, 0, %v2693
      %v2696 = vsub.s32 32, %v2695
      %v2697 = vshll.u32 %v2688, %v2695
      %v2698 = vshrl.u32 %v2680, %v2696
      %v2699 = vor.u32 %v2697, %v2698
      %v2700 = vsub.s32 4294967266, %v2695
      %v2701 = vadd.s32 %v2700, 127
      %v2702 = vshll.u32 %v2701, 23
      %v2703 = vor.u32 4788187, %v2702
      %v2704 = vand.u32 2147483647, %v2703
      %v2706 = vcvt.s32.f32 %v2699
      %v2707 = vmul.f32 %v2706, %v2704
      %v2708 = vxor.u32 %v2707, 2147483648
      %v2709 = vsel %vm2626, %v2708, %v2707
      %v2710 = vsub.s32 4, %v2686
      %v2711 = vsel %vm2626, %v2710, %v2686
      %v2712 = vsel %vm2625, %v585, %v2709
      %v2713 = vsel %vm2625, 0, %v2711
      %v2714 = vcosq.f32.pop %v2712
      %v2715 = vsinq.f32.pop %v2712
      %vm2716 = vweird.f32 %v585
      %v2717 = vadd.s32 %v2713, 3
      %v2718 = vand.u32 %v2717, 3
      %vm2719 = vcmp.lt.s32.totalorder %v2718, 2
      %vm2720 = vcmp.eq.s32.totalorder %v2718, 0
      %v2721 = vxor.u32 %v2715, 2147483648
      %v2722 = vsel %vm2720, %v2714, %v2721
      %vm2723 = vcmp.eq.s32.totalorder %v2718, 2
      %v2724 = vxor.u32 %v2714, 2147483648
      %v2725 = vsel %vm2723, %v2724, %v2715
      %v2726 = vsel %vm2719, %v2722, %v2725
      %v2727 = vsel %vm2716, nan, %v2726
      %v2728 = vand.u32 2147483647, %v590
      %vm2729 = vcmp.le.f32.partialorder %v2728, 0.7853982
      %vm2730 = vcmp.lt.s32.totalorder %v590, 0
      %v2731 = vand.u32 %v590, 2139095040
      %v2732 = vshrl.u32 %v2731, 23
      %v2733 = vsub.s32 %v2732, 127
      %v2734 = vand.u32 2147483647, %v590
      %v2735 = vand.u32 %v2734, 8388607
      %v2736 = vor.u32 %v2735, 8388608
      %v2737 = vsub.s32 0, %v2736
      %v2738 = vadd.s32 %v2733, 1
      %vm2739 = vcmp.gt.s32.totalorder %v2738, 0
      %v2740 = vsel %vm2739, %v2738, 0
      %v2741 = vshrl.u32 %v2740, 5
      %v2742 = vand.u32 %v2740, 31
      %v2743 = vsub.s32 32, %v2742
      %v2744 = vshrl.u32 683565275, %v2743
      %v2745 = vshll.u32 683565275, %v2742
      %v2746 = vshrl.u32 2475754826, %v2743
      %v2747 = vor.u32 %v2745, %v2746
      %v2748 = vshll.u32 2475754826, %v2742
      %v2749 = vshrl.u32 2131351028, %v2743
      %v2750 = vor.u32 %v2748, %v2749
      %v2751 = vshll.u32 2131351028, %v2742
      %v2752 = vshrl.u32 2102212464, %v2743
      %v2753 = vor.u32 %v2751, %v2752
      %v2754 = vshll.u32 2102212464, %v2742
      %v2755 = vshrl.u32 920167782, %v2743
      %v2756 = vor.u32 %v2754, %v2755
      %v2757 = vshll.u32 920167782, %v2742
      %v2758 = vshrl.u32 1326507024, %v2743
      %v2759 = vor.u32 %v2757, %v2758
      %vm2760 = vcmp.lt.s32.totalorder %v2741, 1
      %vm2761 = vcmp.lt.s32.totalorder %v2741, 2
      %vm2762 = vcmp.lt.s32.totalorder %v2741, 3
      %vm2763 = vcmp.lt.s32.totalorder %v2741, 4
      %v2764 = vsel %vm2760, %v2744, %v2747
      %v2765 = vsel %vm2763, %v2753, 2102212464
      %v2766 = vsel %vm2762, %v2750, %v2765
      %v2767 = vsel %vm2761, %v2764, %v2766
      %v2768 = vsel %vm2760, %v2747, %v2750
      %v2769 = vsel %vm2763, %v2756, 920167782
      %v2770 = vsel %vm2762, %v2753, %v2769
      %v2771 = vsel %vm2761, %v2768, %v2770
      %v2772 = vsel %vm2760, %v2750, %v2753
      %v2773 = vsel %vm2763, %v2759, 1326507024
      %v2774 = vsel %vm2762, %v2756, %v2773
      %v2775 = vsel %vm2761, %v2772, %v2774
      %v2776 = vshll.u32 %v2736, 8
      %v2777 = vmul.u32.u64.compose %v2776, %v2775
      %v2778 = vextract.low.u32 %v2777
      %v2779 = vextract.high.u32 %v2777
      %v2780 = vmul.u32.u64.compose %v2776, %v2771
      %v2781 = vextract.low.u32 %v2780
      %v2782 = vextract.high.u32 %v2780
      %v2783 = vmul.u32 %v2776, %v2767
      %v2784 = vadd.s32 %v2779, %v2781
      %vm2785 = vc.u32 %v2779, %v2781
      %v2786 = vadd.s32 %v2782, 1
      %v2787 = vsel %vm2785, %v2786, %v2782
      %v2788 = vadd.s32 %v2783, %v2787
      %v2789 = vadd.s32 %v2788, 536870912
      %v2790 = vshrl.u32 %v2789, 30
      %v2791 = vshll.u32 %v2790, 30
      %v2792 = vsub.s32 %v2788, %v2791
      %vm2793 = vcmp.lt.s32.totalorder %v2792, 0
      %v2794 = vsub.s32 0, %v2792
      %v2795 = vsel %vm2793, %v2794, %v2792
      %v2796 = vclz %v2795
      %v2797 = vsub.s32 %v2796, 2
      %vm2798 = vcmp.gt.s32.totalorder 0, %v2797
      %v2799 = vsel %vm2798, 0, %v2797
      %v2800 = vsub.s32 32, %v2799
      %v2801 = vshll.u32 %v2792, %v2799
      %v2802 = vshrl.u32 %v2784, %v2800
      %v2803 = vor.u32 %v2801, %v2802
      %v2804 = vsub.s32 4294967266, %v2799
      %v2805 = vadd.s32 %v2804, 127
      %v2806 = vshll.u32 %v2805, 23
      %v2807 = vor.u32 4788187, %v2806
      %v2808 = vand.u32 2147483647, %v2807
      %v2810 = vcvt.s32.f32 %v2803
      %v2811 = vmul.f32 %v2810, %v2808
      %v2812 = vxor.u32 %v2811, 2147483648
      %v2813 = vsel %vm2730, %v2812, %v2811
      %v2814 = vsub.s32 4, %v2790
      %v2815 = vsel %vm2730, %v2814, %v2790
      %v2816 = vsel %vm2729, %v590, %v2813
      %v2817 = vsel %vm2729, 0, %v2815
      %v2818 = vcosq.f32.pop %v2816
      %v2819 = vsinq.f32.pop %v2816
      %vm2820 = vweird.f32 %v590
      %v2821 = vadd.s32 %v2817, 3
      %v2822 = vand.u32 %v2821, 3
      %vm2823 = vcmp.lt.s32.totalorder %v2822, 2
      %vm2824 = vcmp.eq.s32.totalorder %v2822, 0
      %v2825 = vxor.u32 %v2819, 2147483648
      %v2826 = vsel %vm2824, %v2818, %v2825
      %vm2827 = vcmp.eq.s32.totalorder %v2822, 2
      %v2828 = vxor.u32 %v2818, 2147483648
      %v2829 = vsel %vm2827, %v2828, %v2819
      %v2830 = vsel %vm2823, %v2826, %v2829
      %v2831 = vsel %vm2820, nan, %v2830
      %v2832 = vand.u32 2147483647, %v595
      %vm2833 = vcmp.le.f32.partialorder %v2832, 0.7853982
      %vm2834 = vcmp.lt.s32.totalorder %v595, 0
      %v2835 = vand.u32 %v595, 2139095040
      %v2836 = vshrl.u32 %v2835, 23
      %v2837 = vsub.s32 %v2836, 127
      %v2838 = vand.u32 2147483647, %v595
      %v2839 = vand.u32 %v2838, 8388607
      %v2840 = vor.u32 %v2839, 8388608
      %v2841 = vsub.s32 0, %v2840
      %v2842 = vadd.s32 %v2837, 1
      %vm2843 = vcmp.gt.s32.totalorder %v2842, 0
      %v2844 = vsel %vm2843, %v2842, 0
      %v2845 = vshrl.u32 %v2844, 5
      %v2846 = vand.u32 %v2844, 31
      %v2847 = vsub.s32 32, %v2846
      %v2848 = vshrl.u32 683565275, %v2847
      %v2849 = vshll.u32 683565275, %v2846
      %v2850 = vshrl.u32 2475754826, %v2847
      %v2851 = vor.u32 %v2849, %v2850
      %v2852 = vshll.u32 2475754826, %v2846
      %v2853 = vshrl.u32 2131351028, %v2847
      %v2854 = vor.u32 %v2852, %v2853
      %v2855 = vshll.u32 2131351028, %v2846
      %v2856 = vshrl.u32 2102212464, %v2847
      %v2857 = vor.u32 %v2855, %v2856
      %v2858 = vshll.u32 2102212464, %v2846
      %v2859 = vshrl.u32 920167782, %v2847
      %v2860 = vor.u32 %v2858, %v2859
      %v2861 = vshll.u32 920167782, %v2846
      %v2862 = vshrl.u32 1326507024, %v2847
      %v2863 = vor.u32 %v2861, %v2862
      %vm2864 = vcmp.lt.s32.totalorder %v2845, 1
      %vm2865 = vcmp.lt.s32.totalorder %v2845, 2
      %vm2866 = vcmp.lt.s32.totalorder %v2845, 3
      %vm2867 = vcmp.lt.s32.totalorder %v2845, 4
      %v2868 = vsel %vm2864, %v2848, %v2851
      %v2869 = vsel %vm2867, %v2857, 2102212464
      %v2870 = vsel %vm2866, %v2854, %v2869
      %v2871 = vsel %vm2865, %v2868, %v2870
      %v2872 = vsel %vm2864, %v2851, %v2854
      %v2873 = vsel %vm2867, %v2860, 920167782
      %v2874 = vsel %vm2866, %v2857, %v2873
      %v2875 = vsel %vm2865, %v2872, %v2874
      %v2876 = vsel %vm2864, %v2854, %v2857
      %v2877 = vsel %vm2867, %v2863, 1326507024
      %v2878 = vsel %vm2866, %v2860, %v2877
      %v2879 = vsel %vm2865, %v2876, %v2878
      %v2880 = vshll.u32 %v2840, 8
      %v2881 = vmul.u32.u64.compose %v2880, %v2879
      %v2882 = vextract.low.u32 %v2881
      %v2883 = vextract.high.u32 %v2881
      %v2884 = vmul.u32.u64.compose %v2880, %v2875
      %v2885 = vextract.low.u32 %v2884
      %v2886 = vextract.high.u32 %v2884
      %v2887 = vmul.u32 %v2880, %v2871
      %v2888 = vadd.s32 %v2883, %v2885
      %vm2889 = vc.u32 %v2883, %v2885
      %v2890 = vadd.s32 %v2886, 1
      %v2891 = vsel %vm2889, %v2890, %v2886
      %v2892 = vadd.s32 %v2887, %v2891
      %v2893 = vadd.s32 %v2892, 536870912
      %v2894 = vshrl.u32 %v2893, 30
      %v2895 = vshll.u32 %v2894, 30
      %v2896 = vsub.s32 %v2892, %v2895
      %vm2897 = vcmp.lt.s32.totalorder %v2896, 0
      %v2898 = vsub.s32 0, %v2896
      %v2899 = vsel %vm2897, %v2898, %v2896
      %v2900 = vclz %v2899
      %v2901 = vsub.s32 %v2900, 2
      %vm2902 = vcmp.gt.s32.totalorder 0, %v2901
      %v2903 = vsel %vm2902, 0, %v2901
      %v2904 = vsub.s32 32, %v2903
      %v2905 = vshll.u32 %v2896, %v2903
      %v2906 = vshrl.u32 %v2888, %v2904
      %v2907 = vor.u32 %v2905, %v2906
      %v2908 = vsub.s32 4294967266, %v2903
      %v2909 = vadd.s32 %v2908, 127
      %v2910 = vshll.u32 %v2909, 23
      %v2911 = vor.u32 4788187, %v2910
      %v2912 = vand.u32 2147483647, %v2911
      %v2914 = vcvt.s32.f32 %v2907
      %v2915 = vmul.f32 %v2914, %v2912
      %v2916 = vxor.u32 %v2915, 2147483648
      %v2917 = vsel %vm2834, %v2916, %v2915
      %v2918 = vsub.s32 4, %v2894
      %v2919 = vsel %vm2834, %v2918, %v2894
      %v2920 = vsel %vm2833, %v595, %v2917
      %v2921 = vsel %vm2833, 0, %v2919
      %v2922 = vcosq.f32.pop %v2920
      %v2923 = vsinq.f32.pop %v2920
      %vm2924 = vweird.f32 %v595
      %v2925 = vadd.s32 %v2921, 3
      %v2926 = vand.u32 %v2925, 3
      %vm2927 = vcmp.lt.s32.totalorder %v2926, 2
      %vm2928 = vcmp.eq.s32.totalorder %v2926, 0
      %v2929 = vxor.u32 %v2923, 2147483648
      %v2930 = vsel %vm2928, %v2922, %v2929
      %vm2931 = vcmp.eq.s32.totalorder %v2926, 2
      %v2932 = vxor.u32 %v2922, 2147483648
      %v2933 = vsel %vm2931, %v2932, %v2923
      %v2934 = vsel %vm2927, %v2930, %v2933
      %v2935 = vsel %vm2924, nan, %v2934
      %v2936 = vand.u32 2147483647, %v600
      %vm2937 = vcmp.le.f32.partialorder %v2936, 0.7853982
      %vm2938 = vcmp.lt.s32.totalorder %v600, 0
      %v2939 = vand.u32 %v600, 2139095040
      %v2940 = vshrl.u32 %v2939, 23
      %v2941 = vsub.s32 %v2940, 127
      %v2942 = vand.u32 2147483647, %v600
      %v2943 = vand.u32 %v2942, 8388607
      %v2944 = vor.u32 %v2943, 8388608
      %v2945 = vsub.s32 0, %v2944
      %v2946 = vadd.s32 %v2941, 1
      %vm2947 = vcmp.gt.s32.totalorder %v2946, 0
      %v2948 = vsel %vm2947, %v2946, 0
      %v2949 = vshrl.u32 %v2948, 5
      %v2950 = vand.u32 %v2948, 31
      %v2951 = vsub.s32 32, %v2950
      %v2952 = vshrl.u32 683565275, %v2951
      %v2953 = vshll.u32 683565275, %v2950
      %v2954 = vshrl.u32 2475754826, %v2951
      %v2955 = vor.u32 %v2953, %v2954
      %v2956 = vshll.u32 2475754826, %v2950
      %v2957 = vshrl.u32 2131351028, %v2951
      %v2958 = vor.u32 %v2956, %v2957
      %v2959 = vshll.u32 2131351028, %v2950
      %v2960 = vshrl.u32 2102212464, %v2951
      %v2961 = vor.u32 %v2959, %v2960
      %v2962 = vshll.u32 2102212464, %v2950
      %v2963 = vshrl.u32 920167782, %v2951
      %v2964 = vor.u32 %v2962, %v2963
      %v2965 = vshll.u32 920167782, %v2950
      %v2966 = vshrl.u32 1326507024, %v2951
      %v2967 = vor.u32 %v2965, %v2966
      %vm2968 = vcmp.lt.s32.totalorder %v2949, 1
      %vm2969 = vcmp.lt.s32.totalorder %v2949, 2
      %vm2970 = vcmp.lt.s32.totalorder %v2949, 3
      %vm2971 = vcmp.lt.s32.totalorder %v2949, 4
      %v2972 = vsel %vm2968, %v2952, %v2955
      %v2973 = vsel %vm2971, %v2961, 2102212464
      %v2974 = vsel %vm2970, %v2958, %v2973
      %v2975 = vsel %vm2969, %v2972, %v2974
      %v2976 = vsel %vm2968, %v2955, %v2958
      %v2977 = vsel %vm2971, %v2964, 920167782
      %v2978 = vsel %vm2970, %v2961, %v2977
      %v2979 = vsel %vm2969, %v2976, %v2978
      %v2980 = vsel %vm2968, %v2958, %v2961
      %v2981 = vsel %vm2971, %v2967, 1326507024
      %v2982 = vsel %vm2970, %v2964, %v2981
      %v2983 = vsel %vm2969, %v2980, %v2982
      %v2984 = vshll.u32 %v2944, 8
      %v2985 = vmul.u32.u64.compose %v2984, %v2983
      %v2986 = vextract.low.u32 %v2985
      %v2987 = vextract.high.u32 %v2985
      %v2988 = vmul.u32.u64.compose %v2984, %v2979
      %v2989 = vextract.low.u32 %v2988
      %v2990 = vextract.high.u32 %v2988
      %v2991 = vmul.u32 %v2984, %v2975
      %v2992 = vadd.s32 %v2987, %v2989
      %vm2993 = vc.u32 %v2987, %v2989
      %v2994 = vadd.s32 %v2990, 1
      %v2995 = vsel %vm2993, %v2994, %v2990
      %v2996 = vadd.s32 %v2991, %v2995
      %v2997 = vadd.s32 %v2996, 536870912
      %v2998 = vshrl.u32 %v2997, 30
      %v2999 = vshll.u32 %v2998, 30
      %v3000 = vsub.s32 %v2996, %v2999
      %vm3001 = vcmp.lt.s32.totalorder %v3000, 0
      %v3002 = vsub.s32 0, %v3000
      %v3003 = vsel %vm3001, %v3002, %v3000
      %v3004 = vclz %v3003
      %v3005 = vsub.s32 %v3004, 2
      %vm3006 = vcmp.gt.s32.totalorder 0, %v3005
      %v3007 = vsel %vm3006, 0, %v3005
      %v3008 = vsub.s32 32, %v3007
      %v3009 = vshll.u32 %v3000, %v3007
      %v3010 = vshrl.u32 %v2992, %v3008
      %v3011 = vor.u32 %v3009, %v3010
      %v3012 = vsub.s32 4294967266, %v3007
      %v3013 = vadd.s32 %v3012, 127
      %v3014 = vshll.u32 %v3013, 23
      %v3015 = vor.u32 4788187, %v3014
      %v3016 = vand.u32 2147483647, %v3015
      %v3018 = vcvt.s32.f32 %v3011
      %v3019 = vmul.f32 %v3018, %v3016
      %v3020 = vxor.u32 %v3019, 2147483648
      %v3021 = vsel %vm2938, %v3020, %v3019
      %v3022 = vsub.s32 4, %v2998
      %v3023 = vsel %vm2938, %v3022, %v2998
      %v3024 = vsel %vm2937, %v600, %v3021
      %v3025 = vsel %vm2937, 0, %v3023
      %v3026 = vcosq.f32.pop %v3024
      %v3027 = vsinq.f32.pop %v3024
      %vm3028 = vweird.f32 %v600
      %v3029 = vadd.s32 %v3025, 3
      %v3030 = vand.u32 %v3029, 3
      %vm3031 = vcmp.lt.s32.totalorder %v3030, 2
      %vm3032 = vcmp.eq.s32.totalorder %v3030, 0
      %v3033 = vxor.u32 %v3027, 2147483648
      %v3034 = vsel %vm3032, %v3026, %v3033
      %vm3035 = vcmp.eq.s32.totalorder %v3030, 2
      %v3036 = vxor.u32 %v3026, 2147483648
      %v3037 = vsel %vm3035, %v3036, %v3027
      %v3038 = vsel %vm3031, %v3034, %v3037
      %v3039 = vsel %vm3028, nan, %v3038
      %v3040 = vand.u32 2147483647, %v605
      %vm3041 = vcmp.le.f32.partialorder %v3040, 0.7853982
      %vm3042 = vcmp.lt.s32.totalorder %v605, 0
      %v3043 = vand.u32 %v605, 2139095040
      %v3044 = vshrl.u32 %v3043, 23
      %v3045 = vsub.s32 %v3044, 127
      %v3046 = vand.u32 2147483647, %v605
      %v3047 = vand.u32 %v3046, 8388607
      %v3048 = vor.u32 %v3047, 8388608
      %v3049 = vsub.s32 0, %v3048
      %v3050 = vadd.s32 %v3045, 1
      %vm3051 = vcmp.gt.s32.totalorder %v3050, 0
      %v3052 = vsel %vm3051, %v3050, 0
      %v3053 = vshrl.u32 %v3052, 5
      %v3054 = vand.u32 %v3052, 31
      %v3055 = vsub.s32 32, %v3054
      %v3056 = vshrl.u32 683565275, %v3055
      %v3057 = vshll.u32 683565275, %v3054
      %v3058 = vshrl.u32 2475754826, %v3055
      %v3059 = vor.u32 %v3057, %v3058
      %v3060 = vshll.u32 2475754826, %v3054
      %v3061 = vshrl.u32 2131351028, %v3055
      %v3062 = vor.u32 %v3060, %v3061
      %v3063 = vshll.u32 2131351028, %v3054
      %v3064 = vshrl.u32 2102212464, %v3055
      %v3065 = vor.u32 %v3063, %v3064
      %v3066 = vshll.u32 2102212464, %v3054
      %v3067 = vshrl.u32 920167782, %v3055
      %v3068 = vor.u32 %v3066, %v3067
      %v3069 = vshll.u32 920167782, %v3054
      %v3070 = vshrl.u32 1326507024, %v3055
      %v3071 = vor.u32 %v3069, %v3070
      %vm3072 = vcmp.lt.s32.totalorder %v3053, 1
      %vm3073 = vcmp.lt.s32.totalorder %v3053, 2
      %vm3074 = vcmp.lt.s32.totalorder %v3053, 3
      %vm3075 = vcmp.lt.s32.totalorder %v3053, 4
      %v3076 = vsel %vm3072, %v3056, %v3059
      %v3077 = vsel %vm3075, %v3065, 2102212464
      %v3078 = vsel %vm3074, %v3062, %v3077
      %v3079 = vsel %vm3073, %v3076, %v3078
      %v3080 = vsel %vm3072, %v3059, %v3062
      %v3081 = vsel %vm3075, %v3068, 920167782
      %v3082 = vsel %vm3074, %v3065, %v3081
      %v3083 = vsel %vm3073, %v3080, %v3082
      %v3084 = vsel %vm3072, %v3062, %v3065
      %v3085 = vsel %vm3075, %v3071, 1326507024
      %v3086 = vsel %vm3074, %v3068, %v3085
      %v3087 = vsel %vm3073, %v3084, %v3086
      %v3088 = vshll.u32 %v3048, 8
      %v3089 = vmul.u32.u64.compose %v3088, %v3087
      %v3090 = vextract.low.u32 %v3089
      %v3091 = vextract.high.u32 %v3089
      %v3092 = vmul.u32.u64.compose %v3088, %v3083
      %v3093 = vextract.low.u32 %v3092
      %v3094 = vextract.high.u32 %v3092
      %v3095 = vmul.u32 %v3088, %v3079
      %v3096 = vadd.s32 %v3091, %v3093
      %vm3097 = vc.u32 %v3091, %v3093
      %v3098 = vadd.s32 %v3094, 1
      %v3099 = vsel %vm3097, %v3098, %v3094
      %v3100 = vadd.s32 %v3095, %v3099
      %v3101 = vadd.s32 %v3100, 536870912
      %v3102 = vshrl.u32 %v3101, 30
      %v3103 = vshll.u32 %v3102, 30
      %v3104 = vsub.s32 %v3100, %v3103
      %vm3105 = vcmp.lt.s32.totalorder %v3104, 0
      %v3106 = vsub.s32 0, %v3104
      %v3107 = vsel %vm3105, %v3106, %v3104
      %v3108 = vclz %v3107
      %v3109 = vsub.s32 %v3108, 2
      %vm3110 = vcmp.gt.s32.totalorder 0, %v3109
      %v3111 = vsel %vm3110, 0, %v3109
      %v3112 = vsub.s32 32, %v3111
      %v3113 = vshll.u32 %v3104, %v3111
      %v3114 = vshrl.u32 %v3096, %v3112
      %v3115 = vor.u32 %v3113, %v3114
      %v3116 = vsub.s32 4294967266, %v3111
      %v3117 = vadd.s32 %v3116, 127
      %v3118 = vshll.u32 %v3117, 23
      %v3119 = vor.u32 4788187, %v3118
      %v3120 = vand.u32 2147483647, %v3119
      %v3122 = vcvt.s32.f32 %v3115
      %v3123 = vmul.f32 %v3122, %v3120
      %v3124 = vxor.u32 %v3123, 2147483648
      %v3125 = vsel %vm3042, %v3124, %v3123
      %v3126 = vsub.s32 4, %v3102
      %v3127 = vsel %vm3042, %v3126, %v3102
      %v3128 = vsel %vm3041, %v605, %v3125
      %v3129 = vsel %vm3041, 0, %v3127
      %v3130 = vcosq.f32.pop %v3128
      %v3131 = vsinq.f32.pop %v3128
      %vm3132 = vweird.f32 %v605
      %v3133 = vadd.s32 %v3129, 3
      %v3134 = vand.u32 %v3133, 3
      %vm3135 = vcmp.lt.s32.totalorder %v3134, 2
      %vm3136 = vcmp.eq.s32.totalorder %v3134, 0
      %v3137 = vxor.u32 %v3131, 2147483648
      %v3138 = vsel %vm3136, %v3130, %v3137
      %vm3139 = vcmp.eq.s32.totalorder %v3134, 2
      %v3140 = vxor.u32 %v3130, 2147483648
      %v3141 = vsel %vm3139, %v3140, %v3131
      %v3142 = vsel %vm3135, %v3138, %v3141
      %v3143 = vsel %vm3132, nan, %v3142
      %v3144 = vand.u32 2147483647, %v610
      %vm3145 = vcmp.le.f32.partialorder %v3144, 0.7853982
      %vm3146 = vcmp.lt.s32.totalorder %v610, 0
      %v3147 = vand.u32 %v610, 2139095040
      %v3148 = vshrl.u32 %v3147, 23
      %v3149 = vsub.s32 %v3148, 127
      %v3150 = vand.u32 2147483647, %v610
      %v3151 = vand.u32 %v3150, 8388607
      %v3152 = vor.u32 %v3151, 8388608
      %v3153 = vsub.s32 0, %v3152
      %v3154 = vadd.s32 %v3149, 1
      %vm3155 = vcmp.gt.s32.totalorder %v3154, 0
      %v3156 = vsel %vm3155, %v3154, 0
      %v3157 = vshrl.u32 %v3156, 5
      %v3158 = vand.u32 %v3156, 31
      %v3159 = vsub.s32 32, %v3158
      %v3160 = vshrl.u32 683565275, %v3159
      %v3161 = vshll.u32 683565275, %v3158
      %v3162 = vshrl.u32 2475754826, %v3159
      %v3163 = vor.u32 %v3161, %v3162
      %v3164 = vshll.u32 2475754826, %v3158
      %v3165 = vshrl.u32 2131351028, %v3159
      %v3166 = vor.u32 %v3164, %v3165
      %v3167 = vshll.u32 2131351028, %v3158
      %v3168 = vshrl.u32 2102212464, %v3159
      %v3169 = vor.u32 %v3167, %v3168
      %v3170 = vshll.u32 2102212464, %v3158
      %v3171 = vshrl.u32 920167782, %v3159
      %v3172 = vor.u32 %v3170, %v3171
      %v3173 = vshll.u32 920167782, %v3158
      %v3174 = vshrl.u32 1326507024, %v3159
      %v3175 = vor.u32 %v3173, %v3174
      %vm3176 = vcmp.lt.s32.totalorder %v3157, 1
      %vm3177 = vcmp.lt.s32.totalorder %v3157, 2
      %vm3178 = vcmp.lt.s32.totalorder %v3157, 3
      %vm3179 = vcmp.lt.s32.totalorder %v3157, 4
      %v3180 = vsel %vm3176, %v3160, %v3163
      %v3181 = vsel %vm3179, %v3169, 2102212464
      %v3182 = vsel %vm3178, %v3166, %v3181
      %v3183 = vsel %vm3177, %v3180, %v3182
      %v3184 = vsel %vm3176, %v3163, %v3166
      %v3185 = vsel %vm3179, %v3172, 920167782
      %v3186 = vsel %vm3178, %v3169, %v3185
      %v3187 = vsel %vm3177, %v3184, %v3186
      %v3188 = vsel %vm3176, %v3166, %v3169
      %v3189 = vsel %vm3179, %v3175, 1326507024
      %v3190 = vsel %vm3178, %v3172, %v3189
      %v3191 = vsel %vm3177, %v3188, %v3190
      %v3192 = vshll.u32 %v3152, 8
      %v3193 = vmul.u32.u64.compose %v3192, %v3191
      %v3194 = vextract.low.u32 %v3193
      %v3195 = vextract.high.u32 %v3193
      %v3196 = vmul.u32.u64.compose %v3192, %v3187
      %v3197 = vextract.low.u32 %v3196
      %v3198 = vextract.high.u32 %v3196
      %v3199 = vmul.u32 %v3192, %v3183
      %v3200 = vadd.s32 %v3195, %v3197
      %vm3201 = vc.u32 %v3195, %v3197
      %v3202 = vadd.s32 %v3198, 1
      %v3203 = vsel %vm3201, %v3202, %v3198
      %v3204 = vadd.s32 %v3199, %v3203
      %v3205 = vadd.s32 %v3204, 536870912
      %v3206 = vshrl.u32 %v3205, 30
      %v3207 = vshll.u32 %v3206, 30
      %v3208 = vsub.s32 %v3204, %v3207
      %vm3209 = vcmp.lt.s32.totalorder %v3208, 0
      %v3210 = vsub.s32 0, %v3208
      %v3211 = vsel %vm3209, %v3210, %v3208
      %v3212 = vclz %v3211
      %v3213 = vsub.s32 %v3212, 2
      %vm3214 = vcmp.gt.s32.totalorder 0, %v3213
      %v3215 = vsel %vm3214, 0, %v3213
      %v3216 = vsub.s32 32, %v3215
      %v3217 = vshll.u32 %v3208, %v3215
      %v3218 = vshrl.u32 %v3200, %v3216
      %v3219 = vor.u32 %v3217, %v3218
      %v3220 = vsub.s32 4294967266, %v3215
      %v3221 = vadd.s32 %v3220, 127
      %v3222 = vshll.u32 %v3221, 23
      %v3223 = vor.u32 4788187, %v3222
      %v3224 = vand.u32 2147483647, %v3223
      %v3226 = vcvt.s32.f32 %v3219
      %v3227 = vmul.f32 %v3226, %v3224
      %v3228 = vxor.u32 %v3227, 2147483648
      %v3229 = vsel %vm3146, %v3228, %v3227
      %v3230 = vsub.s32 4, %v3206
      %v3231 = vsel %vm3146, %v3230, %v3206
      %v3232 = vsel %vm3145, %v610, %v3229
      %v3233 = vsel %vm3145, 0, %v3231
      %v3234 = vcosq.f32.pop %v3232
      %v3235 = vsinq.f32.pop %v3232
      %vm3236 = vweird.f32 %v610
      %v3237 = vadd.s32 %v3233, 3
      %v3238 = vand.u32 %v3237, 3
      %vm3239 = vcmp.lt.s32.totalorder %v3238, 2
      %vm3240 = vcmp.eq.s32.totalorder %v3238, 0
      %v3241 = vxor.u32 %v3235, 2147483648
      %v3242 = vsel %vm3240, %v3234, %v3241
      %vm3243 = vcmp.eq.s32.totalorder %v3238, 2
      %v3244 = vxor.u32 %v3234, 2147483648
      %v3245 = vsel %vm3243, %v3244, %v3235
      %v3246 = vsel %vm3239, %v3242, %v3245
      %v3247 = vsel %vm3236, nan, %v3246
      %v3248 = vand.u32 2147483647, %v615
      %vm3249 = vcmp.le.f32.partialorder %v3248, 0.7853982
      %vm3250 = vcmp.lt.s32.totalorder %v615, 0
      %v3251 = vand.u32 %v615, 2139095040
      %v3252 = vshrl.u32 %v3251, 23
      %v3253 = vsub.s32 %v3252, 127
      %v3254 = vand.u32 2147483647, %v615
      %v3255 = vand.u32 %v3254, 8388607
      %v3256 = vor.u32 %v3255, 8388608
      %v3257 = vsub.s32 0, %v3256
      %v3258 = vadd.s32 %v3253, 1
      %vm3259 = vcmp.gt.s32.totalorder %v3258, 0
      %v3260 = vsel %vm3259, %v3258, 0
      %v3261 = vshrl.u32 %v3260, 5
      %v3262 = vand.u32 %v3260, 31
      %v3263 = vsub.s32 32, %v3262
      %v3264 = vshrl.u32 683565275, %v3263
      %v3265 = vshll.u32 683565275, %v3262
      %v3266 = vshrl.u32 2475754826, %v3263
      %v3267 = vor.u32 %v3265, %v3266
      %v3268 = vshll.u32 2475754826, %v3262
      %v3269 = vshrl.u32 2131351028, %v3263
      %v3270 = vor.u32 %v3268, %v3269
      %v3271 = vshll.u32 2131351028, %v3262
      %v3272 = vshrl.u32 2102212464, %v3263
      %v3273 = vor.u32 %v3271, %v3272
      %v3274 = vshll.u32 2102212464, %v3262
      %v3275 = vshrl.u32 920167782, %v3263
      %v3276 = vor.u32 %v3274, %v3275
      %v3277 = vshll.u32 920167782, %v3262
      %v3278 = vshrl.u32 1326507024, %v3263
      %v3279 = vor.u32 %v3277, %v3278
      %vm3280 = vcmp.lt.s32.totalorder %v3261, 1
      %vm3281 = vcmp.lt.s32.totalorder %v3261, 2
      %vm3282 = vcmp.lt.s32.totalorder %v3261, 3
      %vm3283 = vcmp.lt.s32.totalorder %v3261, 4
      %v3284 = vsel %vm3280, %v3264, %v3267
      %v3285 = vsel %vm3283, %v3273, 2102212464
      %v3286 = vsel %vm3282, %v3270, %v3285
      %v3287 = vsel %vm3281, %v3284, %v3286
      %v3288 = vsel %vm3280, %v3267, %v3270
      %v3289 = vsel %vm3283, %v3276, 920167782
      %v3290 = vsel %vm3282, %v3273, %v3289
      %v3291 = vsel %vm3281, %v3288, %v3290
      %v3292 = vsel %vm3280, %v3270, %v3273
      %v3293 = vsel %vm3283, %v3279, 1326507024
      %v3294 = vsel %vm3282, %v3276, %v3293
      %v3295 = vsel %vm3281, %v3292, %v3294
      %v3296 = vshll.u32 %v3256, 8
      %v3297 = vmul.u32.u64.compose %v3296, %v3295
      %v3298 = vextract.low.u32 %v3297
      %v3299 = vextract.high.u32 %v3297
      %v3300 = vmul.u32.u64.compose %v3296, %v3291
      %v3301 = vextract.low.u32 %v3300
      %v3302 = vextract.high.u32 %v3300
      %v3303 = vmul.u32 %v3296, %v3287
      %v3304 = vadd.s32 %v3299, %v3301
      %vm3305 = vc.u32 %v3299, %v3301
      %v3306 = vadd.s32 %v3302, 1
      %v3307 = vsel %vm3305, %v3306, %v3302
      %v3308 = vadd.s32 %v3303, %v3307
      %v3309 = vadd.s32 %v3308, 536870912
      %v3310 = vshrl.u32 %v3309, 30
      %v3311 = vshll.u32 %v3310, 30
      %v3312 = vsub.s32 %v3308, %v3311
      %vm3313 = vcmp.lt.s32.totalorder %v3312, 0
      %v3314 = vsub.s32 0, %v3312
      %v3315 = vsel %vm3313, %v3314, %v3312
      %v3316 = vclz %v3315
      %v3317 = vsub.s32 %v3316, 2
      %vm3318 = vcmp.gt.s32.totalorder 0, %v3317
      %v3319 = vsel %vm3318, 0, %v3317
      %v3320 = vsub.s32 32, %v3319
      %v3321 = vshll.u32 %v3312, %v3319
      %v3322 = vshrl.u32 %v3304, %v3320
      %v3323 = vor.u32 %v3321, %v3322
      %v3324 = vsub.s32 4294967266, %v3319
      %v3325 = vadd.s32 %v3324, 127
      %v3326 = vshll.u32 %v3325, 23
      %v3327 = vor.u32 4788187, %v3326
      %v3328 = vand.u32 2147483647, %v3327
      %v3330 = vcvt.s32.f32 %v3323
      %v3331 = vmul.f32 %v3330, %v3328
      %v3332 = vxor.u32 %v3331, 2147483648
      %v3333 = vsel %vm3250, %v3332, %v3331
      %v3334 = vsub.s32 4, %v3310
      %v3335 = vsel %vm3250, %v3334, %v3310
      %v3336 = vsel %vm3249, %v615, %v3333
      %v3337 = vsel %vm3249, 0, %v3335
      %v3338 = vcosq.f32.pop %v3336
      %v3339 = vsinq.f32.pop %v3336
      %vm3340 = vweird.f32 %v615
      %v3341 = vadd.s32 %v3337, 3
      %v3342 = vand.u32 %v3341, 3
      %vm3343 = vcmp.lt.s32.totalorder %v3342, 2
      %vm3344 = vcmp.eq.s32.totalorder %v3342, 0
      %v3345 = vxor.u32 %v3339, 2147483648
      %v3346 = vsel %vm3344, %v3338, %v3345
      %vm3347 = vcmp.eq.s32.totalorder %v3342, 2
      %v3348 = vxor.u32 %v3338, 2147483648
      %v3349 = vsel %vm3347, %v3348, %v3339
      %v3350 = vsel %vm3343, %v3346, %v3349
      %v3351 = vsel %vm3340, nan, %v3350
      %v3352 = vand.u32 2147483647, %v620
      %vm3353 = vcmp.le.f32.partialorder %v3352, 0.7853982
      %vm3354 = vcmp.lt.s32.totalorder %v620, 0
      %v3355 = vand.u32 %v620, 2139095040
      %v3356 = vshrl.u32 %v3355, 23
      %v3357 = vsub.s32 %v3356, 127
      %v3358 = vand.u32 2147483647, %v620
      %v3359 = vand.u32 %v3358, 8388607
      %v3360 = vor.u32 %v3359, 8388608
      %v3361 = vsub.s32 0, %v3360
      %v3362 = vadd.s32 %v3357, 1
      %vm3363 = vcmp.gt.s32.totalorder %v3362, 0
      %v3364 = vsel %vm3363, %v3362, 0
      %v3365 = vshrl.u32 %v3364, 5
      %v3366 = vand.u32 %v3364, 31
      %v3367 = vsub.s32 32, %v3366
      %v3368 = vshrl.u32 683565275, %v3367
      %v3369 = vshll.u32 683565275, %v3366
      %v3370 = vshrl.u32 2475754826, %v3367
      %v3371 = vor.u32 %v3369, %v3370
      %v3372 = vshll.u32 2475754826, %v3366
      %v3373 = vshrl.u32 2131351028, %v3367
      %v3374 = vor.u32 %v3372, %v3373
      %v3375 = vshll.u32 2131351028, %v3366
      %v3376 = vshrl.u32 2102212464, %v3367
      %v3377 = vor.u32 %v3375, %v3376
      %v3378 = vshll.u32 2102212464, %v3366
      %v3379 = vshrl.u32 920167782, %v3367
      %v3380 = vor.u32 %v3378, %v3379
      %v3381 = vshll.u32 920167782, %v3366
      %v3382 = vshrl.u32 1326507024, %v3367
      %v3383 = vor.u32 %v3381, %v3382
      %vm3384 = vcmp.lt.s32.totalorder %v3365, 1
      %vm3385 = vcmp.lt.s32.totalorder %v3365, 2
      %vm3386 = vcmp.lt.s32.totalorder %v3365, 3
      %vm3387 = vcmp.lt.s32.totalorder %v3365, 4
      %v3388 = vsel %vm3384, %v3368, %v3371
      %v3389 = vsel %vm3387, %v3377, 2102212464
      %v3390 = vsel %vm3386, %v3374, %v3389
      %v3391 = vsel %vm3385, %v3388, %v3390
      %v3392 = vsel %vm3384, %v3371, %v3374
      %v3393 = vsel %vm3387, %v3380, 920167782
      %v3394 = vsel %vm3386, %v3377, %v3393
      %v3395 = vsel %vm3385, %v3392, %v3394
      %v3396 = vsel %vm3384, %v3374, %v3377
      %v3397 = vsel %vm3387, %v3383, 1326507024
      %v3398 = vsel %vm3386, %v3380, %v3397
      %v3399 = vsel %vm3385, %v3396, %v3398
      %v3400 = vshll.u32 %v3360, 8
      %v3401 = vmul.u32.u64.compose %v3400, %v3399
      %v3402 = vextract.low.u32 %v3401
      %v3403 = vextract.high.u32 %v3401
      %v3404 = vmul.u32.u64.compose %v3400, %v3395
      %v3405 = vextract.low.u32 %v3404
      %v3406 = vextract.high.u32 %v3404
      %v3407 = vmul.u32 %v3400, %v3391
      %v3408 = vadd.s32 %v3403, %v3405
      %vm3409 = vc.u32 %v3403, %v3405
      %v3410 = vadd.s32 %v3406, 1
      %v3411 = vsel %vm3409, %v3410, %v3406
      %v3412 = vadd.s32 %v3407, %v3411
      %v3413 = vadd.s32 %v3412, 536870912
      %v3414 = vshrl.u32 %v3413, 30
      %v3415 = vshll.u32 %v3414, 30
      %v3416 = vsub.s32 %v3412, %v3415
      %vm3417 = vcmp.lt.s32.totalorder %v3416, 0
      %v3418 = vsub.s32 0, %v3416
      %v3419 = vsel %vm3417, %v3418, %v3416
      %v3420 = vclz %v3419
      %v3421 = vsub.s32 %v3420, 2
      %vm3422 = vcmp.gt.s32.totalorder 0, %v3421
      %v3423 = vsel %vm3422, 0, %v3421
      %v3424 = vsub.s32 32, %v3423
      %v3425 = vshll.u32 %v3416, %v3423
      %v3426 = vshrl.u32 %v3408, %v3424
      %v3427 = vor.u32 %v3425, %v3426
      %v3428 = vsub.s32 4294967266, %v3423
      %v3429 = vadd.s32 %v3428, 127
      %v3430 = vshll.u32 %v3429, 23
      %v3431 = vor.u32 4788187, %v3430
      %v3432 = vand.u32 2147483647, %v3431
      %v3434 = vcvt.s32.f32 %v3427
      %v3435 = vmul.f32 %v3434, %v3432
      %v3436 = vxor.u32 %v3435, 2147483648
      %v3437 = vsel %vm3354, %v3436, %v3435
      %v3438 = vsub.s32 4, %v3414
      %v3439 = vsel %vm3354, %v3438, %v3414
      %v3440 = vsel %vm3353, %v620, %v3437
      %v3441 = vsel %vm3353, 0, %v3439
      %v3442 = vcosq.f32.pop %v3440
      %v3443 = vsinq.f32.pop %v3440
      %vm3444 = vweird.f32 %v620
      %v3445 = vadd.s32 %v3441, 3
      %v3446 = vand.u32 %v3445, 3
      %vm3447 = vcmp.lt.s32.totalorder %v3446, 2
      %vm3448 = vcmp.eq.s32.totalorder %v3446, 0
      %v3449 = vxor.u32 %v3443, 2147483648
      %v3450 = vsel %vm3448, %v3442, %v3449
      %vm3451 = vcmp.eq.s32.totalorder %v3446, 2
      %v3452 = vxor.u32 %v3442, 2147483648
      %v3453 = vsel %vm3451, %v3452, %v3443
      %v3454 = vsel %vm3447, %v3450, %v3453
      %v3455 = vsel %vm3444, nan, %v3454
      %v3456 = vand.u32 2147483647, %v625
      %vm3457 = vcmp.le.f32.partialorder %v3456, 0.7853982
      %vm3458 = vcmp.lt.s32.totalorder %v625, 0
      %v3459 = vand.u32 %v625, 2139095040
      %v3460 = vshrl.u32 %v3459, 23
      %v3461 = vsub.s32 %v3460, 127
      %v3462 = vand.u32 2147483647, %v625
      %v3463 = vand.u32 %v3462, 8388607
      %v3464 = vor.u32 %v3463, 8388608
      %v3465 = vsub.s32 0, %v3464
      %v3466 = vadd.s32 %v3461, 1
      %vm3467 = vcmp.gt.s32.totalorder %v3466, 0
      %v3468 = vsel %vm3467, %v3466, 0
      %v3469 = vshrl.u32 %v3468, 5
      %v3470 = vand.u32 %v3468, 31
      %v3471 = vsub.s32 32, %v3470
      %v3472 = vshrl.u32 683565275, %v3471
      %v3473 = vshll.u32 683565275, %v3470
      %v3474 = vshrl.u32 2475754826, %v3471
      %v3475 = vor.u32 %v3473, %v3474
      %v3476 = vshll.u32 2475754826, %v3470
      %v3477 = vshrl.u32 2131351028, %v3471
      %v3478 = vor.u32 %v3476, %v3477
      %v3479 = vshll.u32 2131351028, %v3470
      %v3480 = vshrl.u32 2102212464, %v3471
      %v3481 = vor.u32 %v3479, %v3480
      %v3482 = vshll.u32 2102212464, %v3470
      %v3483 = vshrl.u32 920167782, %v3471
      %v3484 = vor.u32 %v3482, %v3483
      %v3485 = vshll.u32 920167782, %v3470
      %v3486 = vshrl.u32 1326507024, %v3471
      %v3487 = vor.u32 %v3485, %v3486
      %vm3488 = vcmp.lt.s32.totalorder %v3469, 1
      %vm3489 = vcmp.lt.s32.totalorder %v3469, 2
      %vm3490 = vcmp.lt.s32.totalorder %v3469, 3
      %vm3491 = vcmp.lt.s32.totalorder %v3469, 4
      %v3492 = vsel %vm3488, %v3472, %v3475
      %v3493 = vsel %vm3491, %v3481, 2102212464
      %v3494 = vsel %vm3490, %v3478, %v3493
      %v3495 = vsel %vm3489, %v3492, %v3494
      %v3496 = vsel %vm3488, %v3475, %v3478
      %v3497 = vsel %vm3491, %v3484, 920167782
      %v3498 = vsel %vm3490, %v3481, %v3497
      %v3499 = vsel %vm3489, %v3496, %v3498
      %v3500 = vsel %vm3488, %v3478, %v3481
      %v3501 = vsel %vm3491, %v3487, 1326507024
      %v3502 = vsel %vm3490, %v3484, %v3501
      %v3503 = vsel %vm3489, %v3500, %v3502
      %v3504 = vshll.u32 %v3464, 8
      %v3505 = vmul.u32.u64.compose %v3504, %v3503
      %v3506 = vextract.low.u32 %v3505
      %v3507 = vextract.high.u32 %v3505
      %v3508 = vmul.u32.u64.compose %v3504, %v3499
      %v3509 = vextract.low.u32 %v3508
      %v3510 = vextract.high.u32 %v3508
      %v3511 = vmul.u32 %v3504, %v3495
      %v3512 = vadd.s32 %v3507, %v3509
      %vm3513 = vc.u32 %v3507, %v3509
      %v3514 = vadd.s32 %v3510, 1
      %v3515 = vsel %vm3513, %v3514, %v3510
      %v3516 = vadd.s32 %v3511, %v3515
      %v3517 = vadd.s32 %v3516, 536870912
      %v3518 = vshrl.u32 %v3517, 30
      %v3519 = vshll.u32 %v3518, 30
      %v3520 = vsub.s32 %v3516, %v3519
      %vm3521 = vcmp.lt.s32.totalorder %v3520, 0
      %v3522 = vsub.s32 0, %v3520
      %v3523 = vsel %vm3521, %v3522, %v3520
      %v3524 = vclz %v3523
      %v3525 = vsub.s32 %v3524, 2
      %vm3526 = vcmp.gt.s32.totalorder 0, %v3525
      %v3527 = vsel %vm3526, 0, %v3525
      %v3528 = vsub.s32 32, %v3527
      %v3529 = vshll.u32 %v3520, %v3527
      %v3530 = vshrl.u32 %v3512, %v3528
      %v3531 = vor.u32 %v3529, %v3530
      %v3532 = vsub.s32 4294967266, %v3527
      %v3533 = vadd.s32 %v3532, 127
      %v3534 = vshll.u32 %v3533, 23
      %v3535 = vor.u32 4788187, %v3534
      %v3536 = vand.u32 2147483647, %v3535
      %v3538 = vcvt.s32.f32 %v3531
      %v3539 = vmul.f32 %v3538, %v3536
      %v3540 = vxor.u32 %v3539, 2147483648
      %v3541 = vsel %vm3458, %v3540, %v3539
      %v3542 = vsub.s32 4, %v3518
      %v3543 = vsel %vm3458, %v3542, %v3518
      %v3544 = vsel %vm3457, %v625, %v3541
      %v3545 = vsel %vm3457, 0, %v3543
      %v3546 = vcosq.f32.pop %v3544
      %v3547 = vsinq.f32.pop %v3544
      %vm3548 = vweird.f32 %v625
      %v3549 = vadd.s32 %v3545, 3
      %v3550 = vand.u32 %v3549, 3
      %vm3551 = vcmp.lt.s32.totalorder %v3550, 2
      %vm3552 = vcmp.eq.s32.totalorder %v3550, 0
      %v3553 = vxor.u32 %v3547, 2147483648
      %v3554 = vsel %vm3552, %v3546, %v3553
      %vm3555 = vcmp.eq.s32.totalorder %v3550, 2
      %v3556 = vxor.u32 %v3546, 2147483648
      %v3557 = vsel %vm3555, %v3556, %v3547
      %v3558 = vsel %vm3551, %v3554, %v3557
      %v3559 = vsel %vm3548, nan, %v3558
      %v3560 = vand.u32 2147483647, %v630
      %vm3561 = vcmp.le.f32.partialorder %v3560, 0.7853982
      %vm3562 = vcmp.lt.s32.totalorder %v630, 0
      %v3563 = vand.u32 %v630, 2139095040
      %v3564 = vshrl.u32 %v3563, 23
      %v3565 = vsub.s32 %v3564, 127
      %v3566 = vand.u32 2147483647, %v630
      %v3567 = vand.u32 %v3566, 8388607
      %v3568 = vor.u32 %v3567, 8388608
      %v3569 = vsub.s32 0, %v3568
      %v3570 = vadd.s32 %v3565, 1
      %vm3571 = vcmp.gt.s32.totalorder %v3570, 0
      %v3572 = vsel %vm3571, %v3570, 0
      %v3573 = vshrl.u32 %v3572, 5
      %v3574 = vand.u32 %v3572, 31
      %v3575 = vsub.s32 32, %v3574
      %v3576 = vshrl.u32 683565275, %v3575
      %v3577 = vshll.u32 683565275, %v3574
      %v3578 = vshrl.u32 2475754826, %v3575
      %v3579 = vor.u32 %v3577, %v3578
      %v3580 = vshll.u32 2475754826, %v3574
      %v3581 = vshrl.u32 2131351028, %v3575
      %v3582 = vor.u32 %v3580, %v3581
      %v3583 = vshll.u32 2131351028, %v3574
      %v3584 = vshrl.u32 2102212464, %v3575
      %v3585 = vor.u32 %v3583, %v3584
      %v3586 = vshll.u32 2102212464, %v3574
      %v3587 = vshrl.u32 920167782, %v3575
      %v3588 = vor.u32 %v3586, %v3587
      %v3589 = vshll.u32 920167782, %v3574
      %v3590 = vshrl.u32 1326507024, %v3575
      %v3591 = vor.u32 %v3589, %v3590
      %vm3592 = vcmp.lt.s32.totalorder %v3573, 1
      %vm3593 = vcmp.lt.s32.totalorder %v3573, 2
      %vm3594 = vcmp.lt.s32.totalorder %v3573, 3
      %vm3595 = vcmp.lt.s32.totalorder %v3573, 4
      %v3596 = vsel %vm3592, %v3576, %v3579
      %v3597 = vsel %vm3595, %v3585, 2102212464
      %v3598 = vsel %vm3594, %v3582, %v3597
      %v3599 = vsel %vm3593, %v3596, %v3598
      %v3600 = vsel %vm3592, %v3579, %v3582
      %v3601 = vsel %vm3595, %v3588, 920167782
      %v3602 = vsel %vm3594, %v3585, %v3601
      %v3603 = vsel %vm3593, %v3600, %v3602
      %v3604 = vsel %vm3592, %v3582, %v3585
      %v3605 = vsel %vm3595, %v3591, 1326507024
      %v3606 = vsel %vm3594, %v3588, %v3605
      %v3607 = vsel %vm3593, %v3604, %v3606
      %v3608 = vshll.u32 %v3568, 8
      %v3609 = vmul.u32.u64.compose %v3608, %v3607
      %v3610 = vextract.low.u32 %v3609
      %v3611 = vextract.high.u32 %v3609
      %v3612 = vmul.u32.u64.compose %v3608, %v3603
      %v3613 = vextract.low.u32 %v3612
      %v3614 = vextract.high.u32 %v3612
      %v3615 = vmul.u32 %v3608, %v3599
      %v3616 = vadd.s32 %v3611, %v3613
      %vm3617 = vc.u32 %v3611, %v3613
      %v3618 = vadd.s32 %v3614, 1
      %v3619 = vsel %vm3617, %v3618, %v3614
      %v3620 = vadd.s32 %v3615, %v3619
      %v3621 = vadd.s32 %v3620, 536870912
      %v3622 = vshrl.u32 %v3621, 30
      %v3623 = vshll.u32 %v3622, 30
      %v3624 = vsub.s32 %v3620, %v3623
      %vm3625 = vcmp.lt.s32.totalorder %v3624, 0
      %v3626 = vsub.s32 0, %v3624
      %v3627 = vsel %vm3625, %v3626, %v3624
      %v3628 = vclz %v3627
      %v3629 = vsub.s32 %v3628, 2
      %vm3630 = vcmp.gt.s32.totalorder 0, %v3629
      %v3631 = vsel %vm3630, 0, %v3629
      %v3632 = vsub.s32 32, %v3631
      %v3633 = vshll.u32 %v3624, %v3631
      %v3634 = vshrl.u32 %v3616, %v3632
      %v3635 = vor.u32 %v3633, %v3634
      %v3636 = vsub.s32 4294967266, %v3631
      %v3637 = vadd.s32 %v3636, 127
      %v3638 = vshll.u32 %v3637, 23
      %v3639 = vor.u32 4788187, %v3638
      %v3640 = vand.u32 2147483647, %v3639
      %v3642 = vcvt.s32.f32 %v3635
      %v3643 = vmul.f32 %v3642, %v3640
      %v3644 = vxor.u32 %v3643, 2147483648
      %v3645 = vsel %vm3562, %v3644, %v3643
      %v3646 = vsub.s32 4, %v3622
      %v3647 = vsel %vm3562, %v3646, %v3622
      %v3648 = vsel %vm3561, %v630, %v3645
      %v3649 = vsel %vm3561, 0, %v3647
      %v3650 = vcosq.f32.pop %v3648
      %v3651 = vsinq.f32.pop %v3648
      %vm3652 = vweird.f32 %v630
      %v3653 = vadd.s32 %v3649, 3
      %v3654 = vand.u32 %v3653, 3
      %vm3655 = vcmp.lt.s32.totalorder %v3654, 2
      %vm3656 = vcmp.eq.s32.totalorder %v3654, 0
      %v3657 = vxor.u32 %v3651, 2147483648
      %v3658 = vsel %vm3656, %v3650, %v3657
      %vm3659 = vcmp.eq.s32.totalorder %v3654, 2
      %v3660 = vxor.u32 %v3650, 2147483648
      %v3661 = vsel %vm3659, %v3660, %v3651
      %v3662 = vsel %vm3655, %v3658, %v3661
      %v3663 = vsel %vm3652, nan, %v3662
      %v3664 = vand.u32 2147483647, %v635
      %vm3665 = vcmp.le.f32.partialorder %v3664, 0.7853982
      %vm3666 = vcmp.lt.s32.totalorder %v635, 0
      %v3667 = vand.u32 %v635, 2139095040
      %v3668 = vshrl.u32 %v3667, 23
      %v3669 = vsub.s32 %v3668, 127
      %v3670 = vand.u32 2147483647, %v635
      %v3671 = vand.u32 %v3670, 8388607
      %v3672 = vor.u32 %v3671, 8388608
      %v3673 = vsub.s32 0, %v3672
      %v3674 = vadd.s32 %v3669, 1
      %vm3675 = vcmp.gt.s32.totalorder %v3674, 0
      %v3676 = vsel %vm3675, %v3674, 0
      %v3677 = vshrl.u32 %v3676, 5
      %v3678 = vand.u32 %v3676, 31
      %v3679 = vsub.s32 32, %v3678
      %v3680 = vshrl.u32 683565275, %v3679
      %v3681 = vshll.u32 683565275, %v3678
      %v3682 = vshrl.u32 2475754826, %v3679
      %v3683 = vor.u32 %v3681, %v3682
      %v3684 = vshll.u32 2475754826, %v3678
      %v3685 = vshrl.u32 2131351028, %v3679
      %v3686 = vor.u32 %v3684, %v3685
      %v3687 = vshll.u32 2131351028, %v3678
      %v3688 = vshrl.u32 2102212464, %v3679
      %v3689 = vor.u32 %v3687, %v3688
      %v3690 = vshll.u32 2102212464, %v3678
      %v3691 = vshrl.u32 920167782, %v3679
      %v3692 = vor.u32 %v3690, %v3691
      %v3693 = vshll.u32 920167782, %v3678
      %v3694 = vshrl.u32 1326507024, %v3679
      %v3695 = vor.u32 %v3693, %v3694
      %vm3696 = vcmp.lt.s32.totalorder %v3677, 1
      %vm3697 = vcmp.lt.s32.totalorder %v3677, 2
      %vm3698 = vcmp.lt.s32.totalorder %v3677, 3
      %vm3699 = vcmp.lt.s32.totalorder %v3677, 4
      %v3700 = vsel %vm3696, %v3680, %v3683
      %v3701 = vsel %vm3699, %v3689, 2102212464
      %v3702 = vsel %vm3698, %v3686, %v3701
      %v3703 = vsel %vm3697, %v3700, %v3702
      %v3704 = vsel %vm3696, %v3683, %v3686
      %v3705 = vsel %vm3699, %v3692, 920167782
      %v3706 = vsel %vm3698, %v3689, %v3705
      %v3707 = vsel %vm3697, %v3704, %v3706
      %v3708 = vsel %vm3696, %v3686, %v3689
      %v3709 = vsel %vm3699, %v3695, 1326507024
      %v3710 = vsel %vm3698, %v3692, %v3709
      %v3711 = vsel %vm3697, %v3708, %v3710
      %v3712 = vshll.u32 %v3672, 8
      %v3713 = vmul.u32.u64.compose %v3712, %v3711
      %v3714 = vextract.low.u32 %v3713
      %v3715 = vextract.high.u32 %v3713
      %v3716 = vmul.u32.u64.compose %v3712, %v3707
      %v3717 = vextract.low.u32 %v3716
      %v3718 = vextract.high.u32 %v3716
      %v3719 = vmul.u32 %v3712, %v3703
      %v3720 = vadd.s32 %v3715, %v3717
      %vm3721 = vc.u32 %v3715, %v3717
      %v3722 = vadd.s32 %v3718, 1
      %v3723 = vsel %vm3721, %v3722, %v3718
      %v3724 = vadd.s32 %v3719, %v3723
      %v3725 = vadd.s32 %v3724, 536870912
      %v3726 = vshrl.u32 %v3725, 30
      %v3727 = vshll.u32 %v3726, 30
      %v3728 = vsub.s32 %v3724, %v3727
      %vm3729 = vcmp.lt.s32.totalorder %v3728, 0
      %v3730 = vsub.s32 0, %v3728
      %v3731 = vsel %vm3729, %v3730, %v3728
      %v3732 = vclz %v3731
      %v3733 = vsub.s32 %v3732, 2
      %vm3734 = vcmp.gt.s32.totalorder 0, %v3733
      %v3735 = vsel %vm3734, 0, %v3733
      %v3736 = vsub.s32 32, %v3735
      %v3737 = vshll.u32 %v3728, %v3735
      %v3738 = vshrl.u32 %v3720, %v3736
      %v3739 = vor.u32 %v3737, %v3738
      %v3740 = vsub.s32 4294967266, %v3735
      %v3741 = vadd.s32 %v3740, 127
      %v3742 = vshll.u32 %v3741, 23
      %v3743 = vor.u32 4788187, %v3742
      %v3744 = vand.u32 2147483647, %v3743
      %v3746 = vcvt.s32.f32 %v3739
      %v3747 = vmul.f32 %v3746, %v3744
      %v3748 = vxor.u32 %v3747, 2147483648
      %v3749 = vsel %vm3666, %v3748, %v3747
      %v3750 = vsub.s32 4, %v3726
      %v3751 = vsel %vm3666, %v3750, %v3726
      %v3752 = vsel %vm3665, %v635, %v3749
      %v3753 = vsel %vm3665, 0, %v3751
      %v3754 = vcosq.f32.pop %v3752
      %v3755 = vsinq.f32.pop %v3752
      %vm3756 = vweird.f32 %v635
      %v3757 = vadd.s32 %v3753, 3
      %v3758 = vand.u32 %v3757, 3
      %vm3759 = vcmp.lt.s32.totalorder %v3758, 2
      %vm3760 = vcmp.eq.s32.totalorder %v3758, 0
      %v3761 = vxor.u32 %v3755, 2147483648
      %v3762 = vsel %vm3760, %v3754, %v3761
      %vm3763 = vcmp.eq.s32.totalorder %v3758, 2
      %v3764 = vxor.u32 %v3754, 2147483648
      %v3765 = vsel %vm3763, %v3764, %v3755
      %v3766 = vsel %vm3759, %v3762, %v3765
      %v3767 = vsel %vm3756, nan, %v3766
      %v3768 = vand.u32 2147483647, %v640
      %vm3769 = vcmp.le.f32.partialorder %v3768, 0.7853982
      %vm3770 = vcmp.lt.s32.totalorder %v640, 0
      %v3771 = vand.u32 %v640, 2139095040
      %v3772 = vshrl.u32 %v3771, 23
      %v3773 = vsub.s32 %v3772, 127
      %v3774 = vand.u32 2147483647, %v640
      %v3775 = vand.u32 %v3774, 8388607
      %v3776 = vor.u32 %v3775, 8388608
      %v3777 = vsub.s32 0, %v3776
      %v3778 = vadd.s32 %v3773, 1
      %vm3779 = vcmp.gt.s32.totalorder %v3778, 0
      %v3780 = vsel %vm3779, %v3778, 0
      %v3781 = vshrl.u32 %v3780, 5
      %v3782 = vand.u32 %v3780, 31
      %v3783 = vsub.s32 32, %v3782
      %v3784 = vshrl.u32 683565275, %v3783
      %v3785 = vshll.u32 683565275, %v3782
      %v3786 = vshrl.u32 2475754826, %v3783
      %v3787 = vor.u32 %v3785, %v3786
      %v3788 = vshll.u32 2475754826, %v3782
      %v3789 = vshrl.u32 2131351028, %v3783
      %v3790 = vor.u32 %v3788, %v3789
      %v3791 = vshll.u32 2131351028, %v3782
      %v3792 = vshrl.u32 2102212464, %v3783
      %v3793 = vor.u32 %v3791, %v3792
      %v3794 = vshll.u32 2102212464, %v3782
      %v3795 = vshrl.u32 920167782, %v3783
      %v3796 = vor.u32 %v3794, %v3795
      %v3797 = vshll.u32 920167782, %v3782
      %v3798 = vshrl.u32 1326507024, %v3783
      %v3799 = vor.u32 %v3797, %v3798
      %vm3800 = vcmp.lt.s32.totalorder %v3781, 1
      %vm3801 = vcmp.lt.s32.totalorder %v3781, 2
      %vm3802 = vcmp.lt.s32.totalorder %v3781, 3
      %vm3803 = vcmp.lt.s32.totalorder %v3781, 4
      %v3804 = vsel %vm3800, %v3784, %v3787
      %v3805 = vsel %vm3803, %v3793, 2102212464
      %v3806 = vsel %vm3802, %v3790, %v3805
      %v3807 = vsel %vm3801, %v3804, %v3806
      %v3808 = vsel %vm3800, %v3787, %v3790
      %v3809 = vsel %vm3803, %v3796, 920167782
      %v3810 = vsel %vm3802, %v3793, %v3809
      %v3811 = vsel %vm3801, %v3808, %v3810
      %v3812 = vsel %vm3800, %v3790, %v3793
      %v3813 = vsel %vm3803, %v3799, 1326507024
      %v3814 = vsel %vm3802, %v3796, %v3813
      %v3815 = vsel %vm3801, %v3812, %v3814
      %v3816 = vshll.u32 %v3776, 8
      %v3817 = vmul.u32.u64.compose %v3816, %v3815
      %v3818 = vextract.low.u32 %v3817
      %v3819 = vextract.high.u32 %v3817
      %v3820 = vmul.u32.u64.compose %v3816, %v3811
      %v3821 = vextract.low.u32 %v3820
      %v3822 = vextract.high.u32 %v3820
      %v3823 = vmul.u32 %v3816, %v3807
      %v3824 = vadd.s32 %v3819, %v3821
      %vm3825 = vc.u32 %v3819, %v3821
      %v3826 = vadd.s32 %v3822, 1
      %v3827 = vsel %vm3825, %v3826, %v3822
      %v3828 = vadd.s32 %v3823, %v3827
      %v3829 = vadd.s32 %v3828, 536870912
      %v3830 = vshrl.u32 %v3829, 30
      %v3831 = vshll.u32 %v3830, 30
      %v3832 = vsub.s32 %v3828, %v3831
      %vm3833 = vcmp.lt.s32.totalorder %v3832, 0
      %v3834 = vsub.s32 0, %v3832
      %v3835 = vsel %vm3833, %v3834, %v3832
      %v3836 = vclz %v3835
      %v3837 = vsub.s32 %v3836, 2
      %vm3838 = vcmp.gt.s32.totalorder 0, %v3837
      %v3839 = vsel %vm3838, 0, %v3837
      %v3840 = vsub.s32 32, %v3839
      %v3841 = vshll.u32 %v3832, %v3839
      %v3842 = vshrl.u32 %v3824, %v3840
      %v3843 = vor.u32 %v3841, %v3842
      %v3844 = vsub.s32 4294967266, %v3839
      %v3845 = vadd.s32 %v3844, 127
      %v3846 = vshll.u32 %v3845, 23
      %v3847 = vor.u32 4788187, %v3846
      %v3848 = vand.u32 2147483647, %v3847
      %v3850 = vcvt.s32.f32 %v3843
      %v3851 = vmul.f32 %v3850, %v3848
      %v3852 = vxor.u32 %v3851, 2147483648
      %v3853 = vsel %vm3770, %v3852, %v3851
      %v3854 = vsub.s32 4, %v3830
      %v3855 = vsel %vm3770, %v3854, %v3830
      %v3856 = vsel %vm3769, %v640, %v3853
      %v3857 = vsel %vm3769, 0, %v3855
      %v3858 = vcosq.f32.pop %v3856
      %v3859 = vsinq.f32.pop %v3856
      %vm3860 = vweird.f32 %v640
      %v3861 = vadd.s32 %v3857, 3
      %v3862 = vand.u32 %v3861, 3
      %vm3863 = vcmp.lt.s32.totalorder %v3862, 2
      %vm3864 = vcmp.eq.s32.totalorder %v3862, 0
      %v3865 = vxor.u32 %v3859, 2147483648
      %v3866 = vsel %vm3864, %v3858, %v3865
      %vm3867 = vcmp.eq.s32.totalorder %v3862, 2
      %v3868 = vxor.u32 %v3858, 2147483648
      %v3869 = vsel %vm3867, %v3868, %v3859
      %v3870 = vsel %vm3863, %v3866, %v3869
      %v3871 = vsel %vm3860, nan, %v3870
      %v3872 = vand.u32 2147483647, %v645
      %vm3873 = vcmp.le.f32.partialorder %v3872, 0.7853982
      %vm3874 = vcmp.lt.s32.totalorder %v645, 0
      %v3875 = vand.u32 %v645, 2139095040
      %v3876 = vshrl.u32 %v3875, 23
      %v3877 = vsub.s32 %v3876, 127
      %v3878 = vand.u32 2147483647, %v645
      %v3879 = vand.u32 %v3878, 8388607
      %v3880 = vor.u32 %v3879, 8388608
      %v3881 = vsub.s32 0, %v3880
      %v3882 = vadd.s32 %v3877, 1
      %vm3883 = vcmp.gt.s32.totalorder %v3882, 0
      %v3884 = vsel %vm3883, %v3882, 0
      %v3885 = vshrl.u32 %v3884, 5
      %v3886 = vand.u32 %v3884, 31
      %v3887 = vsub.s32 32, %v3886
      %v3888 = vshrl.u32 683565275, %v3887
      %v3889 = vshll.u32 683565275, %v3886
      %v3890 = vshrl.u32 2475754826, %v3887
      %v3891 = vor.u32 %v3889, %v3890
      %v3892 = vshll.u32 2475754826, %v3886
      %v3893 = vshrl.u32 2131351028, %v3887
      %v3894 = vor.u32 %v3892, %v3893
      %v3895 = vshll.u32 2131351028, %v3886
      %v3896 = vshrl.u32 2102212464, %v3887
      %v3897 = vor.u32 %v3895, %v3896
      %v3898 = vshll.u32 2102212464, %v3886
      %v3899 = vshrl.u32 920167782, %v3887
      %v3900 = vor.u32 %v3898, %v3899
      %v3901 = vshll.u32 920167782, %v3886
      %v3902 = vshrl.u32 1326507024, %v3887
      %v3903 = vor.u32 %v3901, %v3902
      %vm3904 = vcmp.lt.s32.totalorder %v3885, 1
      %vm3905 = vcmp.lt.s32.totalorder %v3885, 2
      %vm3906 = vcmp.lt.s32.totalorder %v3885, 3
      %vm3907 = vcmp.lt.s32.totalorder %v3885, 4
      %v3908 = vsel %vm3904, %v3888, %v3891
      %v3909 = vsel %vm3907, %v3897, 2102212464
      %v3910 = vsel %vm3906, %v3894, %v3909
      %v3911 = vsel %vm3905, %v3908, %v3910
      %v3912 = vsel %vm3904, %v3891, %v3894
      %v3913 = vsel %vm3907, %v3900, 920167782
      %v3914 = vsel %vm3906, %v3897, %v3913
      %v3915 = vsel %vm3905, %v3912, %v3914
      %v3916 = vsel %vm3904, %v3894, %v3897
      %v3917 = vsel %vm3907, %v3903, 1326507024
      %v3918 = vsel %vm3906, %v3900, %v3917
      %v3919 = vsel %vm3905, %v3916, %v3918
      %v3920 = vshll.u32 %v3880, 8
      %v3921 = vmul.u32.u64.compose %v3920, %v3919
      %v3922 = vextract.low.u32 %v3921
      %v3923 = vextract.high.u32 %v3921
      %v3924 = vmul.u32.u64.compose %v3920, %v3915
      %v3925 = vextract.low.u32 %v3924
      %v3926 = vextract.high.u32 %v3924
      %v3927 = vmul.u32 %v3920, %v3911
      %v3928 = vadd.s32 %v3923, %v3925
      %vm3929 = vc.u32 %v3923, %v3925
      %v3930 = vadd.s32 %v3926, 1
      %v3931 = vsel %vm3929, %v3930, %v3926
      %v3932 = vadd.s32 %v3927, %v3931
      %v3933 = vadd.s32 %v3932, 536870912
      %v3934 = vshrl.u32 %v3933, 30
      %v3935 = vshll.u32 %v3934, 30
      %v3936 = vsub.s32 %v3932, %v3935
      %vm3937 = vcmp.lt.s32.totalorder %v3936, 0
      %v3938 = vsub.s32 0, %v3936
      %v3939 = vsel %vm3937, %v3938, %v3936
      %v3940 = vclz %v3939
      %v3941 = vsub.s32 %v3940, 2
      %vm3942 = vcmp.gt.s32.totalorder 0, %v3941
      %v3943 = vsel %vm3942, 0, %v3941
      %v3944 = vsub.s32 32, %v3943
      %v3945 = vshll.u32 %v3936, %v3943
      %v3946 = vshrl.u32 %v3928, %v3944
      %v3947 = vor.u32 %v3945, %v3946
      %v3948 = vsub.s32 4294967266, %v3943
      %v3949 = vadd.s32 %v3948, 127
      %v3950 = vshll.u32 %v3949, 23
      %v3951 = vor.u32 4788187, %v3950
      %v3952 = vand.u32 2147483647, %v3951
      %v3954 = vcvt.s32.f32 %v3947
      %v3955 = vmul.f32 %v3954, %v3952
      %v3956 = vxor.u32 %v3955, 2147483648
      %v3957 = vsel %vm3874, %v3956, %v3955
      %v3958 = vsub.s32 4, %v3934
      %v3959 = vsel %vm3874, %v3958, %v3934
      %v3960 = vsel %vm3873, %v645, %v3957
      %v3961 = vsel %vm3873, 0, %v3959
      %v3962 = vcosq.f32.pop %v3960
      %v3963 = vsinq.f32.pop %v3960
      %vm3964 = vweird.f32 %v645
      %v3965 = vadd.s32 %v3961, 3
      %v3966 = vand.u32 %v3965, 3
      %vm3967 = vcmp.lt.s32.totalorder %v3966, 2
      %vm3968 = vcmp.eq.s32.totalorder %v3966, 0
      %v3969 = vxor.u32 %v3963, 2147483648
      %v3970 = vsel %vm3968, %v3962, %v3969
      %vm3971 = vcmp.eq.s32.totalorder %v3966, 2
      %v3972 = vxor.u32 %v3962, 2147483648
      %v3973 = vsel %vm3971, %v3972, %v3963
      %v3974 = vsel %vm3967, %v3970, %v3973
      %v3975 = vsel %vm3964, nan, %v3974
      %v3976 = vld [vmem:[%s3] sm:$0xff]
      %v3977 = vld [vmem:[%s3 + $0x8] sm:$0xff]
      %v3978 = vld [vmem:[%s3 + $0x10] sm:$0xff]
      %v3979 = vld [vmem:[%s3 + $0x18] sm:$0xff]
      %v3980 = vld [vmem:[%s3 + $0x20] sm:$0xff]
      %v3981 = vld [vmem:[%s3 + $0x28] sm:$0xff]
      %v3982 = vld [vmem:[%s3 + $0x30] sm:$0xff]
      %v3983 = vld [vmem:[%s3 + $0x38] sm:$0xff]
      %v3984 = vld [vmem:[%s3 + $0x40] sm:$0xff]
      %v3985 = vld [vmem:[%s3 + $0x48] sm:$0xff]
      %v3986 = vld [vmem:[%s3 + $0x50] sm:$0xff]
      %v3987 = vld [vmem:[%s3 + $0x58] sm:$0xff]
      %v3988 = vld [vmem:[%s3 + $0x60] sm:$0xff]
      %v3989 = vld [vmem:[%s3 + $0x68] sm:$0xff]
      %v3990 = vld [vmem:[%s3 + $0x70] sm:$0xff]
      %v3991 = vld [vmem:[%s3 + $0x78] sm:$0xff]
      %v3992 = vld [vmem:[%s4] sm:$0x1]
      %v3994 = vlaneseq
      %v3995 = vshrl.u32 %v3994, 7
      %v3996 = vsub.s32 0, %v3995
      %v3997 = vrot.slane %v3992, %v3996
      %3999 = vmatprep.subr.mxu0 0.0
      %4000 = vmatpush1.msra.mxu0 %v3976
      %4001 = vmatprep.subr.mxu0 0.0
      %4002 = vmatpush1.msra.mxu0 %v3977
      %4003 = vmatprep.subr.mxu0 0.0
      %4004 = vmatpush1.msra.mxu0 %v3978
      %4005 = vmatprep.subr.mxu0 0.0
      %4006 = vmatpush1.msra.mxu0 %v3979
      %4007 = vmatprep.subr.mxu0 0.0
      %4008 = vmatpush1.msra.mxu0 %v3980
      %4009 = vmatprep.subr.mxu0 0.0
      %4010 = vmatpush1.msra.mxu0 %v3981
      %4011 = vmatprep.subr.mxu0 0.0
      %4012 = vmatpush1.msra.mxu0 %v3982
      %4013 = vmatprep.subr.mxu0 0.0
      %4014 = vmatpush1.msra.mxu0 %v3983
      %4015 = vmatprep.subr.mxu0 0.0
      %4016 = vmatpush1.msra.mxu0 %v3984
      %4017 = vmatprep.subr.mxu0 0.0
      %4018 = vmatpush1.msra.mxu0 %v3985
      %4019 = vmatprep.subr.mxu0 0.0
      %4020 = vmatpush1.msra.mxu0 %v3986
      %4021 = vmatprep.subr.mxu0 0.0
      %4022 = vmatpush1.msra.mxu0 %v3987
      %4023 = vmatprep.subr.mxu0 0.0
      %4024 = vmatpush1.msra.mxu0 %v3988
      %4025 = vmatprep.subr.mxu0 0.0
      %4026 = vmatpush1.msra.mxu0 %v3989
      %4027 = vmatprep.subr.mxu0 0.0
      %4028 = vmatpush1.msra.mxu0 %v3990
      %4029 = vmatprep.subr.mxu0 0.0
      %4030 = vmatpush1.msra.mxu0 %v3991
      %4031 = vmatprep.subr.mxu0 0.0
      %4032 = vmatpush1.msra.mxu0 0.0
      %4033 = vmatprep.subr.mxu0 0.0
      %4034 = vmatpush1.msra.mxu0 0.0
      %4035 = vmatprep.subr.mxu0 0.0
      %4036 = vmatpush1.msra.mxu0 0.0
      %4037 = vmatprep.subr.mxu0 0.0
      %4038 = vmatpush1.msra.mxu0 0.0
      %4039 = vmatprep.subr.mxu0 0.0
      %4040 = vmatpush1.msra.mxu0 0.0
      %4041 = vmatprep.subr.mxu0 0.0
      %4042 = vmatpush1.msra.mxu0 0.0
      %4043 = vmatprep.subr.mxu0 0.0
      %4044 = vmatpush1.msra.mxu0 0.0
      %4045 = vmatprep.subr.mxu0 0.0
      %4046 = vmatpush1.msra.mxu0 0.0
      %4047 = vmatprep.subr.mxu0 0.0
      %4048 = vmatpush1.msra.mxu0 0.0
      %4049 = vmatprep.subr.mxu0 0.0
      %4050 = vmatpush1.msra.mxu0 0.0
      %4051 = vmatprep.subr.mxu0 0.0
      %4052 = vmatpush1.msra.mxu0 0.0
      %4053 = vmatprep.subr.mxu0 0.0
      %4054 = vmatpush1.msra.mxu0 0.0
      %4055 = vmatprep.subr.mxu0 0.0
      %4056 = vmatpush1.msra.mxu0 0.0
      %4057 = vmatprep.subr.mxu0 0.0
      %4058 = vmatpush1.msra.mxu0 0.0
      %4059 = vmatprep.subr.mxu0 0.0
      %4060 = vmatpush1.msra.mxu0 0.0
      %4061 = vmatprep.subr.mxu0 0.0
      %4062 = vmatpush1.msra.mxu0 0.0
      %4063 = vmatprep.mubr.f32.mxu0 0.0
      %4064 = vmatmul.mubr.f32.gmra.mrb[0].mxu0 %v751
      %v4065 = vpop.f32.mrb[0].mxu0
      %v4066 = vadd.f32 %v3997, %v4065
      %v4067 = vpop.f32.mrb[0].mxu0
      %4068 = vmatprep.mubr.f32.mxu0 0.0
      %4069 = vmatmul.mubr.f32.gmra.mrb[0].mxu0 %v855
      %v4070 = vpop.f32.mrb[0].mxu0
      %v4071 = vadd.f32 %v3997, %v4070
      %v4072 = vpop.f32.mrb[0].mxu0
      %4073 = vmatprep.mubr.f32.mxu0 0.0
      %4074 = vmatmul.mubr.f32.gmra.mrb[0].mxu0 %v959
      %v4075 = vpop.f32.mrb[0].mxu0
      %v4076 = vadd.f32 %v3997, %v4075
      %v4077 = vpop.f32.mrb[0].mxu0
      %4078 = vmatprep.mubr.f32.mxu0 0.0
      %4079 = vmatmul.mubr.f32.gmra.mrb[0].mxu0 %v1063
      %v4080 = vpop.f32.mrb[0].mxu0
      %v4081 = vadd.f32 %v3997, %v4080
      %v4082 = vpop.f32.mrb[0].mxu0
      %4083 = vmatprep.mubr.f32.mxu0 0.0
      %4084 = vmatmul.mubr.f32.gmra.mrb[0].mxu0 %v1167
      %v4085 = vpop.f32.mrb[0].mxu0
      %v4086 = vadd.f32 %v3997, %v4085
      %v4087 = vpop.f32.mrb[0].mxu0
      %4088 = vmatprep.mubr.f32.mxu0 0.0
      %4089 = vmatmul.mubr.f32.gmra.mrb[0].mxu0 %v1271
      %v4090 = vpop.f32.mrb[0].mxu0
      %v4091 = vadd.f32 %v3997, %v4090
      %v4092 = vpop.f32.mrb[0].mxu0
      %4093 = vmatprep.mubr.f32.mxu0 0.0
      %4094 = vmatmul.mubr.f32.gmra.mrb[0].mxu0 %v1375
      %v4095 = vpop.f32.mrb[0].mxu0
      %v4096 = vadd.f32 %v3997, %v4095
      %v4097 = vpop.f32.mrb[0].mxu0
      %4098 = vmatprep.mubr.f32.mxu0 0.0
      %4099 = vmatmul.mubr.f32.gmra.mrb[0].mxu0 %v1479
      %v4100 = vpop.f32.mrb[0].mxu0
      %v4101 = vadd.f32 %v3997, %v4100
      %v4102 = vpop.f32.mrb[0].mxu0
      %4103 = vmatprep.mubr.f32.mxu0 0.0
      %4104 = vmatmul.mubr.f32.gmra.mrb[0].mxu0 %v1583
      %v4105 = vpop.f32.mrb[0].mxu0
      %v4106 = vadd.f32 %v3997, %v4105
      %v4107 = vpop.f32.mrb[0].mxu0
      %4108 = vmatprep.mubr.f32.mxu0 0.0
      %4109 = vmatmul.mubr.f32.gmra.mrb[0].mxu0 %v1687
      %v4110 = vpop.f32.mrb[0].mxu0
      %v4111 = vadd.f32 %v3997, %v4110
      %v4112 = vpop.f32.mrb[0].mxu0
      %4113 = vmatprep.mubr.f32.mxu0 0.0
      %4114 = vmatmul.mubr.f32.gmra.mrb[0].mxu0 %v1791
      %v4115 = vpop.f32.mrb[0].mxu0
      %v4116 = vadd.f32 %v3997, %v4115
      %v4117 = vpop.f32.mrb[0].mxu0
      %4118 = vmatprep.mubr.f32.mxu0 0.0
      %4119 = vmatmul.mubr.f32.gmra.mrb[0].mxu0 %v1895
      %v4120 = vpop.f32.mrb[0].mxu0
      %v4121 = vadd.f32 %v3997, %v4120
      %v4122 = vpop.f32.mrb[0].mxu0
      %4123 = vmatprep.mubr.f32.mxu0 0.0
      %4124 = vmatmul.mubr.f32.gmra.mrb[0].mxu0 %v1999
      %v4125 = vpop.f32.mrb[0].mxu0
      %v4126 = vadd.f32 %v3997, %v4125
      %v4127 = vpop.f32.mrb[0].mxu0
      %4128 = vmatprep.mubr.f32.mxu0 0.0
      %4129 = vmatmul.mubr.f32.gmra.mrb[0].mxu0 %v2103
      %v4130 = vpop.f32.mrb[0].mxu0
      %v4131 = vadd.f32 %v3997, %v4130
      %v4132 = vpop.f32.mrb[0].mxu0
      %4133 = vmatprep.mubr.f32.mxu0 0.0
      %4134 = vmatmul.mubr.f32.gmra.mrb[0].mxu0 %v2207
      %v4135 = vpop.f32.mrb[0].mxu0
      %v4136 = vadd.f32 %v3997, %v4135
      %v4137 = vpop.f32.mrb[0].mxu0
      %4138 = vmatprep.mubr.f32.mxu0 0.0
      %4139 = vmatmul.mubr.f32.gmra.mrb[0].mxu0 %v2311
      %v4140 = vpop.f32.mrb[0].mxu0
      %v4141 = vadd.f32 %v3997, %v4140
      %v4142 = vpop.f32.mrb[0].mxu0
      %4143 = vmatprep.mubr.f32.mxu0 0.0
      %4144 = vmatmul.mubr.f32.gmra.mrb[0].mxu0 %v2415
      %v4145 = vpop.f32.mrb[0].mxu0
      %v4146 = vadd.f32 %v3997, %v4145
      %v4147 = vpop.f32.mrb[0].mxu0
      %4148 = vmatprep.mubr.f32.mxu0 0.0
      %4149 = vmatmul.mubr.f32.gmra.mrb[0].mxu0 %v2519
      %v4150 = vpop.f32.mrb[0].mxu0
      %v4151 = vadd.f32 %v3997, %v4150
      %v4152 = vpop.f32.mrb[0].mxu0
      %4153 = vmatprep.mubr.f32.mxu0 0.0
      %4154 = vmatmul.mubr.f32.gmra.mrb[0].mxu0 %v2623
      %v4155 = vpop.f32.mrb[0].mxu0
      %v4156 = vadd.f32 %v3997, %v4155
      %v4157 = vpop.f32.mrb[0].mxu0
      %4158 = vmatprep.mubr.f32.mxu0 0.0
      %4159 = vmatmul.mubr.f32.gmra.mrb[0].mxu0 %v2727
      %v4160 = vpop.f32.mrb[0].mxu0
      %v4161 = vadd.f32 %v3997, %v4160
      %v4162 = vpop.f32.mrb[0].mxu0
      %4163 = vmatprep.mubr.f32.mxu0 0.0
      %4164 = vmatmul.mubr.f32.gmra.mrb[0].mxu0 %v2831
      %v4165 = vpop.f32.mrb[0].mxu0
      %v4166 = vadd.f32 %v3997, %v4165
      %v4167 = vpop.f32.mrb[0].mxu0
      %4168 = vmatprep.mubr.f32.mxu0 0.0
      %4169 = vmatmul.mubr.f32.gmra.mrb[0].mxu0 %v2935
      %v4170 = vpop.f32.mrb[0].mxu0
      %v4171 = vadd.f32 %v3997, %v4170
      %v4172 = vpop.f32.mrb[0].mxu0
      %4173 = vmatprep.mubr.f32.mxu0 0.0
      %4174 = vmatmul.mubr.f32.gmra.mrb[0].mxu0 %v3039
      %v4175 = vpop.f32.mrb[0].mxu0
      %v4176 = vadd.f32 %v3997, %v4175
      %v4177 = vpop.f32.mrb[0].mxu0
      %4178 = vmatprep.mubr.f32.mxu0 0.0
      %4179 = vmatmul.mubr.f32.gmra.mrb[0].mxu0 %v3143
      %v4180 = vpop.f32.mrb[0].mxu0
      %v4181 = vadd.f32 %v3997, %v4180
      %v4182 = vpop.f32.mrb[0].mxu0
      %4183 = vmatprep.mubr.f32.mxu0 0.0
      %4184 = vmatmul.mubr.f32.gmra.mrb[0].mxu0 %v3247
      %v4185 = vpop.f32.mrb[0].mxu0
      %v4186 = vadd.f32 %v3997, %v4185
      %v4187 = vpop.f32.mrb[0].mxu0
      %4188 = vmatprep.mubr.f32.mxu0 0.0
      %4189 = vmatmul.mubr.f32.gmra.mrb[0].mxu0 %v3351
      %v4190 = vpop.f32.mrb[0].mxu0
      %v4191 = vadd.f32 %v3997, %v4190
      %v4192 = vpop.f32.mrb[0].mxu0
      %4193 = vmatprep.mubr.f32.mxu0 0.0
      %4194 = vmatmul.mubr.f32.gmra.mrb[0].mxu0 %v3455
      %v4195 = vpop.f32.mrb[0].mxu0
      %v4196 = vadd.f32 %v3997, %v4195
      %v4197 = vpop.f32.mrb[0].mxu0
      %4198 = vmatprep.mubr.f32.mxu0 0.0
      %4199 = vmatmul.mubr.f32.gmra.mrb[0].mxu0 %v3559
      %v4200 = vpop.f32.mrb[0].mxu0
      %v4201 = vadd.f32 %v3997, %v4200
      %v4202 = vpop.f32.mrb[0].mxu0
      %4203 = vmatprep.mubr.f32.mxu0 0.0
      %4204 = vmatmul.mubr.f32.gmra.mrb[0].mxu0 %v3663
      %v4205 = vpop.f32.mrb[0].mxu0
      %v4206 = vadd.f32 %v3997, %v4205
      %v4207 = vpop.f32.mrb[0].mxu0
      %4208 = vmatprep.mubr.f32.mxu0 0.0
      %4209 = vmatmul.mubr.f32.gmra.mrb[0].mxu0 %v3767
      %v4210 = vpop.f32.mrb[0].mxu0
      %v4211 = vadd.f32 %v3997, %v4210
      %v4212 = vpop.f32.mrb[0].mxu0
      %4213 = vmatprep.mubr.f32.mxu0 0.0
      %4214 = vmatmul.mubr.f32.gmra.mrb[0].mxu0 %v3871
      %v4215 = vpop.f32.mrb[0].mxu0
      %v4216 = vadd.f32 %v3997, %v4215
      %v4217 = vpop.f32.mrb[0].mxu0
      %4218 = vmatprep.mubr.f32.mxu0 0.0
      %4219 = vmatmul.mubr.f32.gmra.mrb[0].mxu0 %v3975
      %v4220 = vpop.f32.mrb[0].mxu0
      %v4221 = vadd.f32 %v3997, %v4220
      %v4222 = vpop.f32.mrb[0].mxu0
      %4223 = vdwg.mxu0
      %v4224 = vand.u32 2147483647, %v4066
      %vm4225 = vcmp.le.f32.partialorder %v4224, 0.7853982
      %vm4226 = vcmp.lt.s32.totalorder %v4066, 0
      %v4227 = vand.u32 %v4066, 2139095040
      %v4228 = vshrl.u32 %v4227, 23
      %v4229 = vsub.s32 %v4228, 127
      %v4230 = vand.u32 2147483647, %v4066
      %v4231 = vand.u32 %v4230, 8388607
      %v4232 = vor.u32 %v4231, 8388608
      %v4233 = vsub.s32 0, %v4232
      %v4234 = vadd.s32 %v4229, 1
      %vm4235 = vcmp.gt.s32.totalorder %v4234, 0
      %v4236 = vsel %vm4235, %v4234, 0
      %v4237 = vshrl.u32 %v4236, 5
      %v4238 = vand.u32 %v4236, 31
      %v4239 = vsub.s32 32, %v4238
      %v4240 = vshrl.u32 683565275, %v4239
      %v4241 = vshll.u32 683565275, %v4238
      %v4242 = vshrl.u32 2475754826, %v4239
      %v4243 = vor.u32 %v4241, %v4242
      %v4244 = vshll.u32 2475754826, %v4238
      %v4245 = vshrl.u32 2131351028, %v4239
      %v4246 = vor.u32 %v4244, %v4245
      %v4247 = vshll.u32 2131351028, %v4238
      %v4248 = vshrl.u32 2102212464, %v4239
      %v4249 = vor.u32 %v4247, %v4248
      %v4250 = vshll.u32 2102212464, %v4238
      %v4251 = vshrl.u32 920167782, %v4239
      %v4252 = vor.u32 %v4250, %v4251
      %v4253 = vshll.u32 920167782, %v4238
      %v4254 = vshrl.u32 1326507024, %v4239
      %v4255 = vor.u32 %v4253, %v4254
      %vm4256 = vcmp.lt.s32.totalorder %v4237, 1
      %vm4257 = vcmp.lt.s32.totalorder %v4237, 2
      %vm4258 = vcmp.lt.s32.totalorder %v4237, 3
      %vm4259 = vcmp.lt.s32.totalorder %v4237, 4
      %v4260 = vsel %vm4256, %v4240, %v4243
      %v4261 = vsel %vm4259, %v4249, 2102212464
      %v4262 = vsel %vm4258, %v4246, %v4261
      %v4263 = vsel %vm4257, %v4260, %v4262
      %v4264 = vsel %vm4256, %v4243, %v4246
      %v4265 = vsel %vm4259, %v4252, 920167782
      %v4266 = vsel %vm4258, %v4249, %v4265
      %v4267 = vsel %vm4257, %v4264, %v4266
      %v4268 = vsel %vm4256, %v4246, %v4249
      %v4269 = vsel %vm4259, %v4255, 1326507024
      %v4270 = vsel %vm4258, %v4252, %v4269
      %v4271 = vsel %vm4257, %v4268, %v4270
      %v4272 = vshll.u32 %v4232, 8
      %v4273 = vmul.u32.u64.compose %v4272, %v4271
      %v4274 = vextract.low.u32 %v4273
      %v4275 = vextract.high.u32 %v4273
      %v4276 = vmul.u32.u64.compose %v4272, %v4267
      %v4277 = vextract.low.u32 %v4276
      %v4278 = vextract.high.u32 %v4276
      %v4279 = vmul.u32 %v4272, %v4263
      %v4280 = vadd.s32 %v4275, %v4277
      %vm4281 = vc.u32 %v4275, %v4277
      %v4282 = vadd.s32 %v4278, 1
      %v4283 = vsel %vm4281, %v4282, %v4278
      %v4284 = vadd.s32 %v4279, %v4283
      %v4285 = vadd.s32 %v4284, 536870912
      %v4286 = vshrl.u32 %v4285, 30
      %v4287 = vshll.u32 %v4286, 30
      %v4288 = vsub.s32 %v4284, %v4287
      %vm4289 = vcmp.lt.s32.totalorder %v4288, 0
      %v4290 = vsub.s32 0, %v4288
      %v4291 = vsel %vm4289, %v4290, %v4288
      %v4292 = vclz %v4291
      %v4293 = vsub.s32 %v4292, 2
      %vm4294 = vcmp.gt.s32.totalorder 0, %v4293
      %v4295 = vsel %vm4294, 0, %v4293
      %v4296 = vsub.s32 32, %v4295
      %v4297 = vshll.u32 %v4288, %v4295
      %v4298 = vshrl.u32 %v4280, %v4296
      %v4299 = vor.u32 %v4297, %v4298
      %v4300 = vsub.s32 4294967266, %v4295
      %v4301 = vadd.s32 %v4300, 127
      %v4302 = vshll.u32 %v4301, 23
      %v4303 = vor.u32 4788187, %v4302
      %v4304 = vand.u32 2147483647, %v4303
      %v4306 = vcvt.s32.f32 %v4299
      %v4307 = vmul.f32 %v4306, %v4304
      %v4308 = vxor.u32 %v4307, 2147483648
      %v4309 = vsel %vm4226, %v4308, %v4307
      %v4310 = vsub.s32 4, %v4286
      %v4311 = vsel %vm4226, %v4310, %v4286
      %v4312 = vsel %vm4225, %v4066, %v4309
      %v4313 = vsel %vm4225, 0, %v4311
      %v4314 = vcosq.f32.pop %v4312
      %v4315 = vsinq.f32.pop %v4312
      %vm4316 = vweird.f32 %v4066
      %v4317 = vadd.s32 %v4313, 3
      %v4318 = vand.u32 %v4317, 3
      %vm4319 = vcmp.lt.s32.totalorder %v4318, 2
      %vm4320 = vcmp.eq.s32.totalorder %v4318, 0
      %v4321 = vxor.u32 %v4315, 2147483648
      %v4322 = vsel %vm4320, %v4314, %v4321
      %vm4323 = vcmp.eq.s32.totalorder %v4318, 2
      %v4324 = vxor.u32 %v4314, 2147483648
      %v4325 = vsel %vm4323, %v4324, %v4315
      %v4326 = vsel %vm4319, %v4322, %v4325
      %v4327 = vsel %vm4316, nan, %v4326
      %v4328 = vand.u32 2147483647, %v4071
      %vm4329 = vcmp.le.f32.partialorder %v4328, 0.7853982
      %vm4330 = vcmp.lt.s32.totalorder %v4071, 0
      %v4331 = vand.u32 %v4071, 2139095040
      %v4332 = vshrl.u32 %v4331, 23
      %v4333 = vsub.s32 %v4332, 127
      %v4334 = vand.u32 2147483647, %v4071
      %v4335 = vand.u32 %v4334, 8388607
      %v4336 = vor.u32 %v4335, 8388608
      %v4337 = vsub.s32 0, %v4336
      %v4338 = vadd.s32 %v4333, 1
      %vm4339 = vcmp.gt.s32.totalorder %v4338, 0
      %v4340 = vsel %vm4339, %v4338, 0
      %v4341 = vshrl.u32 %v4340, 5
      %v4342 = vand.u32 %v4340, 31
      %v4343 = vsub.s32 32, %v4342
      %v4344 = vshrl.u32 683565275, %v4343
      %v4345 = vshll.u32 683565275, %v4342
      %v4346 = vshrl.u32 2475754826, %v4343
      %v4347 = vor.u32 %v4345, %v4346
      %v4348 = vshll.u32 2475754826, %v4342
      %v4349 = vshrl.u32 2131351028, %v4343
      %v4350 = vor.u32 %v4348, %v4349
      %v4351 = vshll.u32 2131351028, %v4342
      %v4352 = vshrl.u32 2102212464, %v4343
      %v4353 = vor.u32 %v4351, %v4352
      %v4354 = vshll.u32 2102212464, %v4342
      %v4355 = vshrl.u32 920167782, %v4343
      %v4356 = vor.u32 %v4354, %v4355
      %v4357 = vshll.u32 920167782, %v4342
      %v4358 = vshrl.u32 1326507024, %v4343
      %v4359 = vor.u32 %v4357, %v4358
      %vm4360 = vcmp.lt.s32.totalorder %v4341, 1
      %vm4361 = vcmp.lt.s32.totalorder %v4341, 2
      %vm4362 = vcmp.lt.s32.totalorder %v4341, 3
      %vm4363 = vcmp.lt.s32.totalorder %v4341, 4
      %v4364 = vsel %vm4360, %v4344, %v4347
      %v4365 = vsel %vm4363, %v4353, 2102212464
      %v4366 = vsel %vm4362, %v4350, %v4365
      %v4367 = vsel %vm4361, %v4364, %v4366
      %v4368 = vsel %vm4360, %v4347, %v4350
      %v4369 = vsel %vm4363, %v4356, 920167782
      %v4370 = vsel %vm4362, %v4353, %v4369
      %v4371 = vsel %vm4361, %v4368, %v4370
      %v4372 = vsel %vm4360, %v4350, %v4353
      %v4373 = vsel %vm4363, %v4359, 1326507024
      %v4374 = vsel %vm4362, %v4356, %v4373
      %v4375 = vsel %vm4361, %v4372, %v4374
      %v4376 = vshll.u32 %v4336, 8
      %v4377 = vmul.u32.u64.compose %v4376, %v4375
      %v4378 = vextract.low.u32 %v4377
      %v4379 = vextract.high.u32 %v4377
      %v4380 = vmul.u32.u64.compose %v4376, %v4371
      %v4381 = vextract.low.u32 %v4380
      %v4382 = vextract.high.u32 %v4380
      %v4383 = vmul.u32 %v4376, %v4367
      %v4384 = vadd.s32 %v4379, %v4381
      %vm4385 = vc.u32 %v4379, %v4381
      %v4386 = vadd.s32 %v4382, 1
      %v4387 = vsel %vm4385, %v4386, %v4382
      %v4388 = vadd.s32 %v4383, %v4387
      %v4389 = vadd.s32 %v4388, 536870912
      %v4390 = vshrl.u32 %v4389, 30
      %v4391 = vshll.u32 %v4390, 30
      %v4392 = vsub.s32 %v4388, %v4391
      %vm4393 = vcmp.lt.s32.totalorder %v4392, 0
      %v4394 = vsub.s32 0, %v4392
      %v4395 = vsel %vm4393, %v4394, %v4392
      %v4396 = vclz %v4395
      %v4397 = vsub.s32 %v4396, 2
      %vm4398 = vcmp.gt.s32.totalorder 0, %v4397
      %v4399 = vsel %vm4398, 0, %v4397
      %v4400 = vsub.s32 32, %v4399
      %v4401 = vshll.u32 %v4392, %v4399
      %v4402 = vshrl.u32 %v4384, %v4400
      %v4403 = vor.u32 %v4401, %v4402
      %v4404 = vsub.s32 4294967266, %v4399
      %v4405 = vadd.s32 %v4404, 127
      %v4406 = vshll.u32 %v4405, 23
      %v4407 = vor.u32 4788187, %v4406
      %v4408 = vand.u32 2147483647, %v4407
      %v4410 = vcvt.s32.f32 %v4403
      %v4411 = vmul.f32 %v4410, %v4408
      %v4412 = vxor.u32 %v4411, 2147483648
      %v4413 = vsel %vm4330, %v4412, %v4411
      %v4414 = vsub.s32 4, %v4390
      %v4415 = vsel %vm4330, %v4414, %v4390
      %v4416 = vsel %vm4329, %v4071, %v4413
      %v4417 = vsel %vm4329, 0, %v4415
      %v4418 = vcosq.f32.pop %v4416
      %v4419 = vsinq.f32.pop %v4416
      %vm4420 = vweird.f32 %v4071
      %v4421 = vadd.s32 %v4417, 3
      %v4422 = vand.u32 %v4421, 3
      %vm4423 = vcmp.lt.s32.totalorder %v4422, 2
      %vm4424 = vcmp.eq.s32.totalorder %v4422, 0
      %v4425 = vxor.u32 %v4419, 2147483648
      %v4426 = vsel %vm4424, %v4418, %v4425
      %vm4427 = vcmp.eq.s32.totalorder %v4422, 2
      %v4428 = vxor.u32 %v4418, 2147483648
      %v4429 = vsel %vm4427, %v4428, %v4419
      %v4430 = vsel %vm4423, %v4426, %v4429
      %v4431 = vsel %vm4420, nan, %v4430
      %v4432 = vand.u32 2147483647, %v4076
      %vm4433 = vcmp.le.f32.partialorder %v4432, 0.7853982
      %vm4434 = vcmp.lt.s32.totalorder %v4076, 0
      %v4435 = vand.u32 %v4076, 2139095040
      %v4436 = vshrl.u32 %v4435, 23
      %v4437 = vsub.s32 %v4436, 127
      %v4438 = vand.u32 2147483647, %v4076
      %v4439 = vand.u32 %v4438, 8388607
      %v4440 = vor.u32 %v4439, 8388608
      %v4441 = vsub.s32 0, %v4440
      %v4442 = vadd.s32 %v4437, 1
      %vm4443 = vcmp.gt.s32.totalorder %v4442, 0
      %v4444 = vsel %vm4443, %v4442, 0
      %v4445 = vshrl.u32 %v4444, 5
      %v4446 = vand.u32 %v4444, 31
      %v4447 = vsub.s32 32, %v4446
      %v4448 = vshrl.u32 683565275, %v4447
      %v4449 = vshll.u32 683565275, %v4446
      %v4450 = vshrl.u32 2475754826, %v4447
      %v4451 = vor.u32 %v4449, %v4450
      %v4452 = vshll.u32 2475754826, %v4446
      %v4453 = vshrl.u32 2131351028, %v4447
      %v4454 = vor.u32 %v4452, %v4453
      %v4455 = vshll.u32 2131351028, %v4446
      %v4456 = vshrl.u32 2102212464, %v4447
      %v4457 = vor.u32 %v4455, %v4456
      %v4458 = vshll.u32 2102212464, %v4446
      %v4459 = vshrl.u32 920167782, %v4447
      %v4460 = vor.u32 %v4458, %v4459
      %v4461 = vshll.u32 920167782, %v4446
      %v4462 = vshrl.u32 1326507024, %v4447
      %v4463 = vor.u32 %v4461, %v4462
      %vm4464 = vcmp.lt.s32.totalorder %v4445, 1
      %vm4465 = vcmp.lt.s32.totalorder %v4445, 2
      %vm4466 = vcmp.lt.s32.totalorder %v4445, 3
      %vm4467 = vcmp.lt.s32.totalorder %v4445, 4
      %v4468 = vsel %vm4464, %v4448, %v4451
      %v4469 = vsel %vm4467, %v4457, 2102212464
      %v4470 = vsel %vm4466, %v4454, %v4469
      %v4471 = vsel %vm4465, %v4468, %v4470
      %v4472 = vsel %vm4464, %v4451, %v4454
      %v4473 = vsel %vm4467, %v4460, 920167782
      %v4474 = vsel %vm4466, %v4457, %v4473
      %v4475 = vsel %vm4465, %v4472, %v4474
      %v4476 = vsel %vm4464, %v4454, %v4457
      %v4477 = vsel %vm4467, %v4463, 1326507024
      %v4478 = vsel %vm4466, %v4460, %v4477
      %v4479 = vsel %vm4465, %v4476, %v4478
      %v4480 = vshll.u32 %v4440, 8
      %v4481 = vmul.u32.u64.compose %v4480, %v4479
      %v4482 = vextract.low.u32 %v4481
      %v4483 = vextract.high.u32 %v4481
      %v4484 = vmul.u32.u64.compose %v4480, %v4475
      %v4485 = vextract.low.u32 %v4484
      %v4486 = vextract.high.u32 %v4484
      %v4487 = vmul.u32 %v4480, %v4471
      %v4488 = vadd.s32 %v4483, %v4485
      %vm4489 = vc.u32 %v4483, %v4485
      %v4490 = vadd.s32 %v4486, 1
      %v4491 = vsel %vm4489, %v4490, %v4486
      %v4492 = vadd.s32 %v4487, %v4491
      %v4493 = vadd.s32 %v4492, 536870912
      %v4494 = vshrl.u32 %v4493, 30
      %v4495 = vshll.u32 %v4494, 30
      %v4496 = vsub.s32 %v4492, %v4495
      %vm4497 = vcmp.lt.s32.totalorder %v4496, 0
      %v4498 = vsub.s32 0, %v4496
      %v4499 = vsel %vm4497, %v4498, %v4496
      %v4500 = vclz %v4499
      %v4501 = vsub.s32 %v4500, 2
      %vm4502 = vcmp.gt.s32.totalorder 0, %v4501
      %v4503 = vsel %vm4502, 0, %v4501
      %v4504 = vsub.s32 32, %v4503
      %v4505 = vshll.u32 %v4496, %v4503
      %v4506 = vshrl.u32 %v4488, %v4504
      %v4507 = vor.u32 %v4505, %v4506
      %v4508 = vsub.s32 4294967266, %v4503
      %v4509 = vadd.s32 %v4508, 127
      %v4510 = vshll.u32 %v4509, 23
      %v4511 = vor.u32 4788187, %v4510
      %v4512 = vand.u32 2147483647, %v4511
      %v4514 = vcvt.s32.f32 %v4507
      %v4515 = vmul.f32 %v4514, %v4512
      %v4516 = vxor.u32 %v4515, 2147483648
      %v4517 = vsel %vm4434, %v4516, %v4515
      %v4518 = vsub.s32 4, %v4494
      %v4519 = vsel %vm4434, %v4518, %v4494
      %v4520 = vsel %vm4433, %v4076, %v4517
      %v4521 = vsel %vm4433, 0, %v4519
      %v4522 = vcosq.f32.pop %v4520
      %v4523 = vsinq.f32.pop %v4520
      %vm4524 = vweird.f32 %v4076
      %v4525 = vadd.s32 %v4521, 3
      %v4526 = vand.u32 %v4525, 3
      %vm4527 = vcmp.lt.s32.totalorder %v4526, 2
      %vm4528 = vcmp.eq.s32.totalorder %v4526, 0
      %v4529 = vxor.u32 %v4523, 2147483648
      %v4530 = vsel %vm4528, %v4522, %v4529
      %vm4531 = vcmp.eq.s32.totalorder %v4526, 2
      %v4532 = vxor.u32 %v4522, 2147483648
      %v4533 = vsel %vm4531, %v4532, %v4523
      %v4534 = vsel %vm4527, %v4530, %v4533
      %v4535 = vsel %vm4524, nan, %v4534
      %v4536 = vand.u32 2147483647, %v4081
      %vm4537 = vcmp.le.f32.partialorder %v4536, 0.7853982
      %vm4538 = vcmp.lt.s32.totalorder %v4081, 0
      %v4539 = vand.u32 %v4081, 2139095040
      %v4540 = vshrl.u32 %v4539, 23
      %v4541 = vsub.s32 %v4540, 127
      %v4542 = vand.u32 2147483647, %v4081
      %v4543 = vand.u32 %v4542, 8388607
      %v4544 = vor.u32 %v4543, 8388608
      %v4545 = vsub.s32 0, %v4544
      %v4546 = vadd.s32 %v4541, 1
      %vm4547 = vcmp.gt.s32.totalorder %v4546, 0
      %v4548 = vsel %vm4547, %v4546, 0
      %v4549 = vshrl.u32 %v4548, 5
      %v4550 = vand.u32 %v4548, 31
      %v4551 = vsub.s32 32, %v4550
      %v4552 = vshrl.u32 683565275, %v4551
      %v4553 = vshll.u32 683565275, %v4550
      %v4554 = vshrl.u32 2475754826, %v4551
      %v4555 = vor.u32 %v4553, %v4554
      %v4556 = vshll.u32 2475754826, %v4550
      %v4557 = vshrl.u32 2131351028, %v4551
      %v4558 = vor.u32 %v4556, %v4557
      %v4559 = vshll.u32 2131351028, %v4550
      %v4560 = vshrl.u32 2102212464, %v4551
      %v4561 = vor.u32 %v4559, %v4560
      %v4562 = vshll.u32 2102212464, %v4550
      %v4563 = vshrl.u32 920167782, %v4551
      %v4564 = vor.u32 %v4562, %v4563
      %v4565 = vshll.u32 920167782, %v4550
      %v4566 = vshrl.u32 1326507024, %v4551
      %v4567 = vor.u32 %v4565, %v4566
      %vm4568 = vcmp.lt.s32.totalorder %v4549, 1
      %vm4569 = vcmp.lt.s32.totalorder %v4549, 2
      %vm4570 = vcmp.lt.s32.totalorder %v4549, 3
      %vm4571 = vcmp.lt.s32.totalorder %v4549, 4
      %v4572 = vsel %vm4568, %v4552, %v4555
      %v4573 = vsel %vm4571, %v4561, 2102212464
      %v4574 = vsel %vm4570, %v4558, %v4573
      %v4575 = vsel %vm4569, %v4572, %v4574
      %v4576 = vsel %vm4568, %v4555, %v4558
      %v4577 = vsel %vm4571, %v4564, 920167782
      %v4578 = vsel %vm4570, %v4561, %v4577
      %v4579 = vsel %vm4569, %v4576, %v4578
      %v4580 = vsel %vm4568, %v4558, %v4561
      %v4581 = vsel %vm4571, %v4567, 1326507024
      %v4582 = vsel %vm4570, %v4564, %v4581
      %v4583 = vsel %vm4569, %v4580, %v4582
      %v4584 = vshll.u32 %v4544, 8
      %v4585 = vmul.u32.u64.compose %v4584, %v4583
      %v4586 = vextract.low.u32 %v4585
      %v4587 = vextract.high.u32 %v4585
      %v4588 = vmul.u32.u64.compose %v4584, %v4579
      %v4589 = vextract.low.u32 %v4588
      %v4590 = vextract.high.u32 %v4588
      %v4591 = vmul.u32 %v4584, %v4575
      %v4592 = vadd.s32 %v4587, %v4589
      %vm4593 = vc.u32 %v4587, %v4589
      %v4594 = vadd.s32 %v4590, 1
      %v4595 = vsel %vm4593, %v4594, %v4590
      %v4596 = vadd.s32 %v4591, %v4595
      %v4597 = vadd.s32 %v4596, 536870912
      %v4598 = vshrl.u32 %v4597, 30
      %v4599 = vshll.u32 %v4598, 30
      %v4600 = vsub.s32 %v4596, %v4599
      %vm4601 = vcmp.lt.s32.totalorder %v4600, 0
      %v4602 = vsub.s32 0, %v4600
      %v4603 = vsel %vm4601, %v4602, %v4600
      %v4604 = vclz %v4603
      %v4605 = vsub.s32 %v4604, 2
      %vm4606 = vcmp.gt.s32.totalorder 0, %v4605
      %v4607 = vsel %vm4606, 0, %v4605
      %v4608 = vsub.s32 32, %v4607
      %v4609 = vshll.u32 %v4600, %v4607
      %v4610 = vshrl.u32 %v4592, %v4608
      %v4611 = vor.u32 %v4609, %v4610
      %v4612 = vsub.s32 4294967266, %v4607
      %v4613 = vadd.s32 %v4612, 127
      %v4614 = vshll.u32 %v4613, 23
      %v4615 = vor.u32 4788187, %v4614
      %v4616 = vand.u32 2147483647, %v4615
      %v4618 = vcvt.s32.f32 %v4611
      %v4619 = vmul.f32 %v4618, %v4616
      %v4620 = vxor.u32 %v4619, 2147483648
      %v4621 = vsel %vm4538, %v4620, %v4619
      %v4622 = vsub.s32 4, %v4598
      %v4623 = vsel %vm4538, %v4622, %v4598
      %v4624 = vsel %vm4537, %v4081, %v4621
      %v4625 = vsel %vm4537, 0, %v4623
      %v4626 = vcosq.f32.pop %v4624
      %v4627 = vsinq.f32.pop %v4624
      %vm4628 = vweird.f32 %v4081
      %v4629 = vadd.s32 %v4625, 3
      %v4630 = vand.u32 %v4629, 3
      %vm4631 = vcmp.lt.s32.totalorder %v4630, 2
      %vm4632 = vcmp.eq.s32.totalorder %v4630, 0
      %v4633 = vxor.u32 %v4627, 2147483648
      %v4634 = vsel %vm4632, %v4626, %v4633
      %vm4635 = vcmp.eq.s32.totalorder %v4630, 2
      %v4636 = vxor.u32 %v4626, 2147483648
      %v4637 = vsel %vm4635, %v4636, %v4627
      %v4638 = vsel %vm4631, %v4634, %v4637
      %v4639 = vsel %vm4628, nan, %v4638
      %v4640 = vand.u32 2147483647, %v4086
      %vm4641 = vcmp.le.f32.partialorder %v4640, 0.7853982
      %vm4642 = vcmp.lt.s32.totalorder %v4086, 0
      %v4643 = vand.u32 %v4086, 2139095040
      %v4644 = vshrl.u32 %v4643, 23
      %v4645 = vsub.s32 %v4644, 127
      %v4646 = vand.u32 2147483647, %v4086
      %v4647 = vand.u32 %v4646, 8388607
      %v4648 = vor.u32 %v4647, 8388608
      %v4649 = vsub.s32 0, %v4648
      %v4650 = vadd.s32 %v4645, 1
      %vm4651 = vcmp.gt.s32.totalorder %v4650, 0
      %v4652 = vsel %vm4651, %v4650, 0
      %v4653 = vshrl.u32 %v4652, 5
      %v4654 = vand.u32 %v4652, 31
      %v4655 = vsub.s32 32, %v4654
      %v4656 = vshrl.u32 683565275, %v4655
      %v4657 = vshll.u32 683565275, %v4654
      %v4658 = vshrl.u32 2475754826, %v4655
      %v4659 = vor.u32 %v4657, %v4658
      %v4660 = vshll.u32 2475754826, %v4654
      %v4661 = vshrl.u32 2131351028, %v4655
      %v4662 = vor.u32 %v4660, %v4661
      %v4663 = vshll.u32 2131351028, %v4654
      %v4664 = vshrl.u32 2102212464, %v4655
      %v4665 = vor.u32 %v4663, %v4664
      %v4666 = vshll.u32 2102212464, %v4654
      %v4667 = vshrl.u32 920167782, %v4655
      %v4668 = vor.u32 %v4666, %v4667
      %v4669 = vshll.u32 920167782, %v4654
      %v4670 = vshrl.u32 1326507024, %v4655
      %v4671 = vor.u32 %v4669, %v4670
      %vm4672 = vcmp.lt.s32.totalorder %v4653, 1
      %vm4673 = vcmp.lt.s32.totalorder %v4653, 2
      %vm4674 = vcmp.lt.s32.totalorder %v4653, 3
      %vm4675 = vcmp.lt.s32.totalorder %v4653, 4
      %v4676 = vsel %vm4672, %v4656, %v4659
      %v4677 = vsel %vm4675, %v4665, 2102212464
      %v4678 = vsel %vm4674, %v4662, %v4677
      %v4679 = vsel %vm4673, %v4676, %v4678
      %v4680 = vsel %vm4672, %v4659, %v4662
      %v4681 = vsel %vm4675, %v4668, 920167782
      %v4682 = vsel %vm4674, %v4665, %v4681
      %v4683 = vsel %vm4673, %v4680, %v4682
      %v4684 = vsel %vm4672, %v4662, %v4665
      %v4685 = vsel %vm4675, %v4671, 1326507024
      %v4686 = vsel %vm4674, %v4668, %v4685
      %v4687 = vsel %vm4673, %v4684, %v4686
      %v4688 = vshll.u32 %v4648, 8
      %v4689 = vmul.u32.u64.compose %v4688, %v4687
      %v4690 = vextract.low.u32 %v4689
      %v4691 = vextract.high.u32 %v4689
      %v4692 = vmul.u32.u64.compose %v4688, %v4683
      %v4693 = vextract.low.u32 %v4692
      %v4694 = vextract.high.u32 %v4692
      %v4695 = vmul.u32 %v4688, %v4679
      %v4696 = vadd.s32 %v4691, %v4693
      %vm4697 = vc.u32 %v4691, %v4693
      %v4698 = vadd.s32 %v4694, 1
      %v4699 = vsel %vm4697, %v4698, %v4694
      %v4700 = vadd.s32 %v4695, %v4699
      %v4701 = vadd.s32 %v4700, 536870912
      %v4702 = vshrl.u32 %v4701, 30
      %v4703 = vshll.u32 %v4702, 30
      %v4704 = vsub.s32 %v4700, %v4703
      %vm4705 = vcmp.lt.s32.totalorder %v4704, 0
      %v4706 = vsub.s32 0, %v4704
      %v4707 = vsel %vm4705, %v4706, %v4704
      %v4708 = vclz %v4707
      %v4709 = vsub.s32 %v4708, 2
      %vm4710 = vcmp.gt.s32.totalorder 0, %v4709
      %v4711 = vsel %vm4710, 0, %v4709
      %v4712 = vsub.s32 32, %v4711
      %v4713 = vshll.u32 %v4704, %v4711
      %v4714 = vshrl.u32 %v4696, %v4712
      %v4715 = vor.u32 %v4713, %v4714
      %v4716 = vsub.s32 4294967266, %v4711
      %v4717 = vadd.s32 %v4716, 127
      %v4718 = vshll.u32 %v4717, 23
      %v4719 = vor.u32 4788187, %v4718
      %v4720 = vand.u32 2147483647, %v4719
      %v4722 = vcvt.s32.f32 %v4715
      %v4723 = vmul.f32 %v4722, %v4720
      %v4724 = vxor.u32 %v4723, 2147483648
      %v4725 = vsel %vm4642, %v4724, %v4723
      %v4726 = vsub.s32 4, %v4702
      %v4727 = vsel %vm4642, %v4726, %v4702
      %v4728 = vsel %vm4641, %v4086, %v4725
      %v4729 = vsel %vm4641, 0, %v4727
      %v4730 = vcosq.f32.pop %v4728
      %v4731 = vsinq.f32.pop %v4728
      %vm4732 = vweird.f32 %v4086
      %v4733 = vadd.s32 %v4729, 3
      %v4734 = vand.u32 %v4733, 3
      %vm4735 = vcmp.lt.s32.totalorder %v4734, 2
      %vm4736 = vcmp.eq.s32.totalorder %v4734, 0
      %v4737 = vxor.u32 %v4731, 2147483648
      %v4738 = vsel %vm4736, %v4730, %v4737
      %vm4739 = vcmp.eq.s32.totalorder %v4734, 2
      %v4740 = vxor.u32 %v4730, 2147483648
      %v4741 = vsel %vm4739, %v4740, %v4731
      %v4742 = vsel %vm4735, %v4738, %v4741
      %v4743 = vsel %vm4732, nan, %v4742
      %v4744 = vand.u32 2147483647, %v4091
      %vm4745 = vcmp.le.f32.partialorder %v4744, 0.7853982
      %vm4746 = vcmp.lt.s32.totalorder %v4091, 0
      %v4747 = vand.u32 %v4091, 2139095040
      %v4748 = vshrl.u32 %v4747, 23
      %v4749 = vsub.s32 %v4748, 127
      %v4750 = vand.u32 2147483647, %v4091
      %v4751 = vand.u32 %v4750, 8388607
      %v4752 = vor.u32 %v4751, 8388608
      %v4753 = vsub.s32 0, %v4752
      %v4754 = vadd.s32 %v4749, 1
      %vm4755 = vcmp.gt.s32.totalorder %v4754, 0
      %v4756 = vsel %vm4755, %v4754, 0
      %v4757 = vshrl.u32 %v4756, 5
      %v4758 = vand.u32 %v4756, 31
      %v4759 = vsub.s32 32, %v4758
      %v4760 = vshrl.u32 683565275, %v4759
      %v4761 = vshll.u32 683565275, %v4758
      %v4762 = vshrl.u32 2475754826, %v4759
      %v4763 = vor.u32 %v4761, %v4762
      %v4764 = vshll.u32 2475754826, %v4758
      %v4765 = vshrl.u32 2131351028, %v4759
      %v4766 = vor.u32 %v4764, %v4765
      %v4767 = vshll.u32 2131351028, %v4758
      %v4768 = vshrl.u32 2102212464, %v4759
      %v4769 = vor.u32 %v4767, %v4768
      %v4770 = vshll.u32 2102212464, %v4758
      %v4771 = vshrl.u32 920167782, %v4759
      %v4772 = vor.u32 %v4770, %v4771
      %v4773 = vshll.u32 920167782, %v4758
      %v4774 = vshrl.u32 1326507024, %v4759
      %v4775 = vor.u32 %v4773, %v4774
      %vm4776 = vcmp.lt.s32.totalorder %v4757, 1
      %vm4777 = vcmp.lt.s32.totalorder %v4757, 2
      %vm4778 = vcmp.lt.s32.totalorder %v4757, 3
      %vm4779 = vcmp.lt.s32.totalorder %v4757, 4
      %v4780 = vsel %vm4776, %v4760, %v4763
      %v4781 = vsel %vm4779, %v4769, 2102212464
      %v4782 = vsel %vm4778, %v4766, %v4781
      %v4783 = vsel %vm4777, %v4780, %v4782
      %v4784 = vsel %vm4776, %v4763, %v4766
      %v4785 = vsel %vm4779, %v4772, 920167782
      %v4786 = vsel %vm4778, %v4769, %v4785
      %v4787 = vsel %vm4777, %v4784, %v4786
      %v4788 = vsel %vm4776, %v4766, %v4769
      %v4789 = vsel %vm4779, %v4775, 1326507024
      %v4790 = vsel %vm4778, %v4772, %v4789
      %v4791 = vsel %vm4777, %v4788, %v4790
      %v4792 = vshll.u32 %v4752, 8
      %v4793 = vmul.u32.u64.compose %v4792, %v4791
      %v4794 = vextract.low.u32 %v4793
      %v4795 = vextract.high.u32 %v4793
      %v4796 = vmul.u32.u64.compose %v4792, %v4787
      %v4797 = vextract.low.u32 %v4796
      %v4798 = vextract.high.u32 %v4796
      %v4799 = vmul.u32 %v4792, %v4783
      %v4800 = vadd.s32 %v4795, %v4797
      %vm4801 = vc.u32 %v4795, %v4797
      %v4802 = vadd.s32 %v4798, 1
      %v4803 = vsel %vm4801, %v4802, %v4798
      %v4804 = vadd.s32 %v4799, %v4803
      %v4805 = vadd.s32 %v4804, 536870912
      %v4806 = vshrl.u32 %v4805, 30
      %v4807 = vshll.u32 %v4806, 30
      %v4808 = vsub.s32 %v4804, %v4807
      %vm4809 = vcmp.lt.s32.totalorder %v4808, 0
      %v4810 = vsub.s32 0, %v4808
      %v4811 = vsel %vm4809, %v4810, %v4808
      %v4812 = vclz %v4811
      %v4813 = vsub.s32 %v4812, 2
      %vm4814 = vcmp.gt.s32.totalorder 0, %v4813
      %v4815 = vsel %vm4814, 0, %v4813
      %v4816 = vsub.s32 32, %v4815
      %v4817 = vshll.u32 %v4808, %v4815
      %v4818 = vshrl.u32 %v4800, %v4816
      %v4819 = vor.u32 %v4817, %v4818
      %v4820 = vsub.s32 4294967266, %v4815
      %v4821 = vadd.s32 %v4820, 127
      %v4822 = vshll.u32 %v4821, 23
      %v4823 = vor.u32 4788187, %v4822
      %v4824 = vand.u32 2147483647, %v4823
      %v4826 = vcvt.s32.f32 %v4819
      %v4827 = vmul.f32 %v4826, %v4824
      %v4828 = vxor.u32 %v4827, 2147483648
      %v4829 = vsel %vm4746, %v4828, %v4827
      %v4830 = vsub.s32 4, %v4806
      %v4831 = vsel %vm4746, %v4830, %v4806
      %v4832 = vsel %vm4745, %v4091, %v4829
      %v4833 = vsel %vm4745, 0, %v4831
      %v4834 = vcosq.f32.pop %v4832
      %v4835 = vsinq.f32.pop %v4832
      %vm4836 = vweird.f32 %v4091
      %v4837 = vadd.s32 %v4833, 3
      %v4838 = vand.u32 %v4837, 3
      %vm4839 = vcmp.lt.s32.totalorder %v4838, 2
      %vm4840 = vcmp.eq.s32.totalorder %v4838, 0
      %v4841 = vxor.u32 %v4835, 2147483648
      %v4842 = vsel %vm4840, %v4834, %v4841
      %vm4843 = vcmp.eq.s32.totalorder %v4838, 2
      %v4844 = vxor.u32 %v4834, 2147483648
      %v4845 = vsel %vm4843, %v4844, %v4835
      %v4846 = vsel %vm4839, %v4842, %v4845
      %v4847 = vsel %vm4836, nan, %v4846
      %v4848 = vand.u32 2147483647, %v4096
      %vm4849 = vcmp.le.f32.partialorder %v4848, 0.7853982
      %vm4850 = vcmp.lt.s32.totalorder %v4096, 0
      %v4851 = vand.u32 %v4096, 2139095040
      %v4852 = vshrl.u32 %v4851, 23
      %v4853 = vsub.s32 %v4852, 127
      %v4854 = vand.u32 2147483647, %v4096
      %v4855 = vand.u32 %v4854, 8388607
      %v4856 = vor.u32 %v4855, 8388608
      %v4857 = vsub.s32 0, %v4856
      %v4858 = vadd.s32 %v4853, 1
      %vm4859 = vcmp.gt.s32.totalorder %v4858, 0
      %v4860 = vsel %vm4859, %v4858, 0
      %v4861 = vshrl.u32 %v4860, 5
      %v4862 = vand.u32 %v4860, 31
      %v4863 = vsub.s32 32, %v4862
      %v4864 = vshrl.u32 683565275, %v4863
      %v4865 = vshll.u32 683565275, %v4862
      %v4866 = vshrl.u32 2475754826, %v4863
      %v4867 = vor.u32 %v4865, %v4866
      %v4868 = vshll.u32 2475754826, %v4862
      %v4869 = vshrl.u32 2131351028, %v4863
      %v4870 = vor.u32 %v4868, %v4869
      %v4871 = vshll.u32 2131351028, %v4862
      %v4872 = vshrl.u32 2102212464, %v4863
      %v4873 = vor.u32 %v4871, %v4872
      %v4874 = vshll.u32 2102212464, %v4862
      %v4875 = vshrl.u32 920167782, %v4863
      %v4876 = vor.u32 %v4874, %v4875
      %v4877 = vshll.u32 920167782, %v4862
      %v4878 = vshrl.u32 1326507024, %v4863
      %v4879 = vor.u32 %v4877, %v4878
      %vm4880 = vcmp.lt.s32.totalorder %v4861, 1
      %vm4881 = vcmp.lt.s32.totalorder %v4861, 2
      %vm4882 = vcmp.lt.s32.totalorder %v4861, 3
      %vm4883 = vcmp.lt.s32.totalorder %v4861, 4
      %v4884 = vsel %vm4880, %v4864, %v4867
      %v4885 = vsel %vm4883, %v4873, 2102212464
      %v4886 = vsel %vm4882, %v4870, %v4885
      %v4887 = vsel %vm4881, %v4884, %v4886
      %v4888 = vsel %vm4880, %v4867, %v4870
      %v4889 = vsel %vm4883, %v4876, 920167782
      %v4890 = vsel %vm4882, %v4873, %v4889
      %v4891 = vsel %vm4881, %v4888, %v4890
      %v4892 = vsel %vm4880, %v4870, %v4873
      %v4893 = vsel %vm4883, %v4879, 1326507024
      %v4894 = vsel %vm4882, %v4876, %v4893
      %v4895 = vsel %vm4881, %v4892, %v4894
      %v4896 = vshll.u32 %v4856, 8
      %v4897 = vmul.u32.u64.compose %v4896, %v4895
      %v4898 = vextract.low.u32 %v4897
      %v4899 = vextract.high.u32 %v4897
      %v4900 = vmul.u32.u64.compose %v4896, %v4891
      %v4901 = vextract.low.u32 %v4900
      %v4902 = vextract.high.u32 %v4900
      %v4903 = vmul.u32 %v4896, %v4887
      %v4904 = vadd.s32 %v4899, %v4901
      %vm4905 = vc.u32 %v4899, %v4901
      %v4906 = vadd.s32 %v4902, 1
      %v4907 = vsel %vm4905, %v4906, %v4902
      %v4908 = vadd.s32 %v4903, %v4907
      %v4909 = vadd.s32 %v4908, 536870912
      %v4910 = vshrl.u32 %v4909, 30
      %v4911 = vshll.u32 %v4910, 30
      %v4912 = vsub.s32 %v4908, %v4911
      %vm4913 = vcmp.lt.s32.totalorder %v4912, 0
      %v4914 = vsub.s32 0, %v4912
      %v4915 = vsel %vm4913, %v4914, %v4912
      %v4916 = vclz %v4915
      %v4917 = vsub.s32 %v4916, 2
      %vm4918 = vcmp.gt.s32.totalorder 0, %v4917
      %v4919 = vsel %vm4918, 0, %v4917
      %v4920 = vsub.s32 32, %v4919
      %v4921 = vshll.u32 %v4912, %v4919
      %v4922 = vshrl.u32 %v4904, %v4920
      %v4923 = vor.u32 %v4921, %v4922
      %v4924 = vsub.s32 4294967266, %v4919
      %v4925 = vadd.s32 %v4924, 127
      %v4926 = vshll.u32 %v4925, 23
      %v4927 = vor.u32 4788187, %v4926
      %v4928 = vand.u32 2147483647, %v4927
      %v4930 = vcvt.s32.f32 %v4923
      %v4931 = vmul.f32 %v4930, %v4928
      %v4932 = vxor.u32 %v4931, 2147483648
      %v4933 = vsel %vm4850, %v4932, %v4931
      %v4934 = vsub.s32 4, %v4910
      %v4935 = vsel %vm4850, %v4934, %v4910
      %v4936 = vsel %vm4849, %v4096, %v4933
      %v4937 = vsel %vm4849, 0, %v4935
      %v4938 = vcosq.f32.pop %v4936
      %v4939 = vsinq.f32.pop %v4936
      %vm4940 = vweird.f32 %v4096
      %v4941 = vadd.s32 %v4937, 3
      %v4942 = vand.u32 %v4941, 3
      %vm4943 = vcmp.lt.s32.totalorder %v4942, 2
      %vm4944 = vcmp.eq.s32.totalorder %v4942, 0
      %v4945 = vxor.u32 %v4939, 2147483648
      %v4946 = vsel %vm4944, %v4938, %v4945
      %vm4947 = vcmp.eq.s32.totalorder %v4942, 2
      %v4948 = vxor.u32 %v4938, 2147483648
      %v4949 = vsel %vm4947, %v4948, %v4939
      %v4950 = vsel %vm4943, %v4946, %v4949
      %v4951 = vsel %vm4940, nan, %v4950
      %v4952 = vand.u32 2147483647, %v4101
      %vm4953 = vcmp.le.f32.partialorder %v4952, 0.7853982
      %vm4954 = vcmp.lt.s32.totalorder %v4101, 0
      %v4955 = vand.u32 %v4101, 2139095040
      %v4956 = vshrl.u32 %v4955, 23
      %v4957 = vsub.s32 %v4956, 127
      %v4958 = vand.u32 2147483647, %v4101
      %v4959 = vand.u32 %v4958, 8388607
      %v4960 = vor.u32 %v4959, 8388608
      %v4961 = vsub.s32 0, %v4960
      %v4962 = vadd.s32 %v4957, 1
      %vm4963 = vcmp.gt.s32.totalorder %v4962, 0
      %v4964 = vsel %vm4963, %v4962, 0
      %v4965 = vshrl.u32 %v4964, 5
      %v4966 = vand.u32 %v4964, 31
      %v4967 = vsub.s32 32, %v4966
      %v4968 = vshrl.u32 683565275, %v4967
      %v4969 = vshll.u32 683565275, %v4966
      %v4970 = vshrl.u32 2475754826, %v4967
      %v4971 = vor.u32 %v4969, %v4970
      %v4972 = vshll.u32 2475754826, %v4966
      %v4973 = vshrl.u32 2131351028, %v4967
      %v4974 = vor.u32 %v4972, %v4973
      %v4975 = vshll.u32 2131351028, %v4966
      %v4976 = vshrl.u32 2102212464, %v4967
      %v4977 = vor.u32 %v4975, %v4976
      %v4978 = vshll.u32 2102212464, %v4966
      %v4979 = vshrl.u32 920167782, %v4967
      %v4980 = vor.u32 %v4978, %v4979
      %v4981 = vshll.u32 920167782, %v4966
      %v4982 = vshrl.u32 1326507024, %v4967
      %v4983 = vor.u32 %v4981, %v4982
      %vm4984 = vcmp.lt.s32.totalorder %v4965, 1
      %vm4985 = vcmp.lt.s32.totalorder %v4965, 2
      %vm4986 = vcmp.lt.s32.totalorder %v4965, 3
      %vm4987 = vcmp.lt.s32.totalorder %v4965, 4
      %v4988 = vsel %vm4984, %v4968, %v4971
      %v4989 = vsel %vm4987, %v4977, 2102212464
      %v4990 = vsel %vm4986, %v4974, %v4989
      %v4991 = vsel %vm4985, %v4988, %v4990
      %v4992 = vsel %vm4984, %v4971, %v4974
      %v4993 = vsel %vm4987, %v4980, 920167782
      %v4994 = vsel %vm4986, %v4977, %v4993
      %v4995 = vsel %vm4985, %v4992, %v4994
      %v4996 = vsel %vm4984, %v4974, %v4977
      %v4997 = vsel %vm4987, %v4983, 1326507024
      %v4998 = vsel %vm4986, %v4980, %v4997
      %v4999 = vsel %vm4985, %v4996, %v4998
      %v5000 = vshll.u32 %v4960, 8
      %v5001 = vmul.u32.u64.compose %v5000, %v4999
      %v5002 = vextract.low.u32 %v5001
      %v5003 = vextract.high.u32 %v5001
      %v5004 = vmul.u32.u64.compose %v5000, %v4995
      %v5005 = vextract.low.u32 %v5004
      %v5006 = vextract.high.u32 %v5004
      %v5007 = vmul.u32 %v5000, %v4991
      %v5008 = vadd.s32 %v5003, %v5005
      %vm5009 = vc.u32 %v5003, %v5005
      %v5010 = vadd.s32 %v5006, 1
      %v5011 = vsel %vm5009, %v5010, %v5006
      %v5012 = vadd.s32 %v5007, %v5011
      %v5013 = vadd.s32 %v5012, 536870912
      %v5014 = vshrl.u32 %v5013, 30
      %v5015 = vshll.u32 %v5014, 30
      %v5016 = vsub.s32 %v5012, %v5015
      %vm5017 = vcmp.lt.s32.totalorder %v5016, 0
      %v5018 = vsub.s32 0, %v5016
      %v5019 = vsel %vm5017, %v5018, %v5016
      %v5020 = vclz %v5019
      %v5021 = vsub.s32 %v5020, 2
      %vm5022 = vcmp.gt.s32.totalorder 0, %v5021
      %v5023 = vsel %vm5022, 0, %v5021
      %v5024 = vsub.s32 32, %v5023
      %v5025 = vshll.u32 %v5016, %v5023
      %v5026 = vshrl.u32 %v5008, %v5024
      %v5027 = vor.u32 %v5025, %v5026
      %v5028 = vsub.s32 4294967266, %v5023
      %v5029 = vadd.s32 %v5028, 127
      %v5030 = vshll.u32 %v5029, 23
      %v5031 = vor.u32 4788187, %v5030
      %v5032 = vand.u32 2147483647, %v5031
      %v5034 = vcvt.s32.f32 %v5027
      %v5035 = vmul.f32 %v5034, %v5032
      %v5036 = vxor.u32 %v5035, 2147483648
      %v5037 = vsel %vm4954, %v5036, %v5035
      %v5038 = vsub.s32 4, %v5014
      %v5039 = vsel %vm4954, %v5038, %v5014
      %v5040 = vsel %vm4953, %v4101, %v5037
      %v5041 = vsel %vm4953, 0, %v5039
      %v5042 = vcosq.f32.pop %v5040
      %v5043 = vsinq.f32.pop %v5040
      %vm5044 = vweird.f32 %v4101
      %v5045 = vadd.s32 %v5041, 3
      %v5046 = vand.u32 %v5045, 3
      %vm5047 = vcmp.lt.s32.totalorder %v5046, 2
      %vm5048 = vcmp.eq.s32.totalorder %v5046, 0
      %v5049 = vxor.u32 %v5043, 2147483648
      %v5050 = vsel %vm5048, %v5042, %v5049
      %vm5051 = vcmp.eq.s32.totalorder %v5046, 2
      %v5052 = vxor.u32 %v5042, 2147483648
      %v5053 = vsel %vm5051, %v5052, %v5043
      %v5054 = vsel %vm5047, %v5050, %v5053
      %v5055 = vsel %vm5044, nan, %v5054
      %v5056 = vand.u32 2147483647, %v4106
      %vm5057 = vcmp.le.f32.partialorder %v5056, 0.7853982
      %vm5058 = vcmp.lt.s32.totalorder %v4106, 0
      %v5059 = vand.u32 %v4106, 2139095040
      %v5060 = vshrl.u32 %v5059, 23
      %v5061 = vsub.s32 %v5060, 127
      %v5062 = vand.u32 2147483647, %v4106
      %v5063 = vand.u32 %v5062, 8388607
      %v5064 = vor.u32 %v5063, 8388608
      %v5065 = vsub.s32 0, %v5064
      %v5066 = vadd.s32 %v5061, 1
      %vm5067 = vcmp.gt.s32.totalorder %v5066, 0
      %v5068 = vsel %vm5067, %v5066, 0
      %v5069 = vshrl.u32 %v5068, 5
      %v5070 = vand.u32 %v5068, 31
      %v5071 = vsub.s32 32, %v5070
      %v5072 = vshrl.u32 683565275, %v5071
      %v5073 = vshll.u32 683565275, %v5070
      %v5074 = vshrl.u32 2475754826, %v5071
      %v5075 = vor.u32 %v5073, %v5074
      %v5076 = vshll.u32 2475754826, %v5070
      %v5077 = vshrl.u32 2131351028, %v5071
      %v5078 = vor.u32 %v5076, %v5077
      %v5079 = vshll.u32 2131351028, %v5070
      %v5080 = vshrl.u32 2102212464, %v5071
      %v5081 = vor.u32 %v5079, %v5080
      %v5082 = vshll.u32 2102212464, %v5070
      %v5083 = vshrl.u32 920167782, %v5071
      %v5084 = vor.u32 %v5082, %v5083
      %v5085 = vshll.u32 920167782, %v5070
      %v5086 = vshrl.u32 1326507024, %v5071
      %v5087 = vor.u32 %v5085, %v5086
      %vm5088 = vcmp.lt.s32.totalorder %v5069, 1
      %vm5089 = vcmp.lt.s32.totalorder %v5069, 2
      %vm5090 = vcmp.lt.s32.totalorder %v5069, 3
      %vm5091 = vcmp.lt.s32.totalorder %v5069, 4
      %v5092 = vsel %vm5088, %v5072, %v5075
      %v5093 = vsel %vm5091, %v5081, 2102212464
      %v5094 = vsel %vm5090, %v5078, %v5093
      %v5095 = vsel %vm5089, %v5092, %v5094
      %v5096 = vsel %vm5088, %v5075, %v5078
      %v5097 = vsel %vm5091, %v5084, 920167782
      %v5098 = vsel %vm5090, %v5081, %v5097
      %v5099 = vsel %vm5089, %v5096, %v5098
      %v5100 = vsel %vm5088, %v5078, %v5081
      %v5101 = vsel %vm5091, %v5087, 1326507024
      %v5102 = vsel %vm5090, %v5084, %v5101
      %v5103 = vsel %vm5089, %v5100, %v5102
      %v5104 = vshll.u32 %v5064, 8
      %v5105 = vmul.u32.u64.compose %v5104, %v5103
      %v5106 = vextract.low.u32 %v5105
      %v5107 = vextract.high.u32 %v5105
      %v5108 = vmul.u32.u64.compose %v5104, %v5099
      %v5109 = vextract.low.u32 %v5108
      %v5110 = vextract.high.u32 %v5108
      %v5111 = vmul.u32 %v5104, %v5095
      %v5112 = vadd.s32 %v5107, %v5109
      %vm5113 = vc.u32 %v5107, %v5109
      %v5114 = vadd.s32 %v5110, 1
      %v5115 = vsel %vm5113, %v5114, %v5110
      %v5116 = vadd.s32 %v5111, %v5115
      %v5117 = vadd.s32 %v5116, 536870912
      %v5118 = vshrl.u32 %v5117, 30
      %v5119 = vshll.u32 %v5118, 30
      %v5120 = vsub.s32 %v5116, %v5119
      %vm5121 = vcmp.lt.s32.totalorder %v5120, 0
      %v5122 = vsub.s32 0, %v5120
      %v5123 = vsel %vm5121, %v5122, %v5120
      %v5124 = vclz %v5123
      %v5125 = vsub.s32 %v5124, 2
      %vm5126 = vcmp.gt.s32.totalorder 0, %v5125
      %v5127 = vsel %vm5126, 0, %v5125
      %v5128 = vsub.s32 32, %v5127
      %v5129 = vshll.u32 %v5120, %v5127
      %v5130 = vshrl.u32 %v5112, %v5128
      %v5131 = vor.u32 %v5129, %v5130
      %v5132 = vsub.s32 4294967266, %v5127
      %v5133 = vadd.s32 %v5132, 127
      %v5134 = vshll.u32 %v5133, 23
      %v5135 = vor.u32 4788187, %v5134
      %v5136 = vand.u32 2147483647, %v5135
      %v5138 = vcvt.s32.f32 %v5131
      %v5139 = vmul.f32 %v5138, %v5136
      %v5140 = vxor.u32 %v5139, 2147483648
      %v5141 = vsel %vm5058, %v5140, %v5139
      %v5142 = vsub.s32 4, %v5118
      %v5143 = vsel %vm5058, %v5142, %v5118
      %v5144 = vsel %vm5057, %v4106, %v5141
      %v5145 = vsel %vm5057, 0, %v5143
      %v5146 = vcosq.f32.pop %v5144
      %v5147 = vsinq.f32.pop %v5144
      %vm5148 = vweird.f32 %v4106
      %v5149 = vadd.s32 %v5145, 3
      %v5150 = vand.u32 %v5149, 3
      %vm5151 = vcmp.lt.s32.totalorder %v5150, 2
      %vm5152 = vcmp.eq.s32.totalorder %v5150, 0
      %v5153 = vxor.u32 %v5147, 2147483648
      %v5154 = vsel %vm5152, %v5146, %v5153
      %vm5155 = vcmp.eq.s32.totalorder %v5150, 2
      %v5156 = vxor.u32 %v5146, 2147483648
      %v5157 = vsel %vm5155, %v5156, %v5147
      %v5158 = vsel %vm5151, %v5154, %v5157
      %v5159 = vsel %vm5148, nan, %v5158
      %v5160 = vand.u32 2147483647, %v4111
      %vm5161 = vcmp.le.f32.partialorder %v5160, 0.7853982
      %vm5162 = vcmp.lt.s32.totalorder %v4111, 0
      %v5163 = vand.u32 %v4111, 2139095040
      %v5164 = vshrl.u32 %v5163, 23
      %v5165 = vsub.s32 %v5164, 127
      %v5166 = vand.u32 2147483647, %v4111
      %v5167 = vand.u32 %v5166, 8388607
      %v5168 = vor.u32 %v5167, 8388608
      %v5169 = vsub.s32 0, %v5168
      %v5170 = vadd.s32 %v5165, 1
      %vm5171 = vcmp.gt.s32.totalorder %v5170, 0
      %v5172 = vsel %vm5171, %v5170, 0
      %v5173 = vshrl.u32 %v5172, 5
      %v5174 = vand.u32 %v5172, 31
      %v5175 = vsub.s32 32, %v5174
      %v5176 = vshrl.u32 683565275, %v5175
      %v5177 = vshll.u32 683565275, %v5174
      %v5178 = vshrl.u32 2475754826, %v5175
      %v5179 = vor.u32 %v5177, %v5178
      %v5180 = vshll.u32 2475754826, %v5174
      %v5181 = vshrl.u32 2131351028, %v5175
      %v5182 = vor.u32 %v5180, %v5181
      %v5183 = vshll.u32 2131351028, %v5174
      %v5184 = vshrl.u32 2102212464, %v5175
      %v5185 = vor.u32 %v5183, %v5184
      %v5186 = vshll.u32 2102212464, %v5174
      %v5187 = vshrl.u32 920167782, %v5175
      %v5188 = vor.u32 %v5186, %v5187
      %v5189 = vshll.u32 920167782, %v5174
      %v5190 = vshrl.u32 1326507024, %v5175
      %v5191 = vor.u32 %v5189, %v5190
      %vm5192 = vcmp.lt.s32.totalorder %v5173, 1
      %vm5193 = vcmp.lt.s32.totalorder %v5173, 2
      %vm5194 = vcmp.lt.s32.totalorder %v5173, 3
      %vm5195 = vcmp.lt.s32.totalorder %v5173, 4
      %v5196 = vsel %vm5192, %v5176, %v5179
      %v5197 = vsel %vm5195, %v5185, 2102212464
      %v5198 = vsel %vm5194, %v5182, %v5197
      %v5199 = vsel %vm5193, %v5196, %v5198
      %v5200 = vsel %vm5192, %v5179, %v5182
      %v5201 = vsel %vm5195, %v5188, 920167782
      %v5202 = vsel %vm5194, %v5185, %v5201
      %v5203 = vsel %vm5193, %v5200, %v5202
      %v5204 = vsel %vm5192, %v5182, %v5185
      %v5205 = vsel %vm5195, %v5191, 1326507024
      %v5206 = vsel %vm5194, %v5188, %v5205
      %v5207 = vsel %vm5193, %v5204, %v5206
      %v5208 = vshll.u32 %v5168, 8
      %v5209 = vmul.u32.u64.compose %v5208, %v5207
      %v5210 = vextract.low.u32 %v5209
      %v5211 = vextract.high.u32 %v5209
      %v5212 = vmul.u32.u64.compose %v5208, %v5203
      %v5213 = vextract.low.u32 %v5212
      %v5214 = vextract.high.u32 %v5212
      %v5215 = vmul.u32 %v5208, %v5199
      %v5216 = vadd.s32 %v5211, %v5213
      %vm5217 = vc.u32 %v5211, %v5213
      %v5218 = vadd.s32 %v5214, 1
      %v5219 = vsel %vm5217, %v5218, %v5214
      %v5220 = vadd.s32 %v5215, %v5219
      %v5221 = vadd.s32 %v5220, 536870912
      %v5222 = vshrl.u32 %v5221, 30
      %v5223 = vshll.u32 %v5222, 30
      %v5224 = vsub.s32 %v5220, %v5223
      %vm5225 = vcmp.lt.s32.totalorder %v5224, 0
      %v5226 = vsub.s32 0, %v5224
      %v5227 = vsel %vm5225, %v5226, %v5224
      %v5228 = vclz %v5227
      %v5229 = vsub.s32 %v5228, 2
      %vm5230 = vcmp.gt.s32.totalorder 0, %v5229
      %v5231 = vsel %vm5230, 0, %v5229
      %v5232 = vsub.s32 32, %v5231
      %v5233 = vshll.u32 %v5224, %v5231
      %v5234 = vshrl.u32 %v5216, %v5232
      %v5235 = vor.u32 %v5233, %v5234
      %v5236 = vsub.s32 4294967266, %v5231
      %v5237 = vadd.s32 %v5236, 127
      %v5238 = vshll.u32 %v5237, 23
      %v5239 = vor.u32 4788187, %v5238
      %v5240 = vand.u32 2147483647, %v5239
      %v5242 = vcvt.s32.f32 %v5235
      %v5243 = vmul.f32 %v5242, %v5240
      %v5244 = vxor.u32 %v5243, 2147483648
      %v5245 = vsel %vm5162, %v5244, %v5243
      %v5246 = vsub.s32 4, %v5222
      %v5247 = vsel %vm5162, %v5246, %v5222
      %v5248 = vsel %vm5161, %v4111, %v5245
      %v5249 = vsel %vm5161, 0, %v5247
      %v5250 = vcosq.f32.pop %v5248
      %v5251 = vsinq.f32.pop %v5248
      %vm5252 = vweird.f32 %v4111
      %v5253 = vadd.s32 %v5249, 3
      %v5254 = vand.u32 %v5253, 3
      %vm5255 = vcmp.lt.s32.totalorder %v5254, 2
      %vm5256 = vcmp.eq.s32.totalorder %v5254, 0
      %v5257 = vxor.u32 %v5251, 2147483648
      %v5258 = vsel %vm5256, %v5250, %v5257
      %vm5259 = vcmp.eq.s32.totalorder %v5254, 2
      %v5260 = vxor.u32 %v5250, 2147483648
      %v5261 = vsel %vm5259, %v5260, %v5251
      %v5262 = vsel %vm5255, %v5258, %v5261
      %v5263 = vsel %vm5252, nan, %v5262
      %v5264 = vand.u32 2147483647, %v4116
      %vm5265 = vcmp.le.f32.partialorder %v5264, 0.7853982
      %vm5266 = vcmp.lt.s32.totalorder %v4116, 0
      %v5267 = vand.u32 %v4116, 2139095040
      %v5268 = vshrl.u32 %v5267, 23
      %v5269 = vsub.s32 %v5268, 127
      %v5270 = vand.u32 2147483647, %v4116
      %v5271 = vand.u32 %v5270, 8388607
      %v5272 = vor.u32 %v5271, 8388608
      %v5273 = vsub.s32 0, %v5272
      %v5274 = vadd.s32 %v5269, 1
      %vm5275 = vcmp.gt.s32.totalorder %v5274, 0
      %v5276 = vsel %vm5275, %v5274, 0
      %v5277 = vshrl.u32 %v5276, 5
      %v5278 = vand.u32 %v5276, 31
      %v5279 = vsub.s32 32, %v5278
      %v5280 = vshrl.u32 683565275, %v5279
      %v5281 = vshll.u32 683565275, %v5278
      %v5282 = vshrl.u32 2475754826, %v5279
      %v5283 = vor.u32 %v5281, %v5282
      %v5284 = vshll.u32 2475754826, %v5278
      %v5285 = vshrl.u32 2131351028, %v5279
      %v5286 = vor.u32 %v5284, %v5285
      %v5287 = vshll.u32 2131351028, %v5278
      %v5288 = vshrl.u32 2102212464, %v5279
      %v5289 = vor.u32 %v5287, %v5288
      %v5290 = vshll.u32 2102212464, %v5278
      %v5291 = vshrl.u32 920167782, %v5279
      %v5292 = vor.u32 %v5290, %v5291
      %v5293 = vshll.u32 920167782, %v5278
      %v5294 = vshrl.u32 1326507024, %v5279
      %v5295 = vor.u32 %v5293, %v5294
      %vm5296 = vcmp.lt.s32.totalorder %v5277, 1
      %vm5297 = vcmp.lt.s32.totalorder %v5277, 2
      %vm5298 = vcmp.lt.s32.totalorder %v5277, 3
      %vm5299 = vcmp.lt.s32.totalorder %v5277, 4
      %v5300 = vsel %vm5296, %v5280, %v5283
      %v5301 = vsel %vm5299, %v5289, 2102212464
      %v5302 = vsel %vm5298, %v5286, %v5301
      %v5303 = vsel %vm5297, %v5300, %v5302
      %v5304 = vsel %vm5296, %v5283, %v5286
      %v5305 = vsel %vm5299, %v5292, 920167782
      %v5306 = vsel %vm5298, %v5289, %v5305
      %v5307 = vsel %vm5297, %v5304, %v5306
      %v5308 = vsel %vm5296, %v5286, %v5289
      %v5309 = vsel %vm5299, %v5295, 1326507024
      %v5310 = vsel %vm5298, %v5292, %v5309
      %v5311 = vsel %vm5297, %v5308, %v5310
      %v5312 = vshll.u32 %v5272, 8
      %v5313 = vmul.u32.u64.compose %v5312, %v5311
      %v5314 = vextract.low.u32 %v5313
      %v5315 = vextract.high.u32 %v5313
      %v5316 = vmul.u32.u64.compose %v5312, %v5307
      %v5317 = vextract.low.u32 %v5316
      %v5318 = vextract.high.u32 %v5316
      %v5319 = vmul.u32 %v5312, %v5303
      %v5320 = vadd.s32 %v5315, %v5317
      %vm5321 = vc.u32 %v5315, %v5317
      %v5322 = vadd.s32 %v5318, 1
      %v5323 = vsel %vm5321, %v5322, %v5318
      %v5324 = vadd.s32 %v5319, %v5323
      %v5325 = vadd.s32 %v5324, 536870912
      %v5326 = vshrl.u32 %v5325, 30
      %v5327 = vshll.u32 %v5326, 30
      %v5328 = vsub.s32 %v5324, %v5327
      %vm5329 = vcmp.lt.s32.totalorder %v5328, 0
      %v5330 = vsub.s32 0, %v5328
      %v5331 = vsel %vm5329, %v5330, %v5328
      %v5332 = vclz %v5331
      %v5333 = vsub.s32 %v5332, 2
      %vm5334 = vcmp.gt.s32.totalorder 0, %v5333
      %v5335 = vsel %vm5334, 0, %v5333
      %v5336 = vsub.s32 32, %v5335
      %v5337 = vshll.u32 %v5328, %v5335
      %v5338 = vshrl.u32 %v5320, %v5336
      %v5339 = vor.u32 %v5337, %v5338
      %v5340 = vsub.s32 4294967266, %v5335
      %v5341 = vadd.s32 %v5340, 127
      %v5342 = vshll.u32 %v5341, 23
      %v5343 = vor.u32 4788187, %v5342
      %v5344 = vand.u32 2147483647, %v5343
      %v5346 = vcvt.s32.f32 %v5339
      %v5347 = vmul.f32 %v5346, %v5344
      %v5348 = vxor.u32 %v5347, 2147483648
      %v5349 = vsel %vm5266, %v5348, %v5347
      %v5350 = vsub.s32 4, %v5326
      %v5351 = vsel %vm5266, %v5350, %v5326
      %v5352 = vsel %vm5265, %v4116, %v5349
      %v5353 = vsel %vm5265, 0, %v5351
      %v5354 = vcosq.f32.pop %v5352
      %v5355 = vsinq.f32.pop %v5352
      %vm5356 = vweird.f32 %v4116
      %v5357 = vadd.s32 %v5353, 3
      %v5358 = vand.u32 %v5357, 3
      %vm5359 = vcmp.lt.s32.totalorder %v5358, 2
      %vm5360 = vcmp.eq.s32.totalorder %v5358, 0
      %v5361 = vxor.u32 %v5355, 2147483648
      %v5362 = vsel %vm5360, %v5354, %v5361
      %vm5363 = vcmp.eq.s32.totalorder %v5358, 2
      %v5364 = vxor.u32 %v5354, 2147483648
      %v5365 = vsel %vm5363, %v5364, %v5355
      %v5366 = vsel %vm5359, %v5362, %v5365
      %v5367 = vsel %vm5356, nan, %v5366
      %v5368 = vand.u32 2147483647, %v4121
      %vm5369 = vcmp.le.f32.partialorder %v5368, 0.7853982
      %vm5370 = vcmp.lt.s32.totalorder %v4121, 0
      %v5371 = vand.u32 %v4121, 2139095040
      %v5372 = vshrl.u32 %v5371, 23
      %v5373 = vsub.s32 %v5372, 127
      %v5374 = vand.u32 2147483647, %v4121
      %v5375 = vand.u32 %v5374, 8388607
      %v5376 = vor.u32 %v5375, 8388608
      %v5377 = vsub.s32 0, %v5376
      %v5378 = vadd.s32 %v5373, 1
      %vm5379 = vcmp.gt.s32.totalorder %v5378, 0
      %v5380 = vsel %vm5379, %v5378, 0
      %v5381 = vshrl.u32 %v5380, 5
      %v5382 = vand.u32 %v5380, 31
      %v5383 = vsub.s32 32, %v5382
      %v5384 = vshrl.u32 683565275, %v5383
      %v5385 = vshll.u32 683565275, %v5382
      %v5386 = vshrl.u32 2475754826, %v5383
      %v5387 = vor.u32 %v5385, %v5386
      %v5388 = vshll.u32 2475754826, %v5382
      %v5389 = vshrl.u32 2131351028, %v5383
      %v5390 = vor.u32 %v5388, %v5389
      %v5391 = vshll.u32 2131351028, %v5382
      %v5392 = vshrl.u32 2102212464, %v5383
      %v5393 = vor.u32 %v5391, %v5392
      %v5394 = vshll.u32 2102212464, %v5382
      %v5395 = vshrl.u32 920167782, %v5383
      %v5396 = vor.u32 %v5394, %v5395
      %v5397 = vshll.u32 920167782, %v5382
      %v5398 = vshrl.u32 1326507024, %v5383
      %v5399 = vor.u32 %v5397, %v5398
      %vm5400 = vcmp.lt.s32.totalorder %v5381, 1
      %vm5401 = vcmp.lt.s32.totalorder %v5381, 2
      %vm5402 = vcmp.lt.s32.totalorder %v5381, 3
      %vm5403 = vcmp.lt.s32.totalorder %v5381, 4
      %v5404 = vsel %vm5400, %v5384, %v5387
      %v5405 = vsel %vm5403, %v5393, 2102212464
      %v5406 = vsel %vm5402, %v5390, %v5405
      %v5407 = vsel %vm5401, %v5404, %v5406
      %v5408 = vsel %vm5400, %v5387, %v5390
      %v5409 = vsel %vm5403, %v5396, 920167782
      %v5410 = vsel %vm5402, %v5393, %v5409
      %v5411 = vsel %vm5401, %v5408, %v5410
      %v5412 = vsel %vm5400, %v5390, %v5393
      %v5413 = vsel %vm5403, %v5399, 1326507024
      %v5414 = vsel %vm5402, %v5396, %v5413
      %v5415 = vsel %vm5401, %v5412, %v5414
      %v5416 = vshll.u32 %v5376, 8
      %v5417 = vmul.u32.u64.compose %v5416, %v5415
      %v5418 = vextract.low.u32 %v5417
      %v5419 = vextract.high.u32 %v5417
      %v5420 = vmul.u32.u64.compose %v5416, %v5411
      %v5421 = vextract.low.u32 %v5420
      %v5422 = vextract.high.u32 %v5420
      %v5423 = vmul.u32 %v5416, %v5407
      %v5424 = vadd.s32 %v5419, %v5421
      %vm5425 = vc.u32 %v5419, %v5421
      %v5426 = vadd.s32 %v5422, 1
      %v5427 = vsel %vm5425, %v5426, %v5422
      %v5428 = vadd.s32 %v5423, %v5427
      %v5429 = vadd.s32 %v5428, 536870912
      %v5430 = vshrl.u32 %v5429, 30
      %v5431 = vshll.u32 %v5430, 30
      %v5432 = vsub.s32 %v5428, %v5431
      %vm5433 = vcmp.lt.s32.totalorder %v5432, 0
      %v5434 = vsub.s32 0, %v5432
      %v5435 = vsel %vm5433, %v5434, %v5432
      %v5436 = vclz %v5435
      %v5437 = vsub.s32 %v5436, 2
      %vm5438 = vcmp.gt.s32.totalorder 0, %v5437
      %v5439 = vsel %vm5438, 0, %v5437
      %v5440 = vsub.s32 32, %v5439
      %v5441 = vshll.u32 %v5432, %v5439
      %v5442 = vshrl.u32 %v5424, %v5440
      %v5443 = vor.u32 %v5441, %v5442
      %v5444 = vsub.s32 4294967266, %v5439
      %v5445 = vadd.s32 %v5444, 127
      %v5446 = vshll.u32 %v5445, 23
      %v5447 = vor.u32 4788187, %v5446
      %v5448 = vand.u32 2147483647, %v5447
      %v5450 = vcvt.s32.f32 %v5443
      %v5451 = vmul.f32 %v5450, %v5448
      %v5452 = vxor.u32 %v5451, 2147483648
      %v5453 = vsel %vm5370, %v5452, %v5451
      %v5454 = vsub.s32 4, %v5430
      %v5455 = vsel %vm5370, %v5454, %v5430
      %v5456 = vsel %vm5369, %v4121, %v5453
      %v5457 = vsel %vm5369, 0, %v5455
      %v5458 = vcosq.f32.pop %v5456
      %v5459 = vsinq.f32.pop %v5456
      %vm5460 = vweird.f32 %v4121
      %v5461 = vadd.s32 %v5457, 3
      %v5462 = vand.u32 %v5461, 3
      %vm5463 = vcmp.lt.s32.totalorder %v5462, 2
      %vm5464 = vcmp.eq.s32.totalorder %v5462, 0
      %v5465 = vxor.u32 %v5459, 2147483648
      %v5466 = vsel %vm5464, %v5458, %v5465
      %vm5467 = vcmp.eq.s32.totalorder %v5462, 2
      %v5468 = vxor.u32 %v5458, 2147483648
      %v5469 = vsel %vm5467, %v5468, %v5459
      %v5470 = vsel %vm5463, %v5466, %v5469
      %v5471 = vsel %vm5460, nan, %v5470
      %v5472 = vand.u32 2147483647, %v4126
      %vm5473 = vcmp.le.f32.partialorder %v5472, 0.7853982
      %vm5474 = vcmp.lt.s32.totalorder %v4126, 0
      %v5475 = vand.u32 %v4126, 2139095040
      %v5476 = vshrl.u32 %v5475, 23
      %v5477 = vsub.s32 %v5476, 127
      %v5478 = vand.u32 2147483647, %v4126
      %v5479 = vand.u32 %v5478, 8388607
      %v5480 = vor.u32 %v5479, 8388608
      %v5481 = vsub.s32 0, %v5480
      %v5482 = vadd.s32 %v5477, 1
      %vm5483 = vcmp.gt.s32.totalorder %v5482, 0
      %v5484 = vsel %vm5483, %v5482, 0
      %v5485 = vshrl.u32 %v5484, 5
      %v5486 = vand.u32 %v5484, 31
      %v5487 = vsub.s32 32, %v5486
      %v5488 = vshrl.u32 683565275, %v5487
      %v5489 = vshll.u32 683565275, %v5486
      %v5490 = vshrl.u32 2475754826, %v5487
      %v5491 = vor.u32 %v5489, %v5490
      %v5492 = vshll.u32 2475754826, %v5486
      %v5493 = vshrl.u32 2131351028, %v5487
      %v5494 = vor.u32 %v5492, %v5493
      %v5495 = vshll.u32 2131351028, %v5486
      %v5496 = vshrl.u32 2102212464, %v5487
      %v5497 = vor.u32 %v5495, %v5496
      %v5498 = vshll.u32 2102212464, %v5486
      %v5499 = vshrl.u32 920167782, %v5487
      %v5500 = vor.u32 %v5498, %v5499
      %v5501 = vshll.u32 920167782, %v5486
      %v5502 = vshrl.u32 1326507024, %v5487
      %v5503 = vor.u32 %v5501, %v5502
      %vm5504 = vcmp.lt.s32.totalorder %v5485, 1
      %vm5505 = vcmp.lt.s32.totalorder %v5485, 2
      %vm5506 = vcmp.lt.s32.totalorder %v5485, 3
      %vm5507 = vcmp.lt.s32.totalorder %v5485, 4
      %v5508 = vsel %vm5504, %v5488, %v5491
      %v5509 = vsel %vm5507, %v5497, 2102212464
      %v5510 = vsel %vm5506, %v5494, %v5509
      %v5511 = vsel %vm5505, %v5508, %v5510
      %v5512 = vsel %vm5504, %v5491, %v5494
      %v5513 = vsel %vm5507, %v5500, 920167782
      %v5514 = vsel %vm5506, %v5497, %v5513
      %v5515 = vsel %vm5505, %v5512, %v5514
      %v5516 = vsel %vm5504, %v5494, %v5497
      %v5517 = vsel %vm5507, %v5503, 1326507024
      %v5518 = vsel %vm5506, %v5500, %v5517
      %v5519 = vsel %vm5505, %v5516, %v5518
      %v5520 = vshll.u32 %v5480, 8
      %v5521 = vmul.u32.u64.compose %v5520, %v5519
      %v5522 = vextract.low.u32 %v5521
      %v5523 = vextract.high.u32 %v5521
      %v5524 = vmul.u32.u64.compose %v5520, %v5515
      %v5525 = vextract.low.u32 %v5524
      %v5526 = vextract.high.u32 %v5524
      %v5527 = vmul.u32 %v5520, %v5511
      %v5528 = vadd.s32 %v5523, %v5525
      %vm5529 = vc.u32 %v5523, %v5525
      %v5530 = vadd.s32 %v5526, 1
      %v5531 = vsel %vm5529, %v5530, %v5526
      %v5532 = vadd.s32 %v5527, %v5531
      %v5533 = vadd.s32 %v5532, 536870912
      %v5534 = vshrl.u32 %v5533, 30
      %v5535 = vshll.u32 %v5534, 30
      %v5536 = vsub.s32 %v5532, %v5535
      %vm5537 = vcmp.lt.s32.totalorder %v5536, 0
      %v5538 = vsub.s32 0, %v5536
      %v5539 = vsel %vm5537, %v5538, %v5536
      %v5540 = vclz %v5539
      %v5541 = vsub.s32 %v5540, 2
      %vm5542 = vcmp.gt.s32.totalorder 0, %v5541
      %v5543 = vsel %vm5542, 0, %v5541
      %v5544 = vsub.s32 32, %v5543
      %v5545 = vshll.u32 %v5536, %v5543
      %v5546 = vshrl.u32 %v5528, %v5544
      %v5547 = vor.u32 %v5545, %v5546
      %v5548 = vsub.s32 4294967266, %v5543
      %v5549 = vadd.s32 %v5548, 127
      %v5550 = vshll.u32 %v5549, 23
      %v5551 = vor.u32 4788187, %v5550
      %v5552 = vand.u32 2147483647, %v5551
      %v5554 = vcvt.s32.f32 %v5547
      %v5555 = vmul.f32 %v5554, %v5552
      %v5556 = vxor.u32 %v5555, 2147483648
      %v5557 = vsel %vm5474, %v5556, %v5555
      %v5558 = vsub.s32 4, %v5534
      %v5559 = vsel %vm5474, %v5558, %v5534
      %v5560 = vsel %vm5473, %v4126, %v5557
      %v5561 = vsel %vm5473, 0, %v5559
      %v5562 = vcosq.f32.pop %v5560
      %v5563 = vsinq.f32.pop %v5560
      %vm5564 = vweird.f32 %v4126
      %v5565 = vadd.s32 %v5561, 3
      %v5566 = vand.u32 %v5565, 3
      %vm5567 = vcmp.lt.s32.totalorder %v5566, 2
      %vm5568 = vcmp.eq.s32.totalorder %v5566, 0
      %v5569 = vxor.u32 %v5563, 2147483648
      %v5570 = vsel %vm5568, %v5562, %v5569
      %vm5571 = vcmp.eq.s32.totalorder %v5566, 2
      %v5572 = vxor.u32 %v5562, 2147483648
      %v5573 = vsel %vm5571, %v5572, %v5563
      %v5574 = vsel %vm5567, %v5570, %v5573
      %v5575 = vsel %vm5564, nan, %v5574
      %v5576 = vand.u32 2147483647, %v4131
      %vm5577 = vcmp.le.f32.partialorder %v5576, 0.7853982
      %vm5578 = vcmp.lt.s32.totalorder %v4131, 0
      %v5579 = vand.u32 %v4131, 2139095040
      %v5580 = vshrl.u32 %v5579, 23
      %v5581 = vsub.s32 %v5580, 127
      %v5582 = vand.u32 2147483647, %v4131
      %v5583 = vand.u32 %v5582, 8388607
      %v5584 = vor.u32 %v5583, 8388608
      %v5585 = vsub.s32 0, %v5584
      %v5586 = vadd.s32 %v5581, 1
      %vm5587 = vcmp.gt.s32.totalorder %v5586, 0
      %v5588 = vsel %vm5587, %v5586, 0
      %v5589 = vshrl.u32 %v5588, 5
      %v5590 = vand.u32 %v5588, 31
      %v5591 = vsub.s32 32, %v5590
      %v5592 = vshrl.u32 683565275, %v5591
      %v5593 = vshll.u32 683565275, %v5590
      %v5594 = vshrl.u32 2475754826, %v5591
      %v5595 = vor.u32 %v5593, %v5594
      %v5596 = vshll.u32 2475754826, %v5590
      %v5597 = vshrl.u32 2131351028, %v5591
      %v5598 = vor.u32 %v5596, %v5597
      %v5599 = vshll.u32 2131351028, %v5590
      %v5600 = vshrl.u32 2102212464, %v5591
      %v5601 = vor.u32 %v5599, %v5600
      %v5602 = vshll.u32 2102212464, %v5590
      %v5603 = vshrl.u32 920167782, %v5591
      %v5604 = vor.u32 %v5602, %v5603
      %v5605 = vshll.u32 920167782, %v5590
      %v5606 = vshrl.u32 1326507024, %v5591
      %v5607 = vor.u32 %v5605, %v5606
      %vm5608 = vcmp.lt.s32.totalorder %v5589, 1
      %vm5609 = vcmp.lt.s32.totalorder %v5589, 2
      %vm5610 = vcmp.lt.s32.totalorder %v5589, 3
      %vm5611 = vcmp.lt.s32.totalorder %v5589, 4
      %v5612 = vsel %vm5608, %v5592, %v5595
      %v5613 = vsel %vm5611, %v5601, 2102212464
      %v5614 = vsel %vm5610, %v5598, %v5613
      %v5615 = vsel %vm5609, %v5612, %v5614
      %v5616 = vsel %vm5608, %v5595, %v5598
      %v5617 = vsel %vm5611, %v5604, 920167782
      %v5618 = vsel %vm5610, %v5601, %v5617
      %v5619 = vsel %vm5609, %v5616, %v5618
      %v5620 = vsel %vm5608, %v5598, %v5601
      %v5621 = vsel %vm5611, %v5607, 1326507024
      %v5622 = vsel %vm5610, %v5604, %v5621
      %v5623 = vsel %vm5609, %v5620, %v5622
      %v5624 = vshll.u32 %v5584, 8
      %v5625 = vmul.u32.u64.compose %v5624, %v5623
      %v5626 = vextract.low.u32 %v5625
      %v5627 = vextract.high.u32 %v5625
      %v5628 = vmul.u32.u64.compose %v5624, %v5619
      %v5629 = vextract.low.u32 %v5628
      %v5630 = vextract.high.u32 %v5628
      %v5631 = vmul.u32 %v5624, %v5615
      %v5632 = vadd.s32 %v5627, %v5629
      %vm5633 = vc.u32 %v5627, %v5629
      %v5634 = vadd.s32 %v5630, 1
      %v5635 = vsel %vm5633, %v5634, %v5630
      %v5636 = vadd.s32 %v5631, %v5635
      %v5637 = vadd.s32 %v5636, 536870912
      %v5638 = vshrl.u32 %v5637, 30
      %v5639 = vshll.u32 %v5638, 30
      %v5640 = vsub.s32 %v5636, %v5639
      %vm5641 = vcmp.lt.s32.totalorder %v5640, 0
      %v5642 = vsub.s32 0, %v5640
      %v5643 = vsel %vm5641, %v5642, %v5640
      %v5644 = vclz %v5643
      %v5645 = vsub.s32 %v5644, 2
      %vm5646 = vcmp.gt.s32.totalorder 0, %v5645
      %v5647 = vsel %vm5646, 0, %v5645
      %v5648 = vsub.s32 32, %v5647
      %v5649 = vshll.u32 %v5640, %v5647
      %v5650 = vshrl.u32 %v5632, %v5648
      %v5651 = vor.u32 %v5649, %v5650
      %v5652 = vsub.s32 4294967266, %v5647
      %v5653 = vadd.s32 %v5652, 127
      %v5654 = vshll.u32 %v5653, 23
      %v5655 = vor.u32 4788187, %v5654
      %v5656 = vand.u32 2147483647, %v5655
      %v5658 = vcvt.s32.f32 %v5651
      %v5659 = vmul.f32 %v5658, %v5656
      %v5660 = vxor.u32 %v5659, 2147483648
      %v5661 = vsel %vm5578, %v5660, %v5659
      %v5662 = vsub.s32 4, %v5638
      %v5663 = vsel %vm5578, %v5662, %v5638
      %v5664 = vsel %vm5577, %v4131, %v5661
      %v5665 = vsel %vm5577, 0, %v5663
      %v5666 = vcosq.f32.pop %v5664
      %v5667 = vsinq.f32.pop %v5664
      %vm5668 = vweird.f32 %v4131
      %v5669 = vadd.s32 %v5665, 3
      %v5670 = vand.u32 %v5669, 3
      %vm5671 = vcmp.lt.s32.totalorder %v5670, 2
      %vm5672 = vcmp.eq.s32.totalorder %v5670, 0
      %v5673 = vxor.u32 %v5667, 2147483648
      %v5674 = vsel %vm5672, %v5666, %v5673
      %vm5675 = vcmp.eq.s32.totalorder %v5670, 2
      %v5676 = vxor.u32 %v5666, 2147483648
      %v5677 = vsel %vm5675, %v5676, %v5667
      %v5678 = vsel %vm5671, %v5674, %v5677
      %v5679 = vsel %vm5668, nan, %v5678
      %v5680 = vand.u32 2147483647, %v4136
      %vm5681 = vcmp.le.f32.partialorder %v5680, 0.7853982
      %vm5682 = vcmp.lt.s32.totalorder %v4136, 0
      %v5683 = vand.u32 %v4136, 2139095040
      %v5684 = vshrl.u32 %v5683, 23
      %v5685 = vsub.s32 %v5684, 127
      %v5686 = vand.u32 2147483647, %v4136
      %v5687 = vand.u32 %v5686, 8388607
      %v5688 = vor.u32 %v5687, 8388608
      %v5689 = vsub.s32 0, %v5688
      %v5690 = vadd.s32 %v5685, 1
      %vm5691 = vcmp.gt.s32.totalorder %v5690, 0
      %v5692 = vsel %vm5691, %v5690, 0
      %v5693 = vshrl.u32 %v5692, 5
      %v5694 = vand.u32 %v5692, 31
      %v5695 = vsub.s32 32, %v5694
      %v5696 = vshrl.u32 683565275, %v5695
      %v5697 = vshll.u32 683565275, %v5694
      %v5698 = vshrl.u32 2475754826, %v5695
      %v5699 = vor.u32 %v5697, %v5698
      %v5700 = vshll.u32 2475754826, %v5694
      %v5701 = vshrl.u32 2131351028, %v5695
      %v5702 = vor.u32 %v5700, %v5701
      %v5703 = vshll.u32 2131351028, %v5694
      %v5704 = vshrl.u32 2102212464, %v5695
      %v5705 = vor.u32 %v5703, %v5704
      %v5706 = vshll.u32 2102212464, %v5694
      %v5707 = vshrl.u32 920167782, %v5695
      %v5708 = vor.u32 %v5706, %v5707
      %v5709 = vshll.u32 920167782, %v5694
      %v5710 = vshrl.u32 1326507024, %v5695
      %v5711 = vor.u32 %v5709, %v5710
      %vm5712 = vcmp.lt.s32.totalorder %v5693, 1
      %vm5713 = vcmp.lt.s32.totalorder %v5693, 2
      %vm5714 = vcmp.lt.s32.totalorder %v5693, 3
      %vm5715 = vcmp.lt.s32.totalorder %v5693, 4
      %v5716 = vsel %vm5712, %v5696, %v5699
      %v5717 = vsel %vm5715, %v5705, 2102212464
      %v5718 = vsel %vm5714, %v5702, %v5717
      %v5719 = vsel %vm5713, %v5716, %v5718
      %v5720 = vsel %vm5712, %v5699, %v5702
      %v5721 = vsel %vm5715, %v5708, 920167782
      %v5722 = vsel %vm5714, %v5705, %v5721
      %v5723 = vsel %vm5713, %v5720, %v5722
      %v5724 = vsel %vm5712, %v5702, %v5705
      %v5725 = vsel %vm5715, %v5711, 1326507024
      %v5726 = vsel %vm5714, %v5708, %v5725
      %v5727 = vsel %vm5713, %v5724, %v5726
      %v5728 = vshll.u32 %v5688, 8
      %v5729 = vmul.u32.u64.compose %v5728, %v5727
      %v5730 = vextract.low.u32 %v5729
      %v5731 = vextract.high.u32 %v5729
      %v5732 = vmul.u32.u64.compose %v5728, %v5723
      %v5733 = vextract.low.u32 %v5732
      %v5734 = vextract.high.u32 %v5732
      %v5735 = vmul.u32 %v5728, %v5719
      %v5736 = vadd.s32 %v5731, %v5733
      %vm5737 = vc.u32 %v5731, %v5733
      %v5738 = vadd.s32 %v5734, 1
      %v5739 = vsel %vm5737, %v5738, %v5734
      %v5740 = vadd.s32 %v5735, %v5739
      %v5741 = vadd.s32 %v5740, 536870912
      %v5742 = vshrl.u32 %v5741, 30
      %v5743 = vshll.u32 %v5742, 30
      %v5744 = vsub.s32 %v5740, %v5743
      %vm5745 = vcmp.lt.s32.totalorder %v5744, 0
      %v5746 = vsub.s32 0, %v5744
      %v5747 = vsel %vm5745, %v5746, %v5744
      %v5748 = vclz %v5747
      %v5749 = vsub.s32 %v5748, 2
      %vm5750 = vcmp.gt.s32.totalorder 0, %v5749
      %v5751 = vsel %vm5750, 0, %v5749
      %v5752 = vsub.s32 32, %v5751
      %v5753 = vshll.u32 %v5744, %v5751
      %v5754 = vshrl.u32 %v5736, %v5752
      %v5755 = vor.u32 %v5753, %v5754
      %v5756 = vsub.s32 4294967266, %v5751
      %v5757 = vadd.s32 %v5756, 127
      %v5758 = vshll.u32 %v5757, 23
      %v5759 = vor.u32 4788187, %v5758
      %v5760 = vand.u32 2147483647, %v5759
      %v5762 = vcvt.s32.f32 %v5755
      %v5763 = vmul.f32 %v5762, %v5760
      %v5764 = vxor.u32 %v5763, 2147483648
      %v5765 = vsel %vm5682, %v5764, %v5763
      %v5766 = vsub.s32 4, %v5742
      %v5767 = vsel %vm5682, %v5766, %v5742
      %v5768 = vsel %vm5681, %v4136, %v5765
      %v5769 = vsel %vm5681, 0, %v5767
      %v5770 = vcosq.f32.pop %v5768
      %v5771 = vsinq.f32.pop %v5768
      %vm5772 = vweird.f32 %v4136
      %v5773 = vadd.s32 %v5769, 3
      %v5774 = vand.u32 %v5773, 3
      %vm5775 = vcmp.lt.s32.totalorder %v5774, 2
      %vm5776 = vcmp.eq.s32.totalorder %v5774, 0
      %v5777 = vxor.u32 %v5771, 2147483648
      %v5778 = vsel %vm5776, %v5770, %v5777
      %vm5779 = vcmp.eq.s32.totalorder %v5774, 2
      %v5780 = vxor.u32 %v5770, 2147483648
      %v5781 = vsel %vm5779, %v5780, %v5771
      %v5782 = vsel %vm5775, %v5778, %v5781
      %v5783 = vsel %vm5772, nan, %v5782
      %v5784 = vand.u32 2147483647, %v4141
      %vm5785 = vcmp.le.f32.partialorder %v5784, 0.7853982
      %vm5786 = vcmp.lt.s32.totalorder %v4141, 0
      %v5787 = vand.u32 %v4141, 2139095040
      %v5788 = vshrl.u32 %v5787, 23
      %v5789 = vsub.s32 %v5788, 127
      %v5790 = vand.u32 2147483647, %v4141
      %v5791 = vand.u32 %v5790, 8388607
      %v5792 = vor.u32 %v5791, 8388608
      %v5793 = vsub.s32 0, %v5792
      %v5794 = vadd.s32 %v5789, 1
      %vm5795 = vcmp.gt.s32.totalorder %v5794, 0
      %v5796 = vsel %vm5795, %v5794, 0
      %v5797 = vshrl.u32 %v5796, 5
      %v5798 = vand.u32 %v5796, 31
      %v5799 = vsub.s32 32, %v5798
      %v5800 = vshrl.u32 683565275, %v5799
      %v5801 = vshll.u32 683565275, %v5798
      %v5802 = vshrl.u32 2475754826, %v5799
      %v5803 = vor.u32 %v5801, %v5802
      %v5804 = vshll.u32 2475754826, %v5798
      %v5805 = vshrl.u32 2131351028, %v5799
      %v5806 = vor.u32 %v5804, %v5805
      %v5807 = vshll.u32 2131351028, %v5798
      %v5808 = vshrl.u32 2102212464, %v5799
      %v5809 = vor.u32 %v5807, %v5808
      %v5810 = vshll.u32 2102212464, %v5798
      %v5811 = vshrl.u32 920167782, %v5799
      %v5812 = vor.u32 %v5810, %v5811
      %v5813 = vshll.u32 920167782, %v5798
      %v5814 = vshrl.u32 1326507024, %v5799
      %v5815 = vor.u32 %v5813, %v5814
      %vm5816 = vcmp.lt.s32.totalorder %v5797, 1
      %vm5817 = vcmp.lt.s32.totalorder %v5797, 2
      %vm5818 = vcmp.lt.s32.totalorder %v5797, 3
      %vm5819 = vcmp.lt.s32.totalorder %v5797, 4
      %v5820 = vsel %vm5816, %v5800, %v5803
      %v5821 = vsel %vm5819, %v5809, 2102212464
      %v5822 = vsel %vm5818, %v5806, %v5821
      %v5823 = vsel %vm5817, %v5820, %v5822
      %v5824 = vsel %vm5816, %v5803, %v5806
      %v5825 = vsel %vm5819, %v5812, 920167782
      %v5826 = vsel %vm5818, %v5809, %v5825
      %v5827 = vsel %vm5817, %v5824, %v5826
      %v5828 = vsel %vm5816, %v5806, %v5809
      %v5829 = vsel %vm5819, %v5815, 1326507024
      %v5830 = vsel %vm5818, %v5812, %v5829
      %v5831 = vsel %vm5817, %v5828, %v5830
      %v5832 = vshll.u32 %v5792, 8
      %v5833 = vmul.u32.u64.compose %v5832, %v5831
      %v5834 = vextract.low.u32 %v5833
      %v5835 = vextract.high.u32 %v5833
      %v5836 = vmul.u32.u64.compose %v5832, %v5827
      %v5837 = vextract.low.u32 %v5836
      %v5838 = vextract.high.u32 %v5836
      %v5839 = vmul.u32 %v5832, %v5823
      %v5840 = vadd.s32 %v5835, %v5837
      %vm5841 = vc.u32 %v5835, %v5837
      %v5842 = vadd.s32 %v5838, 1
      %v5843 = vsel %vm5841, %v5842, %v5838
      %v5844 = vadd.s32 %v5839, %v5843
      %v5845 = vadd.s32 %v5844, 536870912
      %v5846 = vshrl.u32 %v5845, 30
      %v5847 = vshll.u32 %v5846, 30
      %v5848 = vsub.s32 %v5844, %v5847
      %vm5849 = vcmp.lt.s32.totalorder %v5848, 0
      %v5850 = vsub.s32 0, %v5848
      %v5851 = vsel %vm5849, %v5850, %v5848
      %v5852 = vclz %v5851
      %v5853 = vsub.s32 %v5852, 2
      %vm5854 = vcmp.gt.s32.totalorder 0, %v5853
      %v5855 = vsel %vm5854, 0, %v5853
      %v5856 = vsub.s32 32, %v5855
      %v5857 = vshll.u32 %v5848, %v5855
      %v5858 = vshrl.u32 %v5840, %v5856
      %v5859 = vor.u32 %v5857, %v5858
      %v5860 = vsub.s32 4294967266, %v5855
      %v5861 = vadd.s32 %v5860, 127
      %v5862 = vshll.u32 %v5861, 23
      %v5863 = vor.u32 4788187, %v5862
      %v5864 = vand.u32 2147483647, %v5863
      %v5866 = vcvt.s32.f32 %v5859
      %v5867 = vmul.f32 %v5866, %v5864
      %v5868 = vxor.u32 %v5867, 2147483648
      %v5869 = vsel %vm5786, %v5868, %v5867
      %v5870 = vsub.s32 4, %v5846
      %v5871 = vsel %vm5786, %v5870, %v5846
      %v5872 = vsel %vm5785, %v4141, %v5869
      %v5873 = vsel %vm5785, 0, %v5871
      %v5874 = vcosq.f32.pop %v5872
      %v5875 = vsinq.f32.pop %v5872
      %vm5876 = vweird.f32 %v4141
      %v5877 = vadd.s32 %v5873, 3
      %v5878 = vand.u32 %v5877, 3
      %vm5879 = vcmp.lt.s32.totalorder %v5878, 2
      %vm5880 = vcmp.eq.s32.totalorder %v5878, 0
      %v5881 = vxor.u32 %v5875, 2147483648
      %v5882 = vsel %vm5880, %v5874, %v5881
      %vm5883 = vcmp.eq.s32.totalorder %v5878, 2
      %v5884 = vxor.u32 %v5874, 2147483648
      %v5885 = vsel %vm5883, %v5884, %v5875
      %v5886 = vsel %vm5879, %v5882, %v5885
      %v5887 = vsel %vm5876, nan, %v5886
      %v5888 = vand.u32 2147483647, %v4146
      %vm5889 = vcmp.le.f32.partialorder %v5888, 0.7853982
      %vm5890 = vcmp.lt.s32.totalorder %v4146, 0
      %v5891 = vand.u32 %v4146, 2139095040
      %v5892 = vshrl.u32 %v5891, 23
      %v5893 = vsub.s32 %v5892, 127
      %v5894 = vand.u32 2147483647, %v4146
      %v5895 = vand.u32 %v5894, 8388607
      %v5896 = vor.u32 %v5895, 8388608
      %v5897 = vsub.s32 0, %v5896
      %v5898 = vadd.s32 %v5893, 1
      %vm5899 = vcmp.gt.s32.totalorder %v5898, 0
      %v5900 = vsel %vm5899, %v5898, 0
      %v5901 = vshrl.u32 %v5900, 5
      %v5902 = vand.u32 %v5900, 31
      %v5903 = vsub.s32 32, %v5902
      %v5904 = vshrl.u32 683565275, %v5903
      %v5905 = vshll.u32 683565275, %v5902
      %v5906 = vshrl.u32 2475754826, %v5903
      %v5907 = vor.u32 %v5905, %v5906
      %v5908 = vshll.u32 2475754826, %v5902
      %v5909 = vshrl.u32 2131351028, %v5903
      %v5910 = vor.u32 %v5908, %v5909
      %v5911 = vshll.u32 2131351028, %v5902
      %v5912 = vshrl.u32 2102212464, %v5903
      %v5913 = vor.u32 %v5911, %v5912
      %v5914 = vshll.u32 2102212464, %v5902
      %v5915 = vshrl.u32 920167782, %v5903
      %v5916 = vor.u32 %v5914, %v5915
      %v5917 = vshll.u32 920167782, %v5902
      %v5918 = vshrl.u32 1326507024, %v5903
      %v5919 = vor.u32 %v5917, %v5918
      %vm5920 = vcmp.lt.s32.totalorder %v5901, 1
      %vm5921 = vcmp.lt.s32.totalorder %v5901, 2
      %vm5922 = vcmp.lt.s32.totalorder %v5901, 3
      %vm5923 = vcmp.lt.s32.totalorder %v5901, 4
      %v5924 = vsel %vm5920, %v5904, %v5907
      %v5925 = vsel %vm5923, %v5913, 2102212464
      %v5926 = vsel %vm5922, %v5910, %v5925
      %v5927 = vsel %vm5921, %v5924, %v5926
      %v5928 = vsel %vm5920, %v5907, %v5910
      %v5929 = vsel %vm5923, %v5916, 920167782
      %v5930 = vsel %vm5922, %v5913, %v5929
      %v5931 = vsel %vm5921, %v5928, %v5930
      %v5932 = vsel %vm5920, %v5910, %v5913
      %v5933 = vsel %vm5923, %v5919, 1326507024
      %v5934 = vsel %vm5922, %v5916, %v5933
      %v5935 = vsel %vm5921, %v5932, %v5934
      %v5936 = vshll.u32 %v5896, 8
      %v5937 = vmul.u32.u64.compose %v5936, %v5935
      %v5938 = vextract.low.u32 %v5937
      %v5939 = vextract.high.u32 %v5937
      %v5940 = vmul.u32.u64.compose %v5936, %v5931
      %v5941 = vextract.low.u32 %v5940
      %v5942 = vextract.high.u32 %v5940
      %v5943 = vmul.u32 %v5936, %v5927
      %v5944 = vadd.s32 %v5939, %v5941
      %vm5945 = vc.u32 %v5939, %v5941
      %v5946 = vadd.s32 %v5942, 1
      %v5947 = vsel %vm5945, %v5946, %v5942
      %v5948 = vadd.s32 %v5943, %v5947
      %v5949 = vadd.s32 %v5948, 536870912
      %v5950 = vshrl.u32 %v5949, 30
      %v5951 = vshll.u32 %v5950, 30
      %v5952 = vsub.s32 %v5948, %v5951
      %vm5953 = vcmp.lt.s32.totalorder %v5952, 0
      %v5954 = vsub.s32 0, %v5952
      %v5955 = vsel %vm5953, %v5954, %v5952
      %v5956 = vclz %v5955
      %v5957 = vsub.s32 %v5956, 2
      %vm5958 = vcmp.gt.s32.totalorder 0, %v5957
      %v5959 = vsel %vm5958, 0, %v5957
      %v5960 = vsub.s32 32, %v5959
      %v5961 = vshll.u32 %v5952, %v5959
      %v5962 = vshrl.u32 %v5944, %v5960
      %v5963 = vor.u32 %v5961, %v5962
      %v5964 = vsub.s32 4294967266, %v5959
      %v5965 = vadd.s32 %v5964, 127
      %v5966 = vshll.u32 %v5965, 23
      %v5967 = vor.u32 4788187, %v5966
      %v5968 = vand.u32 2147483647, %v5967
      %v5970 = vcvt.s32.f32 %v5963
      %v5971 = vmul.f32 %v5970, %v5968
      %v5972 = vxor.u32 %v5971, 2147483648
      %v5973 = vsel %vm5890, %v5972, %v5971
      %v5974 = vsub.s32 4, %v5950
      %v5975 = vsel %vm5890, %v5974, %v5950
      %v5976 = vsel %vm5889, %v4146, %v5973
      %v5977 = vsel %vm5889, 0, %v5975
      %v5978 = vcosq.f32.pop %v5976
      %v5979 = vsinq.f32.pop %v5976
      %vm5980 = vweird.f32 %v4146
      %v5981 = vadd.s32 %v5977, 3
      %v5982 = vand.u32 %v5981, 3
      %vm5983 = vcmp.lt.s32.totalorder %v5982, 2
      %vm5984 = vcmp.eq.s32.totalorder %v5982, 0
      %v5985 = vxor.u32 %v5979, 2147483648
      %v5986 = vsel %vm5984, %v5978, %v5985
      %vm5987 = vcmp.eq.s32.totalorder %v5982, 2
      %v5988 = vxor.u32 %v5978, 2147483648
      %v5989 = vsel %vm5987, %v5988, %v5979
      %v5990 = vsel %vm5983, %v5986, %v5989
      %v5991 = vsel %vm5980, nan, %v5990
      %v5992 = vand.u32 2147483647, %v4151
      %vm5993 = vcmp.le.f32.partialorder %v5992, 0.7853982
      %vm5994 = vcmp.lt.s32.totalorder %v4151, 0
      %v5995 = vand.u32 %v4151, 2139095040
      %v5996 = vshrl.u32 %v5995, 23
      %v5997 = vsub.s32 %v5996, 127
      %v5998 = vand.u32 2147483647, %v4151
      %v5999 = vand.u32 %v5998, 8388607
      %v6000 = vor.u32 %v5999, 8388608
      %v6001 = vsub.s32 0, %v6000
      %v6002 = vadd.s32 %v5997, 1
      %vm6003 = vcmp.gt.s32.totalorder %v6002, 0
      %v6004 = vsel %vm6003, %v6002, 0
      %v6005 = vshrl.u32 %v6004, 5
      %v6006 = vand.u32 %v6004, 31
      %v6007 = vsub.s32 32, %v6006
      %v6008 = vshrl.u32 683565275, %v6007
      %v6009 = vshll.u32 683565275, %v6006
      %v6010 = vshrl.u32 2475754826, %v6007
      %v6011 = vor.u32 %v6009, %v6010
      %v6012 = vshll.u32 2475754826, %v6006
      %v6013 = vshrl.u32 2131351028, %v6007
      %v6014 = vor.u32 %v6012, %v6013
      %v6015 = vshll.u32 2131351028, %v6006
      %v6016 = vshrl.u32 2102212464, %v6007
      %v6017 = vor.u32 %v6015, %v6016
      %v6018 = vshll.u32 2102212464, %v6006
      %v6019 = vshrl.u32 920167782, %v6007
      %v6020 = vor.u32 %v6018, %v6019
      %v6021 = vshll.u32 920167782, %v6006
      %v6022 = vshrl.u32 1326507024, %v6007
      %v6023 = vor.u32 %v6021, %v6022
      %vm6024 = vcmp.lt.s32.totalorder %v6005, 1
      %vm6025 = vcmp.lt.s32.totalorder %v6005, 2
      %vm6026 = vcmp.lt.s32.totalorder %v6005, 3
      %vm6027 = vcmp.lt.s32.totalorder %v6005, 4
      %v6028 = vsel %vm6024, %v6008, %v6011
      %v6029 = vsel %vm6027, %v6017, 2102212464
      %v6030 = vsel %vm6026, %v6014, %v6029
      %v6031 = vsel %vm6025, %v6028, %v6030
      %v6032 = vsel %vm6024, %v6011, %v6014
      %v6033 = vsel %vm6027, %v6020, 920167782
      %v6034 = vsel %vm6026, %v6017, %v6033
      %v6035 = vsel %vm6025, %v6032, %v6034
      %v6036 = vsel %vm6024, %v6014, %v6017
      %v6037 = vsel %vm6027, %v6023, 1326507024
      %v6038 = vsel %vm6026, %v6020, %v6037
      %v6039 = vsel %vm6025, %v6036, %v6038
      %v6040 = vshll.u32 %v6000, 8
      %v6041 = vmul.u32.u64.compose %v6040, %v6039
      %v6042 = vextract.low.u32 %v6041
      %v6043 = vextract.high.u32 %v6041
      %v6044 = vmul.u32.u64.compose %v6040, %v6035
      %v6045 = vextract.low.u32 %v6044
      %v6046 = vextract.high.u32 %v6044
      %v6047 = vmul.u32 %v6040, %v6031
      %v6048 = vadd.s32 %v6043, %v6045
      %vm6049 = vc.u32 %v6043, %v6045
      %v6050 = vadd.s32 %v6046, 1
      %v6051 = vsel %vm6049, %v6050, %v6046
      %v6052 = vadd.s32 %v6047, %v6051
      %v6053 = vadd.s32 %v6052, 536870912
      %v6054 = vshrl.u32 %v6053, 30
      %v6055 = vshll.u32 %v6054, 30
      %v6056 = vsub.s32 %v6052, %v6055
      %vm6057 = vcmp.lt.s32.totalorder %v6056, 0
      %v6058 = vsub.s32 0, %v6056
      %v6059 = vsel %vm6057, %v6058, %v6056
      %v6060 = vclz %v6059
      %v6061 = vsub.s32 %v6060, 2
      %vm6062 = vcmp.gt.s32.totalorder 0, %v6061
      %v6063 = vsel %vm6062, 0, %v6061
      %v6064 = vsub.s32 32, %v6063
      %v6065 = vshll.u32 %v6056, %v6063
      %v6066 = vshrl.u32 %v6048, %v6064
      %v6067 = vor.u32 %v6065, %v6066
      %v6068 = vsub.s32 4294967266, %v6063
      %v6069 = vadd.s32 %v6068, 127
      %v6070 = vshll.u32 %v6069, 23
      %v6071 = vor.u32 4788187, %v6070
      %v6072 = vand.u32 2147483647, %v6071
      %v6074 = vcvt.s32.f32 %v6067
      %v6075 = vmul.f32 %v6074, %v6072
      %v6076 = vxor.u32 %v6075, 2147483648
      %v6077 = vsel %vm5994, %v6076, %v6075
      %v6078 = vsub.s32 4, %v6054
      %v6079 = vsel %vm5994, %v6078, %v6054
      %v6080 = vsel %vm5993, %v4151, %v6077
      %v6081 = vsel %vm5993, 0, %v6079
      %v6082 = vcosq.f32.pop %v6080
      %v6083 = vsinq.f32.pop %v6080
      %vm6084 = vweird.f32 %v4151
      %v6085 = vadd.s32 %v6081, 3
      %v6086 = vand.u32 %v6085, 3
      %vm6087 = vcmp.lt.s32.totalorder %v6086, 2
      %vm6088 = vcmp.eq.s32.totalorder %v6086, 0
      %v6089 = vxor.u32 %v6083, 2147483648
      %v6090 = vsel %vm6088, %v6082, %v6089
      %vm6091 = vcmp.eq.s32.totalorder %v6086, 2
      %v6092 = vxor.u32 %v6082, 2147483648
      %v6093 = vsel %vm6091, %v6092, %v6083
      %v6094 = vsel %vm6087, %v6090, %v6093
      %v6095 = vsel %vm6084, nan, %v6094
      %v6096 = vand.u32 2147483647, %v4156
      %vm6097 = vcmp.le.f32.partialorder %v6096, 0.7853982
      %vm6098 = vcmp.lt.s32.totalorder %v4156, 0
      %v6099 = vand.u32 %v4156, 2139095040
      %v6100 = vshrl.u32 %v6099, 23
      %v6101 = vsub.s32 %v6100, 127
      %v6102 = vand.u32 2147483647, %v4156
      %v6103 = vand.u32 %v6102, 8388607
      %v6104 = vor.u32 %v6103, 8388608
      %v6105 = vsub.s32 0, %v6104
      %v6106 = vadd.s32 %v6101, 1
      %vm6107 = vcmp.gt.s32.totalorder %v6106, 0
      %v6108 = vsel %vm6107, %v6106, 0
      %v6109 = vshrl.u32 %v6108, 5
      %v6110 = vand.u32 %v6108, 31
      %v6111 = vsub.s32 32, %v6110
      %v6112 = vshrl.u32 683565275, %v6111
      %v6113 = vshll.u32 683565275, %v6110
      %v6114 = vshrl.u32 2475754826, %v6111
      %v6115 = vor.u32 %v6113, %v6114
      %v6116 = vshll.u32 2475754826, %v6110
      %v6117 = vshrl.u32 2131351028, %v6111
      %v6118 = vor.u32 %v6116, %v6117
      %v6119 = vshll.u32 2131351028, %v6110
      %v6120 = vshrl.u32 2102212464, %v6111
      %v6121 = vor.u32 %v6119, %v6120
      %v6122 = vshll.u32 2102212464, %v6110
      %v6123 = vshrl.u32 920167782, %v6111
      %v6124 = vor.u32 %v6122, %v6123
      %v6125 = vshll.u32 920167782, %v6110
      %v6126 = vshrl.u32 1326507024, %v6111
      %v6127 = vor.u32 %v6125, %v6126
      %vm6128 = vcmp.lt.s32.totalorder %v6109, 1
      %vm6129 = vcmp.lt.s32.totalorder %v6109, 2
      %vm6130 = vcmp.lt.s32.totalorder %v6109, 3
      %vm6131 = vcmp.lt.s32.totalorder %v6109, 4
      %v6132 = vsel %vm6128, %v6112, %v6115
      %v6133 = vsel %vm6131, %v6121, 2102212464
      %v6134 = vsel %vm6130, %v6118, %v6133
      %v6135 = vsel %vm6129, %v6132, %v6134
      %v6136 = vsel %vm6128, %v6115, %v6118
      %v6137 = vsel %vm6131, %v6124, 920167782
      %v6138 = vsel %vm6130, %v6121, %v6137
      %v6139 = vsel %vm6129, %v6136, %v6138
      %v6140 = vsel %vm6128, %v6118, %v6121
      %v6141 = vsel %vm6131, %v6127, 1326507024
      %v6142 = vsel %vm6130, %v6124, %v6141
      %v6143 = vsel %vm6129, %v6140, %v6142
      %v6144 = vshll.u32 %v6104, 8
      %v6145 = vmul.u32.u64.compose %v6144, %v6143
      %v6146 = vextract.low.u32 %v6145
      %v6147 = vextract.high.u32 %v6145
      %v6148 = vmul.u32.u64.compose %v6144, %v6139
      %v6149 = vextract.low.u32 %v6148
      %v6150 = vextract.high.u32 %v6148
      %v6151 = vmul.u32 %v6144, %v6135
      %v6152 = vadd.s32 %v6147, %v6149
      %vm6153 = vc.u32 %v6147, %v6149
      %v6154 = vadd.s32 %v6150, 1
      %v6155 = vsel %vm6153, %v6154, %v6150
      %v6156 = vadd.s32 %v6151, %v6155
      %v6157 = vadd.s32 %v6156, 536870912
      %v6158 = vshrl.u32 %v6157, 30
      %v6159 = vshll.u32 %v6158, 30
      %v6160 = vsub.s32 %v6156, %v6159
      %vm6161 = vcmp.lt.s32.totalorder %v6160, 0
      %v6162 = vsub.s32 0, %v6160
      %v6163 = vsel %vm6161, %v6162, %v6160
      %v6164 = vclz %v6163
      %v6165 = vsub.s32 %v6164, 2
      %vm6166 = vcmp.gt.s32.totalorder 0, %v6165
      %v6167 = vsel %vm6166, 0, %v6165
      %v6168 = vsub.s32 32, %v6167
      %v6169 = vshll.u32 %v6160, %v6167
      %v6170 = vshrl.u32 %v6152, %v6168
      %v6171 = vor.u32 %v6169, %v6170
      %v6172 = vsub.s32 4294967266, %v6167
      %v6173 = vadd.s32 %v6172, 127
      %v6174 = vshll.u32 %v6173, 23
      %v6175 = vor.u32 4788187, %v6174
      %v6176 = vand.u32 2147483647, %v6175
      %v6178 = vcvt.s32.f32 %v6171
      %v6179 = vmul.f32 %v6178, %v6176
      %v6180 = vxor.u32 %v6179, 2147483648
      %v6181 = vsel %vm6098, %v6180, %v6179
      %v6182 = vsub.s32 4, %v6158
      %v6183 = vsel %vm6098, %v6182, %v6158
      %v6184 = vsel %vm6097, %v4156, %v6181
      %v6185 = vsel %vm6097, 0, %v6183
      %v6186 = vcosq.f32.pop %v6184
      %v6187 = vsinq.f32.pop %v6184
      %vm6188 = vweird.f32 %v4156
      %v6189 = vadd.s32 %v6185, 3
      %v6190 = vand.u32 %v6189, 3
      %vm6191 = vcmp.lt.s32.totalorder %v6190, 2
      %vm6192 = vcmp.eq.s32.totalorder %v6190, 0
      %v6193 = vxor.u32 %v6187, 2147483648
      %v6194 = vsel %vm6192, %v6186, %v6193
      %vm6195 = vcmp.eq.s32.totalorder %v6190, 2
      %v6196 = vxor.u32 %v6186, 2147483648
      %v6197 = vsel %vm6195, %v6196, %v6187
      %v6198 = vsel %vm6191, %v6194, %v6197
      %v6199 = vsel %vm6188, nan, %v6198
      %v6200 = vand.u32 2147483647, %v4161
      %vm6201 = vcmp.le.f32.partialorder %v6200, 0.7853982
      %vm6202 = vcmp.lt.s32.totalorder %v4161, 0
      %v6203 = vand.u32 %v4161, 2139095040
      %v6204 = vshrl.u32 %v6203, 23
      %v6205 = vsub.s32 %v6204, 127
      %v6206 = vand.u32 2147483647, %v4161
      %v6207 = vand.u32 %v6206, 8388607
      %v6208 = vor.u32 %v6207, 8388608
      %v6209 = vsub.s32 0, %v6208
      %v6210 = vadd.s32 %v6205, 1
      %vm6211 = vcmp.gt.s32.totalorder %v6210, 0
      %v6212 = vsel %vm6211, %v6210, 0
      %v6213 = vshrl.u32 %v6212, 5
      %v6214 = vand.u32 %v6212, 31
      %v6215 = vsub.s32 32, %v6214
      %v6216 = vshrl.u32 683565275, %v6215
      %v6217 = vshll.u32 683565275, %v6214
      %v6218 = vshrl.u32 2475754826, %v6215
      %v6219 = vor.u32 %v6217, %v6218
      %v6220 = vshll.u32 2475754826, %v6214
      %v6221 = vshrl.u32 2131351028, %v6215
      %v6222 = vor.u32 %v6220, %v6221
      %v6223 = vshll.u32 2131351028, %v6214
      %v6224 = vshrl.u32 2102212464, %v6215
      %v6225 = vor.u32 %v6223, %v6224
      %v6226 = vshll.u32 2102212464, %v6214
      %v6227 = vshrl.u32 920167782, %v6215
      %v6228 = vor.u32 %v6226, %v6227
      %v6229 = vshll.u32 920167782, %v6214
      %v6230 = vshrl.u32 1326507024, %v6215
      %v6231 = vor.u32 %v6229, %v6230
      %vm6232 = vcmp.lt.s32.totalorder %v6213, 1
      %vm6233 = vcmp.lt.s32.totalorder %v6213, 2
      %vm6234 = vcmp.lt.s32.totalorder %v6213, 3
      %vm6235 = vcmp.lt.s32.totalorder %v6213, 4
      %v6236 = vsel %vm6232, %v6216, %v6219
      %v6237 = vsel %vm6235, %v6225, 2102212464
      %v6238 = vsel %vm6234, %v6222, %v6237
      %v6239 = vsel %vm6233, %v6236, %v6238
      %v6240 = vsel %vm6232, %v6219, %v6222
      %v6241 = vsel %vm6235, %v6228, 920167782
      %v6242 = vsel %vm6234, %v6225, %v6241
      %v6243 = vsel %vm6233, %v6240, %v6242
      %v6244 = vsel %vm6232, %v6222, %v6225
      %v6245 = vsel %vm6235, %v6231, 1326507024
      %v6246 = vsel %vm6234, %v6228, %v6245
      %v6247 = vsel %vm6233, %v6244, %v6246
      %v6248 = vshll.u32 %v6208, 8
      %v6249 = vmul.u32.u64.compose %v6248, %v6247
      %v6250 = vextract.low.u32 %v6249
      %v6251 = vextract.high.u32 %v6249
      %v6252 = vmul.u32.u64.compose %v6248, %v6243
      %v6253 = vextract.low.u32 %v6252
      %v6254 = vextract.high.u32 %v6252
      %v6255 = vmul.u32 %v6248, %v6239
      %v6256 = vadd.s32 %v6251, %v6253
      %vm6257 = vc.u32 %v6251, %v6253
      %v6258 = vadd.s32 %v6254, 1
      %v6259 = vsel %vm6257, %v6258, %v6254
      %v6260 = vadd.s32 %v6255, %v6259
      %v6261 = vadd.s32 %v6260, 536870912
      %v6262 = vshrl.u32 %v6261, 30
      %v6263 = vshll.u32 %v6262, 30
      %v6264 = vsub.s32 %v6260, %v6263
      %vm6265 = vcmp.lt.s32.totalorder %v6264, 0
      %v6266 = vsub.s32 0, %v6264
      %v6267 = vsel %vm6265, %v6266, %v6264
      %v6268 = vclz %v6267
      %v6269 = vsub.s32 %v6268, 2
      %vm6270 = vcmp.gt.s32.totalorder 0, %v6269
      %v6271 = vsel %vm6270, 0, %v6269
      %v6272 = vsub.s32 32, %v6271
      %v6273 = vshll.u32 %v6264, %v6271
      %v6274 = vshrl.u32 %v6256, %v6272
      %v6275 = vor.u32 %v6273, %v6274
      %v6276 = vsub.s32 4294967266, %v6271
      %v6277 = vadd.s32 %v6276, 127
      %v6278 = vshll.u32 %v6277, 23
      %v6279 = vor.u32 4788187, %v6278
      %v6280 = vand.u32 2147483647, %v6279
      %v6282 = vcvt.s32.f32 %v6275
      %v6283 = vmul.f32 %v6282, %v6280
      %v6284 = vxor.u32 %v6283, 2147483648
      %v6285 = vsel %vm6202, %v6284, %v6283
      %v6286 = vsub.s32 4, %v6262
      %v6287 = vsel %vm6202, %v6286, %v6262
      %v6288 = vsel %vm6201, %v4161, %v6285
      %v6289 = vsel %vm6201, 0, %v6287
      %v6290 = vcosq.f32.pop %v6288
      %v6291 = vsinq.f32.pop %v6288
      %vm6292 = vweird.f32 %v4161
      %v6293 = vadd.s32 %v6289, 3
      %v6294 = vand.u32 %v6293, 3
      %vm6295 = vcmp.lt.s32.totalorder %v6294, 2
      %vm6296 = vcmp.eq.s32.totalorder %v6294, 0
      %v6297 = vxor.u32 %v6291, 2147483648
      %v6298 = vsel %vm6296, %v6290, %v6297
      %vm6299 = vcmp.eq.s32.totalorder %v6294, 2
      %v6300 = vxor.u32 %v6290, 2147483648
      %v6301 = vsel %vm6299, %v6300, %v6291
      %v6302 = vsel %vm6295, %v6298, %v6301
      %v6303 = vsel %vm6292, nan, %v6302
      %v6304 = vand.u32 2147483647, %v4166
      %vm6305 = vcmp.le.f32.partialorder %v6304, 0.7853982
      %vm6306 = vcmp.lt.s32.totalorder %v4166, 0
      %v6307 = vand.u32 %v4166, 2139095040
      %v6308 = vshrl.u32 %v6307, 23
      %v6309 = vsub.s32 %v6308, 127
      %v6310 = vand.u32 2147483647, %v4166
      %v6311 = vand.u32 %v6310, 8388607
      %v6312 = vor.u32 %v6311, 8388608
      %v6313 = vsub.s32 0, %v6312
      %v6314 = vadd.s32 %v6309, 1
      %vm6315 = vcmp.gt.s32.totalorder %v6314, 0
      %v6316 = vsel %vm6315, %v6314, 0
      %v6317 = vshrl.u32 %v6316, 5
      %v6318 = vand.u32 %v6316, 31
      %v6319 = vsub.s32 32, %v6318
      %v6320 = vshrl.u32 683565275, %v6319
      %v6321 = vshll.u32 683565275, %v6318
      %v6322 = vshrl.u32 2475754826, %v6319
      %v6323 = vor.u32 %v6321, %v6322
      %v6324 = vshll.u32 2475754826, %v6318
      %v6325 = vshrl.u32 2131351028, %v6319
      %v6326 = vor.u32 %v6324, %v6325
      %v6327 = vshll.u32 2131351028, %v6318
      %v6328 = vshrl.u32 2102212464, %v6319
      %v6329 = vor.u32 %v6327, %v6328
      %v6330 = vshll.u32 2102212464, %v6318
      %v6331 = vshrl.u32 920167782, %v6319
      %v6332 = vor.u32 %v6330, %v6331
      %v6333 = vshll.u32 920167782, %v6318
      %v6334 = vshrl.u32 1326507024, %v6319
      %v6335 = vor.u32 %v6333, %v6334
      %vm6336 = vcmp.lt.s32.totalorder %v6317, 1
      %vm6337 = vcmp.lt.s32.totalorder %v6317, 2
      %vm6338 = vcmp.lt.s32.totalorder %v6317, 3
      %vm6339 = vcmp.lt.s32.totalorder %v6317, 4
      %v6340 = vsel %vm6336, %v6320, %v6323
      %v6341 = vsel %vm6339, %v6329, 2102212464
      %v6342 = vsel %vm6338, %v6326, %v6341
      %v6343 = vsel %vm6337, %v6340, %v6342
      %v6344 = vsel %vm6336, %v6323, %v6326
      %v6345 = vsel %vm6339, %v6332, 920167782
      %v6346 = vsel %vm6338, %v6329, %v6345
      %v6347 = vsel %vm6337, %v6344, %v6346
      %v6348 = vsel %vm6336, %v6326, %v6329
      %v6349 = vsel %vm6339, %v6335, 1326507024
      %v6350 = vsel %vm6338, %v6332, %v6349
      %v6351 = vsel %vm6337, %v6348, %v6350
      %v6352 = vshll.u32 %v6312, 8
      %v6353 = vmul.u32.u64.compose %v6352, %v6351
      %v6354 = vextract.low.u32 %v6353
      %v6355 = vextract.high.u32 %v6353
      %v6356 = vmul.u32.u64.compose %v6352, %v6347
      %v6357 = vextract.low.u32 %v6356
      %v6358 = vextract.high.u32 %v6356
      %v6359 = vmul.u32 %v6352, %v6343
      %v6360 = vadd.s32 %v6355, %v6357
      %vm6361 = vc.u32 %v6355, %v6357
      %v6362 = vadd.s32 %v6358, 1
      %v6363 = vsel %vm6361, %v6362, %v6358
      %v6364 = vadd.s32 %v6359, %v6363
      %v6365 = vadd.s32 %v6364, 536870912
      %v6366 = vshrl.u32 %v6365, 30
      %v6367 = vshll.u32 %v6366, 30
      %v6368 = vsub.s32 %v6364, %v6367
      %vm6369 = vcmp.lt.s32.totalorder %v6368, 0
      %v6370 = vsub.s32 0, %v6368
      %v6371 = vsel %vm6369, %v6370, %v6368
      %v6372 = vclz %v6371
      %v6373 = vsub.s32 %v6372, 2
      %vm6374 = vcmp.gt.s32.totalorder 0, %v6373
      %v6375 = vsel %vm6374, 0, %v6373
      %v6376 = vsub.s32 32, %v6375
      %v6377 = vshll.u32 %v6368, %v6375
      %v6378 = vshrl.u32 %v6360, %v6376
      %v6379 = vor.u32 %v6377, %v6378
      %v6380 = vsub.s32 4294967266, %v6375
      %v6381 = vadd.s32 %v6380, 127
      %v6382 = vshll.u32 %v6381, 23
      %v6383 = vor.u32 4788187, %v6382
      %v6384 = vand.u32 2147483647, %v6383
      %v6386 = vcvt.s32.f32 %v6379
      %v6387 = vmul.f32 %v6386, %v6384
      %v6388 = vxor.u32 %v6387, 2147483648
      %v6389 = vsel %vm6306, %v6388, %v6387
      %v6390 = vsub.s32 4, %v6366
      %v6391 = vsel %vm6306, %v6390, %v6366
      %v6392 = vsel %vm6305, %v4166, %v6389
      %v6393 = vsel %vm6305, 0, %v6391
      %v6394 = vcosq.f32.pop %v6392
      %v6395 = vsinq.f32.pop %v6392
      %vm6396 = vweird.f32 %v4166
      %v6397 = vadd.s32 %v6393, 3
      %v6398 = vand.u32 %v6397, 3
      %vm6399 = vcmp.lt.s32.totalorder %v6398, 2
      %vm6400 = vcmp.eq.s32.totalorder %v6398, 0
      %v6401 = vxor.u32 %v6395, 2147483648
      %v6402 = vsel %vm6400, %v6394, %v6401
      %vm6403 = vcmp.eq.s32.totalorder %v6398, 2
      %v6404 = vxor.u32 %v6394, 2147483648
      %v6405 = vsel %vm6403, %v6404, %v6395
      %v6406 = vsel %vm6399, %v6402, %v6405
      %v6407 = vsel %vm6396, nan, %v6406
      %v6408 = vand.u32 2147483647, %v4171
      %vm6409 = vcmp.le.f32.partialorder %v6408, 0.7853982
      %vm6410 = vcmp.lt.s32.totalorder %v4171, 0
      %v6411 = vand.u32 %v4171, 2139095040
      %v6412 = vshrl.u32 %v6411, 23
      %v6413 = vsub.s32 %v6412, 127
      %v6414 = vand.u32 2147483647, %v4171
      %v6415 = vand.u32 %v6414, 8388607
      %v6416 = vor.u32 %v6415, 8388608
      %v6417 = vsub.s32 0, %v6416
      %v6418 = vadd.s32 %v6413, 1
      %vm6419 = vcmp.gt.s32.totalorder %v6418, 0
      %v6420 = vsel %vm6419, %v6418, 0
      %v6421 = vshrl.u32 %v6420, 5
      %v6422 = vand.u32 %v6420, 31
      %v6423 = vsub.s32 32, %v6422
      %v6424 = vshrl.u32 683565275, %v6423
      %v6425 = vshll.u32 683565275, %v6422
      %v6426 = vshrl.u32 2475754826, %v6423
      %v6427 = vor.u32 %v6425, %v6426
      %v6428 = vshll.u32 2475754826, %v6422
      %v6429 = vshrl.u32 2131351028, %v6423
      %v6430 = vor.u32 %v6428, %v6429
      %v6431 = vshll.u32 2131351028, %v6422
      %v6432 = vshrl.u32 2102212464, %v6423
      %v6433 = vor.u32 %v6431, %v6432
      %v6434 = vshll.u32 2102212464, %v6422
      %v6435 = vshrl.u32 920167782, %v6423
      %v6436 = vor.u32 %v6434, %v6435
      %v6437 = vshll.u32 920167782, %v6422
      %v6438 = vshrl.u32 1326507024, %v6423
      %v6439 = vor.u32 %v6437, %v6438
      %vm6440 = vcmp.lt.s32.totalorder %v6421, 1
      %vm6441 = vcmp.lt.s32.totalorder %v6421, 2
      %vm6442 = vcmp.lt.s32.totalorder %v6421, 3
      %vm6443 = vcmp.lt.s32.totalorder %v6421, 4
      %v6444 = vsel %vm6440, %v6424, %v6427
      %v6445 = vsel %vm6443, %v6433, 2102212464
      %v6446 = vsel %vm6442, %v6430, %v6445
      %v6447 = vsel %vm6441, %v6444, %v6446
      %v6448 = vsel %vm6440, %v6427, %v6430
      %v6449 = vsel %vm6443, %v6436, 920167782
      %v6450 = vsel %vm6442, %v6433, %v6449
      %v6451 = vsel %vm6441, %v6448, %v6450
      %v6452 = vsel %vm6440, %v6430, %v6433
      %v6453 = vsel %vm6443, %v6439, 1326507024
      %v6454 = vsel %vm6442, %v6436, %v6453
      %v6455 = vsel %vm6441, %v6452, %v6454
      %v6456 = vshll.u32 %v6416, 8
      %v6457 = vmul.u32.u64.compose %v6456, %v6455
      %v6458 = vextract.low.u32 %v6457
      %v6459 = vextract.high.u32 %v6457
      %v6460 = vmul.u32.u64.compose %v6456, %v6451
      %v6461 = vextract.low.u32 %v6460
      %v6462 = vextract.high.u32 %v6460
      %v6463 = vmul.u32 %v6456, %v6447
      %v6464 = vadd.s32 %v6459, %v6461
      %vm6465 = vc.u32 %v6459, %v6461
      %v6466 = vadd.s32 %v6462, 1
      %v6467 = vsel %vm6465, %v6466, %v6462
      %v6468 = vadd.s32 %v6463, %v6467
      %v6469 = vadd.s32 %v6468, 536870912
      %v6470 = vshrl.u32 %v6469, 30
      %v6471 = vshll.u32 %v6470, 30
      %v6472 = vsub.s32 %v6468, %v6471
      %vm6473 = vcmp.lt.s32.totalorder %v6472, 0
      %v6474 = vsub.s32 0, %v6472
      %v6475 = vsel %vm6473, %v6474, %v6472
      %v6476 = vclz %v6475
      %v6477 = vsub.s32 %v6476, 2
      %vm6478 = vcmp.gt.s32.totalorder 0, %v6477
      %v6479 = vsel %vm6478, 0, %v6477
      %v6480 = vsub.s32 32, %v6479
      %v6481 = vshll.u32 %v6472, %v6479
      %v6482 = vshrl.u32 %v6464, %v6480
      %v6483 = vor.u32 %v6481, %v6482
      %v6484 = vsub.s32 4294967266, %v6479
      %v6485 = vadd.s32 %v6484, 127
      %v6486 = vshll.u32 %v6485, 23
      %v6487 = vor.u32 4788187, %v6486
      %v6488 = vand.u32 2147483647, %v6487
      %v6490 = vcvt.s32.f32 %v6483
      %v6491 = vmul.f32 %v6490, %v6488
      %v6492 = vxor.u32 %v6491, 2147483648
      %v6493 = vsel %vm6410, %v6492, %v6491
      %v6494 = vsub.s32 4, %v6470
      %v6495 = vsel %vm6410, %v6494, %v6470
      %v6496 = vsel %vm6409, %v4171, %v6493
      %v6497 = vsel %vm6409, 0, %v6495
      %v6498 = vcosq.f32.pop %v6496
      %v6499 = vsinq.f32.pop %v6496
      %vm6500 = vweird.f32 %v4171
      %v6501 = vadd.s32 %v6497, 3
      %v6502 = vand.u32 %v6501, 3
      %vm6503 = vcmp.lt.s32.totalorder %v6502, 2
      %vm6504 = vcmp.eq.s32.totalorder %v6502, 0
      %v6505 = vxor.u32 %v6499, 2147483648
      %v6506 = vsel %vm6504, %v6498, %v6505
      %vm6507 = vcmp.eq.s32.totalorder %v6502, 2
      %v6508 = vxor.u32 %v6498, 2147483648
      %v6509 = vsel %vm6507, %v6508, %v6499
      %v6510 = vsel %vm6503, %v6506, %v6509
      %v6511 = vsel %vm6500, nan, %v6510
      %v6512 = vand.u32 2147483647, %v4176
      %vm6513 = vcmp.le.f32.partialorder %v6512, 0.7853982
      %vm6514 = vcmp.lt.s32.totalorder %v4176, 0
      %v6515 = vand.u32 %v4176, 2139095040
      %v6516 = vshrl.u32 %v6515, 23
      %v6517 = vsub.s32 %v6516, 127
      %v6518 = vand.u32 2147483647, %v4176
      %v6519 = vand.u32 %v6518, 8388607
      %v6520 = vor.u32 %v6519, 8388608
      %v6521 = vsub.s32 0, %v6520
      %v6522 = vadd.s32 %v6517, 1
      %vm6523 = vcmp.gt.s32.totalorder %v6522, 0
      %v6524 = vsel %vm6523, %v6522, 0
      %v6525 = vshrl.u32 %v6524, 5
      %v6526 = vand.u32 %v6524, 31
      %v6527 = vsub.s32 32, %v6526
      %v6528 = vshrl.u32 683565275, %v6527
      %v6529 = vshll.u32 683565275, %v6526
      %v6530 = vshrl.u32 2475754826, %v6527
      %v6531 = vor.u32 %v6529, %v6530
      %v6532 = vshll.u32 2475754826, %v6526
      %v6533 = vshrl.u32 2131351028, %v6527
      %v6534 = vor.u32 %v6532, %v6533
      %v6535 = vshll.u32 2131351028, %v6526
      %v6536 = vshrl.u32 2102212464, %v6527
      %v6537 = vor.u32 %v6535, %v6536
      %v6538 = vshll.u32 2102212464, %v6526
      %v6539 = vshrl.u32 920167782, %v6527
      %v6540 = vor.u32 %v6538, %v6539
      %v6541 = vshll.u32 920167782, %v6526
      %v6542 = vshrl.u32 1326507024, %v6527
      %v6543 = vor.u32 %v6541, %v6542
      %vm6544 = vcmp.lt.s32.totalorder %v6525, 1
      %vm6545 = vcmp.lt.s32.totalorder %v6525, 2
      %vm6546 = vcmp.lt.s32.totalorder %v6525, 3
      %vm6547 = vcmp.lt.s32.totalorder %v6525, 4
      %v6548 = vsel %vm6544, %v6528, %v6531
      %v6549 = vsel %vm6547, %v6537, 2102212464
      %v6550 = vsel %vm6546, %v6534, %v6549
      %v6551 = vsel %vm6545, %v6548, %v6550
      %v6552 = vsel %vm6544, %v6531, %v6534
      %v6553 = vsel %vm6547, %v6540, 920167782
      %v6554 = vsel %vm6546, %v6537, %v6553
      %v6555 = vsel %vm6545, %v6552, %v6554
      %v6556 = vsel %vm6544, %v6534, %v6537
      %v6557 = vsel %vm6547, %v6543, 1326507024
      %v6558 = vsel %vm6546, %v6540, %v6557
      %v6559 = vsel %vm6545, %v6556, %v6558
      %v6560 = vshll.u32 %v6520, 8
      %v6561 = vmul.u32.u64.compose %v6560, %v6559
      %v6562 = vextract.low.u32 %v6561
      %v6563 = vextract.high.u32 %v6561
      %v6564 = vmul.u32.u64.compose %v6560, %v6555
      %v6565 = vextract.low.u32 %v6564
      %v6566 = vextract.high.u32 %v6564
      %v6567 = vmul.u32 %v6560, %v6551
      %v6568 = vadd.s32 %v6563, %v6565
      %vm6569 = vc.u32 %v6563, %v6565
      %v6570 = vadd.s32 %v6566, 1
      %v6571 = vsel %vm6569, %v6570, %v6566
      %v6572 = vadd.s32 %v6567, %v6571
      %v6573 = vadd.s32 %v6572, 536870912
      %v6574 = vshrl.u32 %v6573, 30
      %v6575 = vshll.u32 %v6574, 30
      %v6576 = vsub.s32 %v6572, %v6575
      %vm6577 = vcmp.lt.s32.totalorder %v6576, 0
      %v6578 = vsub.s32 0, %v6576
      %v6579 = vsel %vm6577, %v6578, %v6576
      %v6580 = vclz %v6579
      %v6581 = vsub.s32 %v6580, 2
      %vm6582 = vcmp.gt.s32.totalorder 0, %v6581
      %v6583 = vsel %vm6582, 0, %v6581
      %v6584 = vsub.s32 32, %v6583
      %v6585 = vshll.u32 %v6576, %v6583
      %v6586 = vshrl.u32 %v6568, %v6584
      %v6587 = vor.u32 %v6585, %v6586
      %v6588 = vsub.s32 4294967266, %v6583
      %v6589 = vadd.s32 %v6588, 127
      %v6590 = vshll.u32 %v6589, 23
      %v6591 = vor.u32 4788187, %v6590
      %v6592 = vand.u32 2147483647, %v6591
      %v6594 = vcvt.s32.f32 %v6587
      %v6595 = vmul.f32 %v6594, %v6592
      %v6596 = vxor.u32 %v6595, 2147483648
      %v6597 = vsel %vm6514, %v6596, %v6595
      %v6598 = vsub.s32 4, %v6574
      %v6599 = vsel %vm6514, %v6598, %v6574
      %v6600 = vsel %vm6513, %v4176, %v6597
      %v6601 = vsel %vm6513, 0, %v6599
      %v6602 = vcosq.f32.pop %v6600
      %v6603 = vsinq.f32.pop %v6600
      %vm6604 = vweird.f32 %v4176
      %v6605 = vadd.s32 %v6601, 3
      %v6606 = vand.u32 %v6605, 3
      %vm6607 = vcmp.lt.s32.totalorder %v6606, 2
      %vm6608 = vcmp.eq.s32.totalorder %v6606, 0
      %v6609 = vxor.u32 %v6603, 2147483648
      %v6610 = vsel %vm6608, %v6602, %v6609
      %vm6611 = vcmp.eq.s32.totalorder %v6606, 2
      %v6612 = vxor.u32 %v6602, 2147483648
      %v6613 = vsel %vm6611, %v6612, %v6603
      %v6614 = vsel %vm6607, %v6610, %v6613
      %v6615 = vsel %vm6604, nan, %v6614
      %v6616 = vand.u32 2147483647, %v4181
      %vm6617 = vcmp.le.f32.partialorder %v6616, 0.7853982
      %vm6618 = vcmp.lt.s32.totalorder %v4181, 0
      %v6619 = vand.u32 %v4181, 2139095040
      %v6620 = vshrl.u32 %v6619, 23
      %v6621 = vsub.s32 %v6620, 127
      %v6622 = vand.u32 2147483647, %v4181
      %v6623 = vand.u32 %v6622, 8388607
      %v6624 = vor.u32 %v6623, 8388608
      %v6625 = vsub.s32 0, %v6624
      %v6626 = vadd.s32 %v6621, 1
      %vm6627 = vcmp.gt.s32.totalorder %v6626, 0
      %v6628 = vsel %vm6627, %v6626, 0
      %v6629 = vshrl.u32 %v6628, 5
      %v6630 = vand.u32 %v6628, 31
      %v6631 = vsub.s32 32, %v6630
      %v6632 = vshrl.u32 683565275, %v6631
      %v6633 = vshll.u32 683565275, %v6630
      %v6634 = vshrl.u32 2475754826, %v6631
      %v6635 = vor.u32 %v6633, %v6634
      %v6636 = vshll.u32 2475754826, %v6630
      %v6637 = vshrl.u32 2131351028, %v6631
      %v6638 = vor.u32 %v6636, %v6637
      %v6639 = vshll.u32 2131351028, %v6630
      %v6640 = vshrl.u32 2102212464, %v6631
      %v6641 = vor.u32 %v6639, %v6640
      %v6642 = vshll.u32 2102212464, %v6630
      %v6643 = vshrl.u32 920167782, %v6631
      %v6644 = vor.u32 %v6642, %v6643
      %v6645 = vshll.u32 920167782, %v6630
      %v6646 = vshrl.u32 1326507024, %v6631
      %v6647 = vor.u32 %v6645, %v6646
      %vm6648 = vcmp.lt.s32.totalorder %v6629, 1
      %vm6649 = vcmp.lt.s32.totalorder %v6629, 2
      %vm6650 = vcmp.lt.s32.totalorder %v6629, 3
      %vm6651 = vcmp.lt.s32.totalorder %v6629, 4
      %v6652 = vsel %vm6648, %v6632, %v6635
      %v6653 = vsel %vm6651, %v6641, 2102212464
      %v6654 = vsel %vm6650, %v6638, %v6653
      %v6655 = vsel %vm6649, %v6652, %v6654
      %v6656 = vsel %vm6648, %v6635, %v6638
      %v6657 = vsel %vm6651, %v6644, 920167782
      %v6658 = vsel %vm6650, %v6641, %v6657
      %v6659 = vsel %vm6649, %v6656, %v6658
      %v6660 = vsel %vm6648, %v6638, %v6641
      %v6661 = vsel %vm6651, %v6647, 1326507024
      %v6662 = vsel %vm6650, %v6644, %v6661
      %v6663 = vsel %vm6649, %v6660, %v6662
      %v6664 = vshll.u32 %v6624, 8
      %v6665 = vmul.u32.u64.compose %v6664, %v6663
      %v6666 = vextract.low.u32 %v6665
      %v6667 = vextract.high.u32 %v6665
      %v6668 = vmul.u32.u64.compose %v6664, %v6659
      %v6669 = vextract.low.u32 %v6668
      %v6670 = vextract.high.u32 %v6668
      %v6671 = vmul.u32 %v6664, %v6655
      %v6672 = vadd.s32 %v6667, %v6669
      %vm6673 = vc.u32 %v6667, %v6669
      %v6674 = vadd.s32 %v6670, 1
      %v6675 = vsel %vm6673, %v6674, %v6670
      %v6676 = vadd.s32 %v6671, %v6675
      %v6677 = vadd.s32 %v6676, 536870912
      %v6678 = vshrl.u32 %v6677, 30
      %v6679 = vshll.u32 %v6678, 30
      %v6680 = vsub.s32 %v6676, %v6679
      %vm6681 = vcmp.lt.s32.totalorder %v6680, 0
      %v6682 = vsub.s32 0, %v6680
      %v6683 = vsel %vm6681, %v6682, %v6680
      %v6684 = vclz %v6683
      %v6685 = vsub.s32 %v6684, 2
      %vm6686 = vcmp.gt.s32.totalorder 0, %v6685
      %v6687 = vsel %vm6686, 0, %v6685
      %v6688 = vsub.s32 32, %v6687
      %v6689 = vshll.u32 %v6680, %v6687
      %v6690 = vshrl.u32 %v6672, %v6688
      %v6691 = vor.u32 %v6689, %v6690
      %v6692 = vsub.s32 4294967266, %v6687
      %v6693 = vadd.s32 %v6692, 127
      %v6694 = vshll.u32 %v6693, 23
      %v6695 = vor.u32 4788187, %v6694
      %v6696 = vand.u32 2147483647, %v6695
      %v6698 = vcvt.s32.f32 %v6691
      %v6699 = vmul.f32 %v6698, %v6696
      %v6700 = vxor.u32 %v6699, 2147483648
      %v6701 = vsel %vm6618, %v6700, %v6699
      %v6702 = vsub.s32 4, %v6678
      %v6703 = vsel %vm6618, %v6702, %v6678
      %v6704 = vsel %vm6617, %v4181, %v6701
      %v6705 = vsel %vm6617, 0, %v6703
      %v6706 = vcosq.f32.pop %v6704
      %v6707 = vsinq.f32.pop %v6704
      %vm6708 = vweird.f32 %v4181
      %v6709 = vadd.s32 %v6705, 3
      %v6710 = vand.u32 %v6709, 3
      %vm6711 = vcmp.lt.s32.totalorder %v6710, 2
      %vm6712 = vcmp.eq.s32.totalorder %v6710, 0
      %v6713 = vxor.u32 %v6707, 2147483648
      %v6714 = vsel %vm6712, %v6706, %v6713
      %vm6715 = vcmp.eq.s32.totalorder %v6710, 2
      %v6716 = vxor.u32 %v6706, 2147483648
      %v6717 = vsel %vm6715, %v6716, %v6707
      %v6718 = vsel %vm6711, %v6714, %v6717
      %v6719 = vsel %vm6708, nan, %v6718
      %v6720 = vand.u32 2147483647, %v4186
      %vm6721 = vcmp.le.f32.partialorder %v6720, 0.7853982
      %vm6722 = vcmp.lt.s32.totalorder %v4186, 0
      %v6723 = vand.u32 %v4186, 2139095040
      %v6724 = vshrl.u32 %v6723, 23
      %v6725 = vsub.s32 %v6724, 127
      %v6726 = vand.u32 2147483647, %v4186
      %v6727 = vand.u32 %v6726, 8388607
      %v6728 = vor.u32 %v6727, 8388608
      %v6729 = vsub.s32 0, %v6728
      %v6730 = vadd.s32 %v6725, 1
      %vm6731 = vcmp.gt.s32.totalorder %v6730, 0
      %v6732 = vsel %vm6731, %v6730, 0
      %v6733 = vshrl.u32 %v6732, 5
      %v6734 = vand.u32 %v6732, 31
      %v6735 = vsub.s32 32, %v6734
      %v6736 = vshrl.u32 683565275, %v6735
      %v6737 = vshll.u32 683565275, %v6734
      %v6738 = vshrl.u32 2475754826, %v6735
      %v6739 = vor.u32 %v6737, %v6738
      %v6740 = vshll.u32 2475754826, %v6734
      %v6741 = vshrl.u32 2131351028, %v6735
      %v6742 = vor.u32 %v6740, %v6741
      %v6743 = vshll.u32 2131351028, %v6734
      %v6744 = vshrl.u32 2102212464, %v6735
      %v6745 = vor.u32 %v6743, %v6744
      %v6746 = vshll.u32 2102212464, %v6734
      %v6747 = vshrl.u32 920167782, %v6735
      %v6748 = vor.u32 %v6746, %v6747
      %v6749 = vshll.u32 920167782, %v6734
      %v6750 = vshrl.u32 1326507024, %v6735
      %v6751 = vor.u32 %v6749, %v6750
      %vm6752 = vcmp.lt.s32.totalorder %v6733, 1
      %vm6753 = vcmp.lt.s32.totalorder %v6733, 2
      %vm6754 = vcmp.lt.s32.totalorder %v6733, 3
      %vm6755 = vcmp.lt.s32.totalorder %v6733, 4
      %v6756 = vsel %vm6752, %v6736, %v6739
      %v6757 = vsel %vm6755, %v6745, 2102212464
      %v6758 = vsel %vm6754, %v6742, %v6757
      %v6759 = vsel %vm6753, %v6756, %v6758
      %v6760 = vsel %vm6752, %v6739, %v6742
      %v6761 = vsel %vm6755, %v6748, 920167782
      %v6762 = vsel %vm6754, %v6745, %v6761
      %v6763 = vsel %vm6753, %v6760, %v6762
      %v6764 = vsel %vm6752, %v6742, %v6745
      %v6765 = vsel %vm6755, %v6751, 1326507024
      %v6766 = vsel %vm6754, %v6748, %v6765
      %v6767 = vsel %vm6753, %v6764, %v6766
      %v6768 = vshll.u32 %v6728, 8
      %v6769 = vmul.u32.u64.compose %v6768, %v6767
      %v6770 = vextract.low.u32 %v6769
      %v6771 = vextract.high.u32 %v6769
      %v6772 = vmul.u32.u64.compose %v6768, %v6763
      %v6773 = vextract.low.u32 %v6772
      %v6774 = vextract.high.u32 %v6772
      %v6775 = vmul.u32 %v6768, %v6759
      %v6776 = vadd.s32 %v6771, %v6773
      %vm6777 = vc.u32 %v6771, %v6773
      %v6778 = vadd.s32 %v6774, 1
      %v6779 = vsel %vm6777, %v6778, %v6774
      %v6780 = vadd.s32 %v6775, %v6779
      %v6781 = vadd.s32 %v6780, 536870912
      %v6782 = vshrl.u32 %v6781, 30
      %v6783 = vshll.u32 %v6782, 30
      %v6784 = vsub.s32 %v6780, %v6783
      %vm6785 = vcmp.lt.s32.totalorder %v6784, 0
      %v6786 = vsub.s32 0, %v6784
      %v6787 = vsel %vm6785, %v6786, %v6784
      %v6788 = vclz %v6787
      %v6789 = vsub.s32 %v6788, 2
      %vm6790 = vcmp.gt.s32.totalorder 0, %v6789
      %v6791 = vsel %vm6790, 0, %v6789
      %v6792 = vsub.s32 32, %v6791
      %v6793 = vshll.u32 %v6784, %v6791
      %v6794 = vshrl.u32 %v6776, %v6792
      %v6795 = vor.u32 %v6793, %v6794
      %v6796 = vsub.s32 4294967266, %v6791
      %v6797 = vadd.s32 %v6796, 127
      %v6798 = vshll.u32 %v6797, 23
      %v6799 = vor.u32 4788187, %v6798
      %v6800 = vand.u32 2147483647, %v6799
      %v6802 = vcvt.s32.f32 %v6795
      %v6803 = vmul.f32 %v6802, %v6800
      %v6804 = vxor.u32 %v6803, 2147483648
      %v6805 = vsel %vm6722, %v6804, %v6803
      %v6806 = vsub.s32 4, %v6782
      %v6807 = vsel %vm6722, %v6806, %v6782
      %v6808 = vsel %vm6721, %v4186, %v6805
      %v6809 = vsel %vm6721, 0, %v6807
      %v6810 = vcosq.f32.pop %v6808
      %v6811 = vsinq.f32.pop %v6808
      %vm6812 = vweird.f32 %v4186
      %v6813 = vadd.s32 %v6809, 3
      %v6814 = vand.u32 %v6813, 3
      %vm6815 = vcmp.lt.s32.totalorder %v6814, 2
      %vm6816 = vcmp.eq.s32.totalorder %v6814, 0
      %v6817 = vxor.u32 %v6811, 2147483648
      %v6818 = vsel %vm6816, %v6810, %v6817
      %vm6819 = vcmp.eq.s32.totalorder %v6814, 2
      %v6820 = vxor.u32 %v6810, 2147483648
      %v6821 = vsel %vm6819, %v6820, %v6811
      %v6822 = vsel %vm6815, %v6818, %v6821
      %v6823 = vsel %vm6812, nan, %v6822
      %v6824 = vand.u32 2147483647, %v4191
      %vm6825 = vcmp.le.f32.partialorder %v6824, 0.7853982
      %vm6826 = vcmp.lt.s32.totalorder %v4191, 0
      %v6827 = vand.u32 %v4191, 2139095040
      %v6828 = vshrl.u32 %v6827, 23
      %v6829 = vsub.s32 %v6828, 127
      %v6830 = vand.u32 2147483647, %v4191
      %v6831 = vand.u32 %v6830, 8388607
      %v6832 = vor.u32 %v6831, 8388608
      %v6833 = vsub.s32 0, %v6832
      %v6834 = vadd.s32 %v6829, 1
      %vm6835 = vcmp.gt.s32.totalorder %v6834, 0
      %v6836 = vsel %vm6835, %v6834, 0
      %v6837 = vshrl.u32 %v6836, 5
      %v6838 = vand.u32 %v6836, 31
      %v6839 = vsub.s32 32, %v6838
      %v6840 = vshrl.u32 683565275, %v6839
      %v6841 = vshll.u32 683565275, %v6838
      %v6842 = vshrl.u32 2475754826, %v6839
      %v6843 = vor.u32 %v6841, %v6842
      %v6844 = vshll.u32 2475754826, %v6838
      %v6845 = vshrl.u32 2131351028, %v6839
      %v6846 = vor.u32 %v6844, %v6845
      %v6847 = vshll.u32 2131351028, %v6838
      %v6848 = vshrl.u32 2102212464, %v6839
      %v6849 = vor.u32 %v6847, %v6848
      %v6850 = vshll.u32 2102212464, %v6838
      %v6851 = vshrl.u32 920167782, %v6839
      %v6852 = vor.u32 %v6850, %v6851
      %v6853 = vshll.u32 920167782, %v6838
      %v6854 = vshrl.u32 1326507024, %v6839
      %v6855 = vor.u32 %v6853, %v6854
      %vm6856 = vcmp.lt.s32.totalorder %v6837, 1
      %vm6857 = vcmp.lt.s32.totalorder %v6837, 2
      %vm6858 = vcmp.lt.s32.totalorder %v6837, 3
      %vm6859 = vcmp.lt.s32.totalorder %v6837, 4
      %v6860 = vsel %vm6856, %v6840, %v6843
      %v6861 = vsel %vm6859, %v6849, 2102212464
      %v6862 = vsel %vm6858, %v6846, %v6861
      %v6863 = vsel %vm6857, %v6860, %v6862
      %v6864 = vsel %vm6856, %v6843, %v6846
      %v6865 = vsel %vm6859, %v6852, 920167782
      %v6866 = vsel %vm6858, %v6849, %v6865
      %v6867 = vsel %vm6857, %v6864, %v6866
      %v6868 = vsel %vm6856, %v6846, %v6849
      %v6869 = vsel %vm6859, %v6855, 1326507024
      %v6870 = vsel %vm6858, %v6852, %v6869
      %v6871 = vsel %vm6857, %v6868, %v6870
      %v6872 = vshll.u32 %v6832, 8
      %v6873 = vmul.u32.u64.compose %v6872, %v6871
      %v6874 = vextract.low.u32 %v6873
      %v6875 = vextract.high.u32 %v6873
      %v6876 = vmul.u32.u64.compose %v6872, %v6867
      %v6877 = vextract.low.u32 %v6876
      %v6878 = vextract.high.u32 %v6876
      %v6879 = vmul.u32 %v6872, %v6863
      %v6880 = vadd.s32 %v6875, %v6877
      %vm6881 = vc.u32 %v6875, %v6877
      %v6882 = vadd.s32 %v6878, 1
      %v6883 = vsel %vm6881, %v6882, %v6878
      %v6884 = vadd.s32 %v6879, %v6883
      %v6885 = vadd.s32 %v6884, 536870912
      %v6886 = vshrl.u32 %v6885, 30
      %v6887 = vshll.u32 %v6886, 30
      %v6888 = vsub.s32 %v6884, %v6887
      %vm6889 = vcmp.lt.s32.totalorder %v6888, 0
      %v6890 = vsub.s32 0, %v6888
      %v6891 = vsel %vm6889, %v6890, %v6888
      %v6892 = vclz %v6891
      %v6893 = vsub.s32 %v6892, 2
      %vm6894 = vcmp.gt.s32.totalorder 0, %v6893
      %v6895 = vsel %vm6894, 0, %v6893
      %v6896 = vsub.s32 32, %v6895
      %v6897 = vshll.u32 %v6888, %v6895
      %v6898 = vshrl.u32 %v6880, %v6896
      %v6899 = vor.u32 %v6897, %v6898
      %v6900 = vsub.s32 4294967266, %v6895
      %v6901 = vadd.s32 %v6900, 127
      %v6902 = vshll.u32 %v6901, 23
      %v6903 = vor.u32 4788187, %v6902
      %v6904 = vand.u32 2147483647, %v6903
      %v6906 = vcvt.s32.f32 %v6899
      %v6907 = vmul.f32 %v6906, %v6904
      %v6908 = vxor.u32 %v6907, 2147483648
      %v6909 = vsel %vm6826, %v6908, %v6907
      %v6910 = vsub.s32 4, %v6886
      %v6911 = vsel %vm6826, %v6910, %v6886
      %v6912 = vsel %vm6825, %v4191, %v6909
      %v6913 = vsel %vm6825, 0, %v6911
      %v6914 = vcosq.f32.pop %v6912
      %v6915 = vsinq.f32.pop %v6912
      %vm6916 = vweird.f32 %v4191
      %v6917 = vadd.s32 %v6913, 3
      %v6918 = vand.u32 %v6917, 3
      %vm6919 = vcmp.lt.s32.totalorder %v6918, 2
      %vm6920 = vcmp.eq.s32.totalorder %v6918, 0
      %v6921 = vxor.u32 %v6915, 2147483648
      %v6922 = vsel %vm6920, %v6914, %v6921
      %vm6923 = vcmp.eq.s32.totalorder %v6918, 2
      %v6924 = vxor.u32 %v6914, 2147483648
      %v6925 = vsel %vm6923, %v6924, %v6915
      %v6926 = vsel %vm6919, %v6922, %v6925
      %v6927 = vsel %vm6916, nan, %v6926
      %v6928 = vand.u32 2147483647, %v4196
      %vm6929 = vcmp.le.f32.partialorder %v6928, 0.7853982
      %vm6930 = vcmp.lt.s32.totalorder %v4196, 0
      %v6931 = vand.u32 %v4196, 2139095040
      %v6932 = vshrl.u32 %v6931, 23
      %v6933 = vsub.s32 %v6932, 127
      %v6934 = vand.u32 2147483647, %v4196
      %v6935 = vand.u32 %v6934, 8388607
      %v6936 = vor.u32 %v6935, 8388608
      %v6937 = vsub.s32 0, %v6936
      %v6938 = vadd.s32 %v6933, 1
      %vm6939 = vcmp.gt.s32.totalorder %v6938, 0
      %v6940 = vsel %vm6939, %v6938, 0
      %v6941 = vshrl.u32 %v6940, 5
      %v6942 = vand.u32 %v6940, 31
      %v6943 = vsub.s32 32, %v6942
      %v6944 = vshrl.u32 683565275, %v6943
      %v6945 = vshll.u32 683565275, %v6942
      %v6946 = vshrl.u32 2475754826, %v6943
      %v6947 = vor.u32 %v6945, %v6946
      %v6948 = vshll.u32 2475754826, %v6942
      %v6949 = vshrl.u32 2131351028, %v6943
      %v6950 = vor.u32 %v6948, %v6949
      %v6951 = vshll.u32 2131351028, %v6942
      %v6952 = vshrl.u32 2102212464, %v6943
      %v6953 = vor.u32 %v6951, %v6952
      %v6954 = vshll.u32 2102212464, %v6942
      %v6955 = vshrl.u32 920167782, %v6943
      %v6956 = vor.u32 %v6954, %v6955
      %v6957 = vshll.u32 920167782, %v6942
      %v6958 = vshrl.u32 1326507024, %v6943
      %v6959 = vor.u32 %v6957, %v6958
      %vm6960 = vcmp.lt.s32.totalorder %v6941, 1
      %vm6961 = vcmp.lt.s32.totalorder %v6941, 2
      %vm6962 = vcmp.lt.s32.totalorder %v6941, 3
      %vm6963 = vcmp.lt.s32.totalorder %v6941, 4
      %v6964 = vsel %vm6960, %v6944, %v6947
      %v6965 = vsel %vm6963, %v6953, 2102212464
      %v6966 = vsel %vm6962, %v6950, %v6965
      %v6967 = vsel %vm6961, %v6964, %v6966
      %v6968 = vsel %vm6960, %v6947, %v6950
      %v6969 = vsel %vm6963, %v6956, 920167782
      %v6970 = vsel %vm6962, %v6953, %v6969
      %v6971 = vsel %vm6961, %v6968, %v6970
      %v6972 = vsel %vm6960, %v6950, %v6953
      %v6973 = vsel %vm6963, %v6959, 1326507024
      %v6974 = vsel %vm6962, %v6956, %v6973
      %v6975 = vsel %vm6961, %v6972, %v6974
      %v6976 = vshll.u32 %v6936, 8
      %v6977 = vmul.u32.u64.compose %v6976, %v6975
      %v6978 = vextract.low.u32 %v6977
      %v6979 = vextract.high.u32 %v6977
      %v6980 = vmul.u32.u64.compose %v6976, %v6971
      %v6981 = vextract.low.u32 %v6980
      %v6982 = vextract.high.u32 %v6980
      %v6983 = vmul.u32 %v6976, %v6967
      %v6984 = vadd.s32 %v6979, %v6981
      %vm6985 = vc.u32 %v6979, %v6981
      %v6986 = vadd.s32 %v6982, 1
      %v6987 = vsel %vm6985, %v6986, %v6982
      %v6988 = vadd.s32 %v6983, %v6987
      %v6989 = vadd.s32 %v6988, 536870912
      %v6990 = vshrl.u32 %v6989, 30
      %v6991 = vshll.u32 %v6990, 30
      %v6992 = vsub.s32 %v6988, %v6991
      %vm6993 = vcmp.lt.s32.totalorder %v6992, 0
      %v6994 = vsub.s32 0, %v6992
      %v6995 = vsel %vm6993, %v6994, %v6992
      %v6996 = vclz %v6995
      %v6997 = vsub.s32 %v6996, 2
      %vm6998 = vcmp.gt.s32.totalorder 0, %v6997
      %v6999 = vsel %vm6998, 0, %v6997
      %v7000 = vsub.s32 32, %v6999
      %v7001 = vshll.u32 %v6992, %v6999
      %v7002 = vshrl.u32 %v6984, %v7000
      %v7003 = vor.u32 %v7001, %v7002
      %v7004 = vsub.s32 4294967266, %v6999
      %v7005 = vadd.s32 %v7004, 127
      %v7006 = vshll.u32 %v7005, 23
      %v7007 = vor.u32 4788187, %v7006
      %v7008 = vand.u32 2147483647, %v7007
      %v7010 = vcvt.s32.f32 %v7003
      %v7011 = vmul.f32 %v7010, %v7008
      %v7012 = vxor.u32 %v7011, 2147483648
      %v7013 = vsel %vm6930, %v7012, %v7011
      %v7014 = vsub.s32 4, %v6990
      %v7015 = vsel %vm6930, %v7014, %v6990
      %v7016 = vsel %vm6929, %v4196, %v7013
      %v7017 = vsel %vm6929, 0, %v7015
      %v7018 = vcosq.f32.pop %v7016
      %v7019 = vsinq.f32.pop %v7016
      %vm7020 = vweird.f32 %v4196
      %v7021 = vadd.s32 %v7017, 3
      %v7022 = vand.u32 %v7021, 3
      %vm7023 = vcmp.lt.s32.totalorder %v7022, 2
      %vm7024 = vcmp.eq.s32.totalorder %v7022, 0
      %v7025 = vxor.u32 %v7019, 2147483648
      %v7026 = vsel %vm7024, %v7018, %v7025
      %vm7027 = vcmp.eq.s32.totalorder %v7022, 2
      %v7028 = vxor.u32 %v7018, 2147483648
      %v7029 = vsel %vm7027, %v7028, %v7019
      %v7030 = vsel %vm7023, %v7026, %v7029
      %v7031 = vsel %vm7020, nan, %v7030
      %v7032 = vand.u32 2147483647, %v4201
      %vm7033 = vcmp.le.f32.partialorder %v7032, 0.7853982
      %vm7034 = vcmp.lt.s32.totalorder %v4201, 0
      %v7035 = vand.u32 %v4201, 2139095040
      %v7036 = vshrl.u32 %v7035, 23
      %v7037 = vsub.s32 %v7036, 127
      %v7038 = vand.u32 2147483647, %v4201
      %v7039 = vand.u32 %v7038, 8388607
      %v7040 = vor.u32 %v7039, 8388608
      %v7041 = vsub.s32 0, %v7040
      %v7042 = vadd.s32 %v7037, 1
      %vm7043 = vcmp.gt.s32.totalorder %v7042, 0
      %v7044 = vsel %vm7043, %v7042, 0
      %v7045 = vshrl.u32 %v7044, 5
      %v7046 = vand.u32 %v7044, 31
      %v7047 = vsub.s32 32, %v7046
      %v7048 = vshrl.u32 683565275, %v7047
      %v7049 = vshll.u32 683565275, %v7046
      %v7050 = vshrl.u32 2475754826, %v7047
      %v7051 = vor.u32 %v7049, %v7050
      %v7052 = vshll.u32 2475754826, %v7046
      %v7053 = vshrl.u32 2131351028, %v7047
      %v7054 = vor.u32 %v7052, %v7053
      %v7055 = vshll.u32 2131351028, %v7046
      %v7056 = vshrl.u32 2102212464, %v7047
      %v7057 = vor.u32 %v7055, %v7056
      %v7058 = vshll.u32 2102212464, %v7046
      %v7059 = vshrl.u32 920167782, %v7047
      %v7060 = vor.u32 %v7058, %v7059
      %v7061 = vshll.u32 920167782, %v7046
      %v7062 = vshrl.u32 1326507024, %v7047
      %v7063 = vor.u32 %v7061, %v7062
      %vm7064 = vcmp.lt.s32.totalorder %v7045, 1
      %vm7065 = vcmp.lt.s32.totalorder %v7045, 2
      %vm7066 = vcmp.lt.s32.totalorder %v7045, 3
      %vm7067 = vcmp.lt.s32.totalorder %v7045, 4
      %v7068 = vsel %vm7064, %v7048, %v7051
      %v7069 = vsel %vm7067, %v7057, 2102212464
      %v7070 = vsel %vm7066, %v7054, %v7069
      %v7071 = vsel %vm7065, %v7068, %v7070
      %v7072 = vsel %vm7064, %v7051, %v7054
      %v7073 = vsel %vm7067, %v7060, 920167782
      %v7074 = vsel %vm7066, %v7057, %v7073
      %v7075 = vsel %vm7065, %v7072, %v7074
      %v7076 = vsel %vm7064, %v7054, %v7057
      %v7077 = vsel %vm7067, %v7063, 1326507024
      %v7078 = vsel %vm7066, %v7060, %v7077
      %v7079 = vsel %vm7065, %v7076, %v7078
      %v7080 = vshll.u32 %v7040, 8
      %v7081 = vmul.u32.u64.compose %v7080, %v7079
      %v7082 = vextract.low.u32 %v7081
      %v7083 = vextract.high.u32 %v7081
      %v7084 = vmul.u32.u64.compose %v7080, %v7075
      %v7085 = vextract.low.u32 %v7084
      %v7086 = vextract.high.u32 %v7084
      %v7087 = vmul.u32 %v7080, %v7071
      %v7088 = vadd.s32 %v7083, %v7085
      %vm7089 = vc.u32 %v7083, %v7085
      %v7090 = vadd.s32 %v7086, 1
      %v7091 = vsel %vm7089, %v7090, %v7086
      %v7092 = vadd.s32 %v7087, %v7091
      %v7093 = vadd.s32 %v7092, 536870912
      %v7094 = vshrl.u32 %v7093, 30
      %v7095 = vshll.u32 %v7094, 30
      %v7096 = vsub.s32 %v7092, %v7095
      %vm7097 = vcmp.lt.s32.totalorder %v7096, 0
      %v7098 = vsub.s32 0, %v7096
      %v7099 = vsel %vm7097, %v7098, %v7096
      %v7100 = vclz %v7099
      %v7101 = vsub.s32 %v7100, 2
      %vm7102 = vcmp.gt.s32.totalorder 0, %v7101
      %v7103 = vsel %vm7102, 0, %v7101
      %v7104 = vsub.s32 32, %v7103
      %v7105 = vshll.u32 %v7096, %v7103
      %v7106 = vshrl.u32 %v7088, %v7104
      %v7107 = vor.u32 %v7105, %v7106
      %v7108 = vsub.s32 4294967266, %v7103
      %v7109 = vadd.s32 %v7108, 127
      %v7110 = vshll.u32 %v7109, 23
      %v7111 = vor.u32 4788187, %v7110
      %v7112 = vand.u32 2147483647, %v7111
      %v7114 = vcvt.s32.f32 %v7107
      %v7115 = vmul.f32 %v7114, %v7112
      %v7116 = vxor.u32 %v7115, 2147483648
      %v7117 = vsel %vm7034, %v7116, %v7115
      %v7118 = vsub.s32 4, %v7094
      %v7119 = vsel %vm7034, %v7118, %v7094
      %v7120 = vsel %vm7033, %v4201, %v7117
      %v7121 = vsel %vm7033, 0, %v7119
      %v7122 = vcosq.f32.pop %v7120
      %v7123 = vsinq.f32.pop %v7120
      %vm7124 = vweird.f32 %v4201
      %v7125 = vadd.s32 %v7121, 3
      %v7126 = vand.u32 %v7125, 3
      %vm7127 = vcmp.lt.s32.totalorder %v7126, 2
      %vm7128 = vcmp.eq.s32.totalorder %v7126, 0
      %v7129 = vxor.u32 %v7123, 2147483648
      %v7130 = vsel %vm7128, %v7122, %v7129
      %vm7131 = vcmp.eq.s32.totalorder %v7126, 2
      %v7132 = vxor.u32 %v7122, 2147483648
      %v7133 = vsel %vm7131, %v7132, %v7123
      %v7134 = vsel %vm7127, %v7130, %v7133
      %v7135 = vsel %vm7124, nan, %v7134
      %v7136 = vand.u32 2147483647, %v4206
      %vm7137 = vcmp.le.f32.partialorder %v7136, 0.7853982
      %vm7138 = vcmp.lt.s32.totalorder %v4206, 0
      %v7139 = vand.u32 %v4206, 2139095040
      %v7140 = vshrl.u32 %v7139, 23
      %v7141 = vsub.s32 %v7140, 127
      %v7142 = vand.u32 2147483647, %v4206
      %v7143 = vand.u32 %v7142, 8388607
      %v7144 = vor.u32 %v7143, 8388608
      %v7145 = vsub.s32 0, %v7144
      %v7146 = vadd.s32 %v7141, 1
      %vm7147 = vcmp.gt.s32.totalorder %v7146, 0
      %v7148 = vsel %vm7147, %v7146, 0
      %v7149 = vshrl.u32 %v7148, 5
      %v7150 = vand.u32 %v7148, 31
      %v7151 = vsub.s32 32, %v7150
      %v7152 = vshrl.u32 683565275, %v7151
      %v7153 = vshll.u32 683565275, %v7150
      %v7154 = vshrl.u32 2475754826, %v7151
      %v7155 = vor.u32 %v7153, %v7154
      %v7156 = vshll.u32 2475754826, %v7150
      %v7157 = vshrl.u32 2131351028, %v7151
      %v7158 = vor.u32 %v7156, %v7157
      %v7159 = vshll.u32 2131351028, %v7150
      %v7160 = vshrl.u32 2102212464, %v7151
      %v7161 = vor.u32 %v7159, %v7160
      %v7162 = vshll.u32 2102212464, %v7150
      %v7163 = vshrl.u32 920167782, %v7151
      %v7164 = vor.u32 %v7162, %v7163
      %v7165 = vshll.u32 920167782, %v7150
      %v7166 = vshrl.u32 1326507024, %v7151
      %v7167 = vor.u32 %v7165, %v7166
      %vm7168 = vcmp.lt.s32.totalorder %v7149, 1
      %vm7169 = vcmp.lt.s32.totalorder %v7149, 2
      %vm7170 = vcmp.lt.s32.totalorder %v7149, 3
      %vm7171 = vcmp.lt.s32.totalorder %v7149, 4
      %v7172 = vsel %vm7168, %v7152, %v7155
      %v7173 = vsel %vm7171, %v7161, 2102212464
      %v7174 = vsel %vm7170, %v7158, %v7173
      %v7175 = vsel %vm7169, %v7172, %v7174
      %v7176 = vsel %vm7168, %v7155, %v7158
      %v7177 = vsel %vm7171, %v7164, 920167782
      %v7178 = vsel %vm7170, %v7161, %v7177
      %v7179 = vsel %vm7169, %v7176, %v7178
      %v7180 = vsel %vm7168, %v7158, %v7161
      %v7181 = vsel %vm7171, %v7167, 1326507024
      %v7182 = vsel %vm7170, %v7164, %v7181
      %v7183 = vsel %vm7169, %v7180, %v7182
      %v7184 = vshll.u32 %v7144, 8
      %v7185 = vmul.u32.u64.compose %v7184, %v7183
      %v7186 = vextract.low.u32 %v7185
      %v7187 = vextract.high.u32 %v7185
      %v7188 = vmul.u32.u64.compose %v7184, %v7179
      %v7189 = vextract.low.u32 %v7188
      %v7190 = vextract.high.u32 %v7188
      %v7191 = vmul.u32 %v7184, %v7175
      %v7192 = vadd.s32 %v7187, %v7189
      %vm7193 = vc.u32 %v7187, %v7189
      %v7194 = vadd.s32 %v7190, 1
      %v7195 = vsel %vm7193, %v7194, %v7190
      %v7196 = vadd.s32 %v7191, %v7195
      %v7197 = vadd.s32 %v7196, 536870912
      %v7198 = vshrl.u32 %v7197, 30
      %v7199 = vshll.u32 %v7198, 30
      %v7200 = vsub.s32 %v7196, %v7199
      %vm7201 = vcmp.lt.s32.totalorder %v7200, 0
      %v7202 = vsub.s32 0, %v7200
      %v7203 = vsel %vm7201, %v7202, %v7200
      %v7204 = vclz %v7203
      %v7205 = vsub.s32 %v7204, 2
      %vm7206 = vcmp.gt.s32.totalorder 0, %v7205
      %v7207 = vsel %vm7206, 0, %v7205
      %v7208 = vsub.s32 32, %v7207
      %v7209 = vshll.u32 %v7200, %v7207
      %v7210 = vshrl.u32 %v7192, %v7208
      %v7211 = vor.u32 %v7209, %v7210
      %v7212 = vsub.s32 4294967266, %v7207
      %v7213 = vadd.s32 %v7212, 127
      %v7214 = vshll.u32 %v7213, 23
      %v7215 = vor.u32 4788187, %v7214
      %v7216 = vand.u32 2147483647, %v7215
      %v7218 = vcvt.s32.f32 %v7211
      %v7219 = vmul.f32 %v7218, %v7216
      %v7220 = vxor.u32 %v7219, 2147483648
      %v7221 = vsel %vm7138, %v7220, %v7219
      %v7222 = vsub.s32 4, %v7198
      %v7223 = vsel %vm7138, %v7222, %v7198
      %v7224 = vsel %vm7137, %v4206, %v7221
      %v7225 = vsel %vm7137, 0, %v7223
      %v7226 = vcosq.f32.pop %v7224
      %v7227 = vsinq.f32.pop %v7224
      %vm7228 = vweird.f32 %v4206
      %v7229 = vadd.s32 %v7225, 3
      %v7230 = vand.u32 %v7229, 3
      %vm7231 = vcmp.lt.s32.totalorder %v7230, 2
      %vm7232 = vcmp.eq.s32.totalorder %v7230, 0
      %v7233 = vxor.u32 %v7227, 2147483648
      %v7234 = vsel %vm7232, %v7226, %v7233
      %vm7235 = vcmp.eq.s32.totalorder %v7230, 2
      %v7236 = vxor.u32 %v7226, 2147483648
      %v7237 = vsel %vm7235, %v7236, %v7227
      %v7238 = vsel %vm7231, %v7234, %v7237
      %v7239 = vsel %vm7228, nan, %v7238
      %v7240 = vand.u32 2147483647, %v4211
      %vm7241 = vcmp.le.f32.partialorder %v7240, 0.7853982
      %vm7242 = vcmp.lt.s32.totalorder %v4211, 0
      %v7243 = vand.u32 %v4211, 2139095040
      %v7244 = vshrl.u32 %v7243, 23
      %v7245 = vsub.s32 %v7244, 127
      %v7246 = vand.u32 2147483647, %v4211
      %v7247 = vand.u32 %v7246, 8388607
      %v7248 = vor.u32 %v7247, 8388608
      %v7249 = vsub.s32 0, %v7248
      %v7250 = vadd.s32 %v7245, 1
      %vm7251 = vcmp.gt.s32.totalorder %v7250, 0
      %v7252 = vsel %vm7251, %v7250, 0
      %v7253 = vshrl.u32 %v7252, 5
      %v7254 = vand.u32 %v7252, 31
      %v7255 = vsub.s32 32, %v7254
      %v7256 = vshrl.u32 683565275, %v7255
      %v7257 = vshll.u32 683565275, %v7254
      %v7258 = vshrl.u32 2475754826, %v7255
      %v7259 = vor.u32 %v7257, %v7258
      %v7260 = vshll.u32 2475754826, %v7254
      %v7261 = vshrl.u32 2131351028, %v7255
      %v7262 = vor.u32 %v7260, %v7261
      %v7263 = vshll.u32 2131351028, %v7254
      %v7264 = vshrl.u32 2102212464, %v7255
      %v7265 = vor.u32 %v7263, %v7264
      %v7266 = vshll.u32 2102212464, %v7254
      %v7267 = vshrl.u32 920167782, %v7255
      %v7268 = vor.u32 %v7266, %v7267
      %v7269 = vshll.u32 920167782, %v7254
      %v7270 = vshrl.u32 1326507024, %v7255
      %v7271 = vor.u32 %v7269, %v7270
      %vm7272 = vcmp.lt.s32.totalorder %v7253, 1
      %vm7273 = vcmp.lt.s32.totalorder %v7253, 2
      %vm7274 = vcmp.lt.s32.totalorder %v7253, 3
      %vm7275 = vcmp.lt.s32.totalorder %v7253, 4
      %v7276 = vsel %vm7272, %v7256, %v7259
      %v7277 = vsel %vm7275, %v7265, 2102212464
      %v7278 = vsel %vm7274, %v7262, %v7277
      %v7279 = vsel %vm7273, %v7276, %v7278
      %v7280 = vsel %vm7272, %v7259, %v7262
      %v7281 = vsel %vm7275, %v7268, 920167782
      %v7282 = vsel %vm7274, %v7265, %v7281
      %v7283 = vsel %vm7273, %v7280, %v7282
      %v7284 = vsel %vm7272, %v7262, %v7265
      %v7285 = vsel %vm7275, %v7271, 1326507024
      %v7286 = vsel %vm7274, %v7268, %v7285
      %v7287 = vsel %vm7273, %v7284, %v7286
      %v7288 = vshll.u32 %v7248, 8
      %v7289 = vmul.u32.u64.compose %v7288, %v7287
      %v7290 = vextract.low.u32 %v7289
      %v7291 = vextract.high.u32 %v7289
      %v7292 = vmul.u32.u64.compose %v7288, %v7283
      %v7293 = vextract.low.u32 %v7292
      %v7294 = vextract.high.u32 %v7292
      %v7295 = vmul.u32 %v7288, %v7279
      %v7296 = vadd.s32 %v7291, %v7293
      %vm7297 = vc.u32 %v7291, %v7293
      %v7298 = vadd.s32 %v7294, 1
      %v7299 = vsel %vm7297, %v7298, %v7294
      %v7300 = vadd.s32 %v7295, %v7299
      %v7301 = vadd.s32 %v7300, 536870912
      %v7302 = vshrl.u32 %v7301, 30
      %v7303 = vshll.u32 %v7302, 30
      %v7304 = vsub.s32 %v7300, %v7303
      %vm7305 = vcmp.lt.s32.totalorder %v7304, 0
      %v7306 = vsub.s32 0, %v7304
      %v7307 = vsel %vm7305, %v7306, %v7304
      %v7308 = vclz %v7307
      %v7309 = vsub.s32 %v7308, 2
      %vm7310 = vcmp.gt.s32.totalorder 0, %v7309
      %v7311 = vsel %vm7310, 0, %v7309
      %v7312 = vsub.s32 32, %v7311
      %v7313 = vshll.u32 %v7304, %v7311
      %v7314 = vshrl.u32 %v7296, %v7312
      %v7315 = vor.u32 %v7313, %v7314
      %v7316 = vsub.s32 4294967266, %v7311
      %v7317 = vadd.s32 %v7316, 127
      %v7318 = vshll.u32 %v7317, 23
      %v7319 = vor.u32 4788187, %v7318
      %v7320 = vand.u32 2147483647, %v7319
      %v7322 = vcvt.s32.f32 %v7315
      %v7323 = vmul.f32 %v7322, %v7320
      %v7324 = vxor.u32 %v7323, 2147483648
      %v7325 = vsel %vm7242, %v7324, %v7323
      %v7326 = vsub.s32 4, %v7302
      %v7327 = vsel %vm7242, %v7326, %v7302
      %v7328 = vsel %vm7241, %v4211, %v7325
      %v7329 = vsel %vm7241, 0, %v7327
      %v7330 = vcosq.f32.pop %v7328
      %v7331 = vsinq.f32.pop %v7328
      %vm7332 = vweird.f32 %v4211
      %v7333 = vadd.s32 %v7329, 3
      %v7334 = vand.u32 %v7333, 3
      %vm7335 = vcmp.lt.s32.totalorder %v7334, 2
      %vm7336 = vcmp.eq.s32.totalorder %v7334, 0
      %v7337 = vxor.u32 %v7331, 2147483648
      %v7338 = vsel %vm7336, %v7330, %v7337
      %vm7339 = vcmp.eq.s32.totalorder %v7334, 2
      %v7340 = vxor.u32 %v7330, 2147483648
      %v7341 = vsel %vm7339, %v7340, %v7331
      %v7342 = vsel %vm7335, %v7338, %v7341
      %v7343 = vsel %vm7332, nan, %v7342
      %v7344 = vand.u32 2147483647, %v4216
      %vm7345 = vcmp.le.f32.partialorder %v7344, 0.7853982
      %vm7346 = vcmp.lt.s32.totalorder %v4216, 0
      %v7347 = vand.u32 %v4216, 2139095040
      %v7348 = vshrl.u32 %v7347, 23
      %v7349 = vsub.s32 %v7348, 127
      %v7350 = vand.u32 2147483647, %v4216
      %v7351 = vand.u32 %v7350, 8388607
      %v7352 = vor.u32 %v7351, 8388608
      %v7353 = vsub.s32 0, %v7352
      %v7354 = vadd.s32 %v7349, 1
      %vm7355 = vcmp.gt.s32.totalorder %v7354, 0
      %v7356 = vsel %vm7355, %v7354, 0
      %v7357 = vshrl.u32 %v7356, 5
      %v7358 = vand.u32 %v7356, 31
      %v7359 = vsub.s32 32, %v7358
      %v7360 = vshrl.u32 683565275, %v7359
      %v7361 = vshll.u32 683565275, %v7358
      %v7362 = vshrl.u32 2475754826, %v7359
      %v7363 = vor.u32 %v7361, %v7362
      %v7364 = vshll.u32 2475754826, %v7358
      %v7365 = vshrl.u32 2131351028, %v7359
      %v7366 = vor.u32 %v7364, %v7365
      %v7367 = vshll.u32 2131351028, %v7358
      %v7368 = vshrl.u32 2102212464, %v7359
      %v7369 = vor.u32 %v7367, %v7368
      %v7370 = vshll.u32 2102212464, %v7358
      %v7371 = vshrl.u32 920167782, %v7359
      %v7372 = vor.u32 %v7370, %v7371
      %v7373 = vshll.u32 920167782, %v7358
      %v7374 = vshrl.u32 1326507024, %v7359
      %v7375 = vor.u32 %v7373, %v7374
      %vm7376 = vcmp.lt.s32.totalorder %v7357, 1
      %vm7377 = vcmp.lt.s32.totalorder %v7357, 2
      %vm7378 = vcmp.lt.s32.totalorder %v7357, 3
      %vm7379 = vcmp.lt.s32.totalorder %v7357, 4
      %v7380 = vsel %vm7376, %v7360, %v7363
      %v7381 = vsel %vm7379, %v7369, 2102212464
      %v7382 = vsel %vm7378, %v7366, %v7381
      %v7383 = vsel %vm7377, %v7380, %v7382
      %v7384 = vsel %vm7376, %v7363, %v7366
      %v7385 = vsel %vm7379, %v7372, 920167782
      %v7386 = vsel %vm7378, %v7369, %v7385
      %v7387 = vsel %vm7377, %v7384, %v7386
      %v7388 = vsel %vm7376, %v7366, %v7369
      %v7389 = vsel %vm7379, %v7375, 1326507024
      %v7390 = vsel %vm7378, %v7372, %v7389
      %v7391 = vsel %vm7377, %v7388, %v7390
      %v7392 = vshll.u32 %v7352, 8
      %v7393 = vmul.u32.u64.compose %v7392, %v7391
      %v7394 = vextract.low.u32 %v7393
      %v7395 = vextract.high.u32 %v7393
      %v7396 = vmul.u32.u64.compose %v7392, %v7387
      %v7397 = vextract.low.u32 %v7396
      %v7398 = vextract.high.u32 %v7396
      %v7399 = vmul.u32 %v7392, %v7383
      %v7400 = vadd.s32 %v7395, %v7397
      %vm7401 = vc.u32 %v7395, %v7397
      %v7402 = vadd.s32 %v7398, 1
      %v7403 = vsel %vm7401, %v7402, %v7398
      %v7404 = vadd.s32 %v7399, %v7403
      %v7405 = vadd.s32 %v7404, 536870912
      %v7406 = vshrl.u32 %v7405, 30
      %v7407 = vshll.u32 %v7406, 30
      %v7408 = vsub.s32 %v7404, %v7407
      %vm7409 = vcmp.lt.s32.totalorder %v7408, 0
      %v7410 = vsub.s32 0, %v7408
      %v7411 = vsel %vm7409, %v7410, %v7408
      %v7412 = vclz %v7411
      %v7413 = vsub.s32 %v7412, 2
      %vm7414 = vcmp.gt.s32.totalorder 0, %v7413
      %v7415 = vsel %vm7414, 0, %v7413
      %v7416 = vsub.s32 32, %v7415
      %v7417 = vshll.u32 %v7408, %v7415
      %v7418 = vshrl.u32 %v7400, %v7416
      %v7419 = vor.u32 %v7417, %v7418
      %v7420 = vsub.s32 4294967266, %v7415
      %v7421 = vadd.s32 %v7420, 127
      %v7422 = vshll.u32 %v7421, 23
      %v7423 = vor.u32 4788187, %v7422
      %v7424 = vand.u32 2147483647, %v7423
      %v7426 = vcvt.s32.f32 %v7419
      %v7427 = vmul.f32 %v7426, %v7424
      %v7428 = vxor.u32 %v7427, 2147483648
      %v7429 = vsel %vm7346, %v7428, %v7427
      %v7430 = vsub.s32 4, %v7406
      %v7431 = vsel %vm7346, %v7430, %v7406
      %v7432 = vsel %vm7345, %v4216, %v7429
      %v7433 = vsel %vm7345, 0, %v7431
      %v7434 = vcosq.f32.pop %v7432
      %v7435 = vsinq.f32.pop %v7432
      %vm7436 = vweird.f32 %v4216
      %v7437 = vadd.s32 %v7433, 3
      %v7438 = vand.u32 %v7437, 3
      %vm7439 = vcmp.lt.s32.totalorder %v7438, 2
      %vm7440 = vcmp.eq.s32.totalorder %v7438, 0
      %v7441 = vxor.u32 %v7435, 2147483648
      %v7442 = vsel %vm7440, %v7434, %v7441
      %vm7443 = vcmp.eq.s32.totalorder %v7438, 2
      %v7444 = vxor.u32 %v7434, 2147483648
      %v7445 = vsel %vm7443, %v7444, %v7435
      %v7446 = vsel %vm7439, %v7442, %v7445
      %v7447 = vsel %vm7436, nan, %v7446
      %v7448 = vand.u32 2147483647, %v4221
      %vm7449 = vcmp.le.f32.partialorder %v7448, 0.7853982
      %vm7450 = vcmp.lt.s32.totalorder %v4221, 0
      %v7451 = vand.u32 %v4221, 2139095040
      %v7452 = vshrl.u32 %v7451, 23
      %v7453 = vsub.s32 %v7452, 127
      %v7454 = vand.u32 2147483647, %v4221
      %v7455 = vand.u32 %v7454, 8388607
      %v7456 = vor.u32 %v7455, 8388608
      %v7457 = vsub.s32 0, %v7456
      %v7458 = vadd.s32 %v7453, 1
      %vm7459 = vcmp.gt.s32.totalorder %v7458, 0
      %v7460 = vsel %vm7459, %v7458, 0
      %v7461 = vshrl.u32 %v7460, 5
      %v7462 = vand.u32 %v7460, 31
      %v7463 = vsub.s32 32, %v7462
      %v7464 = vshrl.u32 683565275, %v7463
      %v7465 = vshll.u32 683565275, %v7462
      %v7466 = vshrl.u32 2475754826, %v7463
      %v7467 = vor.u32 %v7465, %v7466
      %v7468 = vshll.u32 2475754826, %v7462
      %v7469 = vshrl.u32 2131351028, %v7463
      %v7470 = vor.u32 %v7468, %v7469
      %v7471 = vshll.u32 2131351028, %v7462
      %v7472 = vshrl.u32 2102212464, %v7463
      %v7473 = vor.u32 %v7471, %v7472
      %v7474 = vshll.u32 2102212464, %v7462
      %v7475 = vshrl.u32 920167782, %v7463
      %v7476 = vor.u32 %v7474, %v7475
      %v7477 = vshll.u32 920167782, %v7462
      %v7478 = vshrl.u32 1326507024, %v7463
      %v7479 = vor.u32 %v7477, %v7478
      %vm7480 = vcmp.lt.s32.totalorder %v7461, 1
      %vm7481 = vcmp.lt.s32.totalorder %v7461, 2
      %vm7482 = vcmp.lt.s32.totalorder %v7461, 3
      %vm7483 = vcmp.lt.s32.totalorder %v7461, 4
      %v7484 = vsel %vm7480, %v7464, %v7467
      %v7485 = vsel %vm7483, %v7473, 2102212464
      %v7486 = vsel %vm7482, %v7470, %v7485
      %v7487 = vsel %vm7481, %v7484, %v7486
      %v7488 = vsel %vm7480, %v7467, %v7470
      %v7489 = vsel %vm7483, %v7476, 920167782
      %v7490 = vsel %vm7482, %v7473, %v7489
      %v7491 = vsel %vm7481, %v7488, %v7490
      %v7492 = vsel %vm7480, %v7470, %v7473
      %v7493 = vsel %vm7483, %v7479, 1326507024
      %v7494 = vsel %vm7482, %v7476, %v7493
      %v7495 = vsel %vm7481, %v7492, %v7494
      %v7496 = vshll.u32 %v7456, 8
      %v7497 = vmul.u32.u64.compose %v7496, %v7495
      %v7498 = vextract.low.u32 %v7497
      %v7499 = vextract.high.u32 %v7497
      %v7500 = vmul.u32.u64.compose %v7496, %v7491
      %v7501 = vextract.low.u32 %v7500
      %v7502 = vextract.high.u32 %v7500
      %v7503 = vmul.u32 %v7496, %v7487
      %v7504 = vadd.s32 %v7499, %v7501
      %vm7505 = vc.u32 %v7499, %v7501
      %v7506 = vadd.s32 %v7502, 1
      %v7507 = vsel %vm7505, %v7506, %v7502
      %v7508 = vadd.s32 %v7503, %v7507
      %v7509 = vadd.s32 %v7508, 536870912
      %v7510 = vshrl.u32 %v7509, 30
      %v7511 = vshll.u32 %v7510, 30
      %v7512 = vsub.s32 %v7508, %v7511
      %vm7513 = vcmp.lt.s32.totalorder %v7512, 0
      %v7514 = vsub.s32 0, %v7512
      %v7515 = vsel %vm7513, %v7514, %v7512
      %v7516 = vclz %v7515
      %v7517 = vsub.s32 %v7516, 2
      %vm7518 = vcmp.gt.s32.totalorder 0, %v7517
      %v7519 = vsel %vm7518, 0, %v7517
      %v7520 = vsub.s32 32, %v7519
      %v7521 = vshll.u32 %v7512, %v7519
      %v7522 = vshrl.u32 %v7504, %v7520
      %v7523 = vor.u32 %v7521, %v7522
      %v7524 = vsub.s32 4294967266, %v7519
      %v7525 = vadd.s32 %v7524, 127
      %v7526 = vshll.u32 %v7525, 23
      %v7527 = vor.u32 4788187, %v7526
      %v7528 = vand.u32 2147483647, %v7527
      %v7530 = vcvt.s32.f32 %v7523
      %v7531 = vmul.f32 %v7530, %v7528
      %v7532 = vxor.u32 %v7531, 2147483648
      %v7533 = vsel %vm7450, %v7532, %v7531
      %v7534 = vsub.s32 4, %v7510
      %v7535 = vsel %vm7450, %v7534, %v7510
      %v7536 = vsel %vm7449, %v4221, %v7533
      %v7537 = vsel %vm7449, 0, %v7535
      %v7538 = vcosq.f32.pop %v7536
      %v7539 = vsinq.f32.pop %v7536
      %vm7540 = vweird.f32 %v4221
      %v7541 = vadd.s32 %v7537, 3
      %v7542 = vand.u32 %v7541, 3
      %vm7543 = vcmp.lt.s32.totalorder %v7542, 2
      %vm7544 = vcmp.eq.s32.totalorder %v7542, 0
      %v7545 = vxor.u32 %v7539, 2147483648
      %v7546 = vsel %vm7544, %v7538, %v7545
      %vm7547 = vcmp.eq.s32.totalorder %v7542, 2
      %v7548 = vxor.u32 %v7538, 2147483648
      %v7549 = vsel %vm7547, %v7548, %v7539
      %v7550 = vsel %vm7543, %v7546, %v7549
      %v7551 = vsel %vm7540, nan, %v7550
      %v7552 = vld [vmem:[%s5] sm:$0xff]
      %v7553 = vld [vmem:[%s5 + $0x8] sm:$0xff]
      %v7554 = vld [vmem:[%s5 + $0x10] sm:$0xff]
      %v7555 = vld [vmem:[%s5 + $0x18] sm:$0xff]
      %v7556 = vld [vmem:[%s5 + $0x20] sm:$0xff]
      %v7557 = vld [vmem:[%s5 + $0x28] sm:$0xff]
      %v7558 = vld [vmem:[%s5 + $0x30] sm:$0xff]
      %v7559 = vld [vmem:[%s5 + $0x38] sm:$0xff]
      %v7560 = vld [vmem:[%s5 + $0x40] sm:$0xff]
      %v7561 = vld [vmem:[%s5 + $0x48] sm:$0xff]
      %v7562 = vld [vmem:[%s5 + $0x50] sm:$0xff]
      %v7563 = vld [vmem:[%s5 + $0x58] sm:$0xff]
      %v7564 = vld [vmem:[%s5 + $0x60] sm:$0xff]
      %v7565 = vld [vmem:[%s5 + $0x68] sm:$0xff]
      %v7566 = vld [vmem:[%s5 + $0x70] sm:$0xff]
      %v7567 = vld [vmem:[%s5 + $0x78] sm:$0xff]
      %v7568 = vld [vmem:[%s6] sm:$0x1]
      %v7570 = vlaneseq
      %v7571 = vshrl.u32 %v7570, 7
      %v7572 = vsub.s32 0, %v7571
      %v7573 = vrot.slane %v7568, %v7572
      %7575 = vmatprep.subr.mxu0 0.0
      %7576 = vmatpush1.msra.mxu0 %v7552
      %7577 = vmatprep.subr.mxu0 0.0
      %7578 = vmatpush1.msra.mxu0 %v7553
      %7579 = vmatprep.subr.mxu0 0.0
      %7580 = vmatpush1.msra.mxu0 %v7554
      %7581 = vmatprep.subr.mxu0 0.0
      %7582 = vmatpush1.msra.mxu0 %v7555
      %7583 = vmatprep.subr.mxu0 0.0
      %7584 = vmatpush1.msra.mxu0 %v7556
      %7585 = vmatprep.subr.mxu0 0.0
      %7586 = vmatpush1.msra.mxu0 %v7557
      %7587 = vmatprep.subr.mxu0 0.0
      %7588 = vmatpush1.msra.mxu0 %v7558
      %7589 = vmatprep.subr.mxu0 0.0
      %7590 = vmatpush1.msra.mxu0 %v7559
      %7591 = vmatprep.subr.mxu0 0.0
      %7592 = vmatpush1.msra.mxu0 %v7560
      %7593 = vmatprep.subr.mxu0 0.0
      %7594 = vmatpush1.msra.mxu0 %v7561
      %7595 = vmatprep.subr.mxu0 0.0
      %7596 = vmatpush1.msra.mxu0 %v7562
      %7597 = vmatprep.subr.mxu0 0.0
      %7598 = vmatpush1.msra.mxu0 %v7563
      %7599 = vmatprep.subr.mxu0 0.0
      %7600 = vmatpush1.msra.mxu0 %v7564
      %7601 = vmatprep.subr.mxu0 0.0
      %7602 = vmatpush1.msra.mxu0 %v7565
      %7603 = vmatprep.subr.mxu0 0.0
      %7604 = vmatpush1.msra.mxu0 %v7566
      %7605 = vmatprep.subr.mxu0 0.0
      %7606 = vmatpush1.msra.mxu0 %v7567
      %7607 = vmatprep.subr.mxu0 0.0
      %7608 = vmatpush1.msra.mxu0 0.0
      %7609 = vmatprep.subr.mxu0 0.0
      %7610 = vmatpush1.msra.mxu0 0.0
      %7611 = vmatprep.subr.mxu0 0.0
      %7612 = vmatpush1.msra.mxu0 0.0
      %7613 = vmatprep.subr.mxu0 0.0
      %7614 = vmatpush1.msra.mxu0 0.0
      %7615 = vmatprep.subr.mxu0 0.0
      %7616 = vmatpush1.msra.mxu0 0.0
      %7617 = vmatprep.subr.mxu0 0.0
      %7618 = vmatpush1.msra.mxu0 0.0
      %7619 = vmatprep.subr.mxu0 0.0
      %7620 = vmatpush1.msra.mxu0 0.0
      %7621 = vmatprep.subr.mxu0 0.0
      %7622 = vmatpush1.msra.mxu0 0.0
      %7623 = vmatprep.subr.mxu0 0.0
      %7624 = vmatpush1.msra.mxu0 0.0
      %7625 = vmatprep.subr.mxu0 0.0
      %7626 = vmatpush1.msra.mxu0 0.0
      %7627 = vmatprep.subr.mxu0 0.0
      %7628 = vmatpush1.msra.mxu0 0.0
      %7629 = vmatprep.subr.mxu0 0.0
      %7630 = vmatpush1.msra.mxu0 0.0
      %7631 = vmatprep.subr.mxu0 0.0
      %7632 = vmatpush1.msra.mxu0 0.0
      %7633 = vmatprep.subr.mxu0 0.0
      %7634 = vmatpush1.msra.mxu0 0.0
      %7635 = vmatprep.subr.mxu0 0.0
      %7636 = vmatpush1.msra.mxu0 0.0
      %7637 = vmatprep.subr.mxu0 0.0
      %7638 = vmatpush1.msra.mxu0 0.0
      %7639 = vmatprep.mubr.f32.mxu0 0.0
      %7640 = vmatmul.mubr.f32.gmra.mrb[0].mxu0 %v4327
      %v7641 = vpop.f32.mrb[0].mxu0
      %v7642 = vadd.f32 %v7573, %v7641
      %v7643 = vpop.f32.mrb[0].mxu0
      %7644 = vmatprep.mubr.f32.mxu0 0.0
      %7645 = vmatmul.mubr.f32.gmra.mrb[0].mxu0 %v4431
      %v7646 = vpop.f32.mrb[0].mxu0
      %v7647 = vadd.f32 %v7573, %v7646
      %v7648 = vpop.f32.mrb[0].mxu0
      %7649 = vmatprep.mubr.f32.mxu0 0.0
      %7650 = vmatmul.mubr.f32.gmra.mrb[0].mxu0 %v4535
      %v7651 = vpop.f32.mrb[0].mxu0
      %v7652 = vadd.f32 %v7573, %v7651
      %v7653 = vpop.f32.mrb[0].mxu0
      %7654 = vmatprep.mubr.f32.mxu0 0.0
      %7655 = vmatmul.mubr.f32.gmra.mrb[0].mxu0 %v4639
      %v7656 = vpop.f32.mrb[0].mxu0
      %v7657 = vadd.f32 %v7573, %v7656
      %v7658 = vpop.f32.mrb[0].mxu0
      %7659 = vmatprep.mubr.f32.mxu0 0.0
      %7660 = vmatmul.mubr.f32.gmra.mrb[0].mxu0 %v4743
      %v7661 = vpop.f32.mrb[0].mxu0
      %v7662 = vadd.f32 %v7573, %v7661
      %v7663 = vpop.f32.mrb[0].mxu0
      %7664 = vmatprep.mubr.f32.mxu0 0.0
      %7665 = vmatmul.mubr.f32.gmra.mrb[0].mxu0 %v4847
      %v7666 = vpop.f32.mrb[0].mxu0
      %v7667 = vadd.f32 %v7573, %v7666
      %v7668 = vpop.f32.mrb[0].mxu0
      %7669 = vmatprep.mubr.f32.mxu0 0.0
      %7670 = vmatmul.mubr.f32.gmra.mrb[0].mxu0 %v4951
      %v7671 = vpop.f32.mrb[0].mxu0
      %v7672 = vadd.f32 %v7573, %v7671
      %v7673 = vpop.f32.mrb[0].mxu0
      %7674 = vmatprep.mubr.f32.mxu0 0.0
      %7675 = vmatmul.mubr.f32.gmra.mrb[0].mxu0 %v5055
      %v7676 = vpop.f32.mrb[0].mxu0
      %v7677 = vadd.f32 %v7573, %v7676
      %v7678 = vpop.f32.mrb[0].mxu0
      %7679 = vmatprep.mubr.f32.mxu0 0.0
      %7680 = vmatmul.mubr.f32.gmra.mrb[0].mxu0 %v5159
      %v7681 = vpop.f32.mrb[0].mxu0
      %v7682 = vadd.f32 %v7573, %v7681
      %v7683 = vpop.f32.mrb[0].mxu0
      %7684 = vmatprep.mubr.f32.mxu0 0.0
      %7685 = vmatmul.mubr.f32.gmra.mrb[0].mxu0 %v5263
      %v7686 = vpop.f32.mrb[0].mxu0
      %v7687 = vadd.f32 %v7573, %v7686
      %v7688 = vpop.f32.mrb[0].mxu0
      %7689 = vmatprep.mubr.f32.mxu0 0.0
      %7690 = vmatmul.mubr.f32.gmra.mrb[0].mxu0 %v5367
      %v7691 = vpop.f32.mrb[0].mxu0
      %v7692 = vadd.f32 %v7573, %v7691
      %v7693 = vpop.f32.mrb[0].mxu0
      %7694 = vmatprep.mubr.f32.mxu0 0.0
      %7695 = vmatmul.mubr.f32.gmra.mrb[0].mxu0 %v5471
      %v7696 = vpop.f32.mrb[0].mxu0
      %v7697 = vadd.f32 %v7573, %v7696
      %v7698 = vpop.f32.mrb[0].mxu0
      %7699 = vmatprep.mubr.f32.mxu0 0.0
      %7700 = vmatmul.mubr.f32.gmra.mrb[0].mxu0 %v5575
      %v7701 = vpop.f32.mrb[0].mxu0
      %v7702 = vadd.f32 %v7573, %v7701
      %v7703 = vpop.f32.mrb[0].mxu0
      %7704 = vmatprep.mubr.f32.mxu0 0.0
      %7705 = vmatmul.mubr.f32.gmra.mrb[0].mxu0 %v5679
      %v7706 = vpop.f32.mrb[0].mxu0
      %v7707 = vadd.f32 %v7573, %v7706
      %v7708 = vpop.f32.mrb[0].mxu0
      %7709 = vmatprep.mubr.f32.mxu0 0.0
      %7710 = vmatmul.mubr.f32.gmra.mrb[0].mxu0 %v5783
      %v7711 = vpop.f32.mrb[0].mxu0
      %v7712 = vadd.f32 %v7573, %v7711
      %v7713 = vpop.f32.mrb[0].mxu0
      %7714 = vmatprep.mubr.f32.mxu0 0.0
      %7715 = vmatmul.mubr.f32.gmra.mrb[0].mxu0 %v5887
      %v7716 = vpop.f32.mrb[0].mxu0
      %v7717 = vadd.f32 %v7573, %v7716
      %v7718 = vpop.f32.mrb[0].mxu0
      %7719 = vmatprep.mubr.f32.mxu0 0.0
      %7720 = vmatmul.mubr.f32.gmra.mrb[0].mxu0 %v5991
      %v7721 = vpop.f32.mrb[0].mxu0
      %v7722 = vadd.f32 %v7573, %v7721
      %v7723 = vpop.f32.mrb[0].mxu0
      %7724 = vmatprep.mubr.f32.mxu0 0.0
      %7725 = vmatmul.mubr.f32.gmra.mrb[0].mxu0 %v6095
      %v7726 = vpop.f32.mrb[0].mxu0
      %v7727 = vadd.f32 %v7573, %v7726
      %v7728 = vpop.f32.mrb[0].mxu0
      %7729 = vmatprep.mubr.f32.mxu0 0.0
      %7730 = vmatmul.mubr.f32.gmra.mrb[0].mxu0 %v6199
      %v7731 = vpop.f32.mrb[0].mxu0
      %v7732 = vadd.f32 %v7573, %v7731
      %v7733 = vpop.f32.mrb[0].mxu0
      %7734 = vmatprep.mubr.f32.mxu0 0.0
      %7735 = vmatmul.mubr.f32.gmra.mrb[0].mxu0 %v6303
      %v7736 = vpop.f32.mrb[0].mxu0
      %v7737 = vadd.f32 %v7573, %v7736
      %v7738 = vpop.f32.mrb[0].mxu0
      %7739 = vmatprep.mubr.f32.mxu0 0.0
      %7740 = vmatmul.mubr.f32.gmra.mrb[0].mxu0 %v6407
      %v7741 = vpop.f32.mrb[0].mxu0
      %v7742 = vadd.f32 %v7573, %v7741
      %v7743 = vpop.f32.mrb[0].mxu0
      %7744 = vmatprep.mubr.f32.mxu0 0.0
      %7745 = vmatmul.mubr.f32.gmra.mrb[0].mxu0 %v6511
      %v7746 = vpop.f32.mrb[0].mxu0
      %v7747 = vadd.f32 %v7573, %v7746
      %v7748 = vpop.f32.mrb[0].mxu0
      %7749 = vmatprep.mubr.f32.mxu0 0.0
      %7750 = vmatmul.mubr.f32.gmra.mrb[0].mxu0 %v6615
      %v7751 = vpop.f32.mrb[0].mxu0
      %v7752 = vadd.f32 %v7573, %v7751
      %v7753 = vpop.f32.mrb[0].mxu0
      %7754 = vmatprep.mubr.f32.mxu0 0.0
      %7755 = vmatmul.mubr.f32.gmra.mrb[0].mxu0 %v6719
      %v7756 = vpop.f32.mrb[0].mxu0
      %v7757 = vadd.f32 %v7573, %v7756
      %v7758 = vpop.f32.mrb[0].mxu0
      %7759 = vmatprep.mubr.f32.mxu0 0.0
      %7760 = vmatmul.mubr.f32.gmra.mrb[0].mxu0 %v6823
      %v7761 = vpop.f32.mrb[0].mxu0
      %v7762 = vadd.f32 %v7573, %v7761
      %v7763 = vpop.f32.mrb[0].mxu0
      %7764 = vmatprep.mubr.f32.mxu0 0.0
      %7765 = vmatmul.mubr.f32.gmra.mrb[0].mxu0 %v6927
      %v7766 = vpop.f32.mrb[0].mxu0
      %v7767 = vadd.f32 %v7573, %v7766
      %v7768 = vpop.f32.mrb[0].mxu0
      %7769 = vmatprep.mubr.f32.mxu0 0.0
      %7770 = vmatmul.mubr.f32.gmra.mrb[0].mxu0 %v7031
      %v7771 = vpop.f32.mrb[0].mxu0
      %v7772 = vadd.f32 %v7573, %v7771
      %v7773 = vpop.f32.mrb[0].mxu0
      %7774 = vmatprep.mubr.f32.mxu0 0.0
      %7775 = vmatmul.mubr.f32.gmra.mrb[0].mxu0 %v7135
      %v7776 = vpop.f32.mrb[0].mxu0
      %v7777 = vadd.f32 %v7573, %v7776
      %v7778 = vpop.f32.mrb[0].mxu0
      %7779 = vmatprep.mubr.f32.mxu0 0.0
      %7780 = vmatmul.mubr.f32.gmra.mrb[0].mxu0 %v7239
      %v7781 = vpop.f32.mrb[0].mxu0
      %v7782 = vadd.f32 %v7573, %v7781
      %v7783 = vpop.f32.mrb[0].mxu0
      %7784 = vmatprep.mubr.f32.mxu0 0.0
      %7785 = vmatmul.mubr.f32.gmra.mrb[0].mxu0 %v7343
      %v7786 = vpop.f32.mrb[0].mxu0
      %v7787 = vadd.f32 %v7573, %v7786
      %v7788 = vpop.f32.mrb[0].mxu0
      %7789 = vmatprep.mubr.f32.mxu0 0.0
      %7790 = vmatmul.mubr.f32.gmra.mrb[0].mxu0 %v7447
      %v7791 = vpop.f32.mrb[0].mxu0
      %v7792 = vadd.f32 %v7573, %v7791
      %v7793 = vpop.f32.mrb[0].mxu0
      %7794 = vmatprep.mubr.f32.mxu0 0.0
      %7795 = vmatmul.mubr.f32.gmra.mrb[0].mxu0 %v7551
      %v7796 = vpop.f32.mrb[0].mxu0
      %v7797 = vadd.f32 %v7573, %v7796
      %v7798 = vpop.f32.mrb[0].mxu0
      %7799 = vdwg.mxu0
      %7800 = vst [vmem:[%s280] sm:$0xff] %v7642
      %7801 = vst [vmem:[%s280 + $0x8] sm:$0xff] %v7647
      %7802 = vst [vmem:[%s280 + $0x10] sm:$0xff] %v7652
      %7803 = vst [vmem:[%s280 + $0x18] sm:$0xff] %v7657
      %7804 = vst [vmem:[%s280 + $0x20] sm:$0xff] %v7662
      %7805 = vst [vmem:[%s280 + $0x28] sm:$0xff] %v7667
      %7806 = vst [vmem:[%s280 + $0x30] sm:$0xff] %v7672
      %7807 = vst [vmem:[%s280 + $0x38] sm:$0xff] %v7677
      %7808 = vst [vmem:[%s280 + $0x40] sm:$0xff] %v7682
      %7809 = vst [vmem:[%s280 + $0x48] sm:$0xff] %v7687
      %7810 = vst [vmem:[%s280 + $0x50] sm:$0xff] %v7692
      %7811 = vst [vmem:[%s280 + $0x58] sm:$0xff] %v7697
      %7812 = vst [vmem:[%s280 + $0x60] sm:$0xff] %v7702
      %7813 = vst [vmem:[%s280 + $0x68] sm:$0xff] %v7707
      %7814 = vst [vmem:[%s280 + $0x70] sm:$0xff] %v7712
      %7815 = vst [vmem:[%s280 + $0x78] sm:$0xff] %v7717
      %7816 = vst [vmem:[%s280 + $0x80] sm:$0xff] %v7722
      %7817 = vst [vmem:[%s280 + $0x88] sm:$0xff] %v7727
      %7818 = vst [vmem:[%s280 + $0x90] sm:$0xff] %v7732
      %7819 = vst [vmem:[%s280 + $0x98] sm:$0xff] %v7737
      %7820 = vst [vmem:[%s280 + $0xa0] sm:$0xff] %v7742
      %7821 = vst [vmem:[%s280 + $0xa8] sm:$0xff] %v7747
      %7822 = vst [vmem:[%s280 + $0xb0] sm:$0xff] %v7752
      %7823 = vst [vmem:[%s280 + $0xb8] sm:$0xff] %v7757
      %7824 = vst [vmem:[%s280 + $0xc0] sm:$0xff] %v7762
      %7825 = vst [vmem:[%s280 + $0xc8] sm:$0xff] %v7767
      %7826 = vst [vmem:[%s280 + $0xd0] sm:$0xff] %v7772
      %7827 = vst [vmem:[%s280 + $0xd8] sm:$0xff] %v7777
      %7828 = vst [vmem:[%s280 + $0xe0] sm:$0xff] %v7782
      %7829 = vst [vmem:[%s280 + $0xe8] sm:$0xff] %v7787
      %7830 = vst [vmem:[%s280 + $0xf0] sm:$0xff] %v7792
      %7831 = vst [vmem:[%s280 + $0xf8] sm:$0xff] %v7797
      %s7832 = smul.u32 32, %s18
      %p7833 = scmp.lt.s32.totalorder %s7832, 127
      %s7834 = scalar_select %p7833, %s7832, 127
      %s7835 = smul.addr %s7834, 8
      %s7836 = scalar_lea.vmem %s7, %s7835
      // Predicated region
      $region49: #{siren_forward.1} parent=47 // pred_check
        %p7837 = pneg %p188
      $region50: #{siren_forward.1} parent=47 // pred_check_branch
        %7839 = sbr.rel (%p7837) target = $region52
      $region51: #{siren_forward.1} parent=47 // pred_region
        %s7840 = smul.u32 32, %s18
      $region52: #{siren_forward.1} parent=47 // pred_fallthru
        _
    $region48: #{siren_forward.1} parent=5 // pred_fallthru
      _
    %p7841 = scmp.le.s32.totalorder 2, %s13
    // Predicated region
    $region53: #{siren_forward.1} parent=5 // pred_check
      %p7842 = pneg %p7841
    $region54: #{siren_forward.1} parent=5 // pred_check_branch
      %7844 = sbr.rel (%p7842) target = $region56
    $region55: #{siren_forward.1} parent=5 // pred_region
      %s7845 = ssub.s32 %s13, 2
      // Predicated region
      $region57: #{siren_forward.1} parent=55 // pred_check
        %p7846 = pneg %p194
      $region58: #{siren_forward.1} parent=55 // pred_check_branch
        %7848 = sbr.rel (%p7846) target = $region60
      $region59: #{siren_forward.1} parent=55 // pred_region
        %s7849 = smul.u32 32, %s19
        %p7850 = scmp.lt.s32.totalorder %s7849, 127
        %s7851 = scalar_select %p7850, %s7849, 127
        %s7852 = smul.addr %s7851, 8
        %s7853 = scalar_lea.vmem %s7, %s7852
      $region60: #{siren_forward.1} parent=55 // pred_fallthru
        _
    $region56: #{siren_forward.1} parent=5 // pred_fallthru
      _
  $region6: #{siren_forward.1} parent=0 // loop_footer
    %s17 = sadd.s32 1, %s13
  $region7: #{siren_forward.1} parent=0 // loop_footer_branch
    %12 = sbr.rel target = $region3
  $region8: #{siren_forward.1} parent=0 // loop_exit
    _

</llo_original>
